<compile_context>
chip_gen: v7x
topology: tpu7x:2x2x1
jax: 0.10.0
libtpu: 0.0.40
codegen_flags: <defaults>
</compile_context>

<pallas_src>
import functools
import math

import numpy as np
import jax
import jax.numpy as jnp
from jax import lax
from jax.experimental import pallas as pl
from jax.experimental.pallas import tpu as pltpu

LN_EPS = 1e-5
MM_DTYPE = jnp.bfloat16   # matmul operand dtype (set to jnp.float32 for exact parity)


# ----------------------------------------------------------------------------
# helpers
# ----------------------------------------------------------------------------
def _layernorm(x, gamma, beta):
    x = x.astype(jnp.float32)
    mu = jnp.mean(x, axis=-1, keepdims=True)
    var = jnp.mean((x - mu) ** 2, axis=-1, keepdims=True)
    return (x - mu) * lax.rsqrt(var + LN_EPS) * gamma + beta


def _full_block(shape):
    """Whole-array block for a 1-step grid."""
    return pl.BlockSpec(tuple(shape), lambda i, _r=len(shape): (0,) * _r)


# ----------------------------------------------------------------------------
# Pallas kernel bodies
# ----------------------------------------------------------------------------
def _swin_block_compute(x_ref, bias_ref,
                        g1_ref, be1_ref, wqkv_ref, bqkv_ref, wproj_ref, bproj_ref,
                        g2_ref, be2_ref, w1_ref, bm1_ref, w2_ref, bm2_ref,
                        *, batch, num_windows, window_len, num_heads, scale):
    """Shared fused Swin block math on windowed tokens.

    x_ref: (T, C) tokens in (batch, window, token-in-window) order, T=B*nW*N.
    bias_ref: (num_heads, nW, N, N)  == rel-pos bias + shift mask.
    Returns  out = y + MLP(LN2(y)),  y = x + proj(MHSA(LN1(x)))   as f32 (T, C).
    """
    T, C = x_ref.shape
    N = window_len
    Wn = batch * num_windows          # total windows
    hd = C // num_heads

    x = x_ref[...].astype(jnp.float32)                                 # (T, C)

    # ---- LayerNorm1 + fused QKV projection over all windows ----
    xn = _layernorm(x, g1_ref[...], be1_ref[...])
    qkv = jnp.dot(xn.astype(MM_DTYPE), wqkv_ref[...],
                  preferred_element_type=jnp.float32) + bqkv_ref[...]  # (T, 3C)

    def heads_major(col0):
        # (T, C) column range -> (num_heads*Wn, N, hd), head-major batch axis.
        parts = [qkv[:, col0 + h * hd: col0 + (h + 1) * hd].reshape(Wn, N, hd)
                 for h in range(num_heads)]
        return jnp.concatenate(parts, axis=0).astype(MM_DTYPE)

    q = heads_major(0)
    k = heads_major(C)
    v = heads_major(2 * C)

    # ---- attention scores (one batched matmul over head*window) ----
    s = jnp.einsum('bqd,bkd->bqk', q, k,
                   preferred_element_type=jnp.float32) * scale         # (h*Wn, N, N)
    s = s.reshape(num_heads, batch, num_windows, N, N) + bias_ref[...][:, None]
    s = s.reshape(num_heads * Wn, N, N)

    # ---- softmax (f32), reciprocal on the EUP ----
    m = jnp.max(s, axis=-1, keepdims=True)
    e = jnp.exp(s - m)
    p = e * pl.reciprocal(jnp.sum(e, axis=-1, keepdims=True), approx=True)

    # ---- P @ V (batched) ----
    o = jnp.einsum('bqk,bkd->bqd', p.astype(MM_DTYPE), v,
                   preferred_element_type=jnp.float32)                 # (h*Wn, N, hd)
    o = o.reshape(num_heads, T, hd).astype(MM_DTYPE)                   # head-major

    # ---- head merge folded into the output projection:
    #      concat_h(o_h) @ Wproj == sum_h o_h @ Wproj[h*hd:(h+1)*hd, :]
    wp = wproj_ref[...].reshape(num_heads, hd, C)
    attn_out = jnp.sum(jnp.einsum('htd,hdc->htc', o, wp,
                                  preferred_element_type=jnp.float32), axis=0)
    attn_out = attn_out + bproj_ref[...]                               # (T, C)

    # ---- residual 1 ----
    y = x + attn_out

    # ---- LayerNorm2 + MLP (exact erf GELU) + residual 2 ----
    yn = _layernorm(y, g2_ref[...], be2_ref[...])
    h = jnp.dot(yn.astype(MM_DTYPE), w1_ref[...],
                preferred_element_type=jnp.float32) + bm1_ref[...]
    h = 0.5 * h * (1.0 + lax.erf(h * (1.0 / math.sqrt(2.0))))
    mo = jnp.dot(h.astype(MM_DTYPE), w2_ref[...],
                 preferred_element_type=jnp.float32) + bm2_ref[...]
    return y + mo                                                      # (T, C) f32


def swin_block_kernel(x_ref, bias_ref,
                      g1_ref, be1_ref, wqkv_ref, bqkv_ref, wproj_ref, bproj_ref,
                      g2_ref, be2_ref, w1_ref, bm1_ref, w2_ref, bm2_ref,
                      o_ref, *, batch, num_windows, window_len, num_heads, scale):
    out = _swin_block_compute(
        x_ref, bias_ref, g1_ref, be1_ref, wqkv_ref, bqkv_ref, wproj_ref, bproj_ref,
        g2_ref, be2_ref, w1_ref, bm1_ref, w2_ref, bm2_ref,
        batch=batch, num_windows=num_windows, window_len=window_len,
        num_heads=num_heads, scale=scale)
    # lane-dense store: (C, T) with T a multiple of 128 -> unmasked full-lane writes
    o_ref[...] = out.T.astype(o_ref.dtype)


def swin_block_expand_kernel(x_ref, bias_ref,
                             g1_ref, be1_ref, wqkv_ref, bqkv_ref, wproj_ref, bproj_ref,
                             g2_ref, be2_ref, w1_ref, bm1_ref, w2_ref, bm2_ref,
                             we_ref, gu_ref, bu_ref,
                             o_ref, *, batch, num_windows, window_len, num_heads, scale):
    """Last Swin block with the token-wise PatchExpand hot path fused:
    Linear(dim -> 2*dim, no bias) then LayerNorm(2*dim) (norm BEFORE rearrange)."""
    out = _swin_block_compute(
        x_ref, bias_ref, g1_ref, be1_ref, wqkv_ref, bqkv_ref, wproj_ref, bproj_ref,
        g2_ref, be2_ref, w1_ref, bm1_ref, w2_ref, bm2_ref,
        batch=batch, num_windows=num_windows, window_len=window_len,
        num_heads=num_heads, scale=scale)
    e = jnp.dot(out.astype(MM_DTYPE), we_ref[...],
                preferred_element_type=jnp.float32)                    # (T, 2C)
    e = _layernorm(e, gu_ref[...], bu_ref[...])
    o_ref[...] = e.T.astype(o_ref.dtype)                               # lane-dense (2C, T)


def patch_expand_kernel(x_ref, we_ref, g_ref, b_ref, o_ref):
    """Standalone PatchExpand hot path (used only when depth == 0)."""
    x = x_ref[...]
    y = jnp.dot(x.astype(MM_DTYPE), we_ref[...],
                preferred_element_type=jnp.float32)
    y = _layernorm(y, g_ref[...], b_ref[...])
    o_ref[...] = y.T.astype(o_ref.dtype)


# ----------------------------------------------------------------------------
# pallas_call wrappers
# ----------------------------------------------------------------------------
def _block_args(xw, bias, p):
    return (xw, bias,
            p["g1"], p["be1"],
            p["wqkv"].astype(MM_DTYPE), p["bqkv"],
            p["wproj"].astype(MM_DTYPE), p["bproj"],
            p["g2"], p["be2"],
            p["w1"].astype(MM_DTYPE), p["b1"],
            p["w2"].astype(MM_DTYPE), p["b2"])


def swin_block_pallas(xw, bias, p, *, batch, num_windows, window_len, num_heads,
                      scale, expand=None):
    T, C = xw.shape
    args = _block_args(xw, bias, p)
    if expand is None:
        kern = functools.partial(
            swin_block_kernel, batch=batch, num_windows=num_windows,
            window_len=window_len, num_heads=num_heads, scale=scale)
        out_c = C
    else:
        args = args + (expand["we"].astype(MM_DTYPE), expand["gu"], expand["bu"])
        kern = functools.partial(
            swin_block_expand_kernel, batch=batch, num_windows=num_windows,
            window_len=window_len, num_heads=num_heads, scale=scale)
        out_c = expand["we"].shape[1]

    out_t = pl.pallas_call(
        kern,
        out_shape=jax.ShapeDtypeStruct((out_c, T), xw.dtype),
        grid=(1,),
        in_specs=[_full_block(a.shape) for a in args],
        out_specs=_full_block((out_c, T)),
        compiler_params=pltpu.CompilerParams(dimension_semantics=("parallel",)),
    )(*args)
    return out_t.T                                                     # (T, out_c)


def patch_expand_linear_norm_pallas(x, up):
    """Standalone expand+norm (only needed when depth == 0)."""
    B, L, C = x.shape
    C2 = up["we"].shape[1]
    T = B * L
    xf = x.reshape(T, C)
    args = (xf, up["we"].astype(MM_DTYPE), up["gu"], up["bu"])
    y_t = pl.pallas_call(
        patch_expand_kernel,
        out_shape=jax.ShapeDtypeStruct((C2, T), x.dtype),
        grid=(1,),
        in_specs=[_full_block(a.shape) for a in args],
        out_specs=_full_block((C2, T)),
        compiler_params=pltpu.CompilerParams(dimension_semantics=("parallel",)),
    )(*args)
    return y_t.T.reshape(B, L, C2)


# ----------------------------------------------------------------------------
# layout glue (roll / window partition) + layer forward
# ----------------------------------------------------------------------------
def window_partition_jax(x, ws):
    B, H, W, C = x.shape
    x = x.reshape(B, H // ws, ws, W // ws, ws, C).transpose(0, 1, 3, 2, 4, 5)
    return x.reshape(-1, ws, ws, C)


def window_reverse_jax(windows, ws, H, W):
    B = windows.shape[0] // ((H // ws) * (W // ws))
    x = windows.reshape(B, H // ws, W // ws, ws, ws, -1).transpose(0, 1, 3, 2, 4, 5)
    return x.reshape(B, H, W, -1)


def build_shift_mask(H, W, ws, shift):
    nW = (H // ws) * (W // ws)
    if shift == 0:
        return np.zeros((nW, ws * ws, ws * ws), np.float32)
    img_mask = np.zeros((1, H, W, 1), np.float32)
    h_slices = (slice(0, -ws), slice(-ws, -shift), slice(-shift, None))
    w_slices = (slice(0, -ws), slice(-ws, -shift), slice(-shift, None))
    cnt = 0
    for hs in h_slices:
        for wsl in w_slices:
            img_mask[:, hs, wsl, :] = cnt
            cnt += 1
    mw = img_mask.reshape(1, H // ws, ws, W // ws, ws, 1).transpose(0, 1, 3, 2, 4, 5)
    mw = mw.reshape(-1, ws * ws)
    am = mw[:, None, :] - mw[:, :, None]
    return np.where(am != 0, -100.0, 0.0).astype(np.float32)


def relative_position_index(ws):
    coords = np.stack(np.meshgrid(np.arange(ws), np.arange(ws), indexing="ij"))
    cf = coords.reshape(2, -1)
    rc = cf[:, :, None] - cf[:, None, :]
    rc = rc.transpose(1, 2, 0)
    rc[:, :, 0] += ws - 1
    rc[:, :, 1] += ws - 1
    rc[:, :, 0] *= 2 * ws - 1
    return rc.sum(-1)  # (N, N)


def pixel_shuffle_rearrange(x, B, H, W, L):
    """'b h w (p1 p2 c) -> b (h p1) (w p2) c' with p1=p2=2, flattened back to tokens."""
    C2 = x.shape[-1]
    c = C2 // 4
    y = x.reshape(B, H, W, 2, 2, c).transpose(0, 1, 3, 2, 4, 5)
    return y.reshape(B, 2 * H, 2 * W, c).reshape(B, 4 * L, c)


def init_params(key, dim, num_heads, ws, mlp_ratio, depth):
    hidden = int(dim * mlp_ratio)
    blocks = []
    for _ in range(depth):
        key, k0, k1, k2, k3, k4 = jax.random.split(key, 6)
        blocks.append(dict(
            g1=jnp.ones((1, dim), jnp.float32), be1=jnp.zeros((1, dim), jnp.float32),
            wqkv=(0.02 * jax.random.normal(k0, (dim, 3 * dim), jnp.float32)),
            bqkv=jnp.zeros((1, 3 * dim), jnp.float32),
            wproj=(0.02 * jax.random.normal(k1, (dim, dim), jnp.float32)),
            bproj=jnp.zeros((1, dim), jnp.float32),
            bias_table=(0.02 * jax.random.normal(
                k2, ((2 * ws - 1) * (2 * ws - 1), num_heads), jnp.float32)),
            g2=jnp.ones((1, dim), jnp.float32), be2=jnp.zeros((1, dim), jnp.float32),
            w1=(0.02 * jax.random.normal(k3, (dim, hidden), jnp.float32)),
            b1=jnp.zeros((1, hidden), jnp.float32),
            w2=(0.02 * jax.random.normal(k4, (hidden, dim), jnp.float32)),
            b2=jnp.zeros((1, dim), jnp.float32),
        ))
    key, ku = jax.random.split(key)
    up = dict(
        we=(0.02 * jax.random.normal(ku, (dim, 2 * dim), jnp.float32)),
        gu=jnp.ones((1, 2 * dim), jnp.float32),
        bu=jnp.zeros((1, 2 * dim), jnp.float32),
    )
    return blocks, up


def basic_layer_up_forward(x, blocks, up, *, H, W, ws, num_heads, depth):
    B, L, C = x.shape
    assert L == H * W and C % num_heads == 0 and ws <= min(H, W)
    head_dim = C // num_heads
    scale = head_dim ** (-0.5)
    N = ws * ws
    nW = (H // ws) * (W // ws)

    # constants hoisted out of the depth loop
    rel_idx = relative_position_index(ws).reshape(-1)
    masks = {0: jnp.asarray(build_shift_mask(H, W, ws, 0))}
    if ws // 2 > 0:
        masks[ws // 2] = jnp.asarray(build_shift_mask(H, W, ws, ws // 2))

    for i in range(depth):
        shift = 0 if i % 2 == 0 else ws // 2
        p = blocks[i]
        rbias = p["bias_table"][rel_idx].reshape(N, N, num_heads).transpose(2, 0, 1)
        bias = rbias[:, None] + masks[shift][None]          # (heads, nW, N, N)

        # roll + window partition are pure token permutations; LN/MLP/residuals
        # (and PatchExpand's linear+norm) are token-wise, so the whole block is
        # computed in the windowed layout and the permutation is undone after.
        xv = x.reshape(B, H, W, -1)
        if shift > 0:
            xv = jnp.roll(xv, shift=(-shift, -shift), axis=(1, 2))
        xw = window_partition_jax(xv, ws).reshape(B * nW * N, -1)

        fuse_expand = (up is not None) and (i == depth - 1)
        yw = swin_block_pallas(xw, bias, p, batch=B, num_windows=nW,
                               window_len=N, num_heads=num_heads, scale=scale,
                               expand=(up if fuse_expand else None))

        out_c = yw.shape[-1]
        yv = window_reverse_jax(yw.reshape(B * nW, ws, ws, out_c), ws, H, W)
        if shift > 0:
            yv = jnp.roll(yv, shift=(shift, shift), axis=(1, 2))
        x = yv.reshape(B, L, out_c)

    if up is not None:
        if depth == 0:
            x = patch_expand_linear_norm_pallas(x, up)
        # pixel-shuffle rearrange (after LN, exactly as in the reference module)
        x = pixel_shuffle_rearrange(x.reshape(B, H, W, -1), B, H, W, L)
    return x


# ----------------------------------------------------------------------------
if __name__ == "__main__":
    # Small config consistent with the module: dim=32, resolution 8x8, depth=2,
    # num_heads=4, window_size=4, mlp_ratio=4.0, with PatchExpand upsample.
    B, H, W = 2, 8, 8
    dim, depth, num_heads, ws = 32, 2, 4, 4

    key = jax.random.PRNGKey(0)
    key, kx = jax.random.split(key)
    x = jax.random.normal(kx, (B, H * W, dim), jnp.float32)

    blocks, up = init_params(key, dim, num_heads, ws, mlp_ratio=4.0, depth=depth)

    fwd = jax.jit(functools.partial(basic_layer_up_forward, H=H, W=W, ws=ws,
                                    num_heads=num_heads, depth=depth))
    out = jax.block_until_ready(fwd(x, blocks, up))

    assert out.shape == (B, 4 * H * W, dim // 2), out.shape
    assert bool(jnp.all(jnp.isfinite(out)))
    print("KERNEL_OK")
</pallas_src>

<mosaic_0001>
module attributes {stable_mosaic.version = 11 : i64} {
  func.func @swin_block_kernel(%arg0: i32, %arg1: memref<128x32xf32, #tpu.memory_space<vmem>>, %arg2: memref<4x4x16x16xf32, #tpu.memory_space<vmem>>, %arg3: memref<1x32xf32, #tpu.memory_space<vmem>>, %arg4: memref<1x32xf32, #tpu.memory_space<vmem>>, %arg5: memref<32x96xbf16, #tpu.memory_space<vmem>>, %arg6: memref<1x96xf32, #tpu.memory_space<vmem>>, %arg7: memref<32x32xbf16, #tpu.memory_space<vmem>>, %arg8: memref<1x32xf32, #tpu.memory_space<vmem>>, %arg9: memref<1x32xf32, #tpu.memory_space<vmem>>, %arg10: memref<1x32xf32, #tpu.memory_space<vmem>>, %arg11: memref<32x128xbf16, #tpu.memory_space<vmem>>, %arg12: memref<1x128xf32, #tpu.memory_space<vmem>>, %arg13: memref<128x32xbf16, #tpu.memory_space<vmem>>, %arg14: memref<1x32xf32, #tpu.memory_space<vmem>>, %arg15: memref<32x128xf32, #tpu.memory_space<vmem>>) attributes {dimension_semantics = [#tpu.dimension_semantics<parallel>], iteration_bounds = array<i64: 1>, scalar_prefetch = 0 : i64, scratch_operands = 0 : i64, tpu.core_type = #tpu.core_type<tc>, window_params = [{pipeline_mode = #tpu.pipeline_mode<synchronous>, transform_indices = @transform_0, window_bounds = array<i64: 128, 32>}, {pipeline_mode = #tpu.pipeline_mode<synchronous>, transform_indices = @transform_1, window_bounds = array<i64: 4, 4, 16, 16>}, {pipeline_mode = #tpu.pipeline_mode<synchronous>, transform_indices = @transform_2, window_bounds = array<i64: 1, 32>}, {pipeline_mode = #tpu.pipeline_mode<synchronous>, transform_indices = @transform_3, window_bounds = array<i64: 1, 32>}, {pipeline_mode = #tpu.pipeline_mode<synchronous>, transform_indices = @transform_4, window_bounds = array<i64: 32, 96>}, {pipeline_mode = #tpu.pipeline_mode<synchronous>, transform_indices = @transform_5, window_bounds = array<i64: 1, 96>}, {pipeline_mode = #tpu.pipeline_mode<synchronous>, transform_indices = @transform_6, window_bounds = array<i64: 32, 32>}, {pipeline_mode = #tpu.pipeline_mode<synchronous>, transform_indices = @transform_7, window_bounds = array<i64: 1, 32>}, {pipeline_mode = #tpu.pipeline_mode<synchronous>, transform_indices = @transform_8, window_bounds = array<i64: 1, 32>}, {pipeline_mode = #tpu.pipeline_mode<synchronous>, transform_indices = @transform_9, window_bounds = array<i64: 1, 32>}, {pipeline_mode = #tpu.pipeline_mode<synchronous>, transform_indices = @transform_10, window_bounds = array<i64: 32, 128>}, {pipeline_mode = #tpu.pipeline_mode<synchronous>, transform_indices = @transform_11, window_bounds = array<i64: 1, 128>}, {pipeline_mode = #tpu.pipeline_mode<synchronous>, transform_indices = @transform_12, window_bounds = array<i64: 128, 32>}, {pipeline_mode = #tpu.pipeline_mode<synchronous>, transform_indices = @transform_13, window_bounds = array<i64: 1, 32>}, {pipeline_mode = #tpu.pipeline_mode<synchronous>, transform_indices = @transform_14, window_bounds = array<i64: 32, 128>}]} {
    %c0 = arith.constant 0 : index
    %c0_0 = arith.constant 0 : index
    %0 = vector.load %arg1[%c0, %c0_0] : memref<128x32xf32, #tpu.memory_space<vmem>>, vector<128x32xf32>
    %c0_1 = arith.constant 0 : index
    %c0_2 = arith.constant 0 : index
    %1 = vector.load %arg3[%c0_1, %c0_2] : memref<1x32xf32, #tpu.memory_space<vmem>>, vector<1x32xf32>
    %c0_3 = arith.constant 0 : index
    %c0_4 = arith.constant 0 : index
    %2 = vector.load %arg4[%c0_3, %c0_4] : memref<1x32xf32, #tpu.memory_space<vmem>>, vector<1x32xf32>
    %cst = arith.constant dense<0.000000e+00> : vector<128xf32>
    %3 = vector.multi_reduction <add>, %0, %cst [1] : vector<128x32xf32> to vector<128xf32>
    %4 = vector.shape_cast %3 : vector<128xf32> to vector<128x1xf32>
    %cst_5 = arith.constant 3.200000e+01 : f32
    %5 = vector.broadcast %cst_5 : f32 to vector<128x1xf32>
    %6 = arith.divf %4, %5 : vector<128x1xf32>
    %7 = vector.broadcast %6 : vector<128x1xf32> to vector<128x32xf32>
    %8 = arith.subf %0, %7 : vector<128x32xf32>
    %9 = arith.mulf %8, %8 : vector<128x32xf32>
    %cst_6 = arith.constant dense<0.000000e+00> : vector<128xf32>
    %10 = vector.multi_reduction <add>, %9, %cst_6 [1] : vector<128x32xf32> to vector<128xf32>
    %11 = vector.shape_cast %10 : vector<128xf32> to vector<128x1xf32>
    %cst_7 = arith.constant 3.200000e+01 : f32
    %12 = vector.broadcast %cst_7 : f32 to vector<128x1xf32>
    %13 = arith.divf %11, %12 : vector<128x1xf32>
    %14 = vector.broadcast %6 : vector<128x1xf32> to vector<128x32xf32>
    %15 = arith.subf %0, %14 : vector<128x32xf32>
    %cst_8 = arith.constant 9.99999974E-6 : f32
    %16 = vector.broadcast %cst_8 : f32 to vector<128x1xf32>
    %17 = arith.addf %13, %16 : vector<128x1xf32>
    %18 = math.rsqrt %17 : vector<128x1xf32>
    %19 = vector.broadcast %18 : vector<128x1xf32> to vector<128x32xf32>
    %20 = arith.mulf %15, %19 : vector<128x32xf32>
    %21 = vector.broadcast %1 : vector<1x32xf32> to vector<128x32xf32>
    %22 = arith.mulf %20, %21 : vector<128x32xf32>
    %23 = vector.broadcast %2 : vector<1x32xf32> to vector<128x32xf32>
    %24 = arith.addf %22, %23 : vector<128x32xf32>
    %25 = arith.truncf %24 : vector<128x32xf32> to vector<128x32xbf16>
    %c0_9 = arith.constant 0 : index
    %c0_10 = arith.constant 0 : index
    %26 = vector.load %arg5[%c0_9, %c0_10] : memref<32x96xbf16, #tpu.memory_space<vmem>>, vector<32x96xbf16>
    %cst_11 = arith.constant dense<0.000000e+00> : vector<128x96xf32>
    %27 = tpu.matmul %25, %26, %cst_11 {dimension_numbers = #tpu.dot_dimension_numbers<[1], [0], [0], [1], [0, 0, 1, 1], [], []>} : vector<128x32xbf16>, vector<32x96xbf16>, vector<128x96xf32> -> vector<128x96xf32>
    %c0_12 = arith.constant 0 : index
    %c0_13 = arith.constant 0 : index
    %28 = vector.load %arg6[%c0_12, %c0_13] : memref<1x96xf32, #tpu.memory_space<vmem>>, vector<1x96xf32>
    %29 = vector.broadcast %28 : vector<1x96xf32> to vector<128x96xf32>
    %30 = arith.addf %27, %29 : vector<128x96xf32>
    %31 = vector.extract_strided_slice %30 {offsets = [0, 0], sizes = [128, 8], strides = [1, 1]} : vector<128x96xf32> to vector<128x8xf32>
    %32 = vector.shape_cast %31 : vector<128x8xf32> to vector<8x16x8xf32>
    %33 = vector.extract_strided_slice %30 {offsets = [0, 8], sizes = [128, 8], strides = [1, 1]} : vector<128x96xf32> to vector<128x8xf32>
    %34 = vector.shape_cast %33 : vector<128x8xf32> to vector<8x16x8xf32>
    %35 = vector.extract_strided_slice %30 {offsets = [0, 16], sizes = [128, 8], strides = [1, 1]} : vector<128x96xf32> to vector<128x8xf32>
    %36 = vector.shape_cast %35 : vector<128x8xf32> to vector<8x16x8xf32>
    %37 = vector.extract_strided_slice %30 {offsets = [0, 24], sizes = [128, 8], strides = [1, 1]} : vector<128x96xf32> to vector<128x8xf32>
    %38 = vector.shape_cast %37 : vector<128x8xf32> to vector<8x16x8xf32>
    %39 = tpu.concatenate %32, %34, %36, %38 in 0 : vector<8x16x8xf32>, vector<8x16x8xf32>, vector<8x16x8xf32>, vector<8x16x8xf32> -> vector<32x16x8xf32>
    %40 = arith.truncf %39 : vector<32x16x8xf32> to vector<32x16x8xbf16>
    %41 = vector.extract_strided_slice %30 {offsets = [0, 32], sizes = [128, 8], strides = [1, 1]} : vector<128x96xf32> to vector<128x8xf32>
    %42 = vector.shape_cast %41 : vector<128x8xf32> to vector<8x16x8xf32>
    %43 = vector.extract_strided_slice %30 {offsets = [0, 40], sizes = [128, 8], strides = [1, 1]} : vector<128x96xf32> to vector<128x8xf32>
    %44 = vector.shape_cast %43 : vector<128x8xf32> to vector<8x16x8xf32>
    %45 = vector.extract_strided_slice %30 {offsets = [0, 48], sizes = [128, 8], strides = [1, 1]} : vector<128x96xf32> to vector<128x8xf32>
    %46 = vector.shape_cast %45 : vector<128x8xf32> to vector<8x16x8xf32>
    %47 = vector.extract_strided_slice %30 {offsets = [0, 56], sizes = [128, 8], strides = [1, 1]} : vector<128x96xf32> to vector<128x8xf32>
    %48 = vector.shape_cast %47 : vector<128x8xf32> to vector<8x16x8xf32>
    %49 = tpu.concatenate %42, %44, %46, %48 in 0 : vector<8x16x8xf32>, vector<8x16x8xf32>, vector<8x16x8xf32>, vector<8x16x8xf32> -> vector<32x16x8xf32>
    %50 = arith.truncf %49 : vector<32x16x8xf32> to vector<32x16x8xbf16>
    %51 = vector.extract_strided_slice %30 {offsets = [0, 64], sizes = [128, 8], strides = [1, 1]} : vector<128x96xf32> to vector<128x8xf32>
    %52 = vector.shape_cast %51 : vector<128x8xf32> to vector<8x16x8xf32>
    %53 = vector.extract_strided_slice %30 {offsets = [0, 72], sizes = [128, 8], strides = [1, 1]} : vector<128x96xf32> to vector<128x8xf32>
    %54 = vector.shape_cast %53 : vector<128x8xf32> to vector<8x16x8xf32>
    %55 = vector.extract_strided_slice %30 {offsets = [0, 80], sizes = [128, 8], strides = [1, 1]} : vector<128x96xf32> to vector<128x8xf32>
    %56 = vector.shape_cast %55 : vector<128x8xf32> to vector<8x16x8xf32>
    %57 = vector.extract_strided_slice %30 {offsets = [0, 88], sizes = [128, 8], strides = [1, 1]} : vector<128x96xf32> to vector<128x8xf32>
    %58 = vector.shape_cast %57 : vector<128x8xf32> to vector<8x16x8xf32>
    %59 = tpu.concatenate %52, %54, %56, %58 in 0 : vector<8x16x8xf32>, vector<8x16x8xf32>, vector<8x16x8xf32>, vector<8x16x8xf32> -> vector<32x16x8xf32>
    %60 = arith.truncf %59 : vector<32x16x8xf32> to vector<32x16x8xbf16>
    "tpu.trace_start"() <{level = 10 : i32, message = "bqd,bkd->bqk"}> : () -> ()
    %cst_14 = arith.constant dense<0.000000e+00> : vector<32x16x16xf32>
    %61 = tpu.matmul %40, %50, %cst_14 {dimension_numbers = #tpu.dot_dimension_numbers<[2], [2], [1], [1], [0, 0, 0, 1, 1, 1], [0], [0]>} : vector<32x16x8xbf16>, vector<32x16x8xbf16>, vector<32x16x16xf32> -> vector<32x16x16xf32>
    "tpu.trace_stop"() : () -> ()
    %cst_15 = arith.constant 0.353553385 : f32
    %62 = vector.broadcast %cst_15 : f32 to vector<32x16x16xf32>
    %63 = arith.mulf %61, %62 : vector<32x16x16xf32>
    %64 = vector.shape_cast %63 : vector<32x16x16xf32> to vector<4x2x4x16x16xf32>
    %c0_16 = arith.constant 0 : index
    %c0_17 = arith.constant 0 : index
    %c0_18 = arith.constant 0 : index
    %c0_19 = arith.constant 0 : index
    %65 = vector.load %arg2[%c0_16, %c0_17, %c0_18, %c0_19] : memref<4x4x16x16xf32, #tpu.memory_space<vmem>>, vector<4x4x16x16xf32>
    %66 = vector.shape_cast %65 : vector<4x4x16x16xf32> to vector<4x1x4x16x16xf32>
    %67 = vector.broadcast %66 : vector<4x1x4x16x16xf32> to vector<4x2x4x16x16xf32>
    %68 = arith.addf %64, %67 : vector<4x2x4x16x16xf32>
    %69 = vector.shape_cast %68 : vector<4x2x4x16x16xf32> to vector<32x16x16xf32>
    %cst_20 = arith.constant dense<0xFF800000> : vector<32x16xf32>
    %70 = vector.multi_reduction <maximumf>, %69, %cst_20 [2] : vector<32x16x16xf32> to vector<32x16xf32>
    %71 = vector.shape_cast %70 : vector<32x16xf32> to vector<32x16x1xf32>
    %72 = vector.broadcast %71 : vector<32x16x1xf32> to vector<32x16x16xf32>
    %73 = arith.subf %69, %72 : vector<32x16x16xf32>
    %74 = math.exp %73 : vector<32x16x16xf32>
    %cst_21 = arith.constant dense<0.000000e+00> : vector<32x16xf32>
    %75 = vector.multi_reduction <add>, %74, %cst_21 [2] : vector<32x16x16xf32> to vector<32x16xf32>
    %76 = vector.shape_cast %75 : vector<32x16xf32> to vector<32x16x1xf32>
    %77 = tpu.reciprocal %76 {approx = true} : vector<32x16x1xf32> -> vector<32x16x1xf32>
    %78 = vector.broadcast %77 : vector<32x16x1xf32> to vector<32x16x16xf32>
    %79 = arith.mulf %74, %78 : vector<32x16x16xf32>
    %80 = arith.truncf %79 : vector<32x16x16xf32> to vector<32x16x16xbf16>
    "tpu.trace_start"() <{level = 10 : i32, message = "bqk,bkd->bqd"}> : () -> ()
    %cst_22 = arith.constant dense<0.000000e+00> : vector<32x16x8xf32>
    %81 = tpu.matmul %80, %60, %cst_22 {dimension_numbers = #tpu.dot_dimension_numbers<[2], [1], [1], [2], [0, 0, 0, 1, 1, 2], [0], [0]>} : vector<32x16x16xbf16>, vector<32x16x8xbf16>, vector<32x16x8xf32> -> vector<32x16x8xf32>
    "tpu.trace_stop"() : () -> ()
    %82 = vector.shape_cast %81 : vector<32x16x8xf32> to vector<4x128x8xf32>
    %83 = arith.truncf %82 : vector<4x128x8xf32> to vector<4x128x8xbf16>
    %c0_23 = arith.constant 0 : index
    %c0_24 = arith.constant 0 : index
    %84 = vector.load %arg7[%c0_23, %c0_24] : memref<32x32xbf16, #tpu.memory_space<vmem>>, vector<32x32xbf16>
    %85 = vector.shape_cast %84 : vector<32x32xbf16> to vector<4x8x32xbf16>
    "tpu.trace_start"() <{level = 10 : i32, message = "htd,hdc->htc"}> : () -> ()
    %cst_25 = arith.constant dense<0.000000e+00> : vector<4x128x32xf32>
    %86 = tpu.matmul %83, %85, %cst_25 {dimension_numbers = #tpu.dot_dimension_numbers<[2], [1], [1], [2], [0, 0, 0, 1, 1, 2], [0], [0]>} : vector<4x128x8xbf16>, vector<4x8x32xbf16>, vector<4x128x32xf32> -> vector<4x128x32xf32>
    "tpu.trace_stop"() : () -> ()
    %cst_26 = arith.constant dense<0.000000e+00> : vector<128x32xf32>
    %87 = vector.multi_reduction <add>, %86, %cst_26 [0] : vector<4x128x32xf32> to vector<128x32xf32>
    %c0_27 = arith.constant 0 : index
    %c0_28 = arith.constant 0 : index
    %88 = vector.load %arg8[%c0_27, %c0_28] : memref<1x32xf32, #tpu.memory_space<vmem>>, vector<1x32xf32>
    %89 = vector.broadcast %88 : vector<1x32xf32> to vector<128x32xf32>
    %90 = arith.addf %87, %89 : vector<128x32xf32>
    %91 = arith.addf %0, %90 : vector<128x32xf32>
    %c0_29 = arith.constant 0 : index
    %c0_30 = arith.constant 0 : index
    %92 = vector.load %arg9[%c0_29, %c0_30] : memref<1x32xf32, #tpu.memory_space<vmem>>, vector<1x32xf32>
    %c0_31 = arith.constant 0 : index
    %c0_32 = arith.constant 0 : index
    %93 = vector.load %arg10[%c0_31, %c0_32] : memref<1x32xf32, #tpu.memory_space<vmem>>, vector<1x32xf32>
    %cst_33 = arith.constant dense<0.000000e+00> : vector<128xf32>
    %94 = vector.multi_reduction <add>, %91, %cst_33 [1] : vector<128x32xf32> to vector<128xf32>
    %95 = vector.shape_cast %94 : vector<128xf32> to vector<128x1xf32>
    %cst_34 = arith.constant 3.200000e+01 : f32
    %96 = vector.broadcast %cst_34 : f32 to vector<128x1xf32>
    %97 = arith.divf %95, %96 : vector<128x1xf32>
    %98 = vector.broadcast %97 : vector<128x1xf32> to vector<128x32xf32>
    %99 = arith.subf %91, %98 : vector<128x32xf32>
    %100 = arith.mulf %99, %99 : vector<128x32xf32>
    %cst_35 = arith.constant dense<0.000000e+00> : vector<128xf32>
    %101 = vector.multi_reduction <add>, %100, %cst_35 [1] : vector<128x32xf32> to vector<128xf32>
    %102 = vector.shape_cast %101 : vector<128xf32> to vector<128x1xf32>
    %cst_36 = arith.constant 3.200000e+01 : f32
    %103 = vector.broadcast %cst_36 : f32 to vector<128x1xf32>
    %104 = arith.divf %102, %103 : vector<128x1xf32>
    %105 = vector.broadcast %97 : vector<128x1xf32> to vector<128x32xf32>
    %106 = arith.subf %91, %105 : vector<128x32xf32>
    %cst_37 = arith.constant 9.99999974E-6 : f32
    %107 = vector.broadcast %cst_37 : f32 to vector<128x1xf32>
    %108 = arith.addf %104, %107 : vector<128x1xf32>
    %109 = math.rsqrt %108 : vector<128x1xf32>
    %110 = vector.broadcast %109 : vector<128x1xf32> to vector<128x32xf32>
    %111 = arith.mulf %106, %110 : vector<128x32xf32>
    %112 = vector.broadcast %92 : vector<1x32xf32> to vector<128x32xf32>
    %113 = arith.mulf %111, %112 : vector<128x32xf32>
    %114 = vector.broadcast %93 : vector<1x32xf32> to vector<128x32xf32>
    %115 = arith.addf %113, %114 : vector<128x32xf32>
    %116 = arith.truncf %115 : vector<128x32xf32> to vector<128x32xbf16>
    %c0_38 = arith.constant 0 : index
    %c0_39 = arith.constant 0 : index
    %117 = vector.load %arg11[%c0_38, %c0_39] : memref<32x128xbf16, #tpu.memory_space<vmem>>, vector<32x128xbf16>
    %cst_40 = arith.constant dense<0.000000e+00> : vector<128x128xf32>
    %118 = tpu.matmul %116, %117, %cst_40 {dimension_numbers = #tpu.dot_dimension_numbers<[1], [0], [0], [1], [0, 0, 1, 1], [], []>} : vector<128x32xbf16>, vector<32x128xbf16>, vector<128x128xf32> -> vector<128x128xf32>
    %c0_41 = arith.constant 0 : index
    %c0_42 = arith.constant 0 : index
    %119 = vector.load %arg12[%c0_41, %c0_42] : memref<1x128xf32, #tpu.memory_space<vmem>>, vector<1x128xf32>
    %120 = vector.broadcast %119 : vector<1x128xf32> to vector<128x128xf32>
    %121 = arith.addf %118, %120 : vector<128x128xf32>
    %cst_43 = arith.constant 5.000000e-01 : f32
    %122 = vector.broadcast %cst_43 : f32 to vector<128x128xf32>
    %123 = arith.mulf %122, %121 : vector<128x128xf32>
    %cst_44 = arith.constant 0.707106769 : f32
    %124 = vector.broadcast %cst_44 : f32 to vector<128x128xf32>
    %125 = arith.mulf %121, %124 : vector<128x128xf32>
    %126 = math.erf %125 : vector<128x128xf32>
    %cst_45 = arith.constant 1.000000e+00 : f32
    %127 = vector.broadcast %cst_45 : f32 to vector<128x128xf32>
    %128 = arith.addf %127, %126 : vector<128x128xf32>
    %129 = arith.mulf %123, %128 : vector<128x128xf32>
    %130 = arith.truncf %129 : vector<128x128xf32> to vector<128x128xbf16>
    %c0_46 = arith.constant 0 : index
    %c0_47 = arith.constant 0 : index
    %131 = vector.load %arg13[%c0_46, %c0_47] : memref<128x32xbf16, #tpu.memory_space<vmem>>, vector<128x32xbf16>
    %cst_48 = arith.constant dense<0.000000e+00> : vector<128x32xf32>
    %132 = tpu.matmul %130, %131, %cst_48 {dimension_numbers = #tpu.dot_dimension_numbers<[1], [0], [0], [1], [0, 0, 1, 1], [], []>} : vector<128x128xbf16>, vector<128x32xbf16>, vector<128x32xf32> -> vector<128x32xf32>
    %c0_49 = arith.constant 0 : index
    %c0_50 = arith.constant 0 : index
    %133 = vector.load %arg14[%c0_49, %c0_50] : memref<1x32xf32, #tpu.memory_space<vmem>>, vector<1x32xf32>
    %134 = vector.broadcast %133 : vector<1x32xf32> to vector<128x32xf32>
    %135 = arith.addf %132, %134 : vector<128x32xf32>
    %136 = arith.addf %91, %135 : vector<128x32xf32>
    %137 = tpu.transpose %136, [1, 0] : vector<128x32xf32> -> vector<32x128xf32>
    %c0_51 = arith.constant 0 : index
    %c0_52 = arith.constant 0 : index
    %138 = vector.load %arg15[%c0_51, %c0_52] : memref<32x128xf32, #tpu.memory_space<vmem>>, vector<32x128xf32>
    tpu.vector_store %arg15[%c0_51, %c0_52], %137 {strides = array<i32>} : memref<32x128xf32, #tpu.memory_space<vmem>>, vector<32x128xf32>,
    return
  }
  func.func @transform_0(%arg0: i32) -> (i32, i32) {
    %c0_i32 = arith.constant 0 : i32
    %c0_i32_0 = arith.constant 0 : i32
    %c0_i32_1 = arith.constant 0 : i32
    return %c0_i32, %c0_i32_0 : i32, i32
  }
  func.func @transform_1(%arg0: i32) -> (i32, i32, i32, i32) {
    %c0_i32 = arith.constant 0 : i32
    %c0_i32_0 = arith.constant 0 : i32
    %c0_i32_1 = arith.constant 0 : i32
    %c0_i32_2 = arith.constant 0 : i32
    %c0_i32_3 = arith.constant 0 : i32
    return %c0_i32, %c0_i32_0, %c0_i32_1, %c0_i32_2 : i32, i32, i32, i32
  }
  func.func @transform_2(%arg0: i32) -> (i32, i32) {
    %c0_i32 = arith.constant 0 : i32
    %c0_i32_0 = arith.constant 0 : i32
    %c0_i32_1 = arith.constant 0 : i32
    return %c0_i32, %c0_i32_0 : i32, i32
  }
  func.func @transform_3(%arg0: i32) -> (i32, i32) {
    %c0_i32 = arith.constant 0 : i32
    %c0_i32_0 = arith.constant 0 : i32
    %c0_i32_1 = arith.constant 0 : i32
    return %c0_i32, %c0_i32_0 : i32, i32
  }
  func.func @transform_4(%arg0: i32) -> (i32, i32) {
    %c0_i32 = arith.constant 0 : i32
    %c0_i32_0 = arith.constant 0 : i32
    %c0_i32_1 = arith.constant 0 : i32
    return %c0_i32, %c0_i32_0 : i32, i32
  }
  func.func @transform_5(%arg0: i32) -> (i32, i32) {
    %c0_i32 = arith.constant 0 : i32
    %c0_i32_0 = arith.constant 0 : i32
    %c0_i32_1 = arith.constant 0 : i32
    return %c0_i32, %c0_i32_0 : i32, i32
  }
  func.func @transform_6(%arg0: i32) -> (i32, i32) {
    %c0_i32 = arith.constant 0 : i32
    %c0_i32_0 = arith.constant 0 : i32
    %c0_i32_1 = arith.constant 0 : i32
    return %c0_i32, %c0_i32_0 : i32, i32
  }
  func.func @transform_7(%arg0: i32) -> (i32, i32) {
    %c0_i32 = arith.constant 0 : i32
    %c0_i32_0 = arith.constant 0 : i32
    %c0_i32_1 = arith.constant 0 : i32
    return %c0_i32, %c0_i32_0 : i32, i32
  }
  func.func @transform_8(%arg0: i32) -> (i32, i32) {
    %c0_i32 = arith.constant 0 : i32
    %c0_i32_0 = arith.constant 0 : i32
    %c0_i32_1 = arith.constant 0 : i32
    return %c0_i32, %c0_i32_0 : i32, i32
  }
  func.func @transform_9(%arg0: i32) -> (i32, i32) {
    %c0_i32 = arith.constant 0 : i32
    %c0_i32_0 = arith.constant 0 : i32
    %c0_i32_1 = arith.constant 0 : i32
    return %c0_i32, %c0_i32_0 : i32, i32
  }
  func.func @transform_10(%arg0: i32) -> (i32, i32) {
    %c0_i32 = arith.constant 0 : i32
    %c0_i32_0 = arith.constant 0 : i32
    %c0_i32_1 = arith.constant 0 : i32
    return %c0_i32, %c0_i32_0 : i32, i32
  }
  func.func @transform_11(%arg0: i32) -> (i32, i32) {
    %c0_i32 = arith.constant 0 : i32
    %c0_i32_0 = arith.constant 0 : i32
    %c0_i32_1 = arith.constant 0 : i32
    return %c0_i32, %c0_i32_0 : i32, i32
  }
  func.func @transform_12(%arg0: i32) -> (i32, i32) {
    %c0_i32 = arith.constant 0 : i32
    %c0_i32_0 = arith.constant 0 : i32
    %c0_i32_1 = arith.constant 0 : i32
    return %c0_i32, %c0_i32_0 : i32, i32
  }
  func.func @transform_13(%arg0: i32) -> (i32, i32) {
    %c0_i32 = arith.constant 0 : i32
    %c0_i32_0 = arith.constant 0 : i32
    %c0_i32_1 = arith.constant 0 : i32
    return %c0_i32, %c0_i32_0 : i32, i32
  }
  func.func @transform_14(%arg0: i32) -> (i32, i32) {
    %c0_i32 = arith.constant 0 : i32
    %c0_i32_0 = arith.constant 0 : i32
    %c0_i32_1 = arith.constant 0 : i32
    return %c0_i32, %c0_i32_0 : i32, i32
  }
}

module attributes {stable_mosaic.version = 11 : i64} {
  func.func @swin_block_expand_kernel(%arg0: i32, %arg1: memref<128x32xf32, #tpu.memory_space<vmem>>, %arg2: memref<4x4x16x16xf32, #tpu.memory_space<vmem>>, %arg3: memref<1x32xf32, #tpu.memory_space<vmem>>, %arg4: memref<1x32xf32, #tpu.memory_space<vmem>>, %arg5: memref<32x96xbf16, #tpu.memory_space<vmem>>, %arg6: memref<1x96xf32, #tpu.memory_space<vmem>>, %arg7: memref<32x32xbf16, #tpu.memory_space<vmem>>, %arg8: memref<1x32xf32, #tpu.memory_space<vmem>>, %arg9: memref<1x32xf32, #tpu.memory_space<vmem>>, %arg10: memref<1x32xf32, #tpu.memory_space<vmem>>, %arg11: memref<32x128xbf16, #tpu.memory_space<vmem>>, %arg12: memref<1x128xf32, #tpu.memory_space<vmem>>, %arg13: memref<128x32xbf16, #tpu.memory_space<vmem>>, %arg14: memref<1x32xf32, #tpu.memory_space<vmem>>, %arg15: memref<32x64xbf16, #tpu.memory_space<vmem>>, %arg16: memref<1x64xf32, #tpu.memory_space<vmem>>, %arg17: memref<1x64xf32, #tpu.memory_space<vmem>>, %arg18: memref<64x128xf32, #tpu.memory_space<vmem>>) attributes {dimension_semantics = [#tpu.dimension_semantics<parallel>], iteration_bounds = array<i64: 1>, scalar_prefetch = 0 : i64, scratch_operands = 0 : i64, tpu.core_type = #tpu.core_type<tc>, window_params = [{pipeline_mode = #tpu.pipeline_mode<synchronous>, transform_indices = @transform_0, window_bounds = array<i64: 128, 32>}, {pipeline_mode = #tpu.pipeline_mode<synchronous>, transform_indices = @transform_1, window_bounds = array<i64: 4, 4, 16, 16>}, {pipeline_mode = #tpu.pipeline_mode<synchronous>, transform_indices = @transform_2, window_bounds = array<i64: 1, 32>}, {pipeline_mode = #tpu.pipeline_mode<synchronous>, transform_indices = @transform_3, window_bounds = array<i64: 1, 32>}, {pipeline_mode = #tpu.pipeline_mode<synchronous>, transform_indices = @transform_4, window_bounds = array<i64: 32, 96>}, {pipeline_mode = #tpu.pipeline_mode<synchronous>, transform_indices = @transform_5, window_bounds = array<i64: 1, 96>}, {pipeline_mode = #tpu.pipeline_mode<synchronous>, transform_indices = @transform_6, window_bounds = array<i64: 32, 32>}, {pipeline_mode = #tpu.pipeline_mode<synchronous>, transform_indices = @transform_7, window_bounds = array<i64: 1, 32>}, {pipeline_mode = #tpu.pipeline_mode<synchronous>, transform_indices = @transform_8, window_bounds = array<i64: 1, 32>}, {pipeline_mode = #tpu.pipeline_mode<synchronous>, transform_indices = @transform_9, window_bounds = array<i64: 1, 32>}, {pipeline_mode = #tpu.pipeline_mode<synchronous>, transform_indices = @transform_10, window_bounds = array<i64: 32, 128>}, {pipeline_mode = #tpu.pipeline_mode<synchronous>, transform_indices = @transform_11, window_bounds = array<i64: 1, 128>}, {pipeline_mode = #tpu.pipeline_mode<synchronous>, transform_indices = @transform_12, window_bounds = array<i64: 128, 32>}, {pipeline_mode = #tpu.pipeline_mode<synchronous>, transform_indices = @transform_13, window_bounds = array<i64: 1, 32>}, {pipeline_mode = #tpu.pipeline_mode<synchronous>, transform_indices = @transform_14, window_bounds = array<i64: 32, 64>}, {pipeline_mode = #tpu.pipeline_mode<synchronous>, transform_indices = @transform_15, window_bounds = array<i64: 1, 64>}, {pipeline_mode = #tpu.pipeline_mode<synchronous>, transform_indices = @transform_16, window_bounds = array<i64: 1, 64>}, {pipeline_mode = #tpu.pipeline_mode<synchronous>, transform_indices = @transform_17, window_bounds = array<i64: 64, 128>}]} {
    %c0 = arith.constant 0 : index
    %c0_0 = arith.constant 0 : index
    %0 = vector.load %arg1[%c0, %c0_0] : memref<128x32xf32, #tpu.memory_space<vmem>>, vector<128x32xf32>
    %c0_1 = arith.constant 0 : index
    %c0_2 = arith.constant 0 : index
    %1 = vector.load %arg3[%c0_1, %c0_2] : memref<1x32xf32, #tpu.memory_space<vmem>>, vector<1x32xf32>
    %c0_3 = arith.constant 0 : index
    %c0_4 = arith.constant 0 : index
    %2 = vector.load %arg4[%c0_3, %c0_4] : memref<1x32xf32, #tpu.memory_space<vmem>>, vector<1x32xf32>
    %cst = arith.constant dense<0.000000e+00> : vector<128xf32>
    %3 = vector.multi_reduction <add>, %0, %cst [1] : vector<128x32xf32> to vector<128xf32>
    %4 = vector.shape_cast %3 : vector<128xf32> to vector<128x1xf32>
    %cst_5 = arith.constant 3.200000e+01 : f32
    %5 = vector.broadcast %cst_5 : f32 to vector<128x1xf32>
    %6 = arith.divf %4, %5 : vector<128x1xf32>
    %7 = vector.broadcast %6 : vector<128x1xf32> to vector<128x32xf32>
    %8 = arith.subf %0, %7 : vector<128x32xf32>
    %9 = arith.mulf %8, %8 : vector<128x32xf32>
    %cst_6 = arith.constant dense<0.000000e+00> : vector<128xf32>
    %10 = vector.multi_reduction <add>, %9, %cst_6 [1] : vector<128x32xf32> to vector<128xf32>
    %11 = vector.shape_cast %10 : vector<128xf32> to vector<128x1xf32>
    %cst_7 = arith.constant 3.200000e+01 : f32
    %12 = vector.broadcast %cst_7 : f32 to vector<128x1xf32>
    %13 = arith.divf %11, %12 : vector<128x1xf32>
    %14 = vector.broadcast %6 : vector<128x1xf32> to vector<128x32xf32>
    %15 = arith.subf %0, %14 : vector<128x32xf32>
    %cst_8 = arith.constant 9.99999974E-6 : f32
    %16 = vector.broadcast %cst_8 : f32 to vector<128x1xf32>
    %17 = arith.addf %13, %16 : vector<128x1xf32>
    %18 = math.rsqrt %17 : vector<128x1xf32>
    %19 = vector.broadcast %18 : vector<128x1xf32> to vector<128x32xf32>
    %20 = arith.mulf %15, %19 : vector<128x32xf32>
    %21 = vector.broadcast %1 : vector<1x32xf32> to vector<128x32xf32>
    %22 = arith.mulf %20, %21 : vector<128x32xf32>
    %23 = vector.broadcast %2 : vector<1x32xf32> to vector<128x32xf32>
    %24 = arith.addf %22, %23 : vector<128x32xf32>
    %25 = arith.truncf %24 : vector<128x32xf32> to vector<128x32xbf16>
    %c0_9 = arith.constant 0 : index
    %c0_10 = arith.constant 0 : index
    %26 = vector.load %arg5[%c0_9, %c0_10] : memref<32x96xbf16, #tpu.memory_space<vmem>>, vector<32x96xbf16>
    %cst_11 = arith.constant dense<0.000000e+00> : vector<128x96xf32>
    %27 = tpu.matmul %25, %26, %cst_11 {dimension_numbers = #tpu.dot_dimension_numbers<[1], [0], [0], [1], [0, 0, 1, 1], [], []>} : vector<128x32xbf16>, vector<32x96xbf16>, vector<128x96xf32> -> vector<128x96xf32>
    %c0_12 = arith.constant 0 : index
    %c0_13 = arith.constant 0 : index
    %28 = vector.load %arg6[%c0_12, %c0_13] : memref<1x96xf32, #tpu.memory_space<vmem>>, vector<1x96xf32>
    %29 = vector.broadcast %28 : vector<1x96xf32> to vector<128x96xf32>
    %30 = arith.addf %27, %29 : vector<128x96xf32>
    %31 = vector.extract_strided_slice %30 {offsets = [0, 0], sizes = [128, 8], strides = [1, 1]} : vector<128x96xf32> to vector<128x8xf32>
    %32 = vector.shape_cast %31 : vector<128x8xf32> to vector<8x16x8xf32>
    %33 = vector.extract_strided_slice %30 {offsets = [0, 8], sizes = [128, 8], strides = [1, 1]} : vector<128x96xf32> to vector<128x8xf32>
    %34 = vector.shape_cast %33 : vector<128x8xf32> to vector<8x16x8xf32>
    %35 = vector.extract_strided_slice %30 {offsets = [0, 16], sizes = [128, 8], strides = [1, 1]} : vector<128x96xf32> to vector<128x8xf32>
    %36 = vector.shape_cast %35 : vector<128x8xf32> to vector<8x16x8xf32>
    %37 = vector.extract_strided_slice %30 {offsets = [0, 24], sizes = [128, 8], strides = [1, 1]} : vector<128x96xf32> to vector<128x8xf32>
    %38 = vector.shape_cast %37 : vector<128x8xf32> to vector<8x16x8xf32>
    %39 = tpu.concatenate %32, %34, %36, %38 in 0 : vector<8x16x8xf32>, vector<8x16x8xf32>, vector<8x16x8xf32>, vector<8x16x8xf32> -> vector<32x16x8xf32>
    %40 = arith.truncf %39 : vector<32x16x8xf32> to vector<32x16x8xbf16>
    %41 = vector.extract_strided_slice %30 {offsets = [0, 32], sizes = [128, 8], strides = [1, 1]} : vector<128x96xf32> to vector<128x8xf32>
    %42 = vector.shape_cast %41 : vector<128x8xf32> to vector<8x16x8xf32>
    %43 = vector.extract_strided_slice %30 {offsets = [0, 40], sizes = [128, 8], strides = [1, 1]} : vector<128x96xf32> to vector<128x8xf32>
    %44 = vector.shape_cast %43 : vector<128x8xf32> to vector<8x16x8xf32>
    %45 = vector.extract_strided_slice %30 {offsets = [0, 48], sizes = [128, 8], strides = [1, 1]} : vector<128x96xf32> to vector<128x8xf32>
    %46 = vector.shape_cast %45 : vector<128x8xf32> to vector<8x16x8xf32>
    %47 = vector.extract_strided_slice %30 {offsets = [0, 56], sizes = [128, 8], strides = [1, 1]} : vector<128x96xf32> to vector<128x8xf32>
    %48 = vector.shape_cast %47 : vector<128x8xf32> to vector<8x16x8xf32>
    %49 = tpu.concatenate %42, %44, %46, %48 in 0 : vector<8x16x8xf32>, vector<8x16x8xf32>, vector<8x16x8xf32>, vector<8x16x8xf32> -> vector<32x16x8xf32>
    %50 = arith.truncf %49 : vector<32x16x8xf32> to vector<32x16x8xbf16>
    %51 = vector.extract_strided_slice %30 {offsets = [0, 64], sizes = [128, 8], strides = [1, 1]} : vector<128x96xf32> to vector<128x8xf32>
    %52 = vector.shape_cast %51 : vector<128x8xf32> to vector<8x16x8xf32>
    %53 = vector.extract_strided_slice %30 {offsets = [0, 72], sizes = [128, 8], strides = [1, 1]} : vector<128x96xf32> to vector<128x8xf32>
    %54 = vector.shape_cast %53 : vector<128x8xf32> to vector<8x16x8xf32>
    %55 = vector.extract_strided_slice %30 {offsets = [0, 80], sizes = [128, 8], strides = [1, 1]} : vector<128x96xf32> to vector<128x8xf32>
    %56 = vector.shape_cast %55 : vector<128x8xf32> to vector<8x16x8xf32>
    %57 = vector.extract_strided_slice %30 {offsets = [0, 88], sizes = [128, 8], strides = [1, 1]} : vector<128x96xf32> to vector<128x8xf32>
    %58 = vector.shape_cast %57 : vector<128x8xf32> to vector<8x16x8xf32>
    %59 = tpu.concatenate %52, %54, %56, %58 in 0 : vector<8x16x8xf32>, vector<8x16x8xf32>, vector<8x16x8xf32>, vector<8x16x8xf32> -> vector<32x16x8xf32>
    %60 = arith.truncf %59 : vector<32x16x8xf32> to vector<32x16x8xbf16>
    "tpu.trace_start"() <{level = 10 : i32, message = "bqd,bkd->bqk"}> : () -> ()
    %cst_14 = arith.constant dense<0.000000e+00> : vector<32x16x16xf32>
    %61 = tpu.matmul %40, %50, %cst_14 {dimension_numbers = #tpu.dot_dimension_numbers<[2], [2], [1], [1], [0, 0, 0, 1, 1, 1], [0], [0]>} : vector<32x16x8xbf16>, vector<32x16x8xbf16>, vector<32x16x16xf32> -> vector<32x16x16xf32>
    "tpu.trace_stop"() : () -> ()
    %cst_15 = arith.constant 0.353553385 : f32
    %62 = vector.broadcast %cst_15 : f32 to vector<32x16x16xf32>
    %63 = arith.mulf %61, %62 : vector<32x16x16xf32>
    %64 = vector.shape_cast %63 : vector<32x16x16xf32> to vector<4x2x4x16x16xf32>
    %c0_16 = arith.constant 0 : index
    %c0_17 = arith.constant 0 : index
    %c0_18 = arith.constant 0 : index
    %c0_19 = arith.constant 0 : index
    %65 = vector.load %arg2[%c0_16, %c0_17, %c0_18, %c0_19] : memref<4x4x16x16xf32, #tpu.memory_space<vmem>>, vector<4x4x16x16xf32>
    %66 = vector.shape_cast %65 : vector<4x4x16x16xf32> to vector<4x1x4x16x16xf32>
    %67 = vector.broadcast %66 : vector<4x1x4x16x16xf32> to vector<4x2x4x16x16xf32>
    %68 = arith.addf %64, %67 : vector<4x2x4x16x16xf32>
    %69 = vector.shape_cast %68 : vector<4x2x4x16x16xf32> to vector<32x16x16xf32>
    %cst_20 = arith.constant dense<0xFF800000> : vector<32x16xf32>
    %70 = vector.multi_reduction <maximumf>, %69, %cst_20 [2] : vector<32x16x16xf32> to vector<32x16xf32>
    %71 = vector.shape_cast %70 : vector<32x16xf32> to vector<32x16x1xf32>
    %72 = vector.broadcast %71 : vector<32x16x1xf32> to vector<32x16x16xf32>
    %73 = arith.subf %69, %72 : vector<32x16x16xf32>
    %74 = math.exp %73 : vector<32x16x16xf32>
    %cst_21 = arith.constant dense<0.000000e+00> : vector<32x16xf32>
    %75 = vector.multi_reduction <add>, %74, %cst_21 [2] : vector<32x16x16xf32> to vector<32x16xf32>
    %76 = vector.shape_cast %75 : vector<32x16xf32> to vector<32x16x1xf32>
    %77 = tpu.reciprocal %76 {approx = true} : vector<32x16x1xf32> -> vector<32x16x1xf32>
    %78 = vector.broadcast %77 : vector<32x16x1xf32> to vector<32x16x16xf32>
    %79 = arith.mulf %74, %78 : vector<32x16x16xf32>
    %80 = arith.truncf %79 : vector<32x16x16xf32> to vector<32x16x16xbf16>
    "tpu.trace_start"() <{level = 10 : i32, message = "bqk,bkd->bqd"}> : () -> ()
    %cst_22 = arith.constant dense<0.000000e+00> : vector<32x16x8xf32>
    %81 = tpu.matmul %80, %60, %cst_22 {dimension_numbers = #tpu.dot_dimension_numbers<[2], [1], [1], [2], [0, 0, 0, 1, 1, 2], [0], [0]>} : vector<32x16x16xbf16>, vector<32x16x8xbf16>, vector<32x16x8xf32> -> vector<32x16x8xf32>
    "tpu.trace_stop"() : () -> ()
    %82 = vector.shape_cast %81 : vector<32x16x8xf32> to vector<4x128x8xf32>
    %83 = arith.truncf %82 : vector<4x128x8xf32> to vector<4x128x8xbf16>
    %c0_23 = arith.constant 0 : index
    %c0_24 = arith.constant 0 : index
    %84 = vector.load %arg7[%c0_23, %c0_24] : memref<32x32xbf16, #tpu.memory_space<vmem>>, vector<32x32xbf16>
    %85 = vector.shape_cast %84 : vector<32x32xbf16> to vector<4x8x32xbf16>
    "tpu.trace_start"() <{level = 10 : i32, message = "htd,hdc->htc"}> : () -> ()
    %cst_25 = arith.constant dense<0.000000e+00> : vector<4x128x32xf32>
    %86 = tpu.matmul %83, %85, %cst_25 {dimension_numbers = #tpu.dot_dimension_numbers<[2], [1], [1], [2], [0, 0, 0, 1, 1, 2], [0], [0]>} : vector<4x128x8xbf16>, vector<4x8x32xbf16>, vector<4x128x32xf32> -> vector<4x128x32xf32>
    "tpu.trace_stop"() : () -> ()
    %cst_26 = arith.constant dense<0.000000e+00> : vector<128x32xf32>
    %87 = vector.multi_reduction <add>, %86, %cst_26 [0] : vector<4x128x32xf32> to vector<128x32xf32>
    %c0_27 = arith.constant 0 : index
    %c0_28 = arith.constant 0 : index
    %88 = vector.load %arg8[%c0_27, %c0_28] : memref<1x32xf32, #tpu.memory_space<vmem>>, vector<1x32xf32>
    %89 = vector.broadcast %88 : vector<1x32xf32> to vector<128x32xf32>
    %90 = arith.addf %87, %89 : vector<128x32xf32>
    %91 = arith.addf %0, %90 : vector<128x32xf32>
    %c0_29 = arith.constant 0 : index
    %c0_30 = arith.constant 0 : index
    %92 = vector.load %arg9[%c0_29, %c0_30] : memref<1x32xf32, #tpu.memory_space<vmem>>, vector<1x32xf32>
    %c0_31 = arith.constant 0 : index
    %c0_32 = arith.constant 0 : index
    %93 = vector.load %arg10[%c0_31, %c0_32] : memref<1x32xf32, #tpu.memory_space<vmem>>, vector<1x32xf32>
    %cst_33 = arith.constant dense<0.000000e+00> : vector<128xf32>
    %94 = vector.multi_reduction <add>, %91, %cst_33 [1] : vector<128x32xf32> to vector<128xf32>
    %95 = vector.shape_cast %94 : vector<128xf32> to vector<128x1xf32>
    %cst_34 = arith.constant 3.200000e+01 : f32
    %96 = vector.broadcast %cst_34 : f32 to vector<128x1xf32>
    %97 = arith.divf %95, %96 : vector<128x1xf32>
    %98 = vector.broadcast %97 : vector<128x1xf32> to vector<128x32xf32>
    %99 = arith.subf %91, %98 : vector<128x32xf32>
    %100 = arith.mulf %99, %99 : vector<128x32xf32>
    %cst_35 = arith.constant dense<0.000000e+00> : vector<128xf32>
    %101 = vector.multi_reduction <add>, %100, %cst_35 [1] : vector<128x32xf32> to vector<128xf32>
    %102 = vector.shape_cast %101 : vector<128xf32> to vector<128x1xf32>
    %cst_36 = arith.constant 3.200000e+01 : f32
    %103 = vector.broadcast %cst_36 : f32 to vector<128x1xf32>
    %104 = arith.divf %102, %103 : vector<128x1xf32>
    %105 = vector.broadcast %97 : vector<128x1xf32> to vector<128x32xf32>
    %106 = arith.subf %91, %105 : vector<128x32xf32>
    %cst_37 = arith.constant 9.99999974E-6 : f32
    %107 = vector.broadcast %cst_37 : f32 to vector<128x1xf32>
    %108 = arith.addf %104, %107 : vector<128x1xf32>
    %109 = math.rsqrt %108 : vector<128x1xf32>
    %110 = vector.broadcast %109 : vector<128x1xf32> to vector<128x32xf32>
    %111 = arith.mulf %106, %110 : vector<128x32xf32>
    %112 = vector.broadcast %92 : vector<1x32xf32> to vector<128x32xf32>
    %113 = arith.mulf %111, %112 : vector<128x32xf32>
    %114 = vector.broadcast %93 : vector<1x32xf32> to vector<128x32xf32>
    %115 = arith.addf %113, %114 : vector<128x32xf32>
    %116 = arith.truncf %115 : vector<128x32xf32> to vector<128x32xbf16>
    %c0_38 = arith.constant 0 : index
    %c0_39 = arith.constant 0 : index
    %117 = vector.load %arg11[%c0_38, %c0_39] : memref<32x128xbf16, #tpu.memory_space<vmem>>, vector<32x128xbf16>
    %cst_40 = arith.constant dense<0.000000e+00> : vector<128x128xf32>
    %118 = tpu.matmul %116, %117, %cst_40 {dimension_numbers = #tpu.dot_dimension_numbers<[1], [0], [0], [1], [0, 0, 1, 1], [], []>} : vector<128x32xbf16>, vector<32x128xbf16>, vector<128x128xf32> -> vector<128x128xf32>
    %c0_41 = arith.constant 0 : index
    %c0_42 = arith.constant 0 : index
    %119 = vector.load %arg12[%c0_41, %c0_42] : memref<1x128xf32, #tpu.memory_space<vmem>>, vector<1x128xf32>
    %120 = vector.broadcast %119 : vector<1x128xf32> to vector<128x128xf32>
    %121 = arith.addf %118, %120 : vector<128x128xf32>
    %cst_43 = arith.constant 5.000000e-01 : f32
    %122 = vector.broadcast %cst_43 : f32 to vector<128x128xf32>
    %123 = arith.mulf %122, %121 : vector<128x128xf32>
    %cst_44 = arith.constant 0.707106769 : f32
    %124 = vector.broadcast %cst_44 : f32 to vector<128x128xf32>
    %125 = arith.mulf %121, %124 : vector<128x128xf32>
    %126 = math.erf %125 : vector<128x128xf32>
    %cst_45 = arith.constant 1.000000e+00 : f32
    %127 = vector.broadcast %cst_45 : f32 to vector<128x128xf32>
    %128 = arith.addf %127, %126 : vector<128x128xf32>
    %129 = arith.mulf %123, %128 : vector<128x128xf32>
    %130 = arith.truncf %129 : vector<128x128xf32> to vector<128x128xbf16>
    %c0_46 = arith.constant 0 : index
    %c0_47 = arith.constant 0 : index
    %131 = vector.load %arg13[%c0_46, %c0_47] : memref<128x32xbf16, #tpu.memory_space<vmem>>, vector<128x32xbf16>
    %cst_48 = arith.constant dense<0.000000e+00> : vector<128x32xf32>
    %132 = tpu.matmul %130, %131, %cst_48 {dimension_numbers = #tpu.dot_dimension_numbers<[1], [0], [0], [1], [0, 0, 1, 1], [], []>} : vector<128x128xbf16>, vector<128x32xbf16>, vector<128x32xf32> -> vector<128x32xf32>
    %c0_49 = arith.constant 0 : index
    %c0_50 = arith.constant 0 : index
    %133 = vector.load %arg14[%c0_49, %c0_50] : memref<1x32xf32, #tpu.memory_space<vmem>>, vector<1x32xf32>
    %134 = vector.broadcast %133 : vector<1x32xf32> to vector<128x32xf32>
    %135 = arith.addf %132, %134 : vector<128x32xf32>
    %136 = arith.addf %91, %135 : vector<128x32xf32>
    %137 = arith.truncf %136 : vector<128x32xf32> to vector<128x32xbf16>
    %c0_51 = arith.constant 0 : index
    %c0_52 = arith.constant 0 : index
    %138 = vector.load %arg15[%c0_51, %c0_52] : memref<32x64xbf16, #tpu.memory_space<vmem>>, vector<32x64xbf16>
    %cst_53 = arith.constant dense<0.000000e+00> : vector<128x64xf32>
    %139 = tpu.matmul %137, %138, %cst_53 {dimension_numbers = #tpu.dot_dimension_numbers<[1], [0], [0], [1], [0, 0, 1, 1], [], []>} : vector<128x32xbf16>, vector<32x64xbf16>, vector<128x64xf32> -> vector<128x64xf32>
    %c0_54 = arith.constant 0 : index
    %c0_55 = arith.constant 0 : index
    %140 = vector.load %arg16[%c0_54, %c0_55] : memref<1x64xf32, #tpu.memory_space<vmem>>, vector<1x64xf32>
    %c0_56 = arith.constant 0 : index
    %c0_57 = arith.constant 0 : index
    %141 = vector.load %arg17[%c0_56, %c0_57] : memref<1x64xf32, #tpu.memory_space<vmem>>, vector<1x64xf32>
    %cst_58 = arith.constant dense<0.000000e+00> : vector<128xf32>
    %142 = vector.multi_reduction <add>, %139, %cst_58 [1] : vector<128x64xf32> to vector<128xf32>
    %143 = vector.shape_cast %142 : vector<128xf32> to vector<128x1xf32>
    %cst_59 = arith.constant 6.400000e+01 : f32
    %144 = vector.broadcast %cst_59 : f32 to vector<128x1xf32>
    %145 = arith.divf %143, %144 : vector<128x1xf32>
    %146 = vector.broadcast %145 : vector<128x1xf32> to vector<128x64xf32>
    %147 = arith.subf %139, %146 : vector<128x64xf32>
    %148 = arith.mulf %147, %147 : vector<128x64xf32>
    %cst_60 = arith.constant dense<0.000000e+00> : vector<128xf32>
    %149 = vector.multi_reduction <add>, %148, %cst_60 [1] : vector<128x64xf32> to vector<128xf32>
    %150 = vector.shape_cast %149 : vector<128xf32> to vector<128x1xf32>
    %cst_61 = arith.constant 6.400000e+01 : f32
    %151 = vector.broadcast %cst_61 : f32 to vector<128x1xf32>
    %152 = arith.divf %150, %151 : vector<128x1xf32>
    %153 = vector.broadcast %145 : vector<128x1xf32> to vector<128x64xf32>
    %154 = arith.subf %139, %153 : vector<128x64xf32>
    %cst_62 = arith.constant 9.99999974E-6 : f32
    %155 = vector.broadcast %cst_62 : f32 to vector<128x1xf32>
    %156 = arith.addf %152, %155 : vector<128x1xf32>
    %157 = math.rsqrt %156 : vector<128x1xf32>
    %158 = vector.broadcast %157 : vector<128x1xf32> to vector<128x64xf32>
    %159 = arith.mulf %154, %158 : vector<128x64xf32>
    %160 = vector.broadcast %140 : vector<1x64xf32> to vector<128x64xf32>
    %161 = arith.mulf %159, %160 : vector<128x64xf32>
    %162 = vector.broadcast %141 : vector<1x64xf32> to vector<128x64xf32>
    %163 = arith.addf %161, %162 : vector<128x64xf32>
    %164 = tpu.transpose %163, [1, 0] : vector<128x64xf32> -> vector<64x128xf32>
    %c0_63 = arith.constant 0 : index
    %c0_64 = arith.constant 0 : index
    %165 = vector.load %arg18[%c0_63, %c0_64] : memref<64x128xf32, #tpu.memory_space<vmem>>, vector<64x128xf32>
    tpu.vector_store %arg18[%c0_63, %c0_64], %164 {strides = array<i32>} : memref<64x128xf32, #tpu.memory_space<vmem>>, vector<64x128xf32>,
    return
  }
  func.func @transform_0(%arg0: i32) -> (i32, i32) {
    %c0_i32 = arith.constant 0 : i32
    %c0_i32_0 = arith.constant 0 : i32
    %c0_i32_1 = arith.constant 0 : i32
    return %c0_i32, %c0_i32_0 : i32, i32
  }
  func.func @transform_1(%arg0: i32) -> (i32, i32, i32, i32) {
    %c0_i32 = arith.constant 0 : i32
    %c0_i32_0 = arith.constant 0 : i32
    %c0_i32_1 = arith.constant 0 : i32
    %c0_i32_2 = arith.constant 0 : i32
    %c0_i32_3 = arith.constant 0 : i32
    return %c0_i32, %c0_i32_0, %c0_i32_1, %c0_i32_2 : i32, i32, i32, i32
  }
  func.func @transform_2(%arg0: i32) -> (i32, i32) {
    %c0_i32 = arith.constant 0 : i32
    %c0_i32_0 = arith.constant 0 : i32
    %c0_i32_1 = arith.constant 0 : i32
    return %c0_i32, %c0_i32_0 : i32, i32
  }
  func.func @transform_3(%arg0: i32) -> (i32, i32) {
    %c0_i32 = arith.constant 0 : i32
    %c0_i32_0 = arith.constant 0 : i32
    %c0_i32_1 = arith.constant 0 : i32
    return %c0_i32, %c0_i32_0 : i32, i32
  }
  func.func @transform_4(%arg0: i32) -> (i32, i32) {
    %c0_i32 = arith.constant 0 : i32
    %c0_i32_0 = arith.constant 0 : i32
    %c0_i32_1 = arith.constant 0 : i32
    return %c0_i32, %c0_i32_0 : i32, i32
  }
  func.func @transform_5(%arg0: i32) -> (i32, i32) {
    %c0_i32 = arith.constant 0 : i32
    %c0_i32_0 = arith.constant 0 : i32
    %c0_i32_1 = arith.constant 0 : i32
    return %c0_i32, %c0_i32_0 : i32, i32
  }
  func.func @transform_6(%arg0: i32) -> (i32, i32) {
    %c0_i32 = arith.constant 0 : i32
    %c0_i32_0 = arith.constant 0 : i32
    %c0_i32_1 = arith.constant 0 : i32
    return %c0_i32, %c0_i32_0 : i32, i32
  }
  func.func @transform_7(%arg0: i32) -> (i32, i32) {
    %c0_i32 = arith.constant 0 : i32
    %c0_i32_0 = arith.constant 0 : i32
    %c0_i32_1 = arith.constant 0 : i32
    return %c0_i32, %c0_i32_0 : i32, i32
  }
  func.func @transform_8(%arg0: i32) -> (i32, i32) {
    %c0_i32 = arith.constant 0 : i32
    %c0_i32_0 = arith.constant 0 : i32
    %c0_i32_1 = arith.constant 0 : i32
    return %c0_i32, %c0_i32_0 : i32, i32
  }
  func.func @transform_9(%arg0: i32) -> (i32, i32) {
    %c0_i32 = arith.constant 0 : i32
    %c0_i32_0 = arith.constant 0 : i32
    %c0_i32_1 = arith.constant 0 : i32
    return %c0_i32, %c0_i32_0 : i32, i32
  }
  func.func @transform_10(%arg0: i32) -> (i32, i32) {
    %c0_i32 = arith.constant 0 : i32
    %c0_i32_0 = arith.constant 0 : i32
    %c0_i32_1 = arith.constant 0 : i32
    return %c0_i32, %c0_i32_0 : i32, i32
  }
  func.func @transform_11(%arg0: i32) -> (i32, i32) {
    %c0_i32 = arith.constant 0 : i32
    %c0_i32_0 = arith.constant 0 : i32
    %c0_i32_1 = arith.constant 0 : i32
    return %c0_i32, %c0_i32_0 : i32, i32
  }
  func.func @transform_12(%arg0: i32) -> (i32, i32) {
    %c0_i32 = arith.constant 0 : i32
    %c0_i32_0 = arith.constant 0 : i32
    %c0_i32_1 = arith.constant 0 : i32
    return %c0_i32, %c0_i32_0 : i32, i32
  }
  func.func @transform_13(%arg0: i32) -> (i32, i32) {
    %c0_i32 = arith.constant 0 : i32
    %c0_i32_0 = arith.constant 0 : i32
    %c0_i32_1 = arith.constant 0 : i32
    return %c0_i32, %c0_i32_0 : i32, i32
  }
  func.func @transform_14(%arg0: i32) -> (i32, i32) {
    %c0_i32 = arith.constant 0 : i32
    %c0_i32_0 = arith.constant 0 : i32
    %c0_i32_1 = arith.constant 0 : i32
    return %c0_i32, %c0_i32_0 : i32, i32
  }
  func.func @transform_15(%arg0: i32) -> (i32, i32) {
    %c0_i32 = arith.constant 0 : i32
    %c0_i32_0 = arith.constant 0 : i32
    %c0_i32_1 = arith.constant 0 : i32
    return %c0_i32, %c0_i32_0 : i32, i32
  }
  func.func @transform_16(%arg0: i32) -> (i32, i32) {
    %c0_i32 = arith.constant 0 : i32
    %c0_i32_0 = arith.constant 0 : i32
    %c0_i32_1 = arith.constant 0 : i32
    return %c0_i32, %c0_i32_0 : i32, i32
  }
  func.func @transform_17(%arg0: i32) -> (i32, i32) {
    %c0_i32 = arith.constant 0 : i32
    %c0_i32_0 = arith.constant 0 : i32
    %c0_i32_1 = arith.constant 0 : i32
    return %c0_i32, %c0_i32_0 : i32, i32
  }
}

</mosaic_0001>

<llo_original>
// kernel: basic_layer_up_forward.2
$region0: #{basic_layer_up_forward.2}
  #allocation0 [shape = 'u32[]', space=smem, size = 0x4, offset = 0x4, fixed_abs, tag = 'smem constant byte address 0x4 - core index']
  #allocation1 [shape = 'u32[144,128]{1,0:T(1,128)}', space=vmem, size = 0x12000, scoped, tag = 'internal scratch']
  %s0 = inlined_call_operand.vmem [shape: f32[128,32], index: 0, kind: input, shape index: {}]
  %s1 = inlined_call_operand.vmem [shape: f32[4,4,16,16], index: 1, kind: input, shape index: {}]
  %s2 = inlined_call_operand.vmem [shape: f32[1,32], index: 2, kind: input, shape index: {}]
  %s3 = inlined_call_operand.vmem [shape: f32[1,32], index: 3, kind: input, shape index: {}]
  %s4 = inlined_call_operand.vmem [shape: bf16[32,96], index: 4, kind: input, shape index: {}]
  %s5 = inlined_call_operand.vmem [shape: f32[1,96], index: 5, kind: input, shape index: {}]
  %s6 = inlined_call_operand.vmem [shape: bf16[32,32], index: 6, kind: input, shape index: {}]
  %s7 = inlined_call_operand.vmem [shape: f32[1,32], index: 7, kind: input, shape index: {}]
  %s8 = inlined_call_operand.vmem [shape: f32[1,32], index: 8, kind: input, shape index: {}]
  %s9 = inlined_call_operand.vmem [shape: f32[1,32], index: 9, kind: input, shape index: {}]
  %s10 = inlined_call_operand.vmem [shape: bf16[32,128], index: 10, kind: input, shape index: {}]
  %s11 = inlined_call_operand.vmem [shape: f32[1,128], index: 11, kind: input, shape index: {}]
  %s12 = inlined_call_operand.vmem [shape: bf16[128,32], index: 12, kind: input, shape index: {}]
  %s13 = inlined_call_operand.vmem [shape: f32[1,32], index: 13, kind: input, shape index: {}]
  %s14 = inlined_call_operand.vmem [shape: f32[32,128], index: 14, kind: output, shape index: {}]
  %s15 = sld [smem:[#allocation0]]
  $region66: #{basic_layer_up_forward.2} parent=0
    _
  %s17 = ssub.s32 1, %s15
  %s18 = scalar_select 0, %s17, %s15
  // Predicated region
  $region2: #{basic_layer_up_forward.2} parent=0 // pred_check
    _
  $region3: #{basic_layer_up_forward.2} parent=0 // pred_check_branch
    %20 = sbr.rel (0) target = $region5
  $region4: #{basic_layer_up_forward.2} parent=0 // pred_region
    _
  $region5: #{basic_layer_up_forward.2} parent=0 // pred_fallthru
    _
  // Predicated region
  $region6: #{basic_layer_up_forward.2} parent=0 // pred_check
    _
  $region7: #{basic_layer_up_forward.2} parent=0 // pred_check_branch
    %22 = sbr.rel (0) target = $region9
  $region8: #{basic_layer_up_forward.2} parent=0 // pred_region
    _
  $region9: #{basic_layer_up_forward.2} parent=0 // pred_fallthru
    _
  // Predicated region
  $region10: #{basic_layer_up_forward.2} parent=0 // pred_check
    _
  $region11: #{basic_layer_up_forward.2} parent=0 // pred_check_branch
    %24 = sbr.rel (0) target = $region13
  $region12: #{basic_layer_up_forward.2} parent=0 // pred_region
    _
  $region13: #{basic_layer_up_forward.2} parent=0 // pred_fallthru
    _
  // Predicated region
  $region14: #{basic_layer_up_forward.2} parent=0 // pred_check
    _
  $region15: #{basic_layer_up_forward.2} parent=0 // pred_check_branch
    %26 = sbr.rel (0) target = $region17
  $region16: #{basic_layer_up_forward.2} parent=0 // pred_region
    _
  $region17: #{basic_layer_up_forward.2} parent=0 // pred_fallthru
    _
  // Predicated region
  $region18: #{basic_layer_up_forward.2} parent=0 // pred_check
    _
  $region19: #{basic_layer_up_forward.2} parent=0 // pred_check_branch
    %28 = sbr.rel (0) target = $region21
  $region20: #{basic_layer_up_forward.2} parent=0 // pred_region
    _
  $region21: #{basic_layer_up_forward.2} parent=0 // pred_fallthru
    _
  // Predicated region
  $region22: #{basic_layer_up_forward.2} parent=0 // pred_check
    _
  $region23: #{basic_layer_up_forward.2} parent=0 // pred_check_branch
    %30 = sbr.rel (0) target = $region25
  $region24: #{basic_layer_up_forward.2} parent=0 // pred_region
    _
  $region25: #{basic_layer_up_forward.2} parent=0 // pred_fallthru
    _
  // Predicated region
  $region26: #{basic_layer_up_forward.2} parent=0 // pred_check
    _
  $region27: #{basic_layer_up_forward.2} parent=0 // pred_check_branch
    %32 = sbr.rel (0) target = $region29
  $region28: #{basic_layer_up_forward.2} parent=0 // pred_region
    _
  $region29: #{basic_layer_up_forward.2} parent=0 // pred_fallthru
    _
  // Predicated region
  $region30: #{basic_layer_up_forward.2} parent=0 // pred_check
    _
  $region31: #{basic_layer_up_forward.2} parent=0 // pred_check_branch
    %34 = sbr.rel (0) target = $region33
  $region32: #{basic_layer_up_forward.2} parent=0 // pred_region
    _
  $region33: #{basic_layer_up_forward.2} parent=0 // pred_fallthru
    _
  // Predicated region
  $region34: #{basic_layer_up_forward.2} parent=0 // pred_check
    _
  $region35: #{basic_layer_up_forward.2} parent=0 // pred_check_branch
    %36 = sbr.rel (0) target = $region37
  $region36: #{basic_layer_up_forward.2} parent=0 // pred_region
    _
  $region37: #{basic_layer_up_forward.2} parent=0 // pred_fallthru
    _
  // Predicated region
  $region38: #{basic_layer_up_forward.2} parent=0 // pred_check
    _
  $region39: #{basic_layer_up_forward.2} parent=0 // pred_check_branch
    %38 = sbr.rel (0) target = $region41
  $region40: #{basic_layer_up_forward.2} parent=0 // pred_region
    _
  $region41: #{basic_layer_up_forward.2} parent=0 // pred_fallthru
    _
  // Predicated region
  $region42: #{basic_layer_up_forward.2} parent=0 // pred_check
    _
  $region43: #{basic_layer_up_forward.2} parent=0 // pred_check_branch
    %40 = sbr.rel (0) target = $region45
  $region44: #{basic_layer_up_forward.2} parent=0 // pred_region
    _
  $region45: #{basic_layer_up_forward.2} parent=0 // pred_fallthru
    _
  // Predicated region
  $region46: #{basic_layer_up_forward.2} parent=0 // pred_check
    _
  $region47: #{basic_layer_up_forward.2} parent=0 // pred_check_branch
    %42 = sbr.rel (0) target = $region49
  $region48: #{basic_layer_up_forward.2} parent=0 // pred_region
    _
  $region49: #{basic_layer_up_forward.2} parent=0 // pred_fallthru
    _
  // Predicated region
  $region50: #{basic_layer_up_forward.2} parent=0 // pred_check
    _
  $region51: #{basic_layer_up_forward.2} parent=0 // pred_check_branch
    %44 = sbr.rel (0) target = $region53
  $region52: #{basic_layer_up_forward.2} parent=0 // pred_region
    _
  $region53: #{basic_layer_up_forward.2} parent=0 // pred_fallthru
    _
  // Predicated region
  $region54: #{basic_layer_up_forward.2} parent=0 // pred_check
    _
  $region55: #{basic_layer_up_forward.2} parent=0 // pred_check_branch
    %46 = sbr.rel (0) target = $region57
  $region56: #{basic_layer_up_forward.2} parent=0 // pred_region
    _
  $region57: #{basic_layer_up_forward.2} parent=0 // pred_fallthru
    _
  %v48 = vld [vmem:[%s0] sm:$0xff]
  %v49 = vld [vmem:[%s0 + $0x8] sm:$0xff]
  %v50 = vld [vmem:[%s0 + $0x10] sm:$0xff]
  %v51 = vld [vmem:[%s0 + $0x18] sm:$0xff]
  %v52 = vld [vmem:[%s0 + $0x20] sm:$0xff]
  %v53 = vld [vmem:[%s0 + $0x28] sm:$0xff]
  %v54 = vld [vmem:[%s0 + $0x30] sm:$0xff]
  %v55 = vld [vmem:[%s0 + $0x38] sm:$0xff]
  %v56 = vld [vmem:[%s0 + $0x40] sm:$0xff]
  %v57 = vld [vmem:[%s0 + $0x48] sm:$0xff]
  %v58 = vld [vmem:[%s0 + $0x50] sm:$0xff]
  %v59 = vld [vmem:[%s0 + $0x58] sm:$0xff]
  %v60 = vld [vmem:[%s0 + $0x60] sm:$0xff]
  %v61 = vld [vmem:[%s0 + $0x68] sm:$0xff]
  %v62 = vld [vmem:[%s0 + $0x70] sm:$0xff]
  %v63 = vld [vmem:[%s0 + $0x78] sm:$0xff]
  %v64 = vld [vmem:[%s2] sm:$0x1]
  %v65 = vld [vmem:[%s3] sm:$0x1]
  %vm66 = vcmask 261120
  %v67 = vsel %vm66, %v48, 0.0
  %68 = vadd.xlane.f32.xlu0 %v67
  %v69 = vpop.xlane.xlu0 %68
  %v70 = vsel %vm66, %v49, 0.0
  %71 = vadd.xlane.f32.xlu0 %v70
  %v72 = vpop.xlane.xlu0 %71
  %v73 = vsel %vm66, %v50, 0.0
  %74 = vadd.xlane.f32.xlu0 %v73
  %v75 = vpop.xlane.xlu0 %74
  %v76 = vsel %vm66, %v51, 0.0
  %77 = vadd.xlane.f32.xlu0 %v76
  %v78 = vpop.xlane.xlu0 %77
  %v79 = vsel %vm66, %v52, 0.0
  %80 = vadd.xlane.f32.xlu0 %v79
  %v81 = vpop.xlane.xlu0 %80
  %v82 = vsel %vm66, %v53, 0.0
  %83 = vadd.xlane.f32.xlu0 %v82
  %v84 = vpop.xlane.xlu0 %83
  %v85 = vsel %vm66, %v54, 0.0
  %86 = vadd.xlane.f32.xlu0 %v85
  %v87 = vpop.xlane.xlu0 %86
  %v88 = vsel %vm66, %v55, 0.0
  %89 = vadd.xlane.f32.xlu0 %v88
  %v90 = vpop.xlane.xlu0 %89
  %v91 = vsel %vm66, %v56, 0.0
  %92 = vadd.xlane.f32.xlu0 %v91
  %v93 = vpop.xlane.xlu0 %92
  %v94 = vsel %vm66, %v57, 0.0
  %95 = vadd.xlane.f32.xlu0 %v94
  %v96 = vpop.xlane.xlu0 %95
  %v97 = vsel %vm66, %v58, 0.0
  %98 = vadd.xlane.f32.xlu0 %v97
  %v99 = vpop.xlane.xlu0 %98
  %v100 = vsel %vm66, %v59, 0.0
  %101 = vadd.xlane.f32.xlu0 %v100
  %v102 = vpop.xlane.xlu0 %101
  %v103 = vsel %vm66, %v60, 0.0
  %104 = vadd.xlane.f32.xlu0 %v103
  %v105 = vpop.xlane.xlu0 %104
  %v106 = vsel %vm66, %v61, 0.0
  %107 = vadd.xlane.f32.xlu0 %v106
  %v108 = vpop.xlane.xlu0 %107
  %v109 = vsel %vm66, %v62, 0.0
  %110 = vadd.xlane.f32.xlu0 %v109
  %v111 = vpop.xlane.xlu0 %110
  %v112 = vsel %vm66, %v63, 0.0
  %113 = vadd.xlane.f32.xlu0 %v112
  %v114 = vpop.xlane.xlu0 %113
  %v115 = vrcp.pop 32.0
  %v116 = vmul.f32 %v69, %v115
  %v117 = vmul.f32 %v72, %v115
  %v118 = vmul.f32 %v75, %v115
  %v119 = vmul.f32 %v78, %v115
  %v120 = vmul.f32 %v81, %v115
  %v121 = vmul.f32 %v84, %v115
  %v122 = vmul.f32 %v87, %v115
  %v123 = vmul.f32 %v90, %v115
  %v124 = vmul.f32 %v93, %v115
  %v125 = vmul.f32 %v96, %v115
  %v126 = vmul.f32 %v99, %v115
  %v127 = vmul.f32 %v102, %v115
  %v128 = vmul.f32 %v105, %v115
  %v129 = vmul.f32 %v108, %v115
  %v130 = vmul.f32 %v111, %v115
  %v131 = vmul.f32 %v114, %v115
  %v132 = vsub.f32 %v48, %v116
  %v133 = vsub.f32 %v49, %v117
  %v134 = vsub.f32 %v50, %v118
  %v135 = vsub.f32 %v51, %v119
  %v136 = vsub.f32 %v52, %v120
  %v137 = vsub.f32 %v53, %v121
  %v138 = vsub.f32 %v54, %v122
  %v139 = vsub.f32 %v55, %v123
  %v140 = vsub.f32 %v56, %v124
  %v141 = vsub.f32 %v57, %v125
  %v142 = vsub.f32 %v58, %v126
  %v143 = vsub.f32 %v59, %v127
  %v144 = vsub.f32 %v60, %v128
  %v145 = vsub.f32 %v61, %v129
  %v146 = vsub.f32 %v62, %v130
  %v147 = vsub.f32 %v63, %v131
  %v148 = vmul.f32 %v132, %v132
  %v149 = vmul.f32 %v133, %v133
  %v150 = vmul.f32 %v134, %v134
  %v151 = vmul.f32 %v135, %v135
  %v152 = vmul.f32 %v136, %v136
  %v153 = vmul.f32 %v137, %v137
  %v154 = vmul.f32 %v138, %v138
  %v155 = vmul.f32 %v139, %v139
  %v156 = vmul.f32 %v140, %v140
  %v157 = vmul.f32 %v141, %v141
  %v158 = vmul.f32 %v142, %v142
  %v159 = vmul.f32 %v143, %v143
  %v160 = vmul.f32 %v144, %v144
  %v161 = vmul.f32 %v145, %v145
  %v162 = vmul.f32 %v146, %v146
  %v163 = vmul.f32 %v147, %v147
  %v164 = vsel %vm66, %v148, 0.0
  %165 = vadd.xlane.f32.xlu0 %v164
  %v166 = vpop.xlane.xlu0 %165
  %v167 = vsel %vm66, %v149, 0.0
  %168 = vadd.xlane.f32.xlu0 %v167
  %v169 = vpop.xlane.xlu0 %168
  %v170 = vsel %vm66, %v150, 0.0
  %171 = vadd.xlane.f32.xlu0 %v170
  %v172 = vpop.xlane.xlu0 %171
  %v173 = vsel %vm66, %v151, 0.0
  %174 = vadd.xlane.f32.xlu0 %v173
  %v175 = vpop.xlane.xlu0 %174
  %v176 = vsel %vm66, %v152, 0.0
  %177 = vadd.xlane.f32.xlu0 %v176
  %v178 = vpop.xlane.xlu0 %177
  %v179 = vsel %vm66, %v153, 0.0
  %180 = vadd.xlane.f32.xlu0 %v179
  %v181 = vpop.xlane.xlu0 %180
  %v182 = vsel %vm66, %v154, 0.0
  %183 = vadd.xlane.f32.xlu0 %v182
  %v184 = vpop.xlane.xlu0 %183
  %v185 = vsel %vm66, %v155, 0.0
  %186 = vadd.xlane.f32.xlu0 %v185
  %v187 = vpop.xlane.xlu0 %186
  %v188 = vsel %vm66, %v156, 0.0
  %189 = vadd.xlane.f32.xlu0 %v188
  %v190 = vpop.xlane.xlu0 %189
  %v191 = vsel %vm66, %v157, 0.0
  %192 = vadd.xlane.f32.xlu0 %v191
  %v193 = vpop.xlane.xlu0 %192
  %v194 = vsel %vm66, %v158, 0.0
  %195 = vadd.xlane.f32.xlu0 %v194
  %v196 = vpop.xlane.xlu0 %195
  %v197 = vsel %vm66, %v159, 0.0
  %198 = vadd.xlane.f32.xlu0 %v197
  %v199 = vpop.xlane.xlu0 %198
  %v200 = vsel %vm66, %v160, 0.0
  %201 = vadd.xlane.f32.xlu0 %v200
  %v202 = vpop.xlane.xlu0 %201
  %v203 = vsel %vm66, %v161, 0.0
  %204 = vadd.xlane.f32.xlu0 %v203
  %v205 = vpop.xlane.xlu0 %204
  %v206 = vsel %vm66, %v162, 0.0
  %207 = vadd.xlane.f32.xlu0 %v206
  %v208 = vpop.xlane.xlu0 %207
  %v209 = vsel %vm66, %v163, 0.0
  %210 = vadd.xlane.f32.xlu0 %v209
  %v211 = vpop.xlane.xlu0 %210
  %v212 = vmul.f32 %v166, %v115
  %v213 = vmul.f32 %v169, %v115
  %v214 = vmul.f32 %v172, %v115
  %v215 = vmul.f32 %v175, %v115
  %v216 = vmul.f32 %v178, %v115
  %v217 = vmul.f32 %v181, %v115
  %v218 = vmul.f32 %v184, %v115
  %v219 = vmul.f32 %v187, %v115
  %v220 = vmul.f32 %v190, %v115
  %v221 = vmul.f32 %v193, %v115
  %v222 = vmul.f32 %v196, %v115
  %v223 = vmul.f32 %v199, %v115
  %v224 = vmul.f32 %v202, %v115
  %v225 = vmul.f32 %v205, %v115
  %v226 = vmul.f32 %v208, %v115
  %v227 = vmul.f32 %v211, %v115
  %v228 = vadd.f32 %v212, 1e-05
  %v229 = vadd.f32 %v213, 1e-05
  %v230 = vadd.f32 %v214, 1e-05
  %v231 = vadd.f32 %v215, 1e-05
  %v232 = vadd.f32 %v216, 1e-05
  %v233 = vadd.f32 %v217, 1e-05
  %v234 = vadd.f32 %v218, 1e-05
  %v235 = vadd.f32 %v219, 1e-05
  %v236 = vadd.f32 %v220, 1e-05
  %v237 = vadd.f32 %v221, 1e-05
  %v238 = vadd.f32 %v222, 1e-05
  %v239 = vadd.f32 %v223, 1e-05
  %v240 = vadd.f32 %v224, 1e-05
  %v241 = vadd.f32 %v225, 1e-05
  %v242 = vadd.f32 %v226, 1e-05
  %v243 = vadd.f32 %v227, 1e-05
  %v244 = vrsqrt.pop %v228
  %v245 = vrsqrt.pop %v229
  %v246 = vrsqrt.pop %v230
  %v247 = vrsqrt.pop %v231
  %v248 = vrsqrt.pop %v232
  %v249 = vrsqrt.pop %v233
  %v250 = vrsqrt.pop %v234
  %v251 = vrsqrt.pop %v235
  %v252 = vrsqrt.pop %v236
  %v253 = vrsqrt.pop %v237
  %v254 = vrsqrt.pop %v238
  %v255 = vrsqrt.pop %v239
  %v256 = vrsqrt.pop %v240
  %v257 = vrsqrt.pop %v241
  %v258 = vrsqrt.pop %v242
  %v259 = vrsqrt.pop %v243
  %v260 = vmul.f32 %v132, %v244
  %v261 = vmul.f32 %v133, %v245
  %v262 = vmul.f32 %v134, %v246
  %v263 = vmul.f32 %v135, %v247
  %v264 = vmul.f32 %v136, %v248
  %v265 = vmul.f32 %v137, %v249
  %v266 = vmul.f32 %v138, %v250
  %v267 = vmul.f32 %v139, %v251
  %v268 = vmul.f32 %v140, %v252
  %v269 = vmul.f32 %v141, %v253
  %v270 = vmul.f32 %v142, %v254
  %v271 = vmul.f32 %v143, %v255
  %v272 = vmul.f32 %v144, %v256
  %v273 = vmul.f32 %v145, %v257
  %v274 = vmul.f32 %v146, %v258
  %v275 = vmul.f32 %v147, %v259
  %v277 = vlaneseq
  %v278 = vshrl.u32 %v277, 7
  %v279 = vsub.s32 0, %v278
  %v280 = vrot.slane %v64, %v279
  %v282 = vmul.f32 %v260, %v280
  %v283 = vmul.f32 %v261, %v280
  %v284 = vmul.f32 %v262, %v280
  %v285 = vmul.f32 %v263, %v280
  %v286 = vmul.f32 %v264, %v280
  %v287 = vmul.f32 %v265, %v280
  %v288 = vmul.f32 %v266, %v280
  %v289 = vmul.f32 %v267, %v280
  %v290 = vmul.f32 %v268, %v280
  %v291 = vmul.f32 %v269, %v280
  %v292 = vmul.f32 %v270, %v280
  %v293 = vmul.f32 %v271, %v280
  %v294 = vmul.f32 %v272, %v280
  %v295 = vmul.f32 %v273, %v280
  %v296 = vmul.f32 %v274, %v280
  %v297 = vmul.f32 %v275, %v280
  %v299 = vlaneseq
  %v300 = vshrl.u32 %v299, 7
  %v301 = vsub.s32 0, %v300
  %v302 = vrot.slane %v65, %v301
  %v304 = vadd.f32 %v282, %v302
  %v305 = vadd.f32 %v283, %v302
  %v306 = vadd.f32 %v284, %v302
  %v307 = vadd.f32 %v285, %v302
  %v308 = vadd.f32 %v286, %v302
  %v309 = vadd.f32 %v287, %v302
  %v310 = vadd.f32 %v288, %v302
  %v311 = vadd.f32 %v289, %v302
  %v312 = vadd.f32 %v290, %v302
  %v313 = vadd.f32 %v291, %v302
  %v314 = vadd.f32 %v292, %v302
  %v315 = vadd.f32 %v293, %v302
  %v316 = vadd.f32 %v294, %v302
  %v317 = vadd.f32 %v295, %v302
  %v318 = vadd.f32 %v296, %v302
  %v319 = vadd.f32 %v297, %v302
  %v320 = vpack.c.bf16 %v305, %v304
  %v321 = vpack.c.bf16 %v307, %v306
  %v322 = vpack.c.bf16 %v309, %v308
  %v323 = vpack.c.bf16 %v311, %v310
  %v324 = vpack.c.bf16 %v313, %v312
  %v325 = vpack.c.bf16 %v315, %v314
  %v326 = vpack.c.bf16 %v317, %v316
  %v327 = vpack.c.bf16 %v319, %v318
  %v328 = vld [vmem:[%s4] sm:$0xf]
  %v329 = vld [vmem:[%s4 + $0x4] sm:$0xf]
  %v330 = vld [vmem:[%s4 + $0x8] sm:$0xf]
  %v331 = vld [vmem:[%s4 + $0xc] sm:$0xf]
  %v332 = vld [vmem:[%s5] sm:$0x1]
  %v334 = vlaneseq
  %v335 = vshrl.u32 %v334, 7
  %v336 = vsub.s32 0, %v335
  %v337 = vrot.slane %v332, %v336
  %v343 = vunpack.c.l.b16 %v328
  %v344 = vunpack.c.l.b16 %v329
  %v345 = vunpack.c.l.b16 %v330
  %v346 = vunpack.c.l.b16 %v331
  %v347 = vpack.c.b16 %v344, %v343
  %v348 = vpack.c.b16 %v346, %v345
  %v352 = vsel %vm66, %v320, 0
  %v355 = vsel %vm66, %v321, 0
  %v358 = vsel %vm66, %v322, 0
  %v361 = vsel %vm66, %v323, 0
  %v364 = vsel %vm66, %v324, 0
  %v367 = vsel %vm66, %v325, 0
  %v370 = vsel %vm66, %v326, 0
  %v373 = vsel %vm66, %v327, 0
  %375 = vmatprep.subr.bf16.mxu0 0
  %376 = vmatpush1.bf16.msra.mxu0 %v347
  %377 = vmatprep.subr.bf16.mxu0 0
  %378 = vmatpush1.bf16.msra.mxu0 %v348
  %379 = vmatprep.subr.bf16.mxu0 0
  %380 = vmatpush1.bf16.msra.mxu0 0
  %381 = vmatprep.subr.bf16.mxu0 0
  %382 = vmatpush1.bf16.msra.mxu0 0
  %383 = vmatprep.subr.bf16.mxu0 0
  %384 = vmatpush1.bf16.msra.mxu0 0
  %385 = vmatprep.subr.bf16.mxu0 0
  %386 = vmatpush1.bf16.msra.mxu0 0
  %387 = vmatprep.subr.bf16.mxu0 0
  %388 = vmatpush1.bf16.msra.mxu0 0
  %389 = vmatprep.subr.bf16.mxu0 0
  %390 = vmatpush1.bf16.msra.mxu0 0
  %391 = vmatprep.subr.bf16.mxu0 0
  %392 = vmatpush1.bf16.msra.mxu0 0
  %393 = vmatprep.subr.bf16.mxu0 0
  %394 = vmatpush1.bf16.msra.mxu0 0
  %395 = vmatprep.subr.bf16.mxu0 0
  %396 = vmatpush1.bf16.msra.mxu0 0
  %397 = vmatprep.subr.bf16.mxu0 0
  %398 = vmatpush1.bf16.msra.mxu0 0
  %399 = vmatprep.subr.bf16.mxu0 0
  %400 = vmatpush1.bf16.msra.mxu0 0
  %401 = vmatprep.subr.bf16.mxu0 0
  %402 = vmatpush1.bf16.msra.mxu0 0
  %403 = vmatprep.subr.bf16.mxu0 0
  %404 = vmatpush1.bf16.msra.mxu0 0
  %405 = vmatprep.subr.bf16.mxu0 0
  %406 = vmatpush1.bf16.msra.mxu0 0
  %407 = vmatprep.mubr.bf16.mxu0 0
  %408 = vmatmul.mubr.bf16.gmra.mrb[0].mxu0 %v352
  %v409 = vpop.f32.mrb[0].mxu0
  %v410 = vadd.f32 %v337, %v409
  %v411 = vpop.f32.mrb[0].mxu0
  %v412 = vpop.f32.mrb[0].mxu0
  %v413 = vadd.f32 %v337, %v412
  %v414 = vpop.f32.mrb[0].mxu0
  %415 = vmatprep.mubr.bf16.mxu0 0
  %416 = vmatmul.mubr.bf16.gmra.mrb[0].mxu0 %v355
  %v417 = vpop.f32.mrb[0].mxu0
  %v418 = vadd.f32 %v337, %v417
  %v419 = vpop.f32.mrb[0].mxu0
  %v420 = vpop.f32.mrb[0].mxu0
  %v421 = vadd.f32 %v337, %v420
  %v422 = vpop.f32.mrb[0].mxu0
  %423 = vmatprep.mubr.bf16.mxu0 0
  %424 = vmatmul.mubr.bf16.gmra.mrb[0].mxu0 %v358
  %v425 = vpop.f32.mrb[0].mxu0
  %v426 = vadd.f32 %v337, %v425
  %v427 = vpop.f32.mrb[0].mxu0
  %v428 = vpop.f32.mrb[0].mxu0
  %v429 = vadd.f32 %v337, %v428
  %v430 = vpop.f32.mrb[0].mxu0
  %431 = vmatprep.mubr.bf16.mxu0 0
  %432 = vmatmul.mubr.bf16.gmra.mrb[0].mxu0 %v361
  %v433 = vpop.f32.mrb[0].mxu0
  %v434 = vadd.f32 %v337, %v433
  %v435 = vpop.f32.mrb[0].mxu0
  %v436 = vpop.f32.mrb[0].mxu0
  %v437 = vadd.f32 %v337, %v436
  %v438 = vpop.f32.mrb[0].mxu0
  %439 = vmatprep.mubr.bf16.mxu0 0
  %440 = vmatmul.mubr.bf16.gmra.mrb[0].mxu0 %v364
  %v441 = vpop.f32.mrb[0].mxu0
  %v442 = vadd.f32 %v337, %v441
  %v443 = vpop.f32.mrb[0].mxu0
  %v444 = vpop.f32.mrb[0].mxu0
  %v445 = vadd.f32 %v337, %v444
  %v446 = vpop.f32.mrb[0].mxu0
  %447 = vmatprep.mubr.bf16.mxu0 0
  %448 = vmatmul.mubr.bf16.gmra.mrb[0].mxu0 %v367
  %v449 = vpop.f32.mrb[0].mxu0
  %v450 = vadd.f32 %v337, %v449
  %v451 = vpop.f32.mrb[0].mxu0
  %v452 = vpop.f32.mrb[0].mxu0
  %v453 = vadd.f32 %v337, %v452
  %v454 = vpop.f32.mrb[0].mxu0
  %455 = vmatprep.mubr.bf16.mxu0 0
  %456 = vmatmul.mubr.bf16.gmra.mrb[0].mxu0 %v370
  %v457 = vpop.f32.mrb[0].mxu0
  %v458 = vadd.f32 %v337, %v457
  %v459 = vpop.f32.mrb[0].mxu0
  %v460 = vpop.f32.mrb[0].mxu0
  %v461 = vadd.f32 %v337, %v460
  %v462 = vpop.f32.mrb[0].mxu0
  %463 = vmatprep.mubr.bf16.mxu0 0
  %464 = vmatmul.mubr.bf16.gmra.mrb[0].mxu0 %v373
  %v465 = vpop.f32.mrb[0].mxu0
  %v466 = vadd.f32 %v337, %v465
  %v467 = vpop.f32.mrb[0].mxu0
  %v468 = vpop.f32.mrb[0].mxu0
  %v469 = vadd.f32 %v337, %v468
  %v470 = vpop.f32.mrb[0].mxu0
  %471 = vdwg.mxu0
  %488 = vrot.lane.b32.xlu0 %v410, 120
  %v489 = vpop.permute.xlu0 %488
  %490 = vrot.lane.b32.xlu0 %v413, 120
  %v491 = vpop.permute.xlu0 %490
  %492 = vrot.lane.b32.xlu0 %v418, 120
  %v493 = vpop.permute.xlu0 %492
  %494 = vrot.lane.b32.xlu0 %v421, 120
  %v495 = vpop.permute.xlu0 %494
  %496 = vrot.lane.b32.xlu0 %v426, 120
  %v497 = vpop.permute.xlu0 %496
  %498 = vrot.lane.b32.xlu0 %v429, 120
  %v499 = vpop.permute.xlu0 %498
  %500 = vrot.lane.b32.xlu0 %v434, 120
  %v501 = vpop.permute.xlu0 %500
  %502 = vrot.lane.b32.xlu0 %v437, 120
  %v503 = vpop.permute.xlu0 %502
  %504 = vrot.lane.b32.xlu0 %v442, 120
  %v505 = vpop.permute.xlu0 %504
  %506 = vrot.lane.b32.xlu0 %v445, 120
  %v507 = vpop.permute.xlu0 %506
  %508 = vrot.lane.b32.xlu0 %v450, 120
  %v509 = vpop.permute.xlu0 %508
  %510 = vrot.lane.b32.xlu0 %v453, 120
  %v511 = vpop.permute.xlu0 %510
  %512 = vrot.lane.b32.xlu0 %v458, 120
  %v513 = vpop.permute.xlu0 %512
  %514 = vrot.lane.b32.xlu0 %v461, 120
  %v515 = vpop.permute.xlu0 %514
  %516 = vrot.lane.b32.xlu0 %v466, 120
  %v517 = vpop.permute.xlu0 %516
  %518 = vrot.lane.b32.xlu0 %v469, 120
  %v519 = vpop.permute.xlu0 %518
  %536 = vrot.lane.b32.xlu0 %v410, 112
  %v537 = vpop.permute.xlu0 %536
  %538 = vrot.lane.b32.xlu0 %v413, 112
  %v539 = vpop.permute.xlu0 %538
  %540 = vrot.lane.b32.xlu0 %v418, 112
  %v541 = vpop.permute.xlu0 %540
  %542 = vrot.lane.b32.xlu0 %v421, 112
  %v543 = vpop.permute.xlu0 %542
  %544 = vrot.lane.b32.xlu0 %v426, 112
  %v545 = vpop.permute.xlu0 %544
  %546 = vrot.lane.b32.xlu0 %v429, 112
  %v547 = vpop.permute.xlu0 %546
  %548 = vrot.lane.b32.xlu0 %v434, 112
  %v549 = vpop.permute.xlu0 %548
  %550 = vrot.lane.b32.xlu0 %v437, 112
  %v551 = vpop.permute.xlu0 %550
  %552 = vrot.lane.b32.xlu0 %v442, 112
  %v553 = vpop.permute.xlu0 %552
  %554 = vrot.lane.b32.xlu0 %v445, 112
  %v555 = vpop.permute.xlu0 %554
  %556 = vrot.lane.b32.xlu0 %v450, 112
  %v557 = vpop.permute.xlu0 %556
  %558 = vrot.lane.b32.xlu0 %v453, 112
  %v559 = vpop.permute.xlu0 %558
  %560 = vrot.lane.b32.xlu0 %v458, 112
  %v561 = vpop.permute.xlu0 %560
  %562 = vrot.lane.b32.xlu0 %v461, 112
  %v563 = vpop.permute.xlu0 %562
  %564 = vrot.lane.b32.xlu0 %v466, 112
  %v565 = vpop.permute.xlu0 %564
  %566 = vrot.lane.b32.xlu0 %v469, 112
  %v567 = vpop.permute.xlu0 %566
  %584 = vrot.lane.b32.xlu0 %v410, 104
  %v585 = vpop.permute.xlu0 %584
  %586 = vrot.lane.b32.xlu0 %v413, 104
  %v587 = vpop.permute.xlu0 %586
  %588 = vrot.lane.b32.xlu0 %v418, 104
  %v589 = vpop.permute.xlu0 %588
  %590 = vrot.lane.b32.xlu0 %v421, 104
  %v591 = vpop.permute.xlu0 %590
  %592 = vrot.lane.b32.xlu0 %v426, 104
  %v593 = vpop.permute.xlu0 %592
  %594 = vrot.lane.b32.xlu0 %v429, 104
  %v595 = vpop.permute.xlu0 %594
  %596 = vrot.lane.b32.xlu0 %v434, 104
  %v597 = vpop.permute.xlu0 %596
  %598 = vrot.lane.b32.xlu0 %v437, 104
  %v599 = vpop.permute.xlu0 %598
  %600 = vrot.lane.b32.xlu0 %v442, 104
  %v601 = vpop.permute.xlu0 %600
  %602 = vrot.lane.b32.xlu0 %v445, 104
  %v603 = vpop.permute.xlu0 %602
  %604 = vrot.lane.b32.xlu0 %v450, 104
  %v605 = vpop.permute.xlu0 %604
  %606 = vrot.lane.b32.xlu0 %v453, 104
  %v607 = vpop.permute.xlu0 %606
  %608 = vrot.lane.b32.xlu0 %v458, 104
  %v609 = vpop.permute.xlu0 %608
  %610 = vrot.lane.b32.xlu0 %v461, 104
  %v611 = vpop.permute.xlu0 %610
  %612 = vrot.lane.b32.xlu0 %v466, 104
  %v613 = vpop.permute.xlu0 %612
  %614 = vrot.lane.b32.xlu0 %v469, 104
  %v615 = vpop.permute.xlu0 %614
  %v632 = vpack.c.bf16 %v413, %v410
  %v633 = vpack.c.bf16 %v421, %v418
  %v634 = vpack.c.bf16 %v429, %v426
  %v635 = vpack.c.bf16 %v437, %v434
  %v636 = vpack.c.bf16 %v445, %v442
  %v637 = vpack.c.bf16 %v453, %v450
  %v638 = vpack.c.bf16 %v461, %v458
  %v639 = vpack.c.bf16 %v469, %v466
  %v640 = vpack.c.bf16 %v491, %v489
  %v641 = vpack.c.bf16 %v495, %v493
  %v642 = vpack.c.bf16 %v499, %v497
  %v643 = vpack.c.bf16 %v503, %v501
  %v644 = vpack.c.bf16 %v507, %v505
  %v645 = vpack.c.bf16 %v511, %v509
  %v646 = vpack.c.bf16 %v515, %v513
  %v647 = vpack.c.bf16 %v519, %v517
  %v648 = vpack.c.bf16 %v539, %v537
  %v649 = vpack.c.bf16 %v543, %v541
  %v650 = vpack.c.bf16 %v547, %v545
  %v651 = vpack.c.bf16 %v551, %v549
  %v652 = vpack.c.bf16 %v555, %v553
  %v653 = vpack.c.bf16 %v559, %v557
  %v654 = vpack.c.bf16 %v563, %v561
  %v655 = vpack.c.bf16 %v567, %v565
  %v656 = vpack.c.bf16 %v587, %v585
  %v657 = vpack.c.bf16 %v591, %v589
  %v658 = vpack.c.bf16 %v595, %v593
  %v659 = vpack.c.bf16 %v599, %v597
  %v660 = vpack.c.bf16 %v603, %v601
  %v661 = vpack.c.bf16 %v607, %v605
  %v662 = vpack.c.bf16 %v611, %v609
  %v663 = vpack.c.bf16 %v615, %v613
  %665 = vrot.lane.b32.xlu0 %v632, 96
  %v666 = vpop.permute.xlu0 %665
  %vm667 = vcmask 64512
  %v669 = vsel %vm667, %v632, 0
  %v672 = vsel %vm667, %v666, 0
  %674 = vmatprep.subr.bf16.mxu0 0
  %675 = vmatpush1.bf16.xpose.msra.mxu0 %v672
  %676 = vmatprep.subr.bf16.mxu0 0
  %677 = vmatpush1.bf16.xpose.msra.mxu0 0
  %678 = vmatprep.subr.bf16.mxu0 0
  %679 = vmatpush1.bf16.xpose.msra.mxu0 0
  %680 = vmatprep.subr.bf16.mxu0 0
  %681 = vmatpush1.bf16.xpose.msra.mxu0 0
  %682 = vmatprep.subr.bf16.mxu0 0
  %683 = vmatpush1.bf16.xpose.msra.mxu0 0
  %684 = vmatprep.subr.bf16.mxu0 0
  %685 = vmatpush1.bf16.xpose.msra.mxu0 0
  %686 = vmatprep.subr.bf16.mxu0 0
  %687 = vmatpush1.bf16.xpose.msra.mxu0 0
  %688 = vmatprep.subr.bf16.mxu0 0
  %689 = vmatpush1.bf16.xpose.msra.mxu0 0
  %690 = vmatprep.subr.bf16.mxu0 0
  %691 = vmatpush1.bf16.xpose.msra.mxu0 0
  %692 = vmatprep.subr.bf16.mxu0 0
  %693 = vmatpush1.bf16.xpose.msra.mxu0 0
  %694 = vmatprep.subr.bf16.mxu0 0
  %695 = vmatpush1.bf16.xpose.msra.mxu0 0
  %696 = vmatprep.subr.bf16.mxu0 0
  %697 = vmatpush1.bf16.xpose.msra.mxu0 0
  %698 = vmatprep.subr.bf16.mxu0 0
  %699 = vmatpush1.bf16.xpose.msra.mxu0 0
  %700 = vmatprep.subr.bf16.mxu0 0
  %701 = vmatpush1.bf16.xpose.msra.mxu0 0
  %702 = vmatprep.subr.bf16.mxu0 0
  %703 = vmatpush1.bf16.xpose.msra.mxu0 0
  %704 = vmatprep.subr.bf16.mxu0 0
  %705 = vmatpush1.bf16.xpose.msra.mxu0 0
  %706 = vmatprep.mubr.bf16.mxu0 0
  %707 = vmatmul.mubr.bf16.gmra.mrb[0].mxu0 %v669
  %v708 = vpop.f32.mrb[0].mxu0
  %v709 = vadd.f32 0.0, %v708
  %v710 = vpop.f32.mrb[0].mxu0
  %v711 = vpop.f32.mrb[0].mxu0
  %v712 = vadd.f32 0.0, %v711
  %v713 = vpop.f32.mrb[0].mxu0
  %714 = vdwg.mxu0
  %716 = vrot.lane.b32.xlu0 %v633, 96
  %v717 = vpop.permute.xlu0 %716
  %v719 = vsel %vm667, %v633, 0
  %v722 = vsel %vm667, %v717, 0
  %724 = vmatprep.subr.bf16.mxu0 0
  %725 = vmatpush1.bf16.xpose.msra.mxu0 %v722
  %726 = vmatprep.subr.bf16.mxu0 0
  %727 = vmatpush1.bf16.xpose.msra.mxu0 0
  %728 = vmatprep.subr.bf16.mxu0 0
  %729 = vmatpush1.bf16.xpose.msra.mxu0 0
  %730 = vmatprep.subr.bf16.mxu0 0
  %731 = vmatpush1.bf16.xpose.msra.mxu0 0
  %732 = vmatprep.subr.bf16.mxu0 0
  %733 = vmatpush1.bf16.xpose.msra.mxu0 0
  %734 = vmatprep.subr.bf16.mxu0 0
  %735 = vmatpush1.bf16.xpose.msra.mxu0 0
  %736 = vmatprep.subr.bf16.mxu0 0
  %737 = vmatpush1.bf16.xpose.msra.mxu0 0
  %738 = vmatprep.subr.bf16.mxu0 0
  %739 = vmatpush1.bf16.xpose.msra.mxu0 0
  %740 = vmatprep.subr.bf16.mxu0 0
  %741 = vmatpush1.bf16.xpose.msra.mxu0 0
  %742 = vmatprep.subr.bf16.mxu0 0
  %743 = vmatpush1.bf16.xpose.msra.mxu0 0
  %744 = vmatprep.subr.bf16.mxu0 0
  %745 = vmatpush1.bf16.xpose.msra.mxu0 0
  %746 = vmatprep.subr.bf16.mxu0 0
  %747 = vmatpush1.bf16.xpose.msra.mxu0 0
  %748 = vmatprep.subr.bf16.mxu0 0
  %749 = vmatpush1.bf16.xpose.msra.mxu0 0
  %750 = vmatprep.subr.bf16.mxu0 0
  %751 = vmatpush1.bf16.xpose.msra.mxu0 0
  %752 = vmatprep.subr.bf16.mxu0 0
  %753 = vmatpush1.bf16.xpose.msra.mxu0 0
  %754 = vmatprep.subr.bf16.mxu0 0
  %755 = vmatpush1.bf16.xpose.msra.mxu0 0
  %756 = vmatprep.mubr.bf16.mxu0 0
  %757 = vmatmul.mubr.bf16.gmra.mrb[0].mxu0 %v719
  %v758 = vpop.f32.mrb[0].mxu0
  %v759 = vadd.f32 0.0, %v758
  %v760 = vpop.f32.mrb[0].mxu0
  %v761 = vpop.f32.mrb[0].mxu0
  %v762 = vadd.f32 0.0, %v761
  %v763 = vpop.f32.mrb[0].mxu0
  %764 = vdwg.mxu0
  %766 = vrot.lane.b32.xlu0 %v634, 96
  %v767 = vpop.permute.xlu0 %766
  %v769 = vsel %vm667, %v634, 0
  %v772 = vsel %vm667, %v767, 0
  %774 = vmatprep.subr.bf16.mxu0 0
  %775 = vmatpush1.bf16.xpose.msra.mxu0 %v772
  %776 = vmatprep.subr.bf16.mxu0 0
  %777 = vmatpush1.bf16.xpose.msra.mxu0 0
  %778 = vmatprep.subr.bf16.mxu0 0
  %779 = vmatpush1.bf16.xpose.msra.mxu0 0
  %780 = vmatprep.subr.bf16.mxu0 0
  %781 = vmatpush1.bf16.xpose.msra.mxu0 0
  %782 = vmatprep.subr.bf16.mxu0 0
  %783 = vmatpush1.bf16.xpose.msra.mxu0 0
  %784 = vmatprep.subr.bf16.mxu0 0
  %785 = vmatpush1.bf16.xpose.msra.mxu0 0
  %786 = vmatprep.subr.bf16.mxu0 0
  %787 = vmatpush1.bf16.xpose.msra.mxu0 0
  %788 = vmatprep.subr.bf16.mxu0 0
  %789 = vmatpush1.bf16.xpose.msra.mxu0 0
  %790 = vmatprep.subr.bf16.mxu0 0
  %791 = vmatpush1.bf16.xpose.msra.mxu0 0
  %792 = vmatprep.subr.bf16.mxu0 0
  %793 = vmatpush1.bf16.xpose.msra.mxu0 0
  %794 = vmatprep.subr.bf16.mxu0 0
  %795 = vmatpush1.bf16.xpose.msra.mxu0 0
  %796 = vmatprep.subr.bf16.mxu0 0
  %797 = vmatpush1.bf16.xpose.msra.mxu0 0
  %798 = vmatprep.subr.bf16.mxu0 0
  %799 = vmatpush1.bf16.xpose.msra.mxu0 0
  %800 = vmatprep.subr.bf16.mxu0 0
  %801 = vmatpush1.bf16.xpose.msra.mxu0 0
  %802 = vmatprep.subr.bf16.mxu0 0
  %803 = vmatpush1.bf16.xpose.msra.mxu0 0
  %804 = vmatprep.subr.bf16.mxu0 0
  %805 = vmatpush1.bf16.xpose.msra.mxu0 0
  %806 = vmatprep.mubr.bf16.mxu0 0
  %807 = vmatmul.mubr.bf16.gmra.mrb[0].mxu0 %v769
  %v808 = vpop.f32.mrb[0].mxu0
  %v809 = vadd.f32 0.0, %v808
  %v810 = vpop.f32.mrb[0].mxu0
  %v811 = vpop.f32.mrb[0].mxu0
  %v812 = vadd.f32 0.0, %v811
  %v813 = vpop.f32.mrb[0].mxu0
  %814 = vdwg.mxu0
  %816 = vrot.lane.b32.xlu0 %v635, 96
  %v817 = vpop.permute.xlu0 %816
  %v819 = vsel %vm667, %v635, 0
  %v822 = vsel %vm667, %v817, 0
  %824 = vmatprep.subr.bf16.mxu0 0
  %825 = vmatpush1.bf16.xpose.msra.mxu0 %v822
  %826 = vmatprep.subr.bf16.mxu0 0
  %827 = vmatpush1.bf16.xpose.msra.mxu0 0
  %828 = vmatprep.subr.bf16.mxu0 0
  %829 = vmatpush1.bf16.xpose.msra.mxu0 0
  %830 = vmatprep.subr.bf16.mxu0 0
  %831 = vmatpush1.bf16.xpose.msra.mxu0 0
  %832 = vmatprep.subr.bf16.mxu0 0
  %833 = vmatpush1.bf16.xpose.msra.mxu0 0
  %834 = vmatprep.subr.bf16.mxu0 0
  %835 = vmatpush1.bf16.xpose.msra.mxu0 0
  %836 = vmatprep.subr.bf16.mxu0 0
  %837 = vmatpush1.bf16.xpose.msra.mxu0 0
  %838 = vmatprep.subr.bf16.mxu0 0
  %839 = vmatpush1.bf16.xpose.msra.mxu0 0
  %840 = vmatprep.subr.bf16.mxu0 0
  %841 = vmatpush1.bf16.xpose.msra.mxu0 0
  %842 = vmatprep.subr.bf16.mxu0 0
  %843 = vmatpush1.bf16.xpose.msra.mxu0 0
  %844 = vmatprep.subr.bf16.mxu0 0
  %845 = vmatpush1.bf16.xpose.msra.mxu0 0
  %846 = vmatprep.subr.bf16.mxu0 0
  %847 = vmatpush1.bf16.xpose.msra.mxu0 0
  %848 = vmatprep.subr.bf16.mxu0 0
  %849 = vmatpush1.bf16.xpose.msra.mxu0 0
  %850 = vmatprep.subr.bf16.mxu0 0
  %851 = vmatpush1.bf16.xpose.msra.mxu0 0
  %852 = vmatprep.subr.bf16.mxu0 0
  %853 = vmatpush1.bf16.xpose.msra.mxu0 0
  %854 = vmatprep.subr.bf16.mxu0 0
  %855 = vmatpush1.bf16.xpose.msra.mxu0 0
  %856 = vmatprep.mubr.bf16.mxu0 0
  %857 = vmatmul.mubr.bf16.gmra.mrb[0].mxu0 %v819
  %v858 = vpop.f32.mrb[0].mxu0
  %v859 = vadd.f32 0.0, %v858
  %v860 = vpop.f32.mrb[0].mxu0
  %v861 = vpop.f32.mrb[0].mxu0
  %v862 = vadd.f32 0.0, %v861
  %v863 = vpop.f32.mrb[0].mxu0
  %864 = vdwg.mxu0
  %866 = vrot.lane.b32.xlu0 %v636, 96
  %v867 = vpop.permute.xlu0 %866
  %v869 = vsel %vm667, %v636, 0
  %v872 = vsel %vm667, %v867, 0
  %874 = vmatprep.subr.bf16.mxu0 0
  %875 = vmatpush1.bf16.xpose.msra.mxu0 %v872
  %876 = vmatprep.subr.bf16.mxu0 0
  %877 = vmatpush1.bf16.xpose.msra.mxu0 0
  %878 = vmatprep.subr.bf16.mxu0 0
  %879 = vmatpush1.bf16.xpose.msra.mxu0 0
  %880 = vmatprep.subr.bf16.mxu0 0
  %881 = vmatpush1.bf16.xpose.msra.mxu0 0
  %882 = vmatprep.subr.bf16.mxu0 0
  %883 = vmatpush1.bf16.xpose.msra.mxu0 0
  %884 = vmatprep.subr.bf16.mxu0 0
  %885 = vmatpush1.bf16.xpose.msra.mxu0 0
  %886 = vmatprep.subr.bf16.mxu0 0
  %887 = vmatpush1.bf16.xpose.msra.mxu0 0
  %888 = vmatprep.subr.bf16.mxu0 0
  %889 = vmatpush1.bf16.xpose.msra.mxu0 0
  %890 = vmatprep.subr.bf16.mxu0 0
  %891 = vmatpush1.bf16.xpose.msra.mxu0 0
  %892 = vmatprep.subr.bf16.mxu0 0
  %893 = vmatpush1.bf16.xpose.msra.mxu0 0
  %894 = vmatprep.subr.bf16.mxu0 0
  %895 = vmatpush1.bf16.xpose.msra.mxu0 0
  %896 = vmatprep.subr.bf16.mxu0 0
  %897 = vmatpush1.bf16.xpose.msra.mxu0 0
  %898 = vmatprep.subr.bf16.mxu0 0
  %899 = vmatpush1.bf16.xpose.msra.mxu0 0
  %900 = vmatprep.subr.bf16.mxu0 0
  %901 = vmatpush1.bf16.xpose.msra.mxu0 0
  %902 = vmatprep.subr.bf16.mxu0 0
  %903 = vmatpush1.bf16.xpose.msra.mxu0 0
  %904 = vmatprep.subr.bf16.mxu0 0
  %905 = vmatpush1.bf16.xpose.msra.mxu0 0
  %906 = vmatprep.mubr.bf16.mxu0 0
  %907 = vmatmul.mubr.bf16.gmra.mrb[0].mxu0 %v869
  %v908 = vpop.f32.mrb[0].mxu0
  %v909 = vadd.f32 0.0, %v908
  %v910 = vpop.f32.mrb[0].mxu0
  %v911 = vpop.f32.mrb[0].mxu0
  %v912 = vadd.f32 0.0, %v911
  %v913 = vpop.f32.mrb[0].mxu0
  %914 = vdwg.mxu0
  %916 = vrot.lane.b32.xlu0 %v637, 96
  %v917 = vpop.permute.xlu0 %916
  %v919 = vsel %vm667, %v637, 0
  %v922 = vsel %vm667, %v917, 0
  %924 = vmatprep.subr.bf16.mxu0 0
  %925 = vmatpush1.bf16.xpose.msra.mxu0 %v922
  %926 = vmatprep.subr.bf16.mxu0 0
  %927 = vmatpush1.bf16.xpose.msra.mxu0 0
  %928 = vmatprep.subr.bf16.mxu0 0
  %929 = vmatpush1.bf16.xpose.msra.mxu0 0
  %930 = vmatprep.subr.bf16.mxu0 0
  %931 = vmatpush1.bf16.xpose.msra.mxu0 0
  %932 = vmatprep.subr.bf16.mxu0 0
  %933 = vmatpush1.bf16.xpose.msra.mxu0 0
  %934 = vmatprep.subr.bf16.mxu0 0
  %935 = vmatpush1.bf16.xpose.msra.mxu0 0
  %936 = vmatprep.subr.bf16.mxu0 0
  %937 = vmatpush1.bf16.xpose.msra.mxu0 0
  %938 = vmatprep.subr.bf16.mxu0 0
  %939 = vmatpush1.bf16.xpose.msra.mxu0 0
  %940 = vmatprep.subr.bf16.mxu0 0
  %941 = vmatpush1.bf16.xpose.msra.mxu0 0
  %942 = vmatprep.subr.bf16.mxu0 0
  %943 = vmatpush1.bf16.xpose.msra.mxu0 0
  %944 = vmatprep.subr.bf16.mxu0 0
  %945 = vmatpush1.bf16.xpose.msra.mxu0 0
  %946 = vmatprep.subr.bf16.mxu0 0
  %947 = vmatpush1.bf16.xpose.msra.mxu0 0
  %948 = vmatprep.subr.bf16.mxu0 0
  %949 = vmatpush1.bf16.xpose.msra.mxu0 0
  %950 = vmatprep.subr.bf16.mxu0 0
  %951 = vmatpush1.bf16.xpose.msra.mxu0 0
  %952 = vmatprep.subr.bf16.mxu0 0
  %953 = vmatpush1.bf16.xpose.msra.mxu0 0
  %954 = vmatprep.subr.bf16.mxu0 0
  %955 = vmatpush1.bf16.xpose.msra.mxu0 0
  %956 = vmatprep.mubr.bf16.mxu0 0
  %957 = vmatmul.mubr.bf16.gmra.mrb[0].mxu0 %v919
  %v958 = vpop.f32.mrb[0].mxu0
  %v959 = vadd.f32 0.0, %v958
  %v960 = vpop.f32.mrb[0].mxu0
  %v961 = vpop.f32.mrb[0].mxu0
  %v962 = vadd.f32 0.0, %v961
  %v963 = vpop.f32.mrb[0].mxu0
  %964 = vdwg.mxu0
  %966 = vrot.lane.b32.xlu0 %v638, 96
  %v967 = vpop.permute.xlu0 %966
  %v969 = vsel %vm667, %v638, 0
  %v972 = vsel %vm667, %v967, 0
  %974 = vmatprep.subr.bf16.mxu0 0
  %975 = vmatpush1.bf16.xpose.msra.mxu0 %v972
  %976 = vmatprep.subr.bf16.mxu0 0
  %977 = vmatpush1.bf16.xpose.msra.mxu0 0
  %978 = vmatprep.subr.bf16.mxu0 0
  %979 = vmatpush1.bf16.xpose.msra.mxu0 0
  %980 = vmatprep.subr.bf16.mxu0 0
  %981 = vmatpush1.bf16.xpose.msra.mxu0 0
  %982 = vmatprep.subr.bf16.mxu0 0
  %983 = vmatpush1.bf16.xpose.msra.mxu0 0
  %984 = vmatprep.subr.bf16.mxu0 0
  %985 = vmatpush1.bf16.xpose.msra.mxu0 0
  %986 = vmatprep.subr.bf16.mxu0 0
  %987 = vmatpush1.bf16.xpose.msra.mxu0 0
  %988 = vmatprep.subr.bf16.mxu0 0
  %989 = vmatpush1.bf16.xpose.msra.mxu0 0
  %990 = vmatprep.subr.bf16.mxu0 0
  %991 = vmatpush1.bf16.xpose.msra.mxu0 0
  %992 = vmatprep.subr.bf16.mxu0 0
  %993 = vmatpush1.bf16.xpose.msra.mxu0 0
  %994 = vmatprep.subr.bf16.mxu0 0
  %995 = vmatpush1.bf16.xpose.msra.mxu0 0
  %996 = vmatprep.subr.bf16.mxu0 0
  %997 = vmatpush1.bf16.xpose.msra.mxu0 0
  %998 = vmatprep.subr.bf16.mxu0 0
  %999 = vmatpush1.bf16.xpose.msra.mxu0 0
  %1000 = vmatprep.subr.bf16.mxu0 0
  %1001 = vmatpush1.bf16.xpose.msra.mxu0 0
  %1002 = vmatprep.subr.bf16.mxu0 0
  %1003 = vmatpush1.bf16.xpose.msra.mxu0 0
  %1004 = vmatprep.subr.bf16.mxu0 0
  %1005 = vmatpush1.bf16.xpose.msra.mxu0 0
  %1006 = vmatprep.mubr.bf16.mxu0 0
  %1007 = vmatmul.mubr.bf16.gmra.mrb[0].mxu0 %v969
  %v1008 = vpop.f32.mrb[0].mxu0
  %v1009 = vadd.f32 0.0, %v1008
  %v1010 = vpop.f32.mrb[0].mxu0
  %v1011 = vpop.f32.mrb[0].mxu0
  %v1012 = vadd.f32 0.0, %v1011
  %v1013 = vpop.f32.mrb[0].mxu0
  %1014 = vdwg.mxu0
  %1016 = vrot.lane.b32.xlu0 %v639, 96
  %v1017 = vpop.permute.xlu0 %1016
  %v1019 = vsel %vm667, %v639, 0
  %v1022 = vsel %vm667, %v1017, 0
  %1024 = vmatprep.subr.bf16.mxu0 0
  %1025 = vmatpush1.bf16.xpose.msra.mxu0 %v1022
  %1026 = vmatprep.subr.bf16.mxu0 0
  %1027 = vmatpush1.bf16.xpose.msra.mxu0 0
  %1028 = vmatprep.subr.bf16.mxu0 0
  %1029 = vmatpush1.bf16.xpose.msra.mxu0 0
  %1030 = vmatprep.subr.bf16.mxu0 0
  %1031 = vmatpush1.bf16.xpose.msra.mxu0 0
  %1032 = vmatprep.subr.bf16.mxu0 0
  %1033 = vmatpush1.bf16.xpose.msra.mxu0 0
  %1034 = vmatprep.subr.bf16.mxu0 0
  %1035 = vmatpush1.bf16.xpose.msra.mxu0 0
  %1036 = vmatprep.subr.bf16.mxu0 0
  %1037 = vmatpush1.bf16.xpose.msra.mxu0 0
  %1038 = vmatprep.subr.bf16.mxu0 0
  %1039 = vmatpush1.bf16.xpose.msra.mxu0 0
  %1040 = vmatprep.subr.bf16.mxu0 0
  %1041 = vmatpush1.bf16.xpose.msra.mxu0 0
  %1042 = vmatprep.subr.bf16.mxu0 0
  %1043 = vmatpush1.bf16.xpose.msra.mxu0 0
  %1044 = vmatprep.subr.bf16.mxu0 0
  %1045 = vmatpush1.bf16.xpose.msra.mxu0 0
  %1046 = vmatprep.subr.bf16.mxu0 0
  %1047 = vmatpush1.bf16.xpose.msra.mxu0 0
  %1048 = vmatprep.subr.bf16.mxu0 0
  %1049 = vmatpush1.bf16.xpose.msra.mxu0 0
  %1050 = vmatprep.subr.bf16.mxu0 0
  %1051 = vmatpush1.bf16.xpose.msra.mxu0 0
  %1052 = vmatprep.subr.bf16.mxu0 0
  %1053 = vmatpush1.bf16.xpose.msra.mxu0 0
  %1054 = vmatprep.subr.bf16.mxu0 0
  %1055 = vmatpush1.bf16.xpose.msra.mxu0 0
  %1056 = vmatprep.mubr.bf16.mxu0 0
  %1057 = vmatmul.mubr.bf16.gmra.mrb[0].mxu0 %v1019
  %v1058 = vpop.f32.mrb[0].mxu0
  %v1059 = vadd.f32 0.0, %v1058
  %v1060 = vpop.f32.mrb[0].mxu0
  %v1061 = vpop.f32.mrb[0].mxu0
  %v1062 = vadd.f32 0.0, %v1061
  %v1063 = vpop.f32.mrb[0].mxu0
  %1064 = vdwg.mxu0
  %1066 = vrot.lane.b32.xlu0 %v640, 96
  %v1067 = vpop.permute.xlu0 %1066
  %v1069 = vsel %vm667, %v640, 0
  %v1072 = vsel %vm667, %v1067, 0
  %1074 = vmatprep.subr.bf16.mxu0 0
  %1075 = vmatpush1.bf16.xpose.msra.mxu0 %v1072
  %1076 = vmatprep.subr.bf16.mxu0 0
  %1077 = vmatpush1.bf16.xpose.msra.mxu0 0
  %1078 = vmatprep.subr.bf16.mxu0 0
  %1079 = vmatpush1.bf16.xpose.msra.mxu0 0
  %1080 = vmatprep.subr.bf16.mxu0 0
  %1081 = vmatpush1.bf16.xpose.msra.mxu0 0
  %1082 = vmatprep.subr.bf16.mxu0 0
  %1083 = vmatpush1.bf16.xpose.msra.mxu0 0
  %1084 = vmatprep.subr.bf16.mxu0 0
  %1085 = vmatpush1.bf16.xpose.msra.mxu0 0
  %1086 = vmatprep.subr.bf16.mxu0 0
  %1087 = vmatpush1.bf16.xpose.msra.mxu0 0
  %1088 = vmatprep.subr.bf16.mxu0 0
  %1089 = vmatpush1.bf16.xpose.msra.mxu0 0
  %1090 = vmatprep.subr.bf16.mxu0 0
  %1091 = vmatpush1.bf16.xpose.msra.mxu0 0
  %1092 = vmatprep.subr.bf16.mxu0 0
  %1093 = vmatpush1.bf16.xpose.msra.mxu0 0
  %1094 = vmatprep.subr.bf16.mxu0 0
  %1095 = vmatpush1.bf16.xpose.msra.mxu0 0
  %1096 = vmatprep.subr.bf16.mxu0 0
  %1097 = vmatpush1.bf16.xpose.msra.mxu0 0
  %1098 = vmatprep.subr.bf16.mxu0 0
  %1099 = vmatpush1.bf16.xpose.msra.mxu0 0
  %1100 = vmatprep.subr.bf16.mxu0 0
  %1101 = vmatpush1.bf16.xpose.msra.mxu0 0
  %1102 = vmatprep.subr.bf16.mxu0 0
  %1103 = vmatpush1.bf16.xpose.msra.mxu0 0
  %1104 = vmatprep.subr.bf16.mxu0 0
  %1105 = vmatpush1.bf16.xpose.msra.mxu0 0
  %1106 = vmatprep.mubr.bf16.mxu0 0
  %1107 = vmatmul.mubr.bf16.gmra.mrb[0].mxu0 %v1069
  %v1108 = vpop.f32.mrb[0].mxu0
  %v1109 = vadd.f32 0.0, %v1108
  %v1110 = vpop.f32.mrb[0].mxu0
  %v1111 = vpop.f32.mrb[0].mxu0
  %v1112 = vadd.f32 0.0, %v1111
  %v1113 = vpop.f32.mrb[0].mxu0
  %1114 = vdwg.mxu0
  %1116 = vrot.lane.b32.xlu0 %v641, 96
  %v1117 = vpop.permute.xlu0 %1116
  %v1119 = vsel %vm667, %v641, 0
  %v1122 = vsel %vm667, %v1117, 0
  %1124 = vmatprep.subr.bf16.mxu0 0
  %1125 = vmatpush1.bf16.xpose.msra.mxu0 %v1122
  %1126 = vmatprep.subr.bf16.mxu0 0
  %1127 = vmatpush1.bf16.xpose.msra.mxu0 0
  %1128 = vmatprep.subr.bf16.mxu0 0
  %1129 = vmatpush1.bf16.xpose.msra.mxu0 0
  %1130 = vmatprep.subr.bf16.mxu0 0
  %1131 = vmatpush1.bf16.xpose.msra.mxu0 0
  %1132 = vmatprep.subr.bf16.mxu0 0
  %1133 = vmatpush1.bf16.xpose.msra.mxu0 0
  %1134 = vmatprep.subr.bf16.mxu0 0
  %1135 = vmatpush1.bf16.xpose.msra.mxu0 0
  %1136 = vmatprep.subr.bf16.mxu0 0
  %1137 = vmatpush1.bf16.xpose.msra.mxu0 0
  %1138 = vmatprep.subr.bf16.mxu0 0
  %1139 = vmatpush1.bf16.xpose.msra.mxu0 0
  %1140 = vmatprep.subr.bf16.mxu0 0
  %1141 = vmatpush1.bf16.xpose.msra.mxu0 0
  %1142 = vmatprep.subr.bf16.mxu0 0
  %1143 = vmatpush1.bf16.xpose.msra.mxu0 0
  %1144 = vmatprep.subr.bf16.mxu0 0
  %1145 = vmatpush1.bf16.xpose.msra.mxu0 0
  %1146 = vmatprep.subr.bf16.mxu0 0
  %1147 = vmatpush1.bf16.xpose.msra.mxu0 0
  %1148 = vmatprep.subr.bf16.mxu0 0
  %1149 = vmatpush1.bf16.xpose.msra.mxu0 0
  %1150 = vmatprep.subr.bf16.mxu0 0
  %1151 = vmatpush1.bf16.xpose.msra.mxu0 0
  %1152 = vmatprep.subr.bf16.mxu0 0
  %1153 = vmatpush1.bf16.xpose.msra.mxu0 0
  %1154 = vmatprep.subr.bf16.mxu0 0
  %1155 = vmatpush1.bf16.xpose.msra.mxu0 0
  %1156 = vmatprep.mubr.bf16.mxu0 0
  %1157 = vmatmul.mubr.bf16.gmra.mrb[0].mxu0 %v1119
  %v1158 = vpop.f32.mrb[0].mxu0
  %v1159 = vadd.f32 0.0, %v1158
  %v1160 = vpop.f32.mrb[0].mxu0
  %v1161 = vpop.f32.mrb[0].mxu0
  %v1162 = vadd.f32 0.0, %v1161
  %v1163 = vpop.f32.mrb[0].mxu0
  %1164 = vdwg.mxu0
  %1166 = vrot.lane.b32.xlu0 %v642, 96
  %v1167 = vpop.permute.xlu0 %1166
  %v1169 = vsel %vm667, %v642, 0
  %v1172 = vsel %vm667, %v1167, 0
  %1174 = vmatprep.subr.bf16.mxu0 0
  %1175 = vmatpush1.bf16.xpose.msra.mxu0 %v1172
  %1176 = vmatprep.subr.bf16.mxu0 0
  %1177 = vmatpush1.bf16.xpose.msra.mxu0 0
  %1178 = vmatprep.subr.bf16.mxu0 0
  %1179 = vmatpush1.bf16.xpose.msra.mxu0 0
  %1180 = vmatprep.subr.bf16.mxu0 0
  %1181 = vmatpush1.bf16.xpose.msra.mxu0 0
  %1182 = vmatprep.subr.bf16.mxu0 0
  %1183 = vmatpush1.bf16.xpose.msra.mxu0 0
  %1184 = vmatprep.subr.bf16.mxu0 0
  %1185 = vmatpush1.bf16.xpose.msra.mxu0 0
  %1186 = vmatprep.subr.bf16.mxu0 0
  %1187 = vmatpush1.bf16.xpose.msra.mxu0 0
  %1188 = vmatprep.subr.bf16.mxu0 0
  %1189 = vmatpush1.bf16.xpose.msra.mxu0 0
  %1190 = vmatprep.subr.bf16.mxu0 0
  %1191 = vmatpush1.bf16.xpose.msra.mxu0 0
  %1192 = vmatprep.subr.bf16.mxu0 0
  %1193 = vmatpush1.bf16.xpose.msra.mxu0 0
  %1194 = vmatprep.subr.bf16.mxu0 0
  %1195 = vmatpush1.bf16.xpose.msra.mxu0 0
  %1196 = vmatprep.subr.bf16.mxu0 0
  %1197 = vmatpush1.bf16.xpose.msra.mxu0 0
  %1198 = vmatprep.subr.bf16.mxu0 0
  %1199 = vmatpush1.bf16.xpose.msra.mxu0 0
  %1200 = vmatprep.subr.bf16.mxu0 0
  %1201 = vmatpush1.bf16.xpose.msra.mxu0 0
  %1202 = vmatprep.subr.bf16.mxu0 0
  %1203 = vmatpush1.bf16.xpose.msra.mxu0 0
  %1204 = vmatprep.subr.bf16.mxu0 0
  %1205 = vmatpush1.bf16.xpose.msra.mxu0 0
  %1206 = vmatprep.mubr.bf16.mxu0 0
  %1207 = vmatmul.mubr.bf16.gmra.mrb[0].mxu0 %v1169
  %v1208 = vpop.f32.mrb[0].mxu0
  %v1209 = vadd.f32 0.0, %v1208
  %v1210 = vpop.f32.mrb[0].mxu0
  %v1211 = vpop.f32.mrb[0].mxu0
  %v1212 = vadd.f32 0.0, %v1211
  %v1213 = vpop.f32.mrb[0].mxu0
  %1214 = vdwg.mxu0
  %1216 = vrot.lane.b32.xlu0 %v643, 96
  %v1217 = vpop.permute.xlu0 %1216
  %v1219 = vsel %vm667, %v643, 0
  %v1222 = vsel %vm667, %v1217, 0
  %1224 = vmatprep.subr.bf16.mxu0 0
  %1225 = vmatpush1.bf16.xpose.msra.mxu0 %v1222
  %1226 = vmatprep.subr.bf16.mxu0 0
  %1227 = vmatpush1.bf16.xpose.msra.mxu0 0
  %1228 = vmatprep.subr.bf16.mxu0 0
  %1229 = vmatpush1.bf16.xpose.msra.mxu0 0
  %1230 = vmatprep.subr.bf16.mxu0 0
  %1231 = vmatpush1.bf16.xpose.msra.mxu0 0
  %1232 = vmatprep.subr.bf16.mxu0 0
  %1233 = vmatpush1.bf16.xpose.msra.mxu0 0
  %1234 = vmatprep.subr.bf16.mxu0 0
  %1235 = vmatpush1.bf16.xpose.msra.mxu0 0
  %1236 = vmatprep.subr.bf16.mxu0 0
  %1237 = vmatpush1.bf16.xpose.msra.mxu0 0
  %1238 = vmatprep.subr.bf16.mxu0 0
  %1239 = vmatpush1.bf16.xpose.msra.mxu0 0
  %1240 = vmatprep.subr.bf16.mxu0 0
  %1241 = vmatpush1.bf16.xpose.msra.mxu0 0
  %1242 = vmatprep.subr.bf16.mxu0 0
  %1243 = vmatpush1.bf16.xpose.msra.mxu0 0
  %1244 = vmatprep.subr.bf16.mxu0 0
  %1245 = vmatpush1.bf16.xpose.msra.mxu0 0
  %1246 = vmatprep.subr.bf16.mxu0 0
  %1247 = vmatpush1.bf16.xpose.msra.mxu0 0
  %1248 = vmatprep.subr.bf16.mxu0 0
  %1249 = vmatpush1.bf16.xpose.msra.mxu0 0
  %1250 = vmatprep.subr.bf16.mxu0 0
  %1251 = vmatpush1.bf16.xpose.msra.mxu0 0
  %1252 = vmatprep.subr.bf16.mxu0 0
  %1253 = vmatpush1.bf16.xpose.msra.mxu0 0
  %1254 = vmatprep.subr.bf16.mxu0 0
  %1255 = vmatpush1.bf16.xpose.msra.mxu0 0
  %1256 = vmatprep.mubr.bf16.mxu0 0
  %1257 = vmatmul.mubr.bf16.gmra.mrb[0].mxu0 %v1219
  %v1258 = vpop.f32.mrb[0].mxu0
  %v1259 = vadd.f32 0.0, %v1258
  %v1260 = vpop.f32.mrb[0].mxu0
  %v1261 = vpop.f32.mrb[0].mxu0
  %v1262 = vadd.f32 0.0, %v1261
  %v1263 = vpop.f32.mrb[0].mxu0
  %1264 = vdwg.mxu0
  %1266 = vrot.lane.b32.xlu0 %v644, 96
  %v1267 = vpop.permute.xlu0 %1266
  %v1269 = vsel %vm667, %v644, 0
  %v1272 = vsel %vm667, %v1267, 0
  %1274 = vmatprep.subr.bf16.mxu0 0
  %1275 = vmatpush1.bf16.xpose.msra.mxu0 %v1272
  %1276 = vmatprep.subr.bf16.mxu0 0
  %1277 = vmatpush1.bf16.xpose.msra.mxu0 0
  %1278 = vmatprep.subr.bf16.mxu0 0
  %1279 = vmatpush1.bf16.xpose.msra.mxu0 0
  %1280 = vmatprep.subr.bf16.mxu0 0
  %1281 = vmatpush1.bf16.xpose.msra.mxu0 0
  %1282 = vmatprep.subr.bf16.mxu0 0
  %1283 = vmatpush1.bf16.xpose.msra.mxu0 0
  %1284 = vmatprep.subr.bf16.mxu0 0
  %1285 = vmatpush1.bf16.xpose.msra.mxu0 0
  %1286 = vmatprep.subr.bf16.mxu0 0
  %1287 = vmatpush1.bf16.xpose.msra.mxu0 0
  %1288 = vmatprep.subr.bf16.mxu0 0
  %1289 = vmatpush1.bf16.xpose.msra.mxu0 0
  %1290 = vmatprep.subr.bf16.mxu0 0
  %1291 = vmatpush1.bf16.xpose.msra.mxu0 0
  %1292 = vmatprep.subr.bf16.mxu0 0
  %1293 = vmatpush1.bf16.xpose.msra.mxu0 0
  %1294 = vmatprep.subr.bf16.mxu0 0
  %1295 = vmatpush1.bf16.xpose.msra.mxu0 0
  %1296 = vmatprep.subr.bf16.mxu0 0
  %1297 = vmatpush1.bf16.xpose.msra.mxu0 0
  %1298 = vmatprep.subr.bf16.mxu0 0
  %1299 = vmatpush1.bf16.xpose.msra.mxu0 0
  %1300 = vmatprep.subr.bf16.mxu0 0
  %1301 = vmatpush1.bf16.xpose.msra.mxu0 0
  %1302 = vmatprep.subr.bf16.mxu0 0
  %1303 = vmatpush1.bf16.xpose.msra.mxu0 0
  %1304 = vmatprep.subr.bf16.mxu0 0
  %1305 = vmatpush1.bf16.xpose.msra.mxu0 0
  %1306 = vmatprep.mubr.bf16.mxu0 0
  %1307 = vmatmul.mubr.bf16.gmra.mrb[0].mxu0 %v1269
  %v1308 = vpop.f32.mrb[0].mxu0
  %v1309 = vadd.f32 0.0, %v1308
  %v1310 = vpop.f32.mrb[0].mxu0
  %v1311 = vpop.f32.mrb[0].mxu0
  %v1312 = vadd.f32 0.0, %v1311
  %v1313 = vpop.f32.mrb[0].mxu0
  %1314 = vdwg.mxu0
  %1316 = vrot.lane.b32.xlu0 %v645, 96
  %v1317 = vpop.permute.xlu0 %1316
  %v1319 = vsel %vm667, %v645, 0
  %v1322 = vsel %vm667, %v1317, 0
  %1324 = vmatprep.subr.bf16.mxu0 0
  %1325 = vmatpush1.bf16.xpose.msra.mxu0 %v1322
  %1326 = vmatprep.subr.bf16.mxu0 0
  %1327 = vmatpush1.bf16.xpose.msra.mxu0 0
  %1328 = vmatprep.subr.bf16.mxu0 0
  %1329 = vmatpush1.bf16.xpose.msra.mxu0 0
  %1330 = vmatprep.subr.bf16.mxu0 0
  %1331 = vmatpush1.bf16.xpose.msra.mxu0 0
  %1332 = vmatprep.subr.bf16.mxu0 0
  %1333 = vmatpush1.bf16.xpose.msra.mxu0 0
  %1334 = vmatprep.subr.bf16.mxu0 0
  %1335 = vmatpush1.bf16.xpose.msra.mxu0 0
  %1336 = vmatprep.subr.bf16.mxu0 0
  %1337 = vmatpush1.bf16.xpose.msra.mxu0 0
  %1338 = vmatprep.subr.bf16.mxu0 0
  %1339 = vmatpush1.bf16.xpose.msra.mxu0 0
  %1340 = vmatprep.subr.bf16.mxu0 0
  %1341 = vmatpush1.bf16.xpose.msra.mxu0 0
  %1342 = vmatprep.subr.bf16.mxu0 0
  %1343 = vmatpush1.bf16.xpose.msra.mxu0 0
  %1344 = vmatprep.subr.bf16.mxu0 0
  %1345 = vmatpush1.bf16.xpose.msra.mxu0 0
  %1346 = vmatprep.subr.bf16.mxu0 0
  %1347 = vmatpush1.bf16.xpose.msra.mxu0 0
  %1348 = vmatprep.subr.bf16.mxu0 0
  %1349 = vmatpush1.bf16.xpose.msra.mxu0 0
  %1350 = vmatprep.subr.bf16.mxu0 0
  %1351 = vmatpush1.bf16.xpose.msra.mxu0 0
  %1352 = vmatprep.subr.bf16.mxu0 0
  %1353 = vmatpush1.bf16.xpose.msra.mxu0 0
  %1354 = vmatprep.subr.bf16.mxu0 0
  %1355 = vmatpush1.bf16.xpose.msra.mxu0 0
  %1356 = vmatprep.mubr.bf16.mxu0 0
  %1357 = vmatmul.mubr.bf16.gmra.mrb[0].mxu0 %v1319
  %v1358 = vpop.f32.mrb[0].mxu0
  %v1359 = vadd.f32 0.0, %v1358
  %v1360 = vpop.f32.mrb[0].mxu0
  %v1361 = vpop.f32.mrb[0].mxu0
  %v1362 = vadd.f32 0.0, %v1361
  %v1363 = vpop.f32.mrb[0].mxu0
  %1364 = vdwg.mxu0
  %1366 = vrot.lane.b32.xlu0 %v646, 96
  %v1367 = vpop.permute.xlu0 %1366
  %v1369 = vsel %vm667, %v646, 0
  %v1372 = vsel %vm667, %v1367, 0
  %1374 = vmatprep.subr.bf16.mxu0 0
  %1375 = vmatpush1.bf16.xpose.msra.mxu0 %v1372
  %1376 = vmatprep.subr.bf16.mxu0 0
  %1377 = vmatpush1.bf16.xpose.msra.mxu0 0
  %1378 = vmatprep.subr.bf16.mxu0 0
  %1379 = vmatpush1.bf16.xpose.msra.mxu0 0
  %1380 = vmatprep.subr.bf16.mxu0 0
  %1381 = vmatpush1.bf16.xpose.msra.mxu0 0
  %1382 = vmatprep.subr.bf16.mxu0 0
  %1383 = vmatpush1.bf16.xpose.msra.mxu0 0
  %1384 = vmatprep.subr.bf16.mxu0 0
  %1385 = vmatpush1.bf16.xpose.msra.mxu0 0
  %1386 = vmatprep.subr.bf16.mxu0 0
  %1387 = vmatpush1.bf16.xpose.msra.mxu0 0
  %1388 = vmatprep.subr.bf16.mxu0 0
  %1389 = vmatpush1.bf16.xpose.msra.mxu0 0
  %1390 = vmatprep.subr.bf16.mxu0 0
  %1391 = vmatpush1.bf16.xpose.msra.mxu0 0
  %1392 = vmatprep.subr.bf16.mxu0 0
  %1393 = vmatpush1.bf16.xpose.msra.mxu0 0
  %1394 = vmatprep.subr.bf16.mxu0 0
  %1395 = vmatpush1.bf16.xpose.msra.mxu0 0
  %1396 = vmatprep.subr.bf16.mxu0 0
  %1397 = vmatpush1.bf16.xpose.msra.mxu0 0
  %1398 = vmatprep.subr.bf16.mxu0 0
  %1399 = vmatpush1.bf16.xpose.msra.mxu0 0
  %1400 = vmatprep.subr.bf16.mxu0 0
  %1401 = vmatpush1.bf16.xpose.msra.mxu0 0
  %1402 = vmatprep.subr.bf16.mxu0 0
  %1403 = vmatpush1.bf16.xpose.msra.mxu0 0
  %1404 = vmatprep.subr.bf16.mxu0 0
  %1405 = vmatpush1.bf16.xpose.msra.mxu0 0
  %1406 = vmatprep.mubr.bf16.mxu0 0
  %1407 = vmatmul.mubr.bf16.gmra.mrb[0].mxu0 %v1369
  %v1408 = vpop.f32.mrb[0].mxu0
  %v1409 = vadd.f32 0.0, %v1408
  %v1410 = vpop.f32.mrb[0].mxu0
  %v1411 = vpop.f32.mrb[0].mxu0
  %v1412 = vadd.f32 0.0, %v1411
  %v1413 = vpop.f32.mrb[0].mxu0
  %1414 = vdwg.mxu0
  %1416 = vrot.lane.b32.xlu0 %v647, 96
  %v1417 = vpop.permute.xlu0 %1416
  %v1419 = vsel %vm667, %v647, 0
  %v1422 = vsel %vm667, %v1417, 0
  %1424 = vmatprep.subr.bf16.mxu0 0
  %1425 = vmatpush1.bf16.xpose.msra.mxu0 %v1422
  %1426 = vmatprep.subr.bf16.mxu0 0
  %1427 = vmatpush1.bf16.xpose.msra.mxu0 0
  %1428 = vmatprep.subr.bf16.mxu0 0
  %1429 = vmatpush1.bf16.xpose.msra.mxu0 0
  %1430 = vmatprep.subr.bf16.mxu0 0
  %1431 = vmatpush1.bf16.xpose.msra.mxu0 0
  %1432 = vmatprep.subr.bf16.mxu0 0
  %1433 = vmatpush1.bf16.xpose.msra.mxu0 0
  %1434 = vmatprep.subr.bf16.mxu0 0
  %1435 = vmatpush1.bf16.xpose.msra.mxu0 0
  %1436 = vmatprep.subr.bf16.mxu0 0
  %1437 = vmatpush1.bf16.xpose.msra.mxu0 0
  %1438 = vmatprep.subr.bf16.mxu0 0
  %1439 = vmatpush1.bf16.xpose.msra.mxu0 0
  %1440 = vmatprep.subr.bf16.mxu0 0
  %1441 = vmatpush1.bf16.xpose.msra.mxu0 0
  %1442 = vmatprep.subr.bf16.mxu0 0
  %1443 = vmatpush1.bf16.xpose.msra.mxu0 0
  %1444 = vmatprep.subr.bf16.mxu0 0
  %1445 = vmatpush1.bf16.xpose.msra.mxu0 0
  %1446 = vmatprep.subr.bf16.mxu0 0
  %1447 = vmatpush1.bf16.xpose.msra.mxu0 0
  %1448 = vmatprep.subr.bf16.mxu0 0
  %1449 = vmatpush1.bf16.xpose.msra.mxu0 0
  %1450 = vmatprep.subr.bf16.mxu0 0
  %1451 = vmatpush1.bf16.xpose.msra.mxu0 0
  %1452 = vmatprep.subr.bf16.mxu0 0
  %1453 = vmatpush1.bf16.xpose.msra.mxu0 0
  %1454 = vmatprep.subr.bf16.mxu0 0
  %1455 = vmatpush1.bf16.xpose.msra.mxu0 0
  %1456 = vmatprep.mubr.bf16.mxu0 0
  %1457 = vmatmul.mubr.bf16.gmra.mrb[0].mxu0 %v1419
  %v1458 = vpop.f32.mrb[0].mxu0
  %v1459 = vadd.f32 0.0, %v1458
  %v1460 = vpop.f32.mrb[0].mxu0
  %v1461 = vpop.f32.mrb[0].mxu0
  %v1462 = vadd.f32 0.0, %v1461
  %v1463 = vpop.f32.mrb[0].mxu0
  %1464 = vdwg.mxu0
  %1466 = vrot.lane.b32.xlu0 %v648, 96
  %v1467 = vpop.permute.xlu0 %1466
  %v1469 = vsel %vm667, %v648, 0
  %v1472 = vsel %vm667, %v1467, 0
  %1474 = vmatprep.subr.bf16.mxu0 0
  %1475 = vmatpush1.bf16.xpose.msra.mxu0 %v1472
  %1476 = vmatprep.subr.bf16.mxu0 0
  %1477 = vmatpush1.bf16.xpose.msra.mxu0 0
  %1478 = vmatprep.subr.bf16.mxu0 0
  %1479 = vmatpush1.bf16.xpose.msra.mxu0 0
  %1480 = vmatprep.subr.bf16.mxu0 0
  %1481 = vmatpush1.bf16.xpose.msra.mxu0 0
  %1482 = vmatprep.subr.bf16.mxu0 0
  %1483 = vmatpush1.bf16.xpose.msra.mxu0 0
  %1484 = vmatprep.subr.bf16.mxu0 0
  %1485 = vmatpush1.bf16.xpose.msra.mxu0 0
  %1486 = vmatprep.subr.bf16.mxu0 0
  %1487 = vmatpush1.bf16.xpose.msra.mxu0 0
  %1488 = vmatprep.subr.bf16.mxu0 0
  %1489 = vmatpush1.bf16.xpose.msra.mxu0 0
  %1490 = vmatprep.subr.bf16.mxu0 0
  %1491 = vmatpush1.bf16.xpose.msra.mxu0 0
  %1492 = vmatprep.subr.bf16.mxu0 0
  %1493 = vmatpush1.bf16.xpose.msra.mxu0 0
  %1494 = vmatprep.subr.bf16.mxu0 0
  %1495 = vmatpush1.bf16.xpose.msra.mxu0 0
  %1496 = vmatprep.subr.bf16.mxu0 0
  %1497 = vmatpush1.bf16.xpose.msra.mxu0 0
  %1498 = vmatprep.subr.bf16.mxu0 0
  %1499 = vmatpush1.bf16.xpose.msra.mxu0 0
  %1500 = vmatprep.subr.bf16.mxu0 0
  %1501 = vmatpush1.bf16.xpose.msra.mxu0 0
  %1502 = vmatprep.subr.bf16.mxu0 0
  %1503 = vmatpush1.bf16.xpose.msra.mxu0 0
  %1504 = vmatprep.subr.bf16.mxu0 0
  %1505 = vmatpush1.bf16.xpose.msra.mxu0 0
  %1506 = vmatprep.mubr.bf16.mxu0 0
  %1507 = vmatmul.mubr.bf16.gmra.mrb[0].mxu0 %v1469
  %v1508 = vpop.f32.mrb[0].mxu0
  %v1509 = vadd.f32 0.0, %v1508
  %v1510 = vpop.f32.mrb[0].mxu0
  %v1511 = vpop.f32.mrb[0].mxu0
  %v1512 = vadd.f32 0.0, %v1511
  %v1513 = vpop.f32.mrb[0].mxu0
  %1514 = vdwg.mxu0
  %1516 = vrot.lane.b32.xlu0 %v649, 96
  %v1517 = vpop.permute.xlu0 %1516
  %v1519 = vsel %vm667, %v649, 0
  %v1522 = vsel %vm667, %v1517, 0
  %1524 = vmatprep.subr.bf16.mxu0 0
  %1525 = vmatpush1.bf16.xpose.msra.mxu0 %v1522
  %1526 = vmatprep.subr.bf16.mxu0 0
  %1527 = vmatpush1.bf16.xpose.msra.mxu0 0
  %1528 = vmatprep.subr.bf16.mxu0 0
  %1529 = vmatpush1.bf16.xpose.msra.mxu0 0
  %1530 = vmatprep.subr.bf16.mxu0 0
  %1531 = vmatpush1.bf16.xpose.msra.mxu0 0
  %1532 = vmatprep.subr.bf16.mxu0 0
  %1533 = vmatpush1.bf16.xpose.msra.mxu0 0
  %1534 = vmatprep.subr.bf16.mxu0 0
  %1535 = vmatpush1.bf16.xpose.msra.mxu0 0
  %1536 = vmatprep.subr.bf16.mxu0 0
  %1537 = vmatpush1.bf16.xpose.msra.mxu0 0
  %1538 = vmatprep.subr.bf16.mxu0 0
  %1539 = vmatpush1.bf16.xpose.msra.mxu0 0
  %1540 = vmatprep.subr.bf16.mxu0 0
  %1541 = vmatpush1.bf16.xpose.msra.mxu0 0
  %1542 = vmatprep.subr.bf16.mxu0 0
  %1543 = vmatpush1.bf16.xpose.msra.mxu0 0
  %1544 = vmatprep.subr.bf16.mxu0 0
  %1545 = vmatpush1.bf16.xpose.msra.mxu0 0
  %1546 = vmatprep.subr.bf16.mxu0 0
  %1547 = vmatpush1.bf16.xpose.msra.mxu0 0
  %1548 = vmatprep.subr.bf16.mxu0 0
  %1549 = vmatpush1.bf16.xpose.msra.mxu0 0
  %1550 = vmatprep.subr.bf16.mxu0 0
  %1551 = vmatpush1.bf16.xpose.msra.mxu0 0
  %1552 = vmatprep.subr.bf16.mxu0 0
  %1553 = vmatpush1.bf16.xpose.msra.mxu0 0
  %1554 = vmatprep.subr.bf16.mxu0 0
  %1555 = vmatpush1.bf16.xpose.msra.mxu0 0
  %1556 = vmatprep.mubr.bf16.mxu0 0
  %1557 = vmatmul.mubr.bf16.gmra.mrb[0].mxu0 %v1519
  %v1558 = vpop.f32.mrb[0].mxu0
  %v1559 = vadd.f32 0.0, %v1558
  %v1560 = vpop.f32.mrb[0].mxu0
  %v1561 = vpop.f32.mrb[0].mxu0
  %v1562 = vadd.f32 0.0, %v1561
  %v1563 = vpop.f32.mrb[0].mxu0
  %1564 = vdwg.mxu0
  %1566 = vrot.lane.b32.xlu0 %v650, 96
  %v1567 = vpop.permute.xlu0 %1566
  %v1569 = vsel %vm667, %v650, 0
  %v1572 = vsel %vm667, %v1567, 0
  %1574 = vmatprep.subr.bf16.mxu0 0
  %1575 = vmatpush1.bf16.xpose.msra.mxu0 %v1572
  %1576 = vmatprep.subr.bf16.mxu0 0
  %1577 = vmatpush1.bf16.xpose.msra.mxu0 0
  %1578 = vmatprep.subr.bf16.mxu0 0
  %1579 = vmatpush1.bf16.xpose.msra.mxu0 0
  %1580 = vmatprep.subr.bf16.mxu0 0
  %1581 = vmatpush1.bf16.xpose.msra.mxu0 0
  %1582 = vmatprep.subr.bf16.mxu0 0
  %1583 = vmatpush1.bf16.xpose.msra.mxu0 0
  %1584 = vmatprep.subr.bf16.mxu0 0
  %1585 = vmatpush1.bf16.xpose.msra.mxu0 0
  %1586 = vmatprep.subr.bf16.mxu0 0
  %1587 = vmatpush1.bf16.xpose.msra.mxu0 0
  %1588 = vmatprep.subr.bf16.mxu0 0
  %1589 = vmatpush1.bf16.xpose.msra.mxu0 0
  %1590 = vmatprep.subr.bf16.mxu0 0
  %1591 = vmatpush1.bf16.xpose.msra.mxu0 0
  %1592 = vmatprep.subr.bf16.mxu0 0
  %1593 = vmatpush1.bf16.xpose.msra.mxu0 0
  %1594 = vmatprep.subr.bf16.mxu0 0
  %1595 = vmatpush1.bf16.xpose.msra.mxu0 0
  %1596 = vmatprep.subr.bf16.mxu0 0
  %1597 = vmatpush1.bf16.xpose.msra.mxu0 0
  %1598 = vmatprep.subr.bf16.mxu0 0
  %1599 = vmatpush1.bf16.xpose.msra.mxu0 0
  %1600 = vmatprep.subr.bf16.mxu0 0
  %1601 = vmatpush1.bf16.xpose.msra.mxu0 0
  %1602 = vmatprep.subr.bf16.mxu0 0
  %1603 = vmatpush1.bf16.xpose.msra.mxu0 0
  %1604 = vmatprep.subr.bf16.mxu0 0
  %1605 = vmatpush1.bf16.xpose.msra.mxu0 0
  %1606 = vmatprep.mubr.bf16.mxu0 0
  %1607 = vmatmul.mubr.bf16.gmra.mrb[0].mxu0 %v1569
  %v1608 = vpop.f32.mrb[0].mxu0
  %v1609 = vadd.f32 0.0, %v1608
  %v1610 = vpop.f32.mrb[0].mxu0
  %v1611 = vpop.f32.mrb[0].mxu0
  %v1612 = vadd.f32 0.0, %v1611
  %v1613 = vpop.f32.mrb[0].mxu0
  %1614 = vdwg.mxu0
  %1616 = vrot.lane.b32.xlu0 %v651, 96
  %v1617 = vpop.permute.xlu0 %1616
  %v1619 = vsel %vm667, %v651, 0
  %v1622 = vsel %vm667, %v1617, 0
  %1624 = vmatprep.subr.bf16.mxu0 0
  %1625 = vmatpush1.bf16.xpose.msra.mxu0 %v1622
  %1626 = vmatprep.subr.bf16.mxu0 0
  %1627 = vmatpush1.bf16.xpose.msra.mxu0 0
  %1628 = vmatprep.subr.bf16.mxu0 0
  %1629 = vmatpush1.bf16.xpose.msra.mxu0 0
  %1630 = vmatprep.subr.bf16.mxu0 0
  %1631 = vmatpush1.bf16.xpose.msra.mxu0 0
  %1632 = vmatprep.subr.bf16.mxu0 0
  %1633 = vmatpush1.bf16.xpose.msra.mxu0 0
  %1634 = vmatprep.subr.bf16.mxu0 0
  %1635 = vmatpush1.bf16.xpose.msra.mxu0 0
  %1636 = vmatprep.subr.bf16.mxu0 0
  %1637 = vmatpush1.bf16.xpose.msra.mxu0 0
  %1638 = vmatprep.subr.bf16.mxu0 0
  %1639 = vmatpush1.bf16.xpose.msra.mxu0 0
  %1640 = vmatprep.subr.bf16.mxu0 0
  %1641 = vmatpush1.bf16.xpose.msra.mxu0 0
  %1642 = vmatprep.subr.bf16.mxu0 0
  %1643 = vmatpush1.bf16.xpose.msra.mxu0 0
  %1644 = vmatprep.subr.bf16.mxu0 0
  %1645 = vmatpush1.bf16.xpose.msra.mxu0 0
  %1646 = vmatprep.subr.bf16.mxu0 0
  %1647 = vmatpush1.bf16.xpose.msra.mxu0 0
  %1648 = vmatprep.subr.bf16.mxu0 0
  %1649 = vmatpush1.bf16.xpose.msra.mxu0 0
  %1650 = vmatprep.subr.bf16.mxu0 0
  %1651 = vmatpush1.bf16.xpose.msra.mxu0 0
  %1652 = vmatprep.subr.bf16.mxu0 0
  %1653 = vmatpush1.bf16.xpose.msra.mxu0 0
  %1654 = vmatprep.subr.bf16.mxu0 0
  %1655 = vmatpush1.bf16.xpose.msra.mxu0 0
  %1656 = vmatprep.mubr.bf16.mxu0 0
  %1657 = vmatmul.mubr.bf16.gmra.mrb[0].mxu0 %v1619
  %v1658 = vpop.f32.mrb[0].mxu0
  %v1659 = vadd.f32 0.0, %v1658
  %v1660 = vpop.f32.mrb[0].mxu0
  %v1661 = vpop.f32.mrb[0].mxu0
  %v1662 = vadd.f32 0.0, %v1661
  %v1663 = vpop.f32.mrb[0].mxu0
  %1664 = vdwg.mxu0
  %1666 = vrot.lane.b32.xlu0 %v652, 96
  %v1667 = vpop.permute.xlu0 %1666
  %v1669 = vsel %vm667, %v652, 0
  %v1672 = vsel %vm667, %v1667, 0
  %1674 = vmatprep.subr.bf16.mxu0 0
  %1675 = vmatpush1.bf16.xpose.msra.mxu0 %v1672
  %1676 = vmatprep.subr.bf16.mxu0 0
  %1677 = vmatpush1.bf16.xpose.msra.mxu0 0
  %1678 = vmatprep.subr.bf16.mxu0 0
  %1679 = vmatpush1.bf16.xpose.msra.mxu0 0
  %1680 = vmatprep.subr.bf16.mxu0 0
  %1681 = vmatpush1.bf16.xpose.msra.mxu0 0
  %1682 = vmatprep.subr.bf16.mxu0 0
  %1683 = vmatpush1.bf16.xpose.msra.mxu0 0
  %1684 = vmatprep.subr.bf16.mxu0 0
  %1685 = vmatpush1.bf16.xpose.msra.mxu0 0
  %1686 = vmatprep.subr.bf16.mxu0 0
  %1687 = vmatpush1.bf16.xpose.msra.mxu0 0
  %1688 = vmatprep.subr.bf16.mxu0 0
  %1689 = vmatpush1.bf16.xpose.msra.mxu0 0
  %1690 = vmatprep.subr.bf16.mxu0 0
  %1691 = vmatpush1.bf16.xpose.msra.mxu0 0
  %1692 = vmatprep.subr.bf16.mxu0 0
  %1693 = vmatpush1.bf16.xpose.msra.mxu0 0
  %1694 = vmatprep.subr.bf16.mxu0 0
  %1695 = vmatpush1.bf16.xpose.msra.mxu0 0
  %1696 = vmatprep.subr.bf16.mxu0 0
  %1697 = vmatpush1.bf16.xpose.msra.mxu0 0
  %1698 = vmatprep.subr.bf16.mxu0 0
  %1699 = vmatpush1.bf16.xpose.msra.mxu0 0
  %1700 = vmatprep.subr.bf16.mxu0 0
  %1701 = vmatpush1.bf16.xpose.msra.mxu0 0
  %1702 = vmatprep.subr.bf16.mxu0 0
  %1703 = vmatpush1.bf16.xpose.msra.mxu0 0
  %1704 = vmatprep.subr.bf16.mxu0 0
  %1705 = vmatpush1.bf16.xpose.msra.mxu0 0
  %1706 = vmatprep.mubr.bf16.mxu0 0
  %1707 = vmatmul.mubr.bf16.gmra.mrb[0].mxu0 %v1669
  %v1708 = vpop.f32.mrb[0].mxu0
  %v1709 = vadd.f32 0.0, %v1708
  %v1710 = vpop.f32.mrb[0].mxu0
  %v1711 = vpop.f32.mrb[0].mxu0
  %v1712 = vadd.f32 0.0, %v1711
  %v1713 = vpop.f32.mrb[0].mxu0
  %1714 = vdwg.mxu0
  %1716 = vrot.lane.b32.xlu0 %v653, 96
  %v1717 = vpop.permute.xlu0 %1716
  %v1719 = vsel %vm667, %v653, 0
  %v1722 = vsel %vm667, %v1717, 0
  %1724 = vmatprep.subr.bf16.mxu0 0
  %1725 = vmatpush1.bf16.xpose.msra.mxu0 %v1722
  %1726 = vmatprep.subr.bf16.mxu0 0
  %1727 = vmatpush1.bf16.xpose.msra.mxu0 0
  %1728 = vmatprep.subr.bf16.mxu0 0
  %1729 = vmatpush1.bf16.xpose.msra.mxu0 0
  %1730 = vmatprep.subr.bf16.mxu0 0
  %1731 = vmatpush1.bf16.xpose.msra.mxu0 0
  %1732 = vmatprep.subr.bf16.mxu0 0
  %1733 = vmatpush1.bf16.xpose.msra.mxu0 0
  %1734 = vmatprep.subr.bf16.mxu0 0
  %1735 = vmatpush1.bf16.xpose.msra.mxu0 0
  %1736 = vmatprep.subr.bf16.mxu0 0
  %1737 = vmatpush1.bf16.xpose.msra.mxu0 0
  %1738 = vmatprep.subr.bf16.mxu0 0
  %1739 = vmatpush1.bf16.xpose.msra.mxu0 0
  %1740 = vmatprep.subr.bf16.mxu0 0
  %1741 = vmatpush1.bf16.xpose.msra.mxu0 0
  %1742 = vmatprep.subr.bf16.mxu0 0
  %1743 = vmatpush1.bf16.xpose.msra.mxu0 0
  %1744 = vmatprep.subr.bf16.mxu0 0
  %1745 = vmatpush1.bf16.xpose.msra.mxu0 0
  %1746 = vmatprep.subr.bf16.mxu0 0
  %1747 = vmatpush1.bf16.xpose.msra.mxu0 0
  %1748 = vmatprep.subr.bf16.mxu0 0
  %1749 = vmatpush1.bf16.xpose.msra.mxu0 0
  %1750 = vmatprep.subr.bf16.mxu0 0
  %1751 = vmatpush1.bf16.xpose.msra.mxu0 0
  %1752 = vmatprep.subr.bf16.mxu0 0
  %1753 = vmatpush1.bf16.xpose.msra.mxu0 0
  %1754 = vmatprep.subr.bf16.mxu0 0
  %1755 = vmatpush1.bf16.xpose.msra.mxu0 0
  %1756 = vmatprep.mubr.bf16.mxu0 0
  %1757 = vmatmul.mubr.bf16.gmra.mrb[0].mxu0 %v1719
  %v1758 = vpop.f32.mrb[0].mxu0
  %v1759 = vadd.f32 0.0, %v1758
  %v1760 = vpop.f32.mrb[0].mxu0
  %v1761 = vpop.f32.mrb[0].mxu0
  %v1762 = vadd.f32 0.0, %v1761
  %v1763 = vpop.f32.mrb[0].mxu0
  %1764 = vdwg.mxu0
  %1766 = vrot.lane.b32.xlu0 %v654, 96
  %v1767 = vpop.permute.xlu0 %1766
  %v1769 = vsel %vm667, %v654, 0
  %v1772 = vsel %vm667, %v1767, 0
  %1774 = vmatprep.subr.bf16.mxu0 0
  %1775 = vmatpush1.bf16.xpose.msra.mxu0 %v1772
  %1776 = vmatprep.subr.bf16.mxu0 0
  %1777 = vmatpush1.bf16.xpose.msra.mxu0 0
  %1778 = vmatprep.subr.bf16.mxu0 0
  %1779 = vmatpush1.bf16.xpose.msra.mxu0 0
  %1780 = vmatprep.subr.bf16.mxu0 0
  %1781 = vmatpush1.bf16.xpose.msra.mxu0 0
  %1782 = vmatprep.subr.bf16.mxu0 0
  %1783 = vmatpush1.bf16.xpose.msra.mxu0 0
  %1784 = vmatprep.subr.bf16.mxu0 0
  %1785 = vmatpush1.bf16.xpose.msra.mxu0 0
  %1786 = vmatprep.subr.bf16.mxu0 0
  %1787 = vmatpush1.bf16.xpose.msra.mxu0 0
  %1788 = vmatprep.subr.bf16.mxu0 0
  %1789 = vmatpush1.bf16.xpose.msra.mxu0 0
  %1790 = vmatprep.subr.bf16.mxu0 0
  %1791 = vmatpush1.bf16.xpose.msra.mxu0 0
  %1792 = vmatprep.subr.bf16.mxu0 0
  %1793 = vmatpush1.bf16.xpose.msra.mxu0 0
  %1794 = vmatprep.subr.bf16.mxu0 0
  %1795 = vmatpush1.bf16.xpose.msra.mxu0 0
  %1796 = vmatprep.subr.bf16.mxu0 0
  %1797 = vmatpush1.bf16.xpose.msra.mxu0 0
  %1798 = vmatprep.subr.bf16.mxu0 0
  %1799 = vmatpush1.bf16.xpose.msra.mxu0 0
  %1800 = vmatprep.subr.bf16.mxu0 0
  %1801 = vmatpush1.bf16.xpose.msra.mxu0 0
  %1802 = vmatprep.subr.bf16.mxu0 0
  %1803 = vmatpush1.bf16.xpose.msra.mxu0 0
  %1804 = vmatprep.subr.bf16.mxu0 0
  %1805 = vmatpush1.bf16.xpose.msra.mxu0 0
  %1806 = vmatprep.mubr.bf16.mxu0 0
  %1807 = vmatmul.mubr.bf16.gmra.mrb[0].mxu0 %v1769
  %v1808 = vpop.f32.mrb[0].mxu0
  %v1809 = vadd.f32 0.0, %v1808
  %v1810 = vpop.f32.mrb[0].mxu0
  %v1811 = vpop.f32.mrb[0].mxu0
  %v1812 = vadd.f32 0.0, %v1811
  %v1813 = vpop.f32.mrb[0].mxu0
  %1814 = vdwg.mxu0
  %1816 = vrot.lane.b32.xlu0 %v655, 96
  %v1817 = vpop.permute.xlu0 %1816
  %v1819 = vsel %vm667, %v655, 0
  %v1822 = vsel %vm667, %v1817, 0
  %1824 = vmatprep.subr.bf16.mxu0 0
  %1825 = vmatpush1.bf16.xpose.msra.mxu0 %v1822
  %1826 = vmatprep.subr.bf16.mxu0 0
  %1827 = vmatpush1.bf16.xpose.msra.mxu0 0
  %1828 = vmatprep.subr.bf16.mxu0 0
  %1829 = vmatpush1.bf16.xpose.msra.mxu0 0
  %1830 = vmatprep.subr.bf16.mxu0 0
  %1831 = vmatpush1.bf16.xpose.msra.mxu0 0
  %1832 = vmatprep.subr.bf16.mxu0 0
  %1833 = vmatpush1.bf16.xpose.msra.mxu0 0
  %1834 = vmatprep.subr.bf16.mxu0 0
  %1835 = vmatpush1.bf16.xpose.msra.mxu0 0
  %1836 = vmatprep.subr.bf16.mxu0 0
  %1837 = vmatpush1.bf16.xpose.msra.mxu0 0
  %1838 = vmatprep.subr.bf16.mxu0 0
  %1839 = vmatpush1.bf16.xpose.msra.mxu0 0
  %1840 = vmatprep.subr.bf16.mxu0 0
  %1841 = vmatpush1.bf16.xpose.msra.mxu0 0
  %1842 = vmatprep.subr.bf16.mxu0 0
  %1843 = vmatpush1.bf16.xpose.msra.mxu0 0
  %1844 = vmatprep.subr.bf16.mxu0 0
  %1845 = vmatpush1.bf16.xpose.msra.mxu0 0
  %1846 = vmatprep.subr.bf16.mxu0 0
  %1847 = vmatpush1.bf16.xpose.msra.mxu0 0
  %1848 = vmatprep.subr.bf16.mxu0 0
  %1849 = vmatpush1.bf16.xpose.msra.mxu0 0
  %1850 = vmatprep.subr.bf16.mxu0 0
  %1851 = vmatpush1.bf16.xpose.msra.mxu0 0
  %1852 = vmatprep.subr.bf16.mxu0 0
  %1853 = vmatpush1.bf16.xpose.msra.mxu0 0
  %1854 = vmatprep.subr.bf16.mxu0 0
  %1855 = vmatpush1.bf16.xpose.msra.mxu0 0
  %1856 = vmatprep.mubr.bf16.mxu0 0
  %1857 = vmatmul.mubr.bf16.gmra.mrb[0].mxu0 %v1819
  %v1858 = vpop.f32.mrb[0].mxu0
  %v1859 = vadd.f32 0.0, %v1858
  %v1860 = vpop.f32.mrb[0].mxu0
  %v1861 = vpop.f32.mrb[0].mxu0
  %v1862 = vadd.f32 0.0, %v1861
  %v1863 = vpop.f32.mrb[0].mxu0
  %1864 = vdwg.mxu0
  %1866 = vrot.lane.b32.xlu0 %v656, 96
  %v1867 = vpop.permute.xlu0 %1866
  %v1869 = vsel %vm667, %v656, 0
  %v1872 = vsel %vm667, %v1867, 0
  %1874 = vmatprep.subr.bf16.mxu0 0
  %1875 = vmatpush1.bf16.xpose.msra.mxu0 %v1872
  %1876 = vmatprep.subr.bf16.mxu0 0
  %1877 = vmatpush1.bf16.xpose.msra.mxu0 0
  %1878 = vmatprep.subr.bf16.mxu0 0
  %1879 = vmatpush1.bf16.xpose.msra.mxu0 0
  %1880 = vmatprep.subr.bf16.mxu0 0
  %1881 = vmatpush1.bf16.xpose.msra.mxu0 0
  %1882 = vmatprep.subr.bf16.mxu0 0
  %1883 = vmatpush1.bf16.xpose.msra.mxu0 0
  %1884 = vmatprep.subr.bf16.mxu0 0
  %1885 = vmatpush1.bf16.xpose.msra.mxu0 0
  %1886 = vmatprep.subr.bf16.mxu0 0
  %1887 = vmatpush1.bf16.xpose.msra.mxu0 0
  %1888 = vmatprep.subr.bf16.mxu0 0
  %1889 = vmatpush1.bf16.xpose.msra.mxu0 0
  %1890 = vmatprep.subr.bf16.mxu0 0
  %1891 = vmatpush1.bf16.xpose.msra.mxu0 0
  %1892 = vmatprep.subr.bf16.mxu0 0
  %1893 = vmatpush1.bf16.xpose.msra.mxu0 0
  %1894 = vmatprep.subr.bf16.mxu0 0
  %1895 = vmatpush1.bf16.xpose.msra.mxu0 0
  %1896 = vmatprep.subr.bf16.mxu0 0
  %1897 = vmatpush1.bf16.xpose.msra.mxu0 0
  %1898 = vmatprep.subr.bf16.mxu0 0
  %1899 = vmatpush1.bf16.xpose.msra.mxu0 0
  %1900 = vmatprep.subr.bf16.mxu0 0
  %1901 = vmatpush1.bf16.xpose.msra.mxu0 0
  %1902 = vmatprep.subr.bf16.mxu0 0
  %1903 = vmatpush1.bf16.xpose.msra.mxu0 0
  %1904 = vmatprep.subr.bf16.mxu0 0
  %1905 = vmatpush1.bf16.xpose.msra.mxu0 0
  %1906 = vmatprep.mubr.bf16.mxu0 0
  %1907 = vmatmul.mubr.bf16.gmra.mrb[0].mxu0 %v1869
  %v1908 = vpop.f32.mrb[0].mxu0
  %v1909 = vadd.f32 0.0, %v1908
  %v1910 = vpop.f32.mrb[0].mxu0
  %v1911 = vpop.f32.mrb[0].mxu0
  %v1912 = vadd.f32 0.0, %v1911
  %v1913 = vpop.f32.mrb[0].mxu0
  %1914 = vdwg.mxu0
  %1916 = vrot.lane.b32.xlu0 %v657, 96
  %v1917 = vpop.permute.xlu0 %1916
  %v1919 = vsel %vm667, %v657, 0
  %v1922 = vsel %vm667, %v1917, 0
  %1924 = vmatprep.subr.bf16.mxu0 0
  %1925 = vmatpush1.bf16.xpose.msra.mxu0 %v1922
  %1926 = vmatprep.subr.bf16.mxu0 0
  %1927 = vmatpush1.bf16.xpose.msra.mxu0 0
  %1928 = vmatprep.subr.bf16.mxu0 0
  %1929 = vmatpush1.bf16.xpose.msra.mxu0 0
  %1930 = vmatprep.subr.bf16.mxu0 0
  %1931 = vmatpush1.bf16.xpose.msra.mxu0 0
  %1932 = vmatprep.subr.bf16.mxu0 0
  %1933 = vmatpush1.bf16.xpose.msra.mxu0 0
  %1934 = vmatprep.subr.bf16.mxu0 0
  %1935 = vmatpush1.bf16.xpose.msra.mxu0 0
  %1936 = vmatprep.subr.bf16.mxu0 0
  %1937 = vmatpush1.bf16.xpose.msra.mxu0 0
  %1938 = vmatprep.subr.bf16.mxu0 0
  %1939 = vmatpush1.bf16.xpose.msra.mxu0 0
  %1940 = vmatprep.subr.bf16.mxu0 0
  %1941 = vmatpush1.bf16.xpose.msra.mxu0 0
  %1942 = vmatprep.subr.bf16.mxu0 0
  %1943 = vmatpush1.bf16.xpose.msra.mxu0 0
  %1944 = vmatprep.subr.bf16.mxu0 0
  %1945 = vmatpush1.bf16.xpose.msra.mxu0 0
  %1946 = vmatprep.subr.bf16.mxu0 0
  %1947 = vmatpush1.bf16.xpose.msra.mxu0 0
  %1948 = vmatprep.subr.bf16.mxu0 0
  %1949 = vmatpush1.bf16.xpose.msra.mxu0 0
  %1950 = vmatprep.subr.bf16.mxu0 0
  %1951 = vmatpush1.bf16.xpose.msra.mxu0 0
  %1952 = vmatprep.subr.bf16.mxu0 0
  %1953 = vmatpush1.bf16.xpose.msra.mxu0 0
  %1954 = vmatprep.subr.bf16.mxu0 0
  %1955 = vmatpush1.bf16.xpose.msra.mxu0 0
  %1956 = vmatprep.mubr.bf16.mxu0 0
  %1957 = vmatmul.mubr.bf16.gmra.mrb[0].mxu0 %v1919
  %v1958 = vpop.f32.mrb[0].mxu0
  %v1959 = vadd.f32 0.0, %v1958
  %v1960 = vpop.f32.mrb[0].mxu0
  %v1961 = vpop.f32.mrb[0].mxu0
  %v1962 = vadd.f32 0.0, %v1961
  %v1963 = vpop.f32.mrb[0].mxu0
  %1964 = vdwg.mxu0
  %1966 = vrot.lane.b32.xlu0 %v658, 96
  %v1967 = vpop.permute.xlu0 %1966
  %v1969 = vsel %vm667, %v658, 0
  %v1972 = vsel %vm667, %v1967, 0
  %1974 = vmatprep.subr.bf16.mxu0 0
  %1975 = vmatpush1.bf16.xpose.msra.mxu0 %v1972
  %1976 = vmatprep.subr.bf16.mxu0 0
  %1977 = vmatpush1.bf16.xpose.msra.mxu0 0
  %1978 = vmatprep.subr.bf16.mxu0 0
  %1979 = vmatpush1.bf16.xpose.msra.mxu0 0
  %1980 = vmatprep.subr.bf16.mxu0 0
  %1981 = vmatpush1.bf16.xpose.msra.mxu0 0
  %1982 = vmatprep.subr.bf16.mxu0 0
  %1983 = vmatpush1.bf16.xpose.msra.mxu0 0
  %1984 = vmatprep.subr.bf16.mxu0 0
  %1985 = vmatpush1.bf16.xpose.msra.mxu0 0
  %1986 = vmatprep.subr.bf16.mxu0 0
  %1987 = vmatpush1.bf16.xpose.msra.mxu0 0
  %1988 = vmatprep.subr.bf16.mxu0 0
  %1989 = vmatpush1.bf16.xpose.msra.mxu0 0
  %1990 = vmatprep.subr.bf16.mxu0 0
  %1991 = vmatpush1.bf16.xpose.msra.mxu0 0
  %1992 = vmatprep.subr.bf16.mxu0 0
  %1993 = vmatpush1.bf16.xpose.msra.mxu0 0
  %1994 = vmatprep.subr.bf16.mxu0 0
  %1995 = vmatpush1.bf16.xpose.msra.mxu0 0
  %1996 = vmatprep.subr.bf16.mxu0 0
  %1997 = vmatpush1.bf16.xpose.msra.mxu0 0
  %1998 = vmatprep.subr.bf16.mxu0 0
  %1999 = vmatpush1.bf16.xpose.msra.mxu0 0
  %2000 = vmatprep.subr.bf16.mxu0 0
  %2001 = vmatpush1.bf16.xpose.msra.mxu0 0
  %2002 = vmatprep.subr.bf16.mxu0 0
  %2003 = vmatpush1.bf16.xpose.msra.mxu0 0
  %2004 = vmatprep.subr.bf16.mxu0 0
  %2005 = vmatpush1.bf16.xpose.msra.mxu0 0
  %2006 = vmatprep.mubr.bf16.mxu0 0
  %2007 = vmatmul.mubr.bf16.gmra.mrb[0].mxu0 %v1969
  %v2008 = vpop.f32.mrb[0].mxu0
  %v2009 = vadd.f32 0.0, %v2008
  %v2010 = vpop.f32.mrb[0].mxu0
  %v2011 = vpop.f32.mrb[0].mxu0
  %v2012 = vadd.f32 0.0, %v2011
  %v2013 = vpop.f32.mrb[0].mxu0
  %2014 = vdwg.mxu0
  %2016 = vrot.lane.b32.xlu0 %v659, 96
  %v2017 = vpop.permute.xlu0 %2016
  %v2019 = vsel %vm667, %v659, 0
  %v2022 = vsel %vm667, %v2017, 0
  %2024 = vmatprep.subr.bf16.mxu0 0
  %2025 = vmatpush1.bf16.xpose.msra.mxu0 %v2022
  %2026 = vmatprep.subr.bf16.mxu0 0
  %2027 = vmatpush1.bf16.xpose.msra.mxu0 0
  %2028 = vmatprep.subr.bf16.mxu0 0
  %2029 = vmatpush1.bf16.xpose.msra.mxu0 0
  %2030 = vmatprep.subr.bf16.mxu0 0
  %2031 = vmatpush1.bf16.xpose.msra.mxu0 0
  %2032 = vmatprep.subr.bf16.mxu0 0
  %2033 = vmatpush1.bf16.xpose.msra.mxu0 0
  %2034 = vmatprep.subr.bf16.mxu0 0
  %2035 = vmatpush1.bf16.xpose.msra.mxu0 0
  %2036 = vmatprep.subr.bf16.mxu0 0
  %2037 = vmatpush1.bf16.xpose.msra.mxu0 0
  %2038 = vmatprep.subr.bf16.mxu0 0
  %2039 = vmatpush1.bf16.xpose.msra.mxu0 0
  %2040 = vmatprep.subr.bf16.mxu0 0
  %2041 = vmatpush1.bf16.xpose.msra.mxu0 0
  %2042 = vmatprep.subr.bf16.mxu0 0
  %2043 = vmatpush1.bf16.xpose.msra.mxu0 0
  %2044 = vmatprep.subr.bf16.mxu0 0
  %2045 = vmatpush1.bf16.xpose.msra.mxu0 0
  %2046 = vmatprep.subr.bf16.mxu0 0
  %2047 = vmatpush1.bf16.xpose.msra.mxu0 0
  %2048 = vmatprep.subr.bf16.mxu0 0
  %2049 = vmatpush1.bf16.xpose.msra.mxu0 0
  %2050 = vmatprep.subr.bf16.mxu0 0
  %2051 = vmatpush1.bf16.xpose.msra.mxu0 0
  %2052 = vmatprep.subr.bf16.mxu0 0
  %2053 = vmatpush1.bf16.xpose.msra.mxu0 0
  %2054 = vmatprep.subr.bf16.mxu0 0
  %2055 = vmatpush1.bf16.xpose.msra.mxu0 0
  %2056 = vmatprep.mubr.bf16.mxu0 0
  %2057 = vmatmul.mubr.bf16.gmra.mrb[0].mxu0 %v2019
  %v2058 = vpop.f32.mrb[0].mxu0
  %v2059 = vadd.f32 0.0, %v2058
  %v2060 = vpop.f32.mrb[0].mxu0
  %v2061 = vpop.f32.mrb[0].mxu0
  %v2062 = vadd.f32 0.0, %v2061
  %v2063 = vpop.f32.mrb[0].mxu0
  %2064 = vdwg.mxu0
  %2066 = vrot.lane.b32.xlu0 %v660, 96
  %v2067 = vpop.permute.xlu0 %2066
  %v2069 = vsel %vm667, %v660, 0
  %v2072 = vsel %vm667, %v2067, 0
  %2074 = vmatprep.subr.bf16.mxu0 0
  %2075 = vmatpush1.bf16.xpose.msra.mxu0 %v2072
  %2076 = vmatprep.subr.bf16.mxu0 0
  %2077 = vmatpush1.bf16.xpose.msra.mxu0 0
  %2078 = vmatprep.subr.bf16.mxu0 0
  %2079 = vmatpush1.bf16.xpose.msra.mxu0 0
  %2080 = vmatprep.subr.bf16.mxu0 0
  %2081 = vmatpush1.bf16.xpose.msra.mxu0 0
  %2082 = vmatprep.subr.bf16.mxu0 0
  %2083 = vmatpush1.bf16.xpose.msra.mxu0 0
  %2084 = vmatprep.subr.bf16.mxu0 0
  %2085 = vmatpush1.bf16.xpose.msra.mxu0 0
  %2086 = vmatprep.subr.bf16.mxu0 0
  %2087 = vmatpush1.bf16.xpose.msra.mxu0 0
  %2088 = vmatprep.subr.bf16.mxu0 0
  %2089 = vmatpush1.bf16.xpose.msra.mxu0 0
  %2090 = vmatprep.subr.bf16.mxu0 0
  %2091 = vmatpush1.bf16.xpose.msra.mxu0 0
  %2092 = vmatprep.subr.bf16.mxu0 0
  %2093 = vmatpush1.bf16.xpose.msra.mxu0 0
  %2094 = vmatprep.subr.bf16.mxu0 0
  %2095 = vmatpush1.bf16.xpose.msra.mxu0 0
  %2096 = vmatprep.subr.bf16.mxu0 0
  %2097 = vmatpush1.bf16.xpose.msra.mxu0 0
  %2098 = vmatprep.subr.bf16.mxu0 0
  %2099 = vmatpush1.bf16.xpose.msra.mxu0 0
  %2100 = vmatprep.subr.bf16.mxu0 0
  %2101 = vmatpush1.bf16.xpose.msra.mxu0 0
  %2102 = vmatprep.subr.bf16.mxu0 0
  %2103 = vmatpush1.bf16.xpose.msra.mxu0 0
  %2104 = vmatprep.subr.bf16.mxu0 0
  %2105 = vmatpush1.bf16.xpose.msra.mxu0 0
  %2106 = vmatprep.mubr.bf16.mxu0 0
  %2107 = vmatmul.mubr.bf16.gmra.mrb[0].mxu0 %v2069
  %v2108 = vpop.f32.mrb[0].mxu0
  %v2109 = vadd.f32 0.0, %v2108
  %v2110 = vpop.f32.mrb[0].mxu0
  %v2111 = vpop.f32.mrb[0].mxu0
  %v2112 = vadd.f32 0.0, %v2111
  %v2113 = vpop.f32.mrb[0].mxu0
  %2114 = vdwg.mxu0
  %2116 = vrot.lane.b32.xlu0 %v661, 96
  %v2117 = vpop.permute.xlu0 %2116
  %v2119 = vsel %vm667, %v661, 0
  %v2122 = vsel %vm667, %v2117, 0
  %2124 = vmatprep.subr.bf16.mxu0 0
  %2125 = vmatpush1.bf16.xpose.msra.mxu0 %v2122
  %2126 = vmatprep.subr.bf16.mxu0 0
  %2127 = vmatpush1.bf16.xpose.msra.mxu0 0
  %2128 = vmatprep.subr.bf16.mxu0 0
  %2129 = vmatpush1.bf16.xpose.msra.mxu0 0
  %2130 = vmatprep.subr.bf16.mxu0 0
  %2131 = vmatpush1.bf16.xpose.msra.mxu0 0
  %2132 = vmatprep.subr.bf16.mxu0 0
  %2133 = vmatpush1.bf16.xpose.msra.mxu0 0
  %2134 = vmatprep.subr.bf16.mxu0 0
  %2135 = vmatpush1.bf16.xpose.msra.mxu0 0
  %2136 = vmatprep.subr.bf16.mxu0 0
  %2137 = vmatpush1.bf16.xpose.msra.mxu0 0
  %2138 = vmatprep.subr.bf16.mxu0 0
  %2139 = vmatpush1.bf16.xpose.msra.mxu0 0
  %2140 = vmatprep.subr.bf16.mxu0 0
  %2141 = vmatpush1.bf16.xpose.msra.mxu0 0
  %2142 = vmatprep.subr.bf16.mxu0 0
  %2143 = vmatpush1.bf16.xpose.msra.mxu0 0
  %2144 = vmatprep.subr.bf16.mxu0 0
  %2145 = vmatpush1.bf16.xpose.msra.mxu0 0
  %2146 = vmatprep.subr.bf16.mxu0 0
  %2147 = vmatpush1.bf16.xpose.msra.mxu0 0
  %2148 = vmatprep.subr.bf16.mxu0 0
  %2149 = vmatpush1.bf16.xpose.msra.mxu0 0
  %2150 = vmatprep.subr.bf16.mxu0 0
  %2151 = vmatpush1.bf16.xpose.msra.mxu0 0
  %2152 = vmatprep.subr.bf16.mxu0 0
  %2153 = vmatpush1.bf16.xpose.msra.mxu0 0
  %2154 = vmatprep.subr.bf16.mxu0 0
  %2155 = vmatpush1.bf16.xpose.msra.mxu0 0
  %2156 = vmatprep.mubr.bf16.mxu0 0
  %2157 = vmatmul.mubr.bf16.gmra.mrb[0].mxu0 %v2119
  %v2158 = vpop.f32.mrb[0].mxu0
  %v2159 = vadd.f32 0.0, %v2158
  %v2160 = vpop.f32.mrb[0].mxu0
  %v2161 = vpop.f32.mrb[0].mxu0
  %v2162 = vadd.f32 0.0, %v2161
  %v2163 = vpop.f32.mrb[0].mxu0
  %2164 = vdwg.mxu0
  %2166 = vrot.lane.b32.xlu0 %v662, 96
  %v2167 = vpop.permute.xlu0 %2166
  %v2169 = vsel %vm667, %v662, 0
  %v2172 = vsel %vm667, %v2167, 0
  %2174 = vmatprep.subr.bf16.mxu0 0
  %2175 = vmatpush1.bf16.xpose.msra.mxu0 %v2172
  %2176 = vmatprep.subr.bf16.mxu0 0
  %2177 = vmatpush1.bf16.xpose.msra.mxu0 0
  %2178 = vmatprep.subr.bf16.mxu0 0
  %2179 = vmatpush1.bf16.xpose.msra.mxu0 0
  %2180 = vmatprep.subr.bf16.mxu0 0
  %2181 = vmatpush1.bf16.xpose.msra.mxu0 0
  %2182 = vmatprep.subr.bf16.mxu0 0
  %2183 = vmatpush1.bf16.xpose.msra.mxu0 0
  %2184 = vmatprep.subr.bf16.mxu0 0
  %2185 = vmatpush1.bf16.xpose.msra.mxu0 0
  %2186 = vmatprep.subr.bf16.mxu0 0
  %2187 = vmatpush1.bf16.xpose.msra.mxu0 0
  %2188 = vmatprep.subr.bf16.mxu0 0
  %2189 = vmatpush1.bf16.xpose.msra.mxu0 0
  %2190 = vmatprep.subr.bf16.mxu0 0
  %2191 = vmatpush1.bf16.xpose.msra.mxu0 0
  %2192 = vmatprep.subr.bf16.mxu0 0
  %2193 = vmatpush1.bf16.xpose.msra.mxu0 0
  %2194 = vmatprep.subr.bf16.mxu0 0
  %2195 = vmatpush1.bf16.xpose.msra.mxu0 0
  %2196 = vmatprep.subr.bf16.mxu0 0
  %2197 = vmatpush1.bf16.xpose.msra.mxu0 0
  %2198 = vmatprep.subr.bf16.mxu0 0
  %2199 = vmatpush1.bf16.xpose.msra.mxu0 0
  %2200 = vmatprep.subr.bf16.mxu0 0
  %2201 = vmatpush1.bf16.xpose.msra.mxu0 0
  %2202 = vmatprep.subr.bf16.mxu0 0
  %2203 = vmatpush1.bf16.xpose.msra.mxu0 0
  %2204 = vmatprep.subr.bf16.mxu0 0
  %2205 = vmatpush1.bf16.xpose.msra.mxu0 0
  %2206 = vmatprep.mubr.bf16.mxu0 0
  %2207 = vmatmul.mubr.bf16.gmra.mrb[0].mxu0 %v2169
  %v2208 = vpop.f32.mrb[0].mxu0
  %v2209 = vadd.f32 0.0, %v2208
  %v2210 = vpop.f32.mrb[0].mxu0
  %v2211 = vpop.f32.mrb[0].mxu0
  %v2212 = vadd.f32 0.0, %v2211
  %v2213 = vpop.f32.mrb[0].mxu0
  %2214 = vdwg.mxu0
  %2216 = vrot.lane.b32.xlu0 %v663, 96
  %v2217 = vpop.permute.xlu0 %2216
  %v2219 = vsel %vm667, %v663, 0
  %v2222 = vsel %vm667, %v2217, 0
  %2224 = vmatprep.subr.bf16.mxu0 0
  %2225 = vmatpush1.bf16.xpose.msra.mxu0 %v2222
  %2226 = vmatprep.subr.bf16.mxu0 0
  %2227 = vmatpush1.bf16.xpose.msra.mxu0 0
  %2228 = vmatprep.subr.bf16.mxu0 0
  %2229 = vmatpush1.bf16.xpose.msra.mxu0 0
  %2230 = vmatprep.subr.bf16.mxu0 0
  %2231 = vmatpush1.bf16.xpose.msra.mxu0 0
  %2232 = vmatprep.subr.bf16.mxu0 0
  %2233 = vmatpush1.bf16.xpose.msra.mxu0 0
  %2234 = vmatprep.subr.bf16.mxu0 0
  %2235 = vmatpush1.bf16.xpose.msra.mxu0 0
  %2236 = vmatprep.subr.bf16.mxu0 0
  %2237 = vmatpush1.bf16.xpose.msra.mxu0 0
  %2238 = vmatprep.subr.bf16.mxu0 0
  %2239 = vmatpush1.bf16.xpose.msra.mxu0 0
  %2240 = vmatprep.subr.bf16.mxu0 0
  %2241 = vmatpush1.bf16.xpose.msra.mxu0 0
  %2242 = vmatprep.subr.bf16.mxu0 0
  %2243 = vmatpush1.bf16.xpose.msra.mxu0 0
  %2244 = vmatprep.subr.bf16.mxu0 0
  %2245 = vmatpush1.bf16.xpose.msra.mxu0 0
  %2246 = vmatprep.subr.bf16.mxu0 0
  %2247 = vmatpush1.bf16.xpose.msra.mxu0 0
  %2248 = vmatprep.subr.bf16.mxu0 0
  %2249 = vmatpush1.bf16.xpose.msra.mxu0 0
  %2250 = vmatprep.subr.bf16.mxu0 0
  %2251 = vmatpush1.bf16.xpose.msra.mxu0 0
  %2252 = vmatprep.subr.bf16.mxu0 0
  %2253 = vmatpush1.bf16.xpose.msra.mxu0 0
  %2254 = vmatprep.subr.bf16.mxu0 0
  %2255 = vmatpush1.bf16.xpose.msra.mxu0 0
  %2256 = vmatprep.mubr.bf16.mxu0 0
  %2257 = vmatmul.mubr.bf16.gmra.mrb[0].mxu0 %v2219
  %v2258 = vpop.f32.mrb[0].mxu0
  %v2259 = vadd.f32 0.0, %v2258
  %v2260 = vpop.f32.mrb[0].mxu0
  %v2261 = vpop.f32.mrb[0].mxu0
  %v2262 = vadd.f32 0.0, %v2261
  %v2263 = vpop.f32.mrb[0].mxu0
  %2264 = vdwg.mxu0
  %v2265 = vmul.f32 %v709, 0.35355338
  %v2266 = vmul.f32 %v712, 0.35355338
  %v2267 = vmul.f32 %v759, 0.35355338
  %v2268 = vmul.f32 %v762, 0.35355338
  %v2269 = vmul.f32 %v809, 0.35355338
  %v2270 = vmul.f32 %v812, 0.35355338
  %v2271 = vmul.f32 %v859, 0.35355338
  %v2272 = vmul.f32 %v862, 0.35355338
  %v2273 = vmul.f32 %v909, 0.35355338
  %v2274 = vmul.f32 %v912, 0.35355338
  %v2275 = vmul.f32 %v959, 0.35355338
  %v2276 = vmul.f32 %v962, 0.35355338
  %v2277 = vmul.f32 %v1009, 0.35355338
  %v2278 = vmul.f32 %v1012, 0.35355338
  %v2279 = vmul.f32 %v1059, 0.35355338
  %v2280 = vmul.f32 %v1062, 0.35355338
  %v2281 = vmul.f32 %v1109, 0.35355338
  %v2282 = vmul.f32 %v1112, 0.35355338
  %v2283 = vmul.f32 %v1159, 0.35355338
  %v2284 = vmul.f32 %v1162, 0.35355338
  %v2285 = vmul.f32 %v1209, 0.35355338
  %v2286 = vmul.f32 %v1212, 0.35355338
  %v2287 = vmul.f32 %v1259, 0.35355338
  %v2288 = vmul.f32 %v1262, 0.35355338
  %v2289 = vmul.f32 %v1309, 0.35355338
  %v2290 = vmul.f32 %v1312, 0.35355338
  %v2291 = vmul.f32 %v1359, 0.35355338
  %v2292 = vmul.f32 %v1362, 0.35355338
  %v2293 = vmul.f32 %v1409, 0.35355338
  %v2294 = vmul.f32 %v1412, 0.35355338
  %v2295 = vmul.f32 %v1459, 0.35355338
  %v2296 = vmul.f32 %v1462, 0.35355338
  %v2297 = vmul.f32 %v1509, 0.35355338
  %v2298 = vmul.f32 %v1512, 0.35355338
  %v2299 = vmul.f32 %v1559, 0.35355338
  %v2300 = vmul.f32 %v1562, 0.35355338
  %v2301 = vmul.f32 %v1609, 0.35355338
  %v2302 = vmul.f32 %v1612, 0.35355338
  %v2303 = vmul.f32 %v1659, 0.35355338
  %v2304 = vmul.f32 %v1662, 0.35355338
  %v2305 = vmul.f32 %v1709, 0.35355338
  %v2306 = vmul.f32 %v1712, 0.35355338
  %v2307 = vmul.f32 %v1759, 0.35355338
  %v2308 = vmul.f32 %v1762, 0.35355338
  %v2309 = vmul.f32 %v1809, 0.35355338
  %v2310 = vmul.f32 %v1812, 0.35355338
  %v2311 = vmul.f32 %v1859, 0.35355338
  %v2312 = vmul.f32 %v1862, 0.35355338
  %v2313 = vmul.f32 %v1909, 0.35355338
  %v2314 = vmul.f32 %v1912, 0.35355338
  %v2315 = vmul.f32 %v1959, 0.35355338
  %v2316 = vmul.f32 %v1962, 0.35355338
  %v2317 = vmul.f32 %v2009, 0.35355338
  %v2318 = vmul.f32 %v2012, 0.35355338
  %v2319 = vmul.f32 %v2059, 0.35355338
  %v2320 = vmul.f32 %v2062, 0.35355338
  %v2321 = vmul.f32 %v2109, 0.35355338
  %v2322 = vmul.f32 %v2112, 0.35355338
  %v2323 = vmul.f32 %v2159, 0.35355338
  %v2324 = vmul.f32 %v2162, 0.35355338
  %v2325 = vmul.f32 %v2209, 0.35355338
  %v2326 = vmul.f32 %v2212, 0.35355338
  %v2327 = vmul.f32 %v2259, 0.35355338
  %v2328 = vmul.f32 %v2262, 0.35355338
  %v2329 = vld [vmem:[%s1] sm:$0xff]
  %v2330 = vld [vmem:[%s1 + $0x8] sm:$0xff]
  %v2331 = vld [vmem:[%s1 + $0x10] sm:$0xff]
  %v2332 = vld [vmem:[%s1 + $0x18] sm:$0xff]
  %v2333 = vld [vmem:[%s1 + $0x20] sm:$0xff]
  %v2334 = vld [vmem:[%s1 + $0x28] sm:$0xff]
  %v2335 = vld [vmem:[%s1 + $0x30] sm:$0xff]
  %v2336 = vld [vmem:[%s1 + $0x38] sm:$0xff]
  %v2337 = vld [vmem:[%s1 + $0x40] sm:$0xff]
  %v2338 = vld [vmem:[%s1 + $0x48] sm:$0xff]
  %v2339 = vld [vmem:[%s1 + $0x50] sm:$0xff]
  %v2340 = vld [vmem:[%s1 + $0x58] sm:$0xff]
  %v2341 = vld [vmem:[%s1 + $0x60] sm:$0xff]
  %v2342 = vld [vmem:[%s1 + $0x68] sm:$0xff]
  %v2343 = vld [vmem:[%s1 + $0x70] sm:$0xff]
  %v2344 = vld [vmem:[%s1 + $0x78] sm:$0xff]
  %v2345 = vld [vmem:[%s1 + $0x80] sm:$0xff]
  %v2346 = vld [vmem:[%s1 + $0x88] sm:$0xff]
  %v2347 = vld [vmem:[%s1 + $0x90] sm:$0xff]
  %v2348 = vld [vmem:[%s1 + $0x98] sm:$0xff]
  %v2349 = vld [vmem:[%s1 + $0xa0] sm:$0xff]
  %v2350 = vld [vmem:[%s1 + $0xa8] sm:$0xff]
  %v2351 = vld [vmem:[%s1 + $0xb0] sm:$0xff]
  %v2352 = vld [vmem:[%s1 + $0xb8] sm:$0xff]
  %v2353 = vld [vmem:[%s1 + $0xc0] sm:$0xff]
  %v2354 = vld [vmem:[%s1 + $0xc8] sm:$0xff]
  %v2355 = vld [vmem:[%s1 + $0xd0] sm:$0xff]
  %v2356 = vld [vmem:[%s1 + $0xd8] sm:$0xff]
  %v2357 = vld [vmem:[%s1 + $0xe0] sm:$0xff]
  %v2358 = vld [vmem:[%s1 + $0xe8] sm:$0xff]
  %v2359 = vld [vmem:[%s1 + $0xf0] sm:$0xff]
  %v2360 = vld [vmem:[%s1 + $0xf8] sm:$0xff]
  %v2361 = vadd.f32 %v2265, %v2329
  %v2362 = vadd.f32 %v2266, %v2330
  %v2363 = vadd.f32 %v2267, %v2331
  %v2364 = vadd.f32 %v2268, %v2332
  %v2365 = vadd.f32 %v2269, %v2333
  %v2366 = vadd.f32 %v2270, %v2334
  %v2367 = vadd.f32 %v2271, %v2335
  %v2368 = vadd.f32 %v2272, %v2336
  %v2369 = vadd.f32 %v2273, %v2329
  %v2370 = vadd.f32 %v2274, %v2330
  %v2371 = vadd.f32 %v2275, %v2331
  %v2372 = vadd.f32 %v2276, %v2332
  %v2373 = vadd.f32 %v2277, %v2333
  %v2374 = vadd.f32 %v2278, %v2334
  %v2375 = vadd.f32 %v2279, %v2335
  %v2376 = vadd.f32 %v2280, %v2336
  %v2377 = vadd.f32 %v2281, %v2337
  %v2378 = vadd.f32 %v2282, %v2338
  %v2379 = vadd.f32 %v2283, %v2339
  %v2380 = vadd.f32 %v2284, %v2340
  %v2381 = vadd.f32 %v2285, %v2341
  %v2382 = vadd.f32 %v2286, %v2342
  %v2383 = vadd.f32 %v2287, %v2343
  %v2384 = vadd.f32 %v2288, %v2344
  %v2385 = vadd.f32 %v2289, %v2337
  %v2386 = vadd.f32 %v2290, %v2338
  %v2387 = vadd.f32 %v2291, %v2339
  %v2388 = vadd.f32 %v2292, %v2340
  %v2389 = vadd.f32 %v2293, %v2341
  %v2390 = vadd.f32 %v2294, %v2342
  %v2391 = vadd.f32 %v2295, %v2343
  %v2392 = vadd.f32 %v2296, %v2344
  %v2393 = vadd.f32 %v2297, %v2345
  %v2394 = vadd.f32 %v2298, %v2346
  %v2395 = vadd.f32 %v2299, %v2347
  %v2396 = vadd.f32 %v2300, %v2348
  %v2397 = vadd.f32 %v2301, %v2349
  %v2398 = vadd.f32 %v2302, %v2350
  %v2399 = vadd.f32 %v2303, %v2351
  %v2400 = vadd.f32 %v2304, %v2352
  %v2401 = vadd.f32 %v2305, %v2345
  %v2402 = vadd.f32 %v2306, %v2346
  %v2403 = vadd.f32 %v2307, %v2347
  %v2404 = vadd.f32 %v2308, %v2348
  %v2405 = vadd.f32 %v2309, %v2349
  %v2406 = vadd.f32 %v2310, %v2350
  %v2407 = vadd.f32 %v2311, %v2351
  %v2408 = vadd.f32 %v2312, %v2352
  %v2409 = vadd.f32 %v2313, %v2353
  %v2410 = vadd.f32 %v2314, %v2354
  %v2411 = vadd.f32 %v2315, %v2355
  %v2412 = vadd.f32 %v2316, %v2356
  %v2413 = vadd.f32 %v2317, %v2357
  %v2414 = vadd.f32 %v2318, %v2358
  %v2415 = vadd.f32 %v2319, %v2359
  %v2416 = vadd.f32 %v2320, %v2360
  %v2417 = vadd.f32 %v2321, %v2353
  %v2418 = vadd.f32 %v2322, %v2354
  %v2419 = vadd.f32 %v2323, %v2355
  %v2420 = vadd.f32 %v2324, %v2356
  %v2421 = vadd.f32 %v2325, %v2357
  %v2422 = vadd.f32 %v2326, %v2358
  %v2423 = vadd.f32 %v2327, %v2359
  %v2424 = vadd.f32 %v2328, %v2360
  %vm2425 = vcmask 130048
  %v2426 = vsel %vm2425, %v2361, -inf
  %2427 = vmax.xlane.f32.xlu0 %v2426
  %v2428 = vpop.xlane.xlu0 %2427
  %v2429 = vsel %vm2425, %v2362, -inf
  %2430 = vmax.xlane.f32.xlu0 %v2429
  %v2431 = vpop.xlane.xlu0 %2430
  %v2432 = vsel %vm2425, %v2363, -inf
  %2433 = vmax.xlane.f32.xlu0 %v2432
  %v2434 = vpop.xlane.xlu0 %2433
  %v2435 = vsel %vm2425, %v2364, -inf
  %2436 = vmax.xlane.f32.xlu0 %v2435
  %v2437 = vpop.xlane.xlu0 %2436
  %v2438 = vsel %vm2425, %v2365, -inf
  %2439 = vmax.xlane.f32.xlu0 %v2438
  %v2440 = vpop.xlane.xlu0 %2439
  %v2441 = vsel %vm2425, %v2366, -inf
  %2442 = vmax.xlane.f32.xlu0 %v2441
  %v2443 = vpop.xlane.xlu0 %2442
  %v2444 = vsel %vm2425, %v2367, -inf
  %2445 = vmax.xlane.f32.xlu0 %v2444
  %v2446 = vpop.xlane.xlu0 %2445
  %v2447 = vsel %vm2425, %v2368, -inf
  %2448 = vmax.xlane.f32.xlu0 %v2447
  %v2449 = vpop.xlane.xlu0 %2448
  %v2450 = vsel %vm2425, %v2369, -inf
  %2451 = vmax.xlane.f32.xlu0 %v2450
  %v2452 = vpop.xlane.xlu0 %2451
  %v2453 = vsel %vm2425, %v2370, -inf
  %2454 = vmax.xlane.f32.xlu0 %v2453
  %v2455 = vpop.xlane.xlu0 %2454
  %v2456 = vsel %vm2425, %v2371, -inf
  %2457 = vmax.xlane.f32.xlu0 %v2456
  %v2458 = vpop.xlane.xlu0 %2457
  %v2459 = vsel %vm2425, %v2372, -inf
  %2460 = vmax.xlane.f32.xlu0 %v2459
  %v2461 = vpop.xlane.xlu0 %2460
  %v2462 = vsel %vm2425, %v2373, -inf
  %2463 = vmax.xlane.f32.xlu0 %v2462
  %v2464 = vpop.xlane.xlu0 %2463
  %v2465 = vsel %vm2425, %v2374, -inf
  %2466 = vmax.xlane.f32.xlu0 %v2465
  %v2467 = vpop.xlane.xlu0 %2466
  %v2468 = vsel %vm2425, %v2375, -inf
  %2469 = vmax.xlane.f32.xlu0 %v2468
  %v2470 = vpop.xlane.xlu0 %2469
  %v2471 = vsel %vm2425, %v2376, -inf
  %2472 = vmax.xlane.f32.xlu0 %v2471
  %v2473 = vpop.xlane.xlu0 %2472
  %v2474 = vsel %vm2425, %v2377, -inf
  %2475 = vmax.xlane.f32.xlu0 %v2474
  %v2476 = vpop.xlane.xlu0 %2475
  %v2477 = vsel %vm2425, %v2378, -inf
  %2478 = vmax.xlane.f32.xlu0 %v2477
  %v2479 = vpop.xlane.xlu0 %2478
  %v2480 = vsel %vm2425, %v2379, -inf
  %2481 = vmax.xlane.f32.xlu0 %v2480
  %v2482 = vpop.xlane.xlu0 %2481
  %v2483 = vsel %vm2425, %v2380, -inf
  %2484 = vmax.xlane.f32.xlu0 %v2483
  %v2485 = vpop.xlane.xlu0 %2484
  %v2486 = vsel %vm2425, %v2381, -inf
  %2487 = vmax.xlane.f32.xlu0 %v2486
  %v2488 = vpop.xlane.xlu0 %2487
  %v2489 = vsel %vm2425, %v2382, -inf
  %2490 = vmax.xlane.f32.xlu0 %v2489
  %v2491 = vpop.xlane.xlu0 %2490
  %v2492 = vsel %vm2425, %v2383, -inf
  %2493 = vmax.xlane.f32.xlu0 %v2492
  %v2494 = vpop.xlane.xlu0 %2493
  %v2495 = vsel %vm2425, %v2384, -inf
  %2496 = vmax.xlane.f32.xlu0 %v2495
  %v2497 = vpop.xlane.xlu0 %2496
  %v2498 = vsel %vm2425, %v2385, -inf
  %2499 = vmax.xlane.f32.xlu0 %v2498
  %v2500 = vpop.xlane.xlu0 %2499
  %v2501 = vsel %vm2425, %v2386, -inf
  %2502 = vmax.xlane.f32.xlu0 %v2501
  %v2503 = vpop.xlane.xlu0 %2502
  %v2504 = vsel %vm2425, %v2387, -inf
  %2505 = vmax.xlane.f32.xlu0 %v2504
  %v2506 = vpop.xlane.xlu0 %2505
  %v2507 = vsel %vm2425, %v2388, -inf
  %2508 = vmax.xlane.f32.xlu0 %v2507
  %v2509 = vpop.xlane.xlu0 %2508
  %v2510 = vsel %vm2425, %v2389, -inf
  %2511 = vmax.xlane.f32.xlu0 %v2510
  %v2512 = vpop.xlane.xlu0 %2511
  %v2513 = vsel %vm2425, %v2390, -inf
  %2514 = vmax.xlane.f32.xlu0 %v2513
  %v2515 = vpop.xlane.xlu0 %2514
  %v2516 = vsel %vm2425, %v2391, -inf
  %2517 = vmax.xlane.f32.xlu0 %v2516
  %v2518 = vpop.xlane.xlu0 %2517
  %v2519 = vsel %vm2425, %v2392, -inf
  %2520 = vmax.xlane.f32.xlu0 %v2519
  %v2521 = vpop.xlane.xlu0 %2520
  %v2522 = vsel %vm2425, %v2393, -inf
  %2523 = vmax.xlane.f32.xlu0 %v2522
  %v2524 = vpop.xlane.xlu0 %2523
  %v2525 = vsel %vm2425, %v2394, -inf
  %2526 = vmax.xlane.f32.xlu0 %v2525
  %v2527 = vpop.xlane.xlu0 %2526
  %v2528 = vsel %vm2425, %v2395, -inf
  %2529 = vmax.xlane.f32.xlu0 %v2528
  %v2530 = vpop.xlane.xlu0 %2529
  %v2531 = vsel %vm2425, %v2396, -inf
  %2532 = vmax.xlane.f32.xlu0 %v2531
  %v2533 = vpop.xlane.xlu0 %2532
  %v2534 = vsel %vm2425, %v2397, -inf
  %2535 = vmax.xlane.f32.xlu0 %v2534
  %v2536 = vpop.xlane.xlu0 %2535
  %v2537 = vsel %vm2425, %v2398, -inf
  %2538 = vmax.xlane.f32.xlu0 %v2537
  %v2539 = vpop.xlane.xlu0 %2538
  %v2540 = vsel %vm2425, %v2399, -inf
  %2541 = vmax.xlane.f32.xlu0 %v2540
  %v2542 = vpop.xlane.xlu0 %2541
  %v2543 = vsel %vm2425, %v2400, -inf
  %2544 = vmax.xlane.f32.xlu0 %v2543
  %v2545 = vpop.xlane.xlu0 %2544
  %v2546 = vsel %vm2425, %v2401, -inf
  %2547 = vmax.xlane.f32.xlu0 %v2546
  %v2548 = vpop.xlane.xlu0 %2547
  %v2549 = vsel %vm2425, %v2402, -inf
  %2550 = vmax.xlane.f32.xlu0 %v2549
  %v2551 = vpop.xlane.xlu0 %2550
  %v2552 = vsel %vm2425, %v2403, -inf
  %2553 = vmax.xlane.f32.xlu0 %v2552
  %v2554 = vpop.xlane.xlu0 %2553
  %v2555 = vsel %vm2425, %v2404, -inf
  %2556 = vmax.xlane.f32.xlu0 %v2555
  %v2557 = vpop.xlane.xlu0 %2556
  %v2558 = vsel %vm2425, %v2405, -inf
  %2559 = vmax.xlane.f32.xlu0 %v2558
  %v2560 = vpop.xlane.xlu0 %2559
  %v2561 = vsel %vm2425, %v2406, -inf
  %2562 = vmax.xlane.f32.xlu0 %v2561
  %v2563 = vpop.xlane.xlu0 %2562
  %v2564 = vsel %vm2425, %v2407, -inf
  %2565 = vmax.xlane.f32.xlu0 %v2564
  %v2566 = vpop.xlane.xlu0 %2565
  %v2567 = vsel %vm2425, %v2408, -inf
  %2568 = vmax.xlane.f32.xlu0 %v2567
  %v2569 = vpop.xlane.xlu0 %2568
  %v2570 = vsel %vm2425, %v2409, -inf
  %2571 = vmax.xlane.f32.xlu0 %v2570
  %v2572 = vpop.xlane.xlu0 %2571
  %v2573 = vsel %vm2425, %v2410, -inf
  %2574 = vmax.xlane.f32.xlu0 %v2573
  %v2575 = vpop.xlane.xlu0 %2574
  %v2576 = vsel %vm2425, %v2411, -inf
  %2577 = vmax.xlane.f32.xlu0 %v2576
  %v2578 = vpop.xlane.xlu0 %2577
  %v2579 = vsel %vm2425, %v2412, -inf
  %2580 = vmax.xlane.f32.xlu0 %v2579
  %v2581 = vpop.xlane.xlu0 %2580
  %v2582 = vsel %vm2425, %v2413, -inf
  %2583 = vmax.xlane.f32.xlu0 %v2582
  %v2584 = vpop.xlane.xlu0 %2583
  %v2585 = vsel %vm2425, %v2414, -inf
  %2586 = vmax.xlane.f32.xlu0 %v2585
  %v2587 = vpop.xlane.xlu0 %2586
  %v2588 = vsel %vm2425, %v2415, -inf
  %2589 = vmax.xlane.f32.xlu0 %v2588
  %v2590 = vpop.xlane.xlu0 %2589
  %v2591 = vsel %vm2425, %v2416, -inf
  %2592 = vmax.xlane.f32.xlu0 %v2591
  %v2593 = vpop.xlane.xlu0 %2592
  %v2594 = vsel %vm2425, %v2417, -inf
  %2595 = vmax.xlane.f32.xlu0 %v2594
  %v2596 = vpop.xlane.xlu0 %2595
  %v2597 = vsel %vm2425, %v2418, -inf
  %2598 = vmax.xlane.f32.xlu0 %v2597
  %v2599 = vpop.xlane.xlu0 %2598
  %v2600 = vsel %vm2425, %v2419, -inf
  %2601 = vmax.xlane.f32.xlu0 %v2600
  %v2602 = vpop.xlane.xlu0 %2601
  %v2603 = vsel %vm2425, %v2420, -inf
  %2604 = vmax.xlane.f32.xlu0 %v2603
  %v2605 = vpop.xlane.xlu0 %2604
  %v2606 = vsel %vm2425, %v2421, -inf
  %2607 = vmax.xlane.f32.xlu0 %v2606
  %v2608 = vpop.xlane.xlu0 %2607
  %v2609 = vsel %vm2425, %v2422, -inf
  %2610 = vmax.xlane.f32.xlu0 %v2609
  %v2611 = vpop.xlane.xlu0 %2610
  %v2612 = vsel %vm2425, %v2423, -inf
  %2613 = vmax.xlane.f32.xlu0 %v2612
  %v2614 = vpop.xlane.xlu0 %2613
  %v2615 = vsel %vm2425, %v2424, -inf
  %2616 = vmax.xlane.f32.xlu0 %v2615
  %v2617 = vpop.xlane.xlu0 %2616
  %v2618 = vsub.f32 %v2361, %v2428
  %v2619 = vsub.f32 %v2362, %v2431
  %v2620 = vsub.f32 %v2363, %v2434
  %v2621 = vsub.f32 %v2364, %v2437
  %v2622 = vsub.f32 %v2365, %v2440
  %v2623 = vsub.f32 %v2366, %v2443
  %v2624 = vsub.f32 %v2367, %v2446
  %v2625 = vsub.f32 %v2368, %v2449
  %v2626 = vsub.f32 %v2369, %v2452
  %v2627 = vsub.f32 %v2370, %v2455
  %v2628 = vsub.f32 %v2371, %v2458
  %v2629 = vsub.f32 %v2372, %v2461
  %v2630 = vsub.f32 %v2373, %v2464
  %v2631 = vsub.f32 %v2374, %v2467
  %v2632 = vsub.f32 %v2375, %v2470
  %v2633 = vsub.f32 %v2376, %v2473
  %v2634 = vsub.f32 %v2377, %v2476
  %v2635 = vsub.f32 %v2378, %v2479
  %v2636 = vsub.f32 %v2379, %v2482
  %v2637 = vsub.f32 %v2380, %v2485
  %v2638 = vsub.f32 %v2381, %v2488
  %v2639 = vsub.f32 %v2382, %v2491
  %v2640 = vsub.f32 %v2383, %v2494
  %v2641 = vsub.f32 %v2384, %v2497
  %v2642 = vsub.f32 %v2385, %v2500
  %v2643 = vsub.f32 %v2386, %v2503
  %v2644 = vsub.f32 %v2387, %v2506
  %v2645 = vsub.f32 %v2388, %v2509
  %v2646 = vsub.f32 %v2389, %v2512
  %v2647 = vsub.f32 %v2390, %v2515
  %v2648 = vsub.f32 %v2391, %v2518
  %v2649 = vsub.f32 %v2392, %v2521
  %v2650 = vsub.f32 %v2393, %v2524
  %v2651 = vsub.f32 %v2394, %v2527
  %v2652 = vsub.f32 %v2395, %v2530
  %v2653 = vsub.f32 %v2396, %v2533
  %v2654 = vsub.f32 %v2397, %v2536
  %v2655 = vsub.f32 %v2398, %v2539
  %v2656 = vsub.f32 %v2399, %v2542
  %v2657 = vsub.f32 %v2400, %v2545
  %v2658 = vsub.f32 %v2401, %v2548
  %v2659 = vsub.f32 %v2402, %v2551
  %v2660 = vsub.f32 %v2403, %v2554
  %v2661 = vsub.f32 %v2404, %v2557
  %v2662 = vsub.f32 %v2405, %v2560
  %v2663 = vsub.f32 %v2406, %v2563
  %v2664 = vsub.f32 %v2407, %v2566
  %v2665 = vsub.f32 %v2408, %v2569
  %v2666 = vsub.f32 %v2409, %v2572
  %v2667 = vsub.f32 %v2410, %v2575
  %v2668 = vsub.f32 %v2411, %v2578
  %v2669 = vsub.f32 %v2412, %v2581
  %v2670 = vsub.f32 %v2413, %v2584
  %v2671 = vsub.f32 %v2414, %v2587
  %v2672 = vsub.f32 %v2415, %v2590
  %v2673 = vsub.f32 %v2416, %v2593
  %v2674 = vsub.f32 %v2417, %v2596
  %v2675 = vsub.f32 %v2418, %v2599
  %v2676 = vsub.f32 %v2419, %v2602
  %v2677 = vsub.f32 %v2420, %v2605
  %v2678 = vsub.f32 %v2421, %v2608
  %v2679 = vsub.f32 %v2422, %v2611
  %v2680 = vsub.f32 %v2423, %v2614
  %v2681 = vsub.f32 %v2424, %v2617
  %v2682 = vmul.f32 %v2618, 1.442695
  %v2683 = vpow.pop %v2682
  %v2684 = vmul.f32 %v2619, 1.442695
  %v2685 = vpow.pop %v2684
  %v2686 = vmul.f32 %v2620, 1.442695
  %v2687 = vpow.pop %v2686
  %v2688 = vmul.f32 %v2621, 1.442695
  %v2689 = vpow.pop %v2688
  %v2690 = vmul.f32 %v2622, 1.442695
  %v2691 = vpow.pop %v2690
  %v2692 = vmul.f32 %v2623, 1.442695
  %v2693 = vpow.pop %v2692
  %v2694 = vmul.f32 %v2624, 1.442695
  %v2695 = vpow.pop %v2694
  %v2696 = vmul.f32 %v2625, 1.442695
  %v2697 = vpow.pop %v2696
  %v2698 = vmul.f32 %v2626, 1.442695
  %v2699 = vpow.pop %v2698
  %v2700 = vmul.f32 %v2627, 1.442695
  %v2701 = vpow.pop %v2700
  %v2702 = vmul.f32 %v2628, 1.442695
  %v2703 = vpow.pop %v2702
  %v2704 = vmul.f32 %v2629, 1.442695
  %v2705 = vpow.pop %v2704
  %v2706 = vmul.f32 %v2630, 1.442695
  %v2707 = vpow.pop %v2706
  %v2708 = vmul.f32 %v2631, 1.442695
  %v2709 = vpow.pop %v2708
  %v2710 = vmul.f32 %v2632, 1.442695
  %v2711 = vpow.pop %v2710
  %v2712 = vmul.f32 %v2633, 1.442695
  %v2713 = vpow.pop %v2712
  %v2714 = vmul.f32 %v2634, 1.442695
  %v2715 = vpow.pop %v2714
  %v2716 = vmul.f32 %v2635, 1.442695
  %v2717 = vpow.pop %v2716
  %v2718 = vmul.f32 %v2636, 1.442695
  %v2719 = vpow.pop %v2718
  %v2720 = vmul.f32 %v2637, 1.442695
  %v2721 = vpow.pop %v2720
  %v2722 = vmul.f32 %v2638, 1.442695
  %v2723 = vpow.pop %v2722
  %v2724 = vmul.f32 %v2639, 1.442695
  %v2725 = vpow.pop %v2724
  %v2726 = vmul.f32 %v2640, 1.442695
  %v2727 = vpow.pop %v2726
  %v2728 = vmul.f32 %v2641, 1.442695
  %v2729 = vpow.pop %v2728
  %v2730 = vmul.f32 %v2642, 1.442695
  %v2731 = vpow.pop %v2730
  %v2732 = vmul.f32 %v2643, 1.442695
  %v2733 = vpow.pop %v2732
  %v2734 = vmul.f32 %v2644, 1.442695
  %v2735 = vpow.pop %v2734
  %v2736 = vmul.f32 %v2645, 1.442695
  %v2737 = vpow.pop %v2736
  %v2738 = vmul.f32 %v2646, 1.442695
  %v2739 = vpow.pop %v2738
  %v2740 = vmul.f32 %v2647, 1.442695
  %v2741 = vpow.pop %v2740
  %v2742 = vmul.f32 %v2648, 1.442695
  %v2743 = vpow.pop %v2742
  %v2744 = vmul.f32 %v2649, 1.442695
  %v2745 = vpow.pop %v2744
  %v2746 = vmul.f32 %v2650, 1.442695
  %v2747 = vpow.pop %v2746
  %v2748 = vmul.f32 %v2651, 1.442695
  %v2749 = vpow.pop %v2748
  %v2750 = vmul.f32 %v2652, 1.442695
  %v2751 = vpow.pop %v2750
  %v2752 = vmul.f32 %v2653, 1.442695
  %v2753 = vpow.pop %v2752
  %v2754 = vmul.f32 %v2654, 1.442695
  %v2755 = vpow.pop %v2754
  %v2756 = vmul.f32 %v2655, 1.442695
  %v2757 = vpow.pop %v2756
  %v2758 = vmul.f32 %v2656, 1.442695
  %v2759 = vpow.pop %v2758
  %v2760 = vmul.f32 %v2657, 1.442695
  %v2761 = vpow.pop %v2760
  %v2762 = vmul.f32 %v2658, 1.442695
  %v2763 = vpow.pop %v2762
  %v2764 = vmul.f32 %v2659, 1.442695
  %v2765 = vpow.pop %v2764
  %v2766 = vmul.f32 %v2660, 1.442695
  %v2767 = vpow.pop %v2766
  %v2768 = vmul.f32 %v2661, 1.442695
  %v2769 = vpow.pop %v2768
  %v2770 = vmul.f32 %v2662, 1.442695
  %v2771 = vpow.pop %v2770
  %v2772 = vmul.f32 %v2663, 1.442695
  %v2773 = vpow.pop %v2772
  %v2774 = vmul.f32 %v2664, 1.442695
  %v2775 = vpow.pop %v2774
  %v2776 = vmul.f32 %v2665, 1.442695
  %v2777 = vpow.pop %v2776
  %v2778 = vmul.f32 %v2666, 1.442695
  %v2779 = vpow.pop %v2778
  %v2780 = vmul.f32 %v2667, 1.442695
  %v2781 = vpow.pop %v2780
  %v2782 = vmul.f32 %v2668, 1.442695
  %v2783 = vpow.pop %v2782
  %v2784 = vmul.f32 %v2669, 1.442695
  %v2785 = vpow.pop %v2784
  %v2786 = vmul.f32 %v2670, 1.442695
  %v2787 = vpow.pop %v2786
  %v2788 = vmul.f32 %v2671, 1.442695
  %v2789 = vpow.pop %v2788
  %v2790 = vmul.f32 %v2672, 1.442695
  %v2791 = vpow.pop %v2790
  %v2792 = vmul.f32 %v2673, 1.442695
  %v2793 = vpow.pop %v2792
  %v2794 = vmul.f32 %v2674, 1.442695
  %v2795 = vpow.pop %v2794
  %v2796 = vmul.f32 %v2675, 1.442695
  %v2797 = vpow.pop %v2796
  %v2798 = vmul.f32 %v2676, 1.442695
  %v2799 = vpow.pop %v2798
  %v2800 = vmul.f32 %v2677, 1.442695
  %v2801 = vpow.pop %v2800
  %v2802 = vmul.f32 %v2678, 1.442695
  %v2803 = vpow.pop %v2802
  %v2804 = vmul.f32 %v2679, 1.442695
  %v2805 = vpow.pop %v2804
  %v2806 = vmul.f32 %v2680, 1.442695
  %v2807 = vpow.pop %v2806
  %v2808 = vmul.f32 %v2681, 1.442695
  %v2809 = vpow.pop %v2808
  %v2810 = vsel %vm2425, %v2683, 0.0
  %2811 = vadd.xlane.f32.xlu0 %v2810
  %v2812 = vpop.xlane.xlu0 %2811
  %v2813 = vsel %vm2425, %v2685, 0.0
  %2814 = vadd.xlane.f32.xlu0 %v2813
  %v2815 = vpop.xlane.xlu0 %2814
  %v2816 = vsel %vm2425, %v2687, 0.0
  %2817 = vadd.xlane.f32.xlu0 %v2816
  %v2818 = vpop.xlane.xlu0 %2817
  %v2819 = vsel %vm2425, %v2689, 0.0
  %2820 = vadd.xlane.f32.xlu0 %v2819
  %v2821 = vpop.xlane.xlu0 %2820
  %v2822 = vsel %vm2425, %v2691, 0.0
  %2823 = vadd.xlane.f32.xlu0 %v2822
  %v2824 = vpop.xlane.xlu0 %2823
  %v2825 = vsel %vm2425, %v2693, 0.0
  %2826 = vadd.xlane.f32.xlu0 %v2825
  %v2827 = vpop.xlane.xlu0 %2826
  %v2828 = vsel %vm2425, %v2695, 0.0
  %2829 = vadd.xlane.f32.xlu0 %v2828
  %v2830 = vpop.xlane.xlu0 %2829
  %v2831 = vsel %vm2425, %v2697, 0.0
  %2832 = vadd.xlane.f32.xlu0 %v2831
  %v2833 = vpop.xlane.xlu0 %2832
  %v2834 = vsel %vm2425, %v2699, 0.0
  %2835 = vadd.xlane.f32.xlu0 %v2834
  %v2836 = vpop.xlane.xlu0 %2835
  %v2837 = vsel %vm2425, %v2701, 0.0
  %2838 = vadd.xlane.f32.xlu0 %v2837
  %v2839 = vpop.xlane.xlu0 %2838
  %v2840 = vsel %vm2425, %v2703, 0.0
  %2841 = vadd.xlane.f32.xlu0 %v2840
  %v2842 = vpop.xlane.xlu0 %2841
  %v2843 = vsel %vm2425, %v2705, 0.0
  %2844 = vadd.xlane.f32.xlu0 %v2843
  %v2845 = vpop.xlane.xlu0 %2844
  %v2846 = vsel %vm2425, %v2707, 0.0
  %2847 = vadd.xlane.f32.xlu0 %v2846
  %v2848 = vpop.xlane.xlu0 %2847
  %v2849 = vsel %vm2425, %v2709, 0.0
  %2850 = vadd.xlane.f32.xlu0 %v2849
  %v2851 = vpop.xlane.xlu0 %2850
  %v2852 = vsel %vm2425, %v2711, 0.0
  %2853 = vadd.xlane.f32.xlu0 %v2852
  %v2854 = vpop.xlane.xlu0 %2853
  %v2855 = vsel %vm2425, %v2713, 0.0
  %2856 = vadd.xlane.f32.xlu0 %v2855
  %v2857 = vpop.xlane.xlu0 %2856
  %v2858 = vsel %vm2425, %v2715, 0.0
  %2859 = vadd.xlane.f32.xlu0 %v2858
  %v2860 = vpop.xlane.xlu0 %2859
  %v2861 = vsel %vm2425, %v2717, 0.0
  %2862 = vadd.xlane.f32.xlu0 %v2861
  %v2863 = vpop.xlane.xlu0 %2862
  %v2864 = vsel %vm2425, %v2719, 0.0
  %2865 = vadd.xlane.f32.xlu0 %v2864
  %v2866 = vpop.xlane.xlu0 %2865
  %v2867 = vsel %vm2425, %v2721, 0.0
  %2868 = vadd.xlane.f32.xlu0 %v2867
  %v2869 = vpop.xlane.xlu0 %2868
  %v2870 = vsel %vm2425, %v2723, 0.0
  %2871 = vadd.xlane.f32.xlu0 %v2870
  %v2872 = vpop.xlane.xlu0 %2871
  %v2873 = vsel %vm2425, %v2725, 0.0
  %2874 = vadd.xlane.f32.xlu0 %v2873
  %v2875 = vpop.xlane.xlu0 %2874
  %v2876 = vsel %vm2425, %v2727, 0.0
  %2877 = vadd.xlane.f32.xlu0 %v2876
  %v2878 = vpop.xlane.xlu0 %2877
  %v2879 = vsel %vm2425, %v2729, 0.0
  %2880 = vadd.xlane.f32.xlu0 %v2879
  %v2881 = vpop.xlane.xlu0 %2880
  %v2882 = vsel %vm2425, %v2731, 0.0
  %2883 = vadd.xlane.f32.xlu0 %v2882
  %v2884 = vpop.xlane.xlu0 %2883
  %v2885 = vsel %vm2425, %v2733, 0.0
  %2886 = vadd.xlane.f32.xlu0 %v2885
  %v2887 = vpop.xlane.xlu0 %2886
  %v2888 = vsel %vm2425, %v2735, 0.0
  %2889 = vadd.xlane.f32.xlu0 %v2888
  %v2890 = vpop.xlane.xlu0 %2889
  %v2891 = vsel %vm2425, %v2737, 0.0
  %2892 = vadd.xlane.f32.xlu0 %v2891
  %v2893 = vpop.xlane.xlu0 %2892
  %v2894 = vsel %vm2425, %v2739, 0.0
  %2895 = vadd.xlane.f32.xlu0 %v2894
  %v2896 = vpop.xlane.xlu0 %2895
  %v2897 = vsel %vm2425, %v2741, 0.0
  %2898 = vadd.xlane.f32.xlu0 %v2897
  %v2899 = vpop.xlane.xlu0 %2898
  %v2900 = vsel %vm2425, %v2743, 0.0
  %2901 = vadd.xlane.f32.xlu0 %v2900
  %v2902 = vpop.xlane.xlu0 %2901
  %v2903 = vsel %vm2425, %v2745, 0.0
  %2904 = vadd.xlane.f32.xlu0 %v2903
  %v2905 = vpop.xlane.xlu0 %2904
  %v2906 = vsel %vm2425, %v2747, 0.0
  %2907 = vadd.xlane.f32.xlu0 %v2906
  %v2908 = vpop.xlane.xlu0 %2907
  %v2909 = vsel %vm2425, %v2749, 0.0
  %2910 = vadd.xlane.f32.xlu0 %v2909
  %v2911 = vpop.xlane.xlu0 %2910
  %v2912 = vsel %vm2425, %v2751, 0.0
  %2913 = vadd.xlane.f32.xlu0 %v2912
  %v2914 = vpop.xlane.xlu0 %2913
  %v2915 = vsel %vm2425, %v2753, 0.0
  %2916 = vadd.xlane.f32.xlu0 %v2915
  %v2917 = vpop.xlane.xlu0 %2916
  %v2918 = vsel %vm2425, %v2755, 0.0
  %2919 = vadd.xlane.f32.xlu0 %v2918
  %v2920 = vpop.xlane.xlu0 %2919
  %v2921 = vsel %vm2425, %v2757, 0.0
  %2922 = vadd.xlane.f32.xlu0 %v2921
  %v2923 = vpop.xlane.xlu0 %2922
  %v2924 = vsel %vm2425, %v2759, 0.0
  %2925 = vadd.xlane.f32.xlu0 %v2924
  %v2926 = vpop.xlane.xlu0 %2925
  %v2927 = vsel %vm2425, %v2761, 0.0
  %2928 = vadd.xlane.f32.xlu0 %v2927
  %v2929 = vpop.xlane.xlu0 %2928
  %v2930 = vsel %vm2425, %v2763, 0.0
  %2931 = vadd.xlane.f32.xlu0 %v2930
  %v2932 = vpop.xlane.xlu0 %2931
  %v2933 = vsel %vm2425, %v2765, 0.0
  %2934 = vadd.xlane.f32.xlu0 %v2933
  %v2935 = vpop.xlane.xlu0 %2934
  %v2936 = vsel %vm2425, %v2767, 0.0
  %2937 = vadd.xlane.f32.xlu0 %v2936
  %v2938 = vpop.xlane.xlu0 %2937
  %v2939 = vsel %vm2425, %v2769, 0.0
  %2940 = vadd.xlane.f32.xlu0 %v2939
  %v2941 = vpop.xlane.xlu0 %2940
  %v2942 = vsel %vm2425, %v2771, 0.0
  %2943 = vadd.xlane.f32.xlu0 %v2942
  %v2944 = vpop.xlane.xlu0 %2943
  %v2945 = vsel %vm2425, %v2773, 0.0
  %2946 = vadd.xlane.f32.xlu0 %v2945
  %v2947 = vpop.xlane.xlu0 %2946
  %v2948 = vsel %vm2425, %v2775, 0.0
  %2949 = vadd.xlane.f32.xlu0 %v2948
  %v2950 = vpop.xlane.xlu0 %2949
  %v2951 = vsel %vm2425, %v2777, 0.0
  %2952 = vadd.xlane.f32.xlu0 %v2951
  %v2953 = vpop.xlane.xlu0 %2952
  %v2954 = vsel %vm2425, %v2779, 0.0
  %2955 = vadd.xlane.f32.xlu0 %v2954
  %v2956 = vpop.xlane.xlu0 %2955
  %v2957 = vsel %vm2425, %v2781, 0.0
  %2958 = vadd.xlane.f32.xlu0 %v2957
  %v2959 = vpop.xlane.xlu0 %2958
  %v2960 = vsel %vm2425, %v2783, 0.0
  %2961 = vadd.xlane.f32.xlu0 %v2960
  %v2962 = vpop.xlane.xlu0 %2961
  %v2963 = vsel %vm2425, %v2785, 0.0
  %2964 = vadd.xlane.f32.xlu0 %v2963
  %v2965 = vpop.xlane.xlu0 %2964
  %v2966 = vsel %vm2425, %v2787, 0.0
  %2967 = vadd.xlane.f32.xlu0 %v2966
  %v2968 = vpop.xlane.xlu0 %2967
  %v2969 = vsel %vm2425, %v2789, 0.0
  %2970 = vadd.xlane.f32.xlu0 %v2969
  %v2971 = vpop.xlane.xlu0 %2970
  %v2972 = vsel %vm2425, %v2791, 0.0
  %2973 = vadd.xlane.f32.xlu0 %v2972
  %v2974 = vpop.xlane.xlu0 %2973
  %v2975 = vsel %vm2425, %v2793, 0.0
  %2976 = vadd.xlane.f32.xlu0 %v2975
  %v2977 = vpop.xlane.xlu0 %2976
  %v2978 = vsel %vm2425, %v2795, 0.0
  %2979 = vadd.xlane.f32.xlu0 %v2978
  %v2980 = vpop.xlane.xlu0 %2979
  %v2981 = vsel %vm2425, %v2797, 0.0
  %2982 = vadd.xlane.f32.xlu0 %v2981
  %v2983 = vpop.xlane.xlu0 %2982
  %v2984 = vsel %vm2425, %v2799, 0.0
  %2985 = vadd.xlane.f32.xlu0 %v2984
  %v2986 = vpop.xlane.xlu0 %2985
  %v2987 = vsel %vm2425, %v2801, 0.0
  %2988 = vadd.xlane.f32.xlu0 %v2987
  %v2989 = vpop.xlane.xlu0 %2988
  %v2990 = vsel %vm2425, %v2803, 0.0
  %2991 = vadd.xlane.f32.xlu0 %v2990
  %v2992 = vpop.xlane.xlu0 %2991
  %v2993 = vsel %vm2425, %v2805, 0.0
  %2994 = vadd.xlane.f32.xlu0 %v2993
  %v2995 = vpop.xlane.xlu0 %2994
  %v2996 = vsel %vm2425, %v2807, 0.0
  %2997 = vadd.xlane.f32.xlu0 %v2996
  %v2998 = vpop.xlane.xlu0 %2997
  %v2999 = vsel %vm2425, %v2809, 0.0
  %3000 = vadd.xlane.f32.xlu0 %v2999
  %v3001 = vpop.xlane.xlu0 %3000
  %v3002 = vrcp.pop %v2812
  %v3003 = vrcp.pop %v2815
  %v3004 = vrcp.pop %v2818
  %v3005 = vrcp.pop %v2821
  %v3006 = vrcp.pop %v2824
  %v3007 = vrcp.pop %v2827
  %v3008 = vrcp.pop %v2830
  %v3009 = vrcp.pop %v2833
  %v3010 = vrcp.pop %v2836
  %v3011 = vrcp.pop %v2839
  %v3012 = vrcp.pop %v2842
  %v3013 = vrcp.pop %v2845
  %v3014 = vrcp.pop %v2848
  %v3015 = vrcp.pop %v2851
  %v3016 = vrcp.pop %v2854
  %v3017 = vrcp.pop %v2857
  %v3018 = vrcp.pop %v2860
  %v3019 = vrcp.pop %v2863
  %v3020 = vrcp.pop %v2866
  %v3021 = vrcp.pop %v2869
  %v3022 = vrcp.pop %v2872
  %v3023 = vrcp.pop %v2875
  %v3024 = vrcp.pop %v2878
  %v3025 = vrcp.pop %v2881
  %v3026 = vrcp.pop %v2884
  %v3027 = vrcp.pop %v2887
  %v3028 = vrcp.pop %v2890
  %v3029 = vrcp.pop %v2893
  %v3030 = vrcp.pop %v2896
  %v3031 = vrcp.pop %v2899
  %v3032 = vrcp.pop %v2902
  %v3033 = vrcp.pop %v2905
  %v3034 = vrcp.pop %v2908
  %v3035 = vrcp.pop %v2911
  %v3036 = vrcp.pop %v2914
  %v3037 = vrcp.pop %v2917
  %v3038 = vrcp.pop %v2920
  %v3039 = vrcp.pop %v2923
  %v3040 = vrcp.pop %v2926
  %v3041 = vrcp.pop %v2929
  %v3042 = vrcp.pop %v2932
  %v3043 = vrcp.pop %v2935
  %v3044 = vrcp.pop %v2938
  %v3045 = vrcp.pop %v2941
  %v3046 = vrcp.pop %v2944
  %v3047 = vrcp.pop %v2947
  %v3048 = vrcp.pop %v2950
  %v3049 = vrcp.pop %v2953
  %v3050 = vrcp.pop %v2956
  %v3051 = vrcp.pop %v2959
  %v3052 = vrcp.pop %v2962
  %v3053 = vrcp.pop %v2965
  %v3054 = vrcp.pop %v2968
  %v3055 = vrcp.pop %v2971
  %v3056 = vrcp.pop %v2974
  %v3057 = vrcp.pop %v2977
  %v3058 = vrcp.pop %v2980
  %v3059 = vrcp.pop %v2983
  %v3060 = vrcp.pop %v2986
  %v3061 = vrcp.pop %v2989
  %v3062 = vrcp.pop %v2992
  %v3063 = vrcp.pop %v2995
  %v3064 = vrcp.pop %v2998
  %v3065 = vrcp.pop %v3001
  %v3066 = vmul.f32 %v2683, %v3002
  %v3067 = vmul.f32 %v2685, %v3003
  %v3068 = vmul.f32 %v2687, %v3004
  %v3069 = vmul.f32 %v2689, %v3005
  %v3070 = vmul.f32 %v2691, %v3006
  %v3071 = vmul.f32 %v2693, %v3007
  %v3072 = vmul.f32 %v2695, %v3008
  %v3073 = vmul.f32 %v2697, %v3009
  %v3074 = vmul.f32 %v2699, %v3010
  %v3075 = vmul.f32 %v2701, %v3011
  %v3076 = vmul.f32 %v2703, %v3012
  %v3077 = vmul.f32 %v2705, %v3013
  %v3078 = vmul.f32 %v2707, %v3014
  %v3079 = vmul.f32 %v2709, %v3015
  %v3080 = vmul.f32 %v2711, %v3016
  %v3081 = vmul.f32 %v2713, %v3017
  %v3082 = vmul.f32 %v2715, %v3018
  %v3083 = vmul.f32 %v2717, %v3019
  %v3084 = vmul.f32 %v2719, %v3020
  %v3085 = vmul.f32 %v2721, %v3021
  %v3086 = vmul.f32 %v2723, %v3022
  %v3087 = vmul.f32 %v2725, %v3023
  %v3088 = vmul.f32 %v2727, %v3024
  %v3089 = vmul.f32 %v2729, %v3025
  %v3090 = vmul.f32 %v2731, %v3026
  %v3091 = vmul.f32 %v2733, %v3027
  %v3092 = vmul.f32 %v2735, %v3028
  %v3093 = vmul.f32 %v2737, %v3029
  %v3094 = vmul.f32 %v2739, %v3030
  %v3095 = vmul.f32 %v2741, %v3031
  %v3096 = vmul.f32 %v2743, %v3032
  %v3097 = vmul.f32 %v2745, %v3033
  %v3098 = vmul.f32 %v2747, %v3034
  %v3099 = vmul.f32 %v2749, %v3035
  %v3100 = vmul.f32 %v2751, %v3036
  %v3101 = vmul.f32 %v2753, %v3037
  %v3102 = vmul.f32 %v2755, %v3038
  %v3103 = vmul.f32 %v2757, %v3039
  %v3104 = vmul.f32 %v2759, %v3040
  %v3105 = vmul.f32 %v2761, %v3041
  %v3106 = vmul.f32 %v2763, %v3042
  %v3107 = vmul.f32 %v2765, %v3043
  %v3108 = vmul.f32 %v2767, %v3044
  %v3109 = vmul.f32 %v2769, %v3045
  %v3110 = vmul.f32 %v2771, %v3046
  %v3111 = vmul.f32 %v2773, %v3047
  %v3112 = vmul.f32 %v2775, %v3048
  %v3113 = vmul.f32 %v2777, %v3049
  %v3114 = vmul.f32 %v2779, %v3050
  %v3115 = vmul.f32 %v2781, %v3051
  %v3116 = vmul.f32 %v2783, %v3052
  %v3117 = vmul.f32 %v2785, %v3053
  %v3118 = vmul.f32 %v2787, %v3054
  %v3119 = vmul.f32 %v2789, %v3055
  %v3120 = vmul.f32 %v2791, %v3056
  %v3121 = vmul.f32 %v2793, %v3057
  %v3122 = vmul.f32 %v2795, %v3058
  %v3123 = vmul.f32 %v2797, %v3059
  %v3124 = vmul.f32 %v2799, %v3060
  %v3125 = vmul.f32 %v2801, %v3061
  %v3126 = vmul.f32 %v2803, %v3062
  %v3127 = vmul.f32 %v2805, %v3063
  %v3128 = vmul.f32 %v2807, %v3064
  %v3129 = vmul.f32 %v2809, %v3065
  %v3130 = vpack.c.bf16 %v3067, %v3066
  %v3131 = vpack.c.bf16 %v3069, %v3068
  %v3132 = vpack.c.bf16 %v3071, %v3070
  %v3133 = vpack.c.bf16 %v3073, %v3072
  %v3134 = vpack.c.bf16 %v3075, %v3074
  %v3135 = vpack.c.bf16 %v3077, %v3076
  %v3136 = vpack.c.bf16 %v3079, %v3078
  %v3137 = vpack.c.bf16 %v3081, %v3080
  %v3138 = vpack.c.bf16 %v3083, %v3082
  %v3139 = vpack.c.bf16 %v3085, %v3084
  %v3140 = vpack.c.bf16 %v3087, %v3086
  %v3141 = vpack.c.bf16 %v3089, %v3088
  %v3142 = vpack.c.bf16 %v3091, %v3090
  %v3143 = vpack.c.bf16 %v3093, %v3092
  %v3144 = vpack.c.bf16 %v3095, %v3094
  %v3145 = vpack.c.bf16 %v3097, %v3096
  %v3146 = vpack.c.bf16 %v3099, %v3098
  %v3147 = vpack.c.bf16 %v3101, %v3100
  %v3148 = vpack.c.bf16 %v3103, %v3102
  %v3149 = vpack.c.bf16 %v3105, %v3104
  %v3150 = vpack.c.bf16 %v3107, %v3106
  %v3151 = vpack.c.bf16 %v3109, %v3108
  %v3152 = vpack.c.bf16 %v3111, %v3110
  %v3153 = vpack.c.bf16 %v3113, %v3112
  %v3154 = vpack.c.bf16 %v3115, %v3114
  %v3155 = vpack.c.bf16 %v3117, %v3116
  %v3156 = vpack.c.bf16 %v3119, %v3118
  %v3157 = vpack.c.bf16 %v3121, %v3120
  %v3158 = vpack.c.bf16 %v3123, %v3122
  %v3159 = vpack.c.bf16 %v3125, %v3124
  %v3160 = vpack.c.bf16 %v3127, %v3126
  %v3161 = vpack.c.bf16 %v3129, %v3128
  %3162 = vrot.lane.b32.xlu0 %v632, 64
  %v3163 = vpop.permute.xlu0 %3162
  %v3166 = vsel %vm2425, %v3130, 0
  %3168 = vmatprep.subr.bf16.mxu0 0
  %3169 = vmatpush1.bf16.msra.mxu0 %v3163
  %3170 = vmatprep.subr.bf16.mxu0 0
  %3171 = vmatpush1.bf16.msra.mxu0 0
  %3172 = vmatprep.subr.bf16.mxu0 0
  %3173 = vmatpush1.bf16.msra.mxu0 0
  %3174 = vmatprep.subr.bf16.mxu0 0
  %3175 = vmatpush1.bf16.msra.mxu0 0
  %3176 = vmatprep.subr.bf16.mxu0 0
  %3177 = vmatpush1.bf16.msra.mxu0 0
  %3178 = vmatprep.subr.bf16.mxu0 0
  %3179 = vmatpush1.bf16.msra.mxu0 0
  %3180 = vmatprep.subr.bf16.mxu0 0
  %3181 = vmatpush1.bf16.msra.mxu0 0
  %3182 = vmatprep.subr.bf16.mxu0 0
  %3183 = vmatpush1.bf16.msra.mxu0 0
  %3184 = vmatprep.subr.bf16.mxu0 0
  %3185 = vmatpush1.bf16.msra.mxu0 0
  %3186 = vmatprep.subr.bf16.mxu0 0
  %3187 = vmatpush1.bf16.msra.mxu0 0
  %3188 = vmatprep.subr.bf16.mxu0 0
  %3189 = vmatpush1.bf16.msra.mxu0 0
  %3190 = vmatprep.subr.bf16.mxu0 0
  %3191 = vmatpush1.bf16.msra.mxu0 0
  %3192 = vmatprep.subr.bf16.mxu0 0
  %3193 = vmatpush1.bf16.msra.mxu0 0
  %3194 = vmatprep.subr.bf16.mxu0 0
  %3195 = vmatpush1.bf16.msra.mxu0 0
  %3196 = vmatprep.subr.bf16.mxu0 0
  %3197 = vmatpush1.bf16.msra.mxu0 0
  %3198 = vmatprep.subr.bf16.mxu0 0
  %3199 = vmatpush1.bf16.msra.mxu0 0
  %3200 = vmatprep.mubr.bf16.mxu0 0
  %3201 = vmatmul.mubr.bf16.gmra.mrb[0].mxu0 %v3166
  %v3202 = vpop.f32.mrb[0].mxu0
  %v3203 = vadd.f32 0.0, %v3202
  %v3204 = vpop.f32.mrb[0].mxu0
  %v3205 = vpop.f32.mrb[0].mxu0
  %v3206 = vadd.f32 0.0, %v3205
  %v3207 = vpop.f32.mrb[0].mxu0
  %3208 = vdwg.mxu0
  %3209 = vrot.lane.b32.xlu0 %v633, 64
  %v3210 = vpop.permute.xlu0 %3209
  %v3213 = vsel %vm2425, %v3131, 0
  %3215 = vmatprep.subr.bf16.mxu0 0
  %3216 = vmatpush1.bf16.msra.mxu0 %v3210
  %3217 = vmatprep.subr.bf16.mxu0 0
  %3218 = vmatpush1.bf16.msra.mxu0 0
  %3219 = vmatprep.subr.bf16.mxu0 0
  %3220 = vmatpush1.bf16.msra.mxu0 0
  %3221 = vmatprep.subr.bf16.mxu0 0
  %3222 = vmatpush1.bf16.msra.mxu0 0
  %3223 = vmatprep.subr.bf16.mxu0 0
  %3224 = vmatpush1.bf16.msra.mxu0 0
  %3225 = vmatprep.subr.bf16.mxu0 0
  %3226 = vmatpush1.bf16.msra.mxu0 0
  %3227 = vmatprep.subr.bf16.mxu0 0
  %3228 = vmatpush1.bf16.msra.mxu0 0
  %3229 = vmatprep.subr.bf16.mxu0 0
  %3230 = vmatpush1.bf16.msra.mxu0 0
  %3231 = vmatprep.subr.bf16.mxu0 0
  %3232 = vmatpush1.bf16.msra.mxu0 0
  %3233 = vmatprep.subr.bf16.mxu0 0
  %3234 = vmatpush1.bf16.msra.mxu0 0
  %3235 = vmatprep.subr.bf16.mxu0 0
  %3236 = vmatpush1.bf16.msra.mxu0 0
  %3237 = vmatprep.subr.bf16.mxu0 0
  %3238 = vmatpush1.bf16.msra.mxu0 0
  %3239 = vmatprep.subr.bf16.mxu0 0
  %3240 = vmatpush1.bf16.msra.mxu0 0
  %3241 = vmatprep.subr.bf16.mxu0 0
  %3242 = vmatpush1.bf16.msra.mxu0 0
  %3243 = vmatprep.subr.bf16.mxu0 0
  %3244 = vmatpush1.bf16.msra.mxu0 0
  %3245 = vmatprep.subr.bf16.mxu0 0
  %3246 = vmatpush1.bf16.msra.mxu0 0
  %3247 = vmatprep.mubr.bf16.mxu0 0
  %3248 = vmatmul.mubr.bf16.gmra.mrb[0].mxu0 %v3213
  %v3249 = vpop.f32.mrb[0].mxu0
  %v3250 = vadd.f32 0.0, %v3249
  %v3251 = vpop.f32.mrb[0].mxu0
  %v3252 = vpop.f32.mrb[0].mxu0
  %v3253 = vadd.f32 0.0, %v3252
  %v3254 = vpop.f32.mrb[0].mxu0
  %3255 = vdwg.mxu0
  %3256 = vrot.lane.b32.xlu0 %v634, 64
  %v3257 = vpop.permute.xlu0 %3256
  %v3260 = vsel %vm2425, %v3132, 0
  %3262 = vmatprep.subr.bf16.mxu0 0
  %3263 = vmatpush1.bf16.msra.mxu0 %v3257
  %3264 = vmatprep.subr.bf16.mxu0 0
  %3265 = vmatpush1.bf16.msra.mxu0 0
  %3266 = vmatprep.subr.bf16.mxu0 0
  %3267 = vmatpush1.bf16.msra.mxu0 0
  %3268 = vmatprep.subr.bf16.mxu0 0
  %3269 = vmatpush1.bf16.msra.mxu0 0
  %3270 = vmatprep.subr.bf16.mxu0 0
  %3271 = vmatpush1.bf16.msra.mxu0 0
  %3272 = vmatprep.subr.bf16.mxu0 0
  %3273 = vmatpush1.bf16.msra.mxu0 0
  %3274 = vmatprep.subr.bf16.mxu0 0
  %3275 = vmatpush1.bf16.msra.mxu0 0
  %3276 = vmatprep.subr.bf16.mxu0 0
  %3277 = vmatpush1.bf16.msra.mxu0 0
  %3278 = vmatprep.subr.bf16.mxu0 0
  %3279 = vmatpush1.bf16.msra.mxu0 0
  %3280 = vmatprep.subr.bf16.mxu0 0
  %3281 = vmatpush1.bf16.msra.mxu0 0
  %3282 = vmatprep.subr.bf16.mxu0 0
  %3283 = vmatpush1.bf16.msra.mxu0 0
  %3284 = vmatprep.subr.bf16.mxu0 0
  %3285 = vmatpush1.bf16.msra.mxu0 0
  %3286 = vmatprep.subr.bf16.mxu0 0
  %3287 = vmatpush1.bf16.msra.mxu0 0
  %3288 = vmatprep.subr.bf16.mxu0 0
  %3289 = vmatpush1.bf16.msra.mxu0 0
  %3290 = vmatprep.subr.bf16.mxu0 0
  %3291 = vmatpush1.bf16.msra.mxu0 0
  %3292 = vmatprep.subr.bf16.mxu0 0
  %3293 = vmatpush1.bf16.msra.mxu0 0
  %3294 = vmatprep.mubr.bf16.mxu0 0
  %3295 = vmatmul.mubr.bf16.gmra.mrb[0].mxu0 %v3260
  %v3296 = vpop.f32.mrb[0].mxu0
  %v3297 = vadd.f32 0.0, %v3296
  %v3298 = vpop.f32.mrb[0].mxu0
  %v3299 = vpop.f32.mrb[0].mxu0
  %v3300 = vadd.f32 0.0, %v3299
  %v3301 = vpop.f32.mrb[0].mxu0
  %3302 = vdwg.mxu0
  %3303 = vrot.lane.b32.xlu0 %v635, 64
  %v3304 = vpop.permute.xlu0 %3303
  %v3307 = vsel %vm2425, %v3133, 0
  %3309 = vmatprep.subr.bf16.mxu0 0
  %3310 = vmatpush1.bf16.msra.mxu0 %v3304
  %3311 = vmatprep.subr.bf16.mxu0 0
  %3312 = vmatpush1.bf16.msra.mxu0 0
  %3313 = vmatprep.subr.bf16.mxu0 0
  %3314 = vmatpush1.bf16.msra.mxu0 0
  %3315 = vmatprep.subr.bf16.mxu0 0
  %3316 = vmatpush1.bf16.msra.mxu0 0
  %3317 = vmatprep.subr.bf16.mxu0 0
  %3318 = vmatpush1.bf16.msra.mxu0 0
  %3319 = vmatprep.subr.bf16.mxu0 0
  %3320 = vmatpush1.bf16.msra.mxu0 0
  %3321 = vmatprep.subr.bf16.mxu0 0
  %3322 = vmatpush1.bf16.msra.mxu0 0
  %3323 = vmatprep.subr.bf16.mxu0 0
  %3324 = vmatpush1.bf16.msra.mxu0 0
  %3325 = vmatprep.subr.bf16.mxu0 0
  %3326 = vmatpush1.bf16.msra.mxu0 0
  %3327 = vmatprep.subr.bf16.mxu0 0
  %3328 = vmatpush1.bf16.msra.mxu0 0
  %3329 = vmatprep.subr.bf16.mxu0 0
  %3330 = vmatpush1.bf16.msra.mxu0 0
  %3331 = vmatprep.subr.bf16.mxu0 0
  %3332 = vmatpush1.bf16.msra.mxu0 0
  %3333 = vmatprep.subr.bf16.mxu0 0
  %3334 = vmatpush1.bf16.msra.mxu0 0
  %3335 = vmatprep.subr.bf16.mxu0 0
  %3336 = vmatpush1.bf16.msra.mxu0 0
  %3337 = vmatprep.subr.bf16.mxu0 0
  %3338 = vmatpush1.bf16.msra.mxu0 0
  %3339 = vmatprep.subr.bf16.mxu0 0
  %3340 = vmatpush1.bf16.msra.mxu0 0
  %3341 = vmatprep.mubr.bf16.mxu0 0
  %3342 = vmatmul.mubr.bf16.gmra.mrb[0].mxu0 %v3307
  %v3343 = vpop.f32.mrb[0].mxu0
  %v3344 = vadd.f32 0.0, %v3343
  %v3345 = vpop.f32.mrb[0].mxu0
  %v3346 = vpop.f32.mrb[0].mxu0
  %v3347 = vadd.f32 0.0, %v3346
  %v3348 = vpop.f32.mrb[0].mxu0
  %3349 = vdwg.mxu0
  %3350 = vrot.lane.b32.xlu0 %v636, 64
  %v3351 = vpop.permute.xlu0 %3350
  %v3354 = vsel %vm2425, %v3134, 0
  %3356 = vmatprep.subr.bf16.mxu0 0
  %3357 = vmatpush1.bf16.msra.mxu0 %v3351
  %3358 = vmatprep.subr.bf16.mxu0 0
  %3359 = vmatpush1.bf16.msra.mxu0 0
  %3360 = vmatprep.subr.bf16.mxu0 0
  %3361 = vmatpush1.bf16.msra.mxu0 0
  %3362 = vmatprep.subr.bf16.mxu0 0
  %3363 = vmatpush1.bf16.msra.mxu0 0
  %3364 = vmatprep.subr.bf16.mxu0 0
  %3365 = vmatpush1.bf16.msra.mxu0 0
  %3366 = vmatprep.subr.bf16.mxu0 0
  %3367 = vmatpush1.bf16.msra.mxu0 0
  %3368 = vmatprep.subr.bf16.mxu0 0
  %3369 = vmatpush1.bf16.msra.mxu0 0
  %3370 = vmatprep.subr.bf16.mxu0 0
  %3371 = vmatpush1.bf16.msra.mxu0 0
  %3372 = vmatprep.subr.bf16.mxu0 0
  %3373 = vmatpush1.bf16.msra.mxu0 0
  %3374 = vmatprep.subr.bf16.mxu0 0
  %3375 = vmatpush1.bf16.msra.mxu0 0
  %3376 = vmatprep.subr.bf16.mxu0 0
  %3377 = vmatpush1.bf16.msra.mxu0 0
  %3378 = vmatprep.subr.bf16.mxu0 0
  %3379 = vmatpush1.bf16.msra.mxu0 0
  %3380 = vmatprep.subr.bf16.mxu0 0
  %3381 = vmatpush1.bf16.msra.mxu0 0
  %3382 = vmatprep.subr.bf16.mxu0 0
  %3383 = vmatpush1.bf16.msra.mxu0 0
  %3384 = vmatprep.subr.bf16.mxu0 0
  %3385 = vmatpush1.bf16.msra.mxu0 0
  %3386 = vmatprep.subr.bf16.mxu0 0
  %3387 = vmatpush1.bf16.msra.mxu0 0
  %3388 = vmatprep.mubr.bf16.mxu0 0
  %3389 = vmatmul.mubr.bf16.gmra.mrb[0].mxu0 %v3354
  %v3390 = vpop.f32.mrb[0].mxu0
  %v3391 = vadd.f32 0.0, %v3390
  %v3392 = vpop.f32.mrb[0].mxu0
  %v3393 = vpop.f32.mrb[0].mxu0
  %v3394 = vadd.f32 0.0, %v3393
  %v3395 = vpop.f32.mrb[0].mxu0
  %3396 = vdwg.mxu0
  %3397 = vrot.lane.b32.xlu0 %v637, 64
  %v3398 = vpop.permute.xlu0 %3397
  %v3401 = vsel %vm2425, %v3135, 0
  %3403 = vmatprep.subr.bf16.mxu0 0
  %3404 = vmatpush1.bf16.msra.mxu0 %v3398
  %3405 = vmatprep.subr.bf16.mxu0 0
  %3406 = vmatpush1.bf16.msra.mxu0 0
  %3407 = vmatprep.subr.bf16.mxu0 0
  %3408 = vmatpush1.bf16.msra.mxu0 0
  %3409 = vmatprep.subr.bf16.mxu0 0
  %3410 = vmatpush1.bf16.msra.mxu0 0
  %3411 = vmatprep.subr.bf16.mxu0 0
  %3412 = vmatpush1.bf16.msra.mxu0 0
  %3413 = vmatprep.subr.bf16.mxu0 0
  %3414 = vmatpush1.bf16.msra.mxu0 0
  %3415 = vmatprep.subr.bf16.mxu0 0
  %3416 = vmatpush1.bf16.msra.mxu0 0
  %3417 = vmatprep.subr.bf16.mxu0 0
  %3418 = vmatpush1.bf16.msra.mxu0 0
  %3419 = vmatprep.subr.bf16.mxu0 0
  %3420 = vmatpush1.bf16.msra.mxu0 0
  %3421 = vmatprep.subr.bf16.mxu0 0
  %3422 = vmatpush1.bf16.msra.mxu0 0
  %3423 = vmatprep.subr.bf16.mxu0 0
  %3424 = vmatpush1.bf16.msra.mxu0 0
  %3425 = vmatprep.subr.bf16.mxu0 0
  %3426 = vmatpush1.bf16.msra.mxu0 0
  %3427 = vmatprep.subr.bf16.mxu0 0
  %3428 = vmatpush1.bf16.msra.mxu0 0
  %3429 = vmatprep.subr.bf16.mxu0 0
  %3430 = vmatpush1.bf16.msra.mxu0 0
  %3431 = vmatprep.subr.bf16.mxu0 0
  %3432 = vmatpush1.bf16.msra.mxu0 0
  %3433 = vmatprep.subr.bf16.mxu0 0
  %3434 = vmatpush1.bf16.msra.mxu0 0
  %3435 = vmatprep.mubr.bf16.mxu0 0
  %3436 = vmatmul.mubr.bf16.gmra.mrb[0].mxu0 %v3401
  %v3437 = vpop.f32.mrb[0].mxu0
  %v3438 = vadd.f32 0.0, %v3437
  %v3439 = vpop.f32.mrb[0].mxu0
  %v3440 = vpop.f32.mrb[0].mxu0
  %v3441 = vadd.f32 0.0, %v3440
  %v3442 = vpop.f32.mrb[0].mxu0
  %3443 = vdwg.mxu0
  %3444 = vrot.lane.b32.xlu0 %v638, 64
  %v3445 = vpop.permute.xlu0 %3444
  %v3448 = vsel %vm2425, %v3136, 0
  %3450 = vmatprep.subr.bf16.mxu0 0
  %3451 = vmatpush1.bf16.msra.mxu0 %v3445
  %3452 = vmatprep.subr.bf16.mxu0 0
  %3453 = vmatpush1.bf16.msra.mxu0 0
  %3454 = vmatprep.subr.bf16.mxu0 0
  %3455 = vmatpush1.bf16.msra.mxu0 0
  %3456 = vmatprep.subr.bf16.mxu0 0
  %3457 = vmatpush1.bf16.msra.mxu0 0
  %3458 = vmatprep.subr.bf16.mxu0 0
  %3459 = vmatpush1.bf16.msra.mxu0 0
  %3460 = vmatprep.subr.bf16.mxu0 0
  %3461 = vmatpush1.bf16.msra.mxu0 0
  %3462 = vmatprep.subr.bf16.mxu0 0
  %3463 = vmatpush1.bf16.msra.mxu0 0
  %3464 = vmatprep.subr.bf16.mxu0 0
  %3465 = vmatpush1.bf16.msra.mxu0 0
  %3466 = vmatprep.subr.bf16.mxu0 0
  %3467 = vmatpush1.bf16.msra.mxu0 0
  %3468 = vmatprep.subr.bf16.mxu0 0
  %3469 = vmatpush1.bf16.msra.mxu0 0
  %3470 = vmatprep.subr.bf16.mxu0 0
  %3471 = vmatpush1.bf16.msra.mxu0 0
  %3472 = vmatprep.subr.bf16.mxu0 0
  %3473 = vmatpush1.bf16.msra.mxu0 0
  %3474 = vmatprep.subr.bf16.mxu0 0
  %3475 = vmatpush1.bf16.msra.mxu0 0
  %3476 = vmatprep.subr.bf16.mxu0 0
  %3477 = vmatpush1.bf16.msra.mxu0 0
  %3478 = vmatprep.subr.bf16.mxu0 0
  %3479 = vmatpush1.bf16.msra.mxu0 0
  %3480 = vmatprep.subr.bf16.mxu0 0
  %3481 = vmatpush1.bf16.msra.mxu0 0
  %3482 = vmatprep.mubr.bf16.mxu0 0
  %3483 = vmatmul.mubr.bf16.gmra.mrb[0].mxu0 %v3448
  %v3484 = vpop.f32.mrb[0].mxu0
  %v3485 = vadd.f32 0.0, %v3484
  %v3486 = vpop.f32.mrb[0].mxu0
  %v3487 = vpop.f32.mrb[0].mxu0
  %v3488 = vadd.f32 0.0, %v3487
  %v3489 = vpop.f32.mrb[0].mxu0
  %3490 = vdwg.mxu0
  %3491 = vrot.lane.b32.xlu0 %v639, 64
  %v3492 = vpop.permute.xlu0 %3491
  %v3495 = vsel %vm2425, %v3137, 0
  %3497 = vmatprep.subr.bf16.mxu0 0
  %3498 = vmatpush1.bf16.msra.mxu0 %v3492
  %3499 = vmatprep.subr.bf16.mxu0 0
  %3500 = vmatpush1.bf16.msra.mxu0 0
  %3501 = vmatprep.subr.bf16.mxu0 0
  %3502 = vmatpush1.bf16.msra.mxu0 0
  %3503 = vmatprep.subr.bf16.mxu0 0
  %3504 = vmatpush1.bf16.msra.mxu0 0
  %3505 = vmatprep.subr.bf16.mxu0 0
  %3506 = vmatpush1.bf16.msra.mxu0 0
  %3507 = vmatprep.subr.bf16.mxu0 0
  %3508 = vmatpush1.bf16.msra.mxu0 0
  %3509 = vmatprep.subr.bf16.mxu0 0
  %3510 = vmatpush1.bf16.msra.mxu0 0
  %3511 = vmatprep.subr.bf16.mxu0 0
  %3512 = vmatpush1.bf16.msra.mxu0 0
  %3513 = vmatprep.subr.bf16.mxu0 0
  %3514 = vmatpush1.bf16.msra.mxu0 0
  %3515 = vmatprep.subr.bf16.mxu0 0
  %3516 = vmatpush1.bf16.msra.mxu0 0
  %3517 = vmatprep.subr.bf16.mxu0 0
  %3518 = vmatpush1.bf16.msra.mxu0 0
  %3519 = vmatprep.subr.bf16.mxu0 0
  %3520 = vmatpush1.bf16.msra.mxu0 0
  %3521 = vmatprep.subr.bf16.mxu0 0
  %3522 = vmatpush1.bf16.msra.mxu0 0
  %3523 = vmatprep.subr.bf16.mxu0 0
  %3524 = vmatpush1.bf16.msra.mxu0 0
  %3525 = vmatprep.subr.bf16.mxu0 0
  %3526 = vmatpush1.bf16.msra.mxu0 0
  %3527 = vmatprep.subr.bf16.mxu0 0
  %3528 = vmatpush1.bf16.msra.mxu0 0
  %3529 = vmatprep.mubr.bf16.mxu0 0
  %3530 = vmatmul.mubr.bf16.gmra.mrb[0].mxu0 %v3495
  %v3531 = vpop.f32.mrb[0].mxu0
  %v3532 = vadd.f32 0.0, %v3531
  %v3533 = vpop.f32.mrb[0].mxu0
  %v3534 = vpop.f32.mrb[0].mxu0
  %v3535 = vadd.f32 0.0, %v3534
  %v3536 = vpop.f32.mrb[0].mxu0
  %3537 = vdwg.mxu0
  %3538 = vrot.lane.b32.xlu0 %v640, 64
  %v3539 = vpop.permute.xlu0 %3538
  %v3542 = vsel %vm2425, %v3138, 0
  %3544 = vmatprep.subr.bf16.mxu0 0
  %3545 = vmatpush1.bf16.msra.mxu0 %v3539
  %3546 = vmatprep.subr.bf16.mxu0 0
  %3547 = vmatpush1.bf16.msra.mxu0 0
  %3548 = vmatprep.subr.bf16.mxu0 0
  %3549 = vmatpush1.bf16.msra.mxu0 0
  %3550 = vmatprep.subr.bf16.mxu0 0
  %3551 = vmatpush1.bf16.msra.mxu0 0
  %3552 = vmatprep.subr.bf16.mxu0 0
  %3553 = vmatpush1.bf16.msra.mxu0 0
  %3554 = vmatprep.subr.bf16.mxu0 0
  %3555 = vmatpush1.bf16.msra.mxu0 0
  %3556 = vmatprep.subr.bf16.mxu0 0
  %3557 = vmatpush1.bf16.msra.mxu0 0
  %3558 = vmatprep.subr.bf16.mxu0 0
  %3559 = vmatpush1.bf16.msra.mxu0 0
  %3560 = vmatprep.subr.bf16.mxu0 0
  %3561 = vmatpush1.bf16.msra.mxu0 0
  %3562 = vmatprep.subr.bf16.mxu0 0
  %3563 = vmatpush1.bf16.msra.mxu0 0
  %3564 = vmatprep.subr.bf16.mxu0 0
  %3565 = vmatpush1.bf16.msra.mxu0 0
  %3566 = vmatprep.subr.bf16.mxu0 0
  %3567 = vmatpush1.bf16.msra.mxu0 0
  %3568 = vmatprep.subr.bf16.mxu0 0
  %3569 = vmatpush1.bf16.msra.mxu0 0
  %3570 = vmatprep.subr.bf16.mxu0 0
  %3571 = vmatpush1.bf16.msra.mxu0 0
  %3572 = vmatprep.subr.bf16.mxu0 0
  %3573 = vmatpush1.bf16.msra.mxu0 0
  %3574 = vmatprep.subr.bf16.mxu0 0
  %3575 = vmatpush1.bf16.msra.mxu0 0
  %3576 = vmatprep.mubr.bf16.mxu0 0
  %3577 = vmatmul.mubr.bf16.gmra.mrb[0].mxu0 %v3542
  %v3578 = vpop.f32.mrb[0].mxu0
  %v3579 = vadd.f32 0.0, %v3578
  %v3580 = vpop.f32.mrb[0].mxu0
  %v3581 = vpop.f32.mrb[0].mxu0
  %v3582 = vadd.f32 0.0, %v3581
  %v3583 = vpop.f32.mrb[0].mxu0
  %3584 = vdwg.mxu0
  %3585 = vrot.lane.b32.xlu0 %v641, 64
  %v3586 = vpop.permute.xlu0 %3585
  %v3589 = vsel %vm2425, %v3139, 0
  %3591 = vmatprep.subr.bf16.mxu0 0
  %3592 = vmatpush1.bf16.msra.mxu0 %v3586
  %3593 = vmatprep.subr.bf16.mxu0 0
  %3594 = vmatpush1.bf16.msra.mxu0 0
  %3595 = vmatprep.subr.bf16.mxu0 0
  %3596 = vmatpush1.bf16.msra.mxu0 0
  %3597 = vmatprep.subr.bf16.mxu0 0
  %3598 = vmatpush1.bf16.msra.mxu0 0
  %3599 = vmatprep.subr.bf16.mxu0 0
  %3600 = vmatpush1.bf16.msra.mxu0 0
  %3601 = vmatprep.subr.bf16.mxu0 0
  %3602 = vmatpush1.bf16.msra.mxu0 0
  %3603 = vmatprep.subr.bf16.mxu0 0
  %3604 = vmatpush1.bf16.msra.mxu0 0
  %3605 = vmatprep.subr.bf16.mxu0 0
  %3606 = vmatpush1.bf16.msra.mxu0 0
  %3607 = vmatprep.subr.bf16.mxu0 0
  %3608 = vmatpush1.bf16.msra.mxu0 0
  %3609 = vmatprep.subr.bf16.mxu0 0
  %3610 = vmatpush1.bf16.msra.mxu0 0
  %3611 = vmatprep.subr.bf16.mxu0 0
  %3612 = vmatpush1.bf16.msra.mxu0 0
  %3613 = vmatprep.subr.bf16.mxu0 0
  %3614 = vmatpush1.bf16.msra.mxu0 0
  %3615 = vmatprep.subr.bf16.mxu0 0
  %3616 = vmatpush1.bf16.msra.mxu0 0
  %3617 = vmatprep.subr.bf16.mxu0 0
  %3618 = vmatpush1.bf16.msra.mxu0 0
  %3619 = vmatprep.subr.bf16.mxu0 0
  %3620 = vmatpush1.bf16.msra.mxu0 0
  %3621 = vmatprep.subr.bf16.mxu0 0
  %3622 = vmatpush1.bf16.msra.mxu0 0
  %3623 = vmatprep.mubr.bf16.mxu0 0
  %3624 = vmatmul.mubr.bf16.gmra.mrb[0].mxu0 %v3589
  %v3625 = vpop.f32.mrb[0].mxu0
  %v3626 = vadd.f32 0.0, %v3625
  %v3627 = vpop.f32.mrb[0].mxu0
  %v3628 = vpop.f32.mrb[0].mxu0
  %v3629 = vadd.f32 0.0, %v3628
  %v3630 = vpop.f32.mrb[0].mxu0
  %3631 = vdwg.mxu0
  %3632 = vrot.lane.b32.xlu0 %v642, 64
  %v3633 = vpop.permute.xlu0 %3632
  %v3636 = vsel %vm2425, %v3140, 0
  %3638 = vmatprep.subr.bf16.mxu0 0
  %3639 = vmatpush1.bf16.msra.mxu0 %v3633
  %3640 = vmatprep.subr.bf16.mxu0 0
  %3641 = vmatpush1.bf16.msra.mxu0 0
  %3642 = vmatprep.subr.bf16.mxu0 0
  %3643 = vmatpush1.bf16.msra.mxu0 0
  %3644 = vmatprep.subr.bf16.mxu0 0
  %3645 = vmatpush1.bf16.msra.mxu0 0
  %3646 = vmatprep.subr.bf16.mxu0 0
  %3647 = vmatpush1.bf16.msra.mxu0 0
  %3648 = vmatprep.subr.bf16.mxu0 0
  %3649 = vmatpush1.bf16.msra.mxu0 0
  %3650 = vmatprep.subr.bf16.mxu0 0
  %3651 = vmatpush1.bf16.msra.mxu0 0
  %3652 = vmatprep.subr.bf16.mxu0 0
  %3653 = vmatpush1.bf16.msra.mxu0 0
  %3654 = vmatprep.subr.bf16.mxu0 0
  %3655 = vmatpush1.bf16.msra.mxu0 0
  %3656 = vmatprep.subr.bf16.mxu0 0
  %3657 = vmatpush1.bf16.msra.mxu0 0
  %3658 = vmatprep.subr.bf16.mxu0 0
  %3659 = vmatpush1.bf16.msra.mxu0 0
  %3660 = vmatprep.subr.bf16.mxu0 0
  %3661 = vmatpush1.bf16.msra.mxu0 0
  %3662 = vmatprep.subr.bf16.mxu0 0
  %3663 = vmatpush1.bf16.msra.mxu0 0
  %3664 = vmatprep.subr.bf16.mxu0 0
  %3665 = vmatpush1.bf16.msra.mxu0 0
  %3666 = vmatprep.subr.bf16.mxu0 0
  %3667 = vmatpush1.bf16.msra.mxu0 0
  %3668 = vmatprep.subr.bf16.mxu0 0
  %3669 = vmatpush1.bf16.msra.mxu0 0
  %3670 = vmatprep.mubr.bf16.mxu0 0
  %3671 = vmatmul.mubr.bf16.gmra.mrb[0].mxu0 %v3636
  %v3672 = vpop.f32.mrb[0].mxu0
  %v3673 = vadd.f32 0.0, %v3672
  %v3674 = vpop.f32.mrb[0].mxu0
  %v3675 = vpop.f32.mrb[0].mxu0
  %v3676 = vadd.f32 0.0, %v3675
  %v3677 = vpop.f32.mrb[0].mxu0
  %3678 = vdwg.mxu0
  %3679 = vrot.lane.b32.xlu0 %v643, 64
  %v3680 = vpop.permute.xlu0 %3679
  %v3683 = vsel %vm2425, %v3141, 0
  %3685 = vmatprep.subr.bf16.mxu0 0
  %3686 = vmatpush1.bf16.msra.mxu0 %v3680
  %3687 = vmatprep.subr.bf16.mxu0 0
  %3688 = vmatpush1.bf16.msra.mxu0 0
  %3689 = vmatprep.subr.bf16.mxu0 0
  %3690 = vmatpush1.bf16.msra.mxu0 0
  %3691 = vmatprep.subr.bf16.mxu0 0
  %3692 = vmatpush1.bf16.msra.mxu0 0
  %3693 = vmatprep.subr.bf16.mxu0 0
  %3694 = vmatpush1.bf16.msra.mxu0 0
  %3695 = vmatprep.subr.bf16.mxu0 0
  %3696 = vmatpush1.bf16.msra.mxu0 0
  %3697 = vmatprep.subr.bf16.mxu0 0
  %3698 = vmatpush1.bf16.msra.mxu0 0
  %3699 = vmatprep.subr.bf16.mxu0 0
  %3700 = vmatpush1.bf16.msra.mxu0 0
  %3701 = vmatprep.subr.bf16.mxu0 0
  %3702 = vmatpush1.bf16.msra.mxu0 0
  %3703 = vmatprep.subr.bf16.mxu0 0
  %3704 = vmatpush1.bf16.msra.mxu0 0
  %3705 = vmatprep.subr.bf16.mxu0 0
  %3706 = vmatpush1.bf16.msra.mxu0 0
  %3707 = vmatprep.subr.bf16.mxu0 0
  %3708 = vmatpush1.bf16.msra.mxu0 0
  %3709 = vmatprep.subr.bf16.mxu0 0
  %3710 = vmatpush1.bf16.msra.mxu0 0
  %3711 = vmatprep.subr.bf16.mxu0 0
  %3712 = vmatpush1.bf16.msra.mxu0 0
  %3713 = vmatprep.subr.bf16.mxu0 0
  %3714 = vmatpush1.bf16.msra.mxu0 0
  %3715 = vmatprep.subr.bf16.mxu0 0
  %3716 = vmatpush1.bf16.msra.mxu0 0
  %3717 = vmatprep.mubr.bf16.mxu0 0
  %3718 = vmatmul.mubr.bf16.gmra.mrb[0].mxu0 %v3683
  %v3719 = vpop.f32.mrb[0].mxu0
  %v3720 = vadd.f32 0.0, %v3719
  %v3721 = vpop.f32.mrb[0].mxu0
  %v3722 = vpop.f32.mrb[0].mxu0
  %v3723 = vadd.f32 0.0, %v3722
  %v3724 = vpop.f32.mrb[0].mxu0
  %3725 = vdwg.mxu0
  %3726 = vrot.lane.b32.xlu0 %v644, 64
  %v3727 = vpop.permute.xlu0 %3726
  %v3730 = vsel %vm2425, %v3142, 0
  %3732 = vmatprep.subr.bf16.mxu0 0
  %3733 = vmatpush1.bf16.msra.mxu0 %v3727
  %3734 = vmatprep.subr.bf16.mxu0 0
  %3735 = vmatpush1.bf16.msra.mxu0 0
  %3736 = vmatprep.subr.bf16.mxu0 0
  %3737 = vmatpush1.bf16.msra.mxu0 0
  %3738 = vmatprep.subr.bf16.mxu0 0
  %3739 = vmatpush1.bf16.msra.mxu0 0
  %3740 = vmatprep.subr.bf16.mxu0 0
  %3741 = vmatpush1.bf16.msra.mxu0 0
  %3742 = vmatprep.subr.bf16.mxu0 0
  %3743 = vmatpush1.bf16.msra.mxu0 0
  %3744 = vmatprep.subr.bf16.mxu0 0
  %3745 = vmatpush1.bf16.msra.mxu0 0
  %3746 = vmatprep.subr.bf16.mxu0 0
  %3747 = vmatpush1.bf16.msra.mxu0 0
  %3748 = vmatprep.subr.bf16.mxu0 0
  %3749 = vmatpush1.bf16.msra.mxu0 0
  %3750 = vmatprep.subr.bf16.mxu0 0
  %3751 = vmatpush1.bf16.msra.mxu0 0
  %3752 = vmatprep.subr.bf16.mxu0 0
  %3753 = vmatpush1.bf16.msra.mxu0 0
  %3754 = vmatprep.subr.bf16.mxu0 0
  %3755 = vmatpush1.bf16.msra.mxu0 0
  %3756 = vmatprep.subr.bf16.mxu0 0
  %3757 = vmatpush1.bf16.msra.mxu0 0
  %3758 = vmatprep.subr.bf16.mxu0 0
  %3759 = vmatpush1.bf16.msra.mxu0 0
  %3760 = vmatprep.subr.bf16.mxu0 0
  %3761 = vmatpush1.bf16.msra.mxu0 0
  %3762 = vmatprep.subr.bf16.mxu0 0
  %3763 = vmatpush1.bf16.msra.mxu0 0
  %3764 = vmatprep.mubr.bf16.mxu0 0
  %3765 = vmatmul.mubr.bf16.gmra.mrb[0].mxu0 %v3730
  %v3766 = vpop.f32.mrb[0].mxu0
  %v3767 = vadd.f32 0.0, %v3766
  %v3768 = vpop.f32.mrb[0].mxu0
  %v3769 = vpop.f32.mrb[0].mxu0
  %v3770 = vadd.f32 0.0, %v3769
  %v3771 = vpop.f32.mrb[0].mxu0
  %3772 = vdwg.mxu0
  %3773 = vrot.lane.b32.xlu0 %v645, 64
  %v3774 = vpop.permute.xlu0 %3773
  %v3777 = vsel %vm2425, %v3143, 0
  %3779 = vmatprep.subr.bf16.mxu0 0
  %3780 = vmatpush1.bf16.msra.mxu0 %v3774
  %3781 = vmatprep.subr.bf16.mxu0 0
  %3782 = vmatpush1.bf16.msra.mxu0 0
  %3783 = vmatprep.subr.bf16.mxu0 0
  %3784 = vmatpush1.bf16.msra.mxu0 0
  %3785 = vmatprep.subr.bf16.mxu0 0
  %3786 = vmatpush1.bf16.msra.mxu0 0
  %3787 = vmatprep.subr.bf16.mxu0 0
  %3788 = vmatpush1.bf16.msra.mxu0 0
  %3789 = vmatprep.subr.bf16.mxu0 0
  %3790 = vmatpush1.bf16.msra.mxu0 0
  %3791 = vmatprep.subr.bf16.mxu0 0
  %3792 = vmatpush1.bf16.msra.mxu0 0
  %3793 = vmatprep.subr.bf16.mxu0 0
  %3794 = vmatpush1.bf16.msra.mxu0 0
  %3795 = vmatprep.subr.bf16.mxu0 0
  %3796 = vmatpush1.bf16.msra.mxu0 0
  %3797 = vmatprep.subr.bf16.mxu0 0
  %3798 = vmatpush1.bf16.msra.mxu0 0
  %3799 = vmatprep.subr.bf16.mxu0 0
  %3800 = vmatpush1.bf16.msra.mxu0 0
  %3801 = vmatprep.subr.bf16.mxu0 0
  %3802 = vmatpush1.bf16.msra.mxu0 0
  %3803 = vmatprep.subr.bf16.mxu0 0
  %3804 = vmatpush1.bf16.msra.mxu0 0
  %3805 = vmatprep.subr.bf16.mxu0 0
  %3806 = vmatpush1.bf16.msra.mxu0 0
  %3807 = vmatprep.subr.bf16.mxu0 0
  %3808 = vmatpush1.bf16.msra.mxu0 0
  %3809 = vmatprep.subr.bf16.mxu0 0
  %3810 = vmatpush1.bf16.msra.mxu0 0
  %3811 = vmatprep.mubr.bf16.mxu0 0
  %3812 = vmatmul.mubr.bf16.gmra.mrb[0].mxu0 %v3777
  %v3813 = vpop.f32.mrb[0].mxu0
  %v3814 = vadd.f32 0.0, %v3813
  %v3815 = vpop.f32.mrb[0].mxu0
  %v3816 = vpop.f32.mrb[0].mxu0
  %v3817 = vadd.f32 0.0, %v3816
  %v3818 = vpop.f32.mrb[0].mxu0
  %3819 = vdwg.mxu0
  %3820 = vrot.lane.b32.xlu0 %v646, 64
  %v3821 = vpop.permute.xlu0 %3820
  %v3824 = vsel %vm2425, %v3144, 0
  %3826 = vmatprep.subr.bf16.mxu0 0
  %3827 = vmatpush1.bf16.msra.mxu0 %v3821
  %3828 = vmatprep.subr.bf16.mxu0 0
  %3829 = vmatpush1.bf16.msra.mxu0 0
  %3830 = vmatprep.subr.bf16.mxu0 0
  %3831 = vmatpush1.bf16.msra.mxu0 0
  %3832 = vmatprep.subr.bf16.mxu0 0
  %3833 = vmatpush1.bf16.msra.mxu0 0
  %3834 = vmatprep.subr.bf16.mxu0 0
  %3835 = vmatpush1.bf16.msra.mxu0 0
  %3836 = vmatprep.subr.bf16.mxu0 0
  %3837 = vmatpush1.bf16.msra.mxu0 0
  %3838 = vmatprep.subr.bf16.mxu0 0
  %3839 = vmatpush1.bf16.msra.mxu0 0
  %3840 = vmatprep.subr.bf16.mxu0 0
  %3841 = vmatpush1.bf16.msra.mxu0 0
  %3842 = vmatprep.subr.bf16.mxu0 0
  %3843 = vmatpush1.bf16.msra.mxu0 0
  %3844 = vmatprep.subr.bf16.mxu0 0
  %3845 = vmatpush1.bf16.msra.mxu0 0
  %3846 = vmatprep.subr.bf16.mxu0 0
  %3847 = vmatpush1.bf16.msra.mxu0 0
  %3848 = vmatprep.subr.bf16.mxu0 0
  %3849 = vmatpush1.bf16.msra.mxu0 0
  %3850 = vmatprep.subr.bf16.mxu0 0
  %3851 = vmatpush1.bf16.msra.mxu0 0
  %3852 = vmatprep.subr.bf16.mxu0 0
  %3853 = vmatpush1.bf16.msra.mxu0 0
  %3854 = vmatprep.subr.bf16.mxu0 0
  %3855 = vmatpush1.bf16.msra.mxu0 0
  %3856 = vmatprep.subr.bf16.mxu0 0
  %3857 = vmatpush1.bf16.msra.mxu0 0
  %3858 = vmatprep.mubr.bf16.mxu0 0
  %3859 = vmatmul.mubr.bf16.gmra.mrb[0].mxu0 %v3824
  %v3860 = vpop.f32.mrb[0].mxu0
  %v3861 = vadd.f32 0.0, %v3860
  %v3862 = vpop.f32.mrb[0].mxu0
  %v3863 = vpop.f32.mrb[0].mxu0
  %v3864 = vadd.f32 0.0, %v3863
  %v3865 = vpop.f32.mrb[0].mxu0
  %3866 = vdwg.mxu0
  %3867 = vrot.lane.b32.xlu0 %v647, 64
  %v3868 = vpop.permute.xlu0 %3867
  %v3871 = vsel %vm2425, %v3145, 0
  %3873 = vmatprep.subr.bf16.mxu0 0
  %3874 = vmatpush1.bf16.msra.mxu0 %v3868
  %3875 = vmatprep.subr.bf16.mxu0 0
  %3876 = vmatpush1.bf16.msra.mxu0 0
  %3877 = vmatprep.subr.bf16.mxu0 0
  %3878 = vmatpush1.bf16.msra.mxu0 0
  %3879 = vmatprep.subr.bf16.mxu0 0
  %3880 = vmatpush1.bf16.msra.mxu0 0
  %3881 = vmatprep.subr.bf16.mxu0 0
  %3882 = vmatpush1.bf16.msra.mxu0 0
  %3883 = vmatprep.subr.bf16.mxu0 0
  %3884 = vmatpush1.bf16.msra.mxu0 0
  %3885 = vmatprep.subr.bf16.mxu0 0
  %3886 = vmatpush1.bf16.msra.mxu0 0
  %3887 = vmatprep.subr.bf16.mxu0 0
  %3888 = vmatpush1.bf16.msra.mxu0 0
  %3889 = vmatprep.subr.bf16.mxu0 0
  %3890 = vmatpush1.bf16.msra.mxu0 0
  %3891 = vmatprep.subr.bf16.mxu0 0
  %3892 = vmatpush1.bf16.msra.mxu0 0
  %3893 = vmatprep.subr.bf16.mxu0 0
  %3894 = vmatpush1.bf16.msra.mxu0 0
  %3895 = vmatprep.subr.bf16.mxu0 0
  %3896 = vmatpush1.bf16.msra.mxu0 0
  %3897 = vmatprep.subr.bf16.mxu0 0
  %3898 = vmatpush1.bf16.msra.mxu0 0
  %3899 = vmatprep.subr.bf16.mxu0 0
  %3900 = vmatpush1.bf16.msra.mxu0 0
  %3901 = vmatprep.subr.bf16.mxu0 0
  %3902 = vmatpush1.bf16.msra.mxu0 0
  %3903 = vmatprep.subr.bf16.mxu0 0
  %3904 = vmatpush1.bf16.msra.mxu0 0
  %3905 = vmatprep.mubr.bf16.mxu0 0
  %3906 = vmatmul.mubr.bf16.gmra.mrb[0].mxu0 %v3871
  %v3907 = vpop.f32.mrb[0].mxu0
  %v3908 = vadd.f32 0.0, %v3907
  %v3909 = vpop.f32.mrb[0].mxu0
  %v3910 = vpop.f32.mrb[0].mxu0
  %v3911 = vadd.f32 0.0, %v3910
  %v3912 = vpop.f32.mrb[0].mxu0
  %3913 = vdwg.mxu0
  %3914 = vrot.lane.b32.xlu0 %v648, 64
  %v3915 = vpop.permute.xlu0 %3914
  %v3918 = vsel %vm2425, %v3146, 0
  %3920 = vmatprep.subr.bf16.mxu0 0
  %3921 = vmatpush1.bf16.msra.mxu0 %v3915
  %3922 = vmatprep.subr.bf16.mxu0 0
  %3923 = vmatpush1.bf16.msra.mxu0 0
  %3924 = vmatprep.subr.bf16.mxu0 0
  %3925 = vmatpush1.bf16.msra.mxu0 0
  %3926 = vmatprep.subr.bf16.mxu0 0
  %3927 = vmatpush1.bf16.msra.mxu0 0
  %3928 = vmatprep.subr.bf16.mxu0 0
  %3929 = vmatpush1.bf16.msra.mxu0 0
  %3930 = vmatprep.subr.bf16.mxu0 0
  %3931 = vmatpush1.bf16.msra.mxu0 0
  %3932 = vmatprep.subr.bf16.mxu0 0
  %3933 = vmatpush1.bf16.msra.mxu0 0
  %3934 = vmatprep.subr.bf16.mxu0 0
  %3935 = vmatpush1.bf16.msra.mxu0 0
  %3936 = vmatprep.subr.bf16.mxu0 0
  %3937 = vmatpush1.bf16.msra.mxu0 0
  %3938 = vmatprep.subr.bf16.mxu0 0
  %3939 = vmatpush1.bf16.msra.mxu0 0
  %3940 = vmatprep.subr.bf16.mxu0 0
  %3941 = vmatpush1.bf16.msra.mxu0 0
  %3942 = vmatprep.subr.bf16.mxu0 0
  %3943 = vmatpush1.bf16.msra.mxu0 0
  %3944 = vmatprep.subr.bf16.mxu0 0
  %3945 = vmatpush1.bf16.msra.mxu0 0
  %3946 = vmatprep.subr.bf16.mxu0 0
  %3947 = vmatpush1.bf16.msra.mxu0 0
  %3948 = vmatprep.subr.bf16.mxu0 0
  %3949 = vmatpush1.bf16.msra.mxu0 0
  %3950 = vmatprep.subr.bf16.mxu0 0
  %3951 = vmatpush1.bf16.msra.mxu0 0
  %3952 = vmatprep.mubr.bf16.mxu0 0
  %3953 = vmatmul.mubr.bf16.gmra.mrb[0].mxu0 %v3918
  %v3954 = vpop.f32.mrb[0].mxu0
  %v3955 = vadd.f32 0.0, %v3954
  %v3956 = vpop.f32.mrb[0].mxu0
  %v3957 = vpop.f32.mrb[0].mxu0
  %v3958 = vadd.f32 0.0, %v3957
  %v3959 = vpop.f32.mrb[0].mxu0
  %3960 = vdwg.mxu0
  %3961 = vrot.lane.b32.xlu0 %v649, 64
  %v3962 = vpop.permute.xlu0 %3961
  %v3965 = vsel %vm2425, %v3147, 0
  %3967 = vmatprep.subr.bf16.mxu0 0
  %3968 = vmatpush1.bf16.msra.mxu0 %v3962
  %3969 = vmatprep.subr.bf16.mxu0 0
  %3970 = vmatpush1.bf16.msra.mxu0 0
  %3971 = vmatprep.subr.bf16.mxu0 0
  %3972 = vmatpush1.bf16.msra.mxu0 0
  %3973 = vmatprep.subr.bf16.mxu0 0
  %3974 = vmatpush1.bf16.msra.mxu0 0
  %3975 = vmatprep.subr.bf16.mxu0 0
  %3976 = vmatpush1.bf16.msra.mxu0 0
  %3977 = vmatprep.subr.bf16.mxu0 0
  %3978 = vmatpush1.bf16.msra.mxu0 0
  %3979 = vmatprep.subr.bf16.mxu0 0
  %3980 = vmatpush1.bf16.msra.mxu0 0
  %3981 = vmatprep.subr.bf16.mxu0 0
  %3982 = vmatpush1.bf16.msra.mxu0 0
  %3983 = vmatprep.subr.bf16.mxu0 0
  %3984 = vmatpush1.bf16.msra.mxu0 0
  %3985 = vmatprep.subr.bf16.mxu0 0
  %3986 = vmatpush1.bf16.msra.mxu0 0
  %3987 = vmatprep.subr.bf16.mxu0 0
  %3988 = vmatpush1.bf16.msra.mxu0 0
  %3989 = vmatprep.subr.bf16.mxu0 0
  %3990 = vmatpush1.bf16.msra.mxu0 0
  %3991 = vmatprep.subr.bf16.mxu0 0
  %3992 = vmatpush1.bf16.msra.mxu0 0
  %3993 = vmatprep.subr.bf16.mxu0 0
  %3994 = vmatpush1.bf16.msra.mxu0 0
  %3995 = vmatprep.subr.bf16.mxu0 0
  %3996 = vmatpush1.bf16.msra.mxu0 0
  %3997 = vmatprep.subr.bf16.mxu0 0
  %3998 = vmatpush1.bf16.msra.mxu0 0
  %3999 = vmatprep.mubr.bf16.mxu0 0
  %4000 = vmatmul.mubr.bf16.gmra.mrb[0].mxu0 %v3965
  %v4001 = vpop.f32.mrb[0].mxu0
  %v4002 = vadd.f32 0.0, %v4001
  %v4003 = vpop.f32.mrb[0].mxu0
  %v4004 = vpop.f32.mrb[0].mxu0
  %v4005 = vadd.f32 0.0, %v4004
  %v4006 = vpop.f32.mrb[0].mxu0
  %4007 = vdwg.mxu0
  %4008 = vrot.lane.b32.xlu0 %v650, 64
  %v4009 = vpop.permute.xlu0 %4008
  %v4012 = vsel %vm2425, %v3148, 0
  %4014 = vmatprep.subr.bf16.mxu0 0
  %4015 = vmatpush1.bf16.msra.mxu0 %v4009
  %4016 = vmatprep.subr.bf16.mxu0 0
  %4017 = vmatpush1.bf16.msra.mxu0 0
  %4018 = vmatprep.subr.bf16.mxu0 0
  %4019 = vmatpush1.bf16.msra.mxu0 0
  %4020 = vmatprep.subr.bf16.mxu0 0
  %4021 = vmatpush1.bf16.msra.mxu0 0
  %4022 = vmatprep.subr.bf16.mxu0 0
  %4023 = vmatpush1.bf16.msra.mxu0 0
  %4024 = vmatprep.subr.bf16.mxu0 0
  %4025 = vmatpush1.bf16.msra.mxu0 0
  %4026 = vmatprep.subr.bf16.mxu0 0
  %4027 = vmatpush1.bf16.msra.mxu0 0
  %4028 = vmatprep.subr.bf16.mxu0 0
  %4029 = vmatpush1.bf16.msra.mxu0 0
  %4030 = vmatprep.subr.bf16.mxu0 0
  %4031 = vmatpush1.bf16.msra.mxu0 0
  %4032 = vmatprep.subr.bf16.mxu0 0
  %4033 = vmatpush1.bf16.msra.mxu0 0
  %4034 = vmatprep.subr.bf16.mxu0 0
  %4035 = vmatpush1.bf16.msra.mxu0 0
  %4036 = vmatprep.subr.bf16.mxu0 0
  %4037 = vmatpush1.bf16.msra.mxu0 0
  %4038 = vmatprep.subr.bf16.mxu0 0
  %4039 = vmatpush1.bf16.msra.mxu0 0
  %4040 = vmatprep.subr.bf16.mxu0 0
  %4041 = vmatpush1.bf16.msra.mxu0 0
  %4042 = vmatprep.subr.bf16.mxu0 0
  %4043 = vmatpush1.bf16.msra.mxu0 0
  %4044 = vmatprep.subr.bf16.mxu0 0
  %4045 = vmatpush1.bf16.msra.mxu0 0
  %4046 = vmatprep.mubr.bf16.mxu0 0
  %4047 = vmatmul.mubr.bf16.gmra.mrb[0].mxu0 %v4012
  %v4048 = vpop.f32.mrb[0].mxu0
  %v4049 = vadd.f32 0.0, %v4048
  %v4050 = vpop.f32.mrb[0].mxu0
  %v4051 = vpop.f32.mrb[0].mxu0
  %v4052 = vadd.f32 0.0, %v4051
  %v4053 = vpop.f32.mrb[0].mxu0
  %4054 = vdwg.mxu0
  %4055 = vrot.lane.b32.xlu0 %v651, 64
  %v4056 = vpop.permute.xlu0 %4055
  %v4059 = vsel %vm2425, %v3149, 0
  %4061 = vmatprep.subr.bf16.mxu0 0
  %4062 = vmatpush1.bf16.msra.mxu0 %v4056
  %4063 = vmatprep.subr.bf16.mxu0 0
  %4064 = vmatpush1.bf16.msra.mxu0 0
  %4065 = vmatprep.subr.bf16.mxu0 0
  %4066 = vmatpush1.bf16.msra.mxu0 0
  %4067 = vmatprep.subr.bf16.mxu0 0
  %4068 = vmatpush1.bf16.msra.mxu0 0
  %4069 = vmatprep.subr.bf16.mxu0 0
  %4070 = vmatpush1.bf16.msra.mxu0 0
  %4071 = vmatprep.subr.bf16.mxu0 0
  %4072 = vmatpush1.bf16.msra.mxu0 0
  %4073 = vmatprep.subr.bf16.mxu0 0
  %4074 = vmatpush1.bf16.msra.mxu0 0
  %4075 = vmatprep.subr.bf16.mxu0 0
  %4076 = vmatpush1.bf16.msra.mxu0 0
  %4077 = vmatprep.subr.bf16.mxu0 0
  %4078 = vmatpush1.bf16.msra.mxu0 0
  %4079 = vmatprep.subr.bf16.mxu0 0
  %4080 = vmatpush1.bf16.msra.mxu0 0
  %4081 = vmatprep.subr.bf16.mxu0 0
  %4082 = vmatpush1.bf16.msra.mxu0 0
  %4083 = vmatprep.subr.bf16.mxu0 0
  %4084 = vmatpush1.bf16.msra.mxu0 0
  %4085 = vmatprep.subr.bf16.mxu0 0
  %4086 = vmatpush1.bf16.msra.mxu0 0
  %4087 = vmatprep.subr.bf16.mxu0 0
  %4088 = vmatpush1.bf16.msra.mxu0 0
  %4089 = vmatprep.subr.bf16.mxu0 0
  %4090 = vmatpush1.bf16.msra.mxu0 0
  %4091 = vmatprep.subr.bf16.mxu0 0
  %4092 = vmatpush1.bf16.msra.mxu0 0
  %4093 = vmatprep.mubr.bf16.mxu0 0
  %4094 = vmatmul.mubr.bf16.gmra.mrb[0].mxu0 %v4059
  %v4095 = vpop.f32.mrb[0].mxu0
  %v4096 = vadd.f32 0.0, %v4095
  %v4097 = vpop.f32.mrb[0].mxu0
  %v4098 = vpop.f32.mrb[0].mxu0
  %v4099 = vadd.f32 0.0, %v4098
  %v4100 = vpop.f32.mrb[0].mxu0
  %4101 = vdwg.mxu0
  %4102 = vrot.lane.b32.xlu0 %v652, 64
  %v4103 = vpop.permute.xlu0 %4102
  %v4106 = vsel %vm2425, %v3150, 0
  %4108 = vmatprep.subr.bf16.mxu0 0
  %4109 = vmatpush1.bf16.msra.mxu0 %v4103
  %4110 = vmatprep.subr.bf16.mxu0 0
  %4111 = vmatpush1.bf16.msra.mxu0 0
  %4112 = vmatprep.subr.bf16.mxu0 0
  %4113 = vmatpush1.bf16.msra.mxu0 0
  %4114 = vmatprep.subr.bf16.mxu0 0
  %4115 = vmatpush1.bf16.msra.mxu0 0
  %4116 = vmatprep.subr.bf16.mxu0 0
  %4117 = vmatpush1.bf16.msra.mxu0 0
  %4118 = vmatprep.subr.bf16.mxu0 0
  %4119 = vmatpush1.bf16.msra.mxu0 0
  %4120 = vmatprep.subr.bf16.mxu0 0
  %4121 = vmatpush1.bf16.msra.mxu0 0
  %4122 = vmatprep.subr.bf16.mxu0 0
  %4123 = vmatpush1.bf16.msra.mxu0 0
  %4124 = vmatprep.subr.bf16.mxu0 0
  %4125 = vmatpush1.bf16.msra.mxu0 0
  %4126 = vmatprep.subr.bf16.mxu0 0
  %4127 = vmatpush1.bf16.msra.mxu0 0
  %4128 = vmatprep.subr.bf16.mxu0 0
  %4129 = vmatpush1.bf16.msra.mxu0 0
  %4130 = vmatprep.subr.bf16.mxu0 0
  %4131 = vmatpush1.bf16.msra.mxu0 0
  %4132 = vmatprep.subr.bf16.mxu0 0
  %4133 = vmatpush1.bf16.msra.mxu0 0
  %4134 = vmatprep.subr.bf16.mxu0 0
  %4135 = vmatpush1.bf16.msra.mxu0 0
  %4136 = vmatprep.subr.bf16.mxu0 0
  %4137 = vmatpush1.bf16.msra.mxu0 0
  %4138 = vmatprep.subr.bf16.mxu0 0
  %4139 = vmatpush1.bf16.msra.mxu0 0
  %4140 = vmatprep.mubr.bf16.mxu0 0
  %4141 = vmatmul.mubr.bf16.gmra.mrb[0].mxu0 %v4106
  %v4142 = vpop.f32.mrb[0].mxu0
  %v4143 = vadd.f32 0.0, %v4142
  %v4144 = vpop.f32.mrb[0].mxu0
  %v4145 = vpop.f32.mrb[0].mxu0
  %v4146 = vadd.f32 0.0, %v4145
  %v4147 = vpop.f32.mrb[0].mxu0
  %4148 = vdwg.mxu0
  %4149 = vrot.lane.b32.xlu0 %v653, 64
  %v4150 = vpop.permute.xlu0 %4149
  %v4153 = vsel %vm2425, %v3151, 0
  %4155 = vmatprep.subr.bf16.mxu0 0
  %4156 = vmatpush1.bf16.msra.mxu0 %v4150
  %4157 = vmatprep.subr.bf16.mxu0 0
  %4158 = vmatpush1.bf16.msra.mxu0 0
  %4159 = vmatprep.subr.bf16.mxu0 0
  %4160 = vmatpush1.bf16.msra.mxu0 0
  %4161 = vmatprep.subr.bf16.mxu0 0
  %4162 = vmatpush1.bf16.msra.mxu0 0
  %4163 = vmatprep.subr.bf16.mxu0 0
  %4164 = vmatpush1.bf16.msra.mxu0 0
  %4165 = vmatprep.subr.bf16.mxu0 0
  %4166 = vmatpush1.bf16.msra.mxu0 0
  %4167 = vmatprep.subr.bf16.mxu0 0
  %4168 = vmatpush1.bf16.msra.mxu0 0
  %4169 = vmatprep.subr.bf16.mxu0 0
  %4170 = vmatpush1.bf16.msra.mxu0 0
  %4171 = vmatprep.subr.bf16.mxu0 0
  %4172 = vmatpush1.bf16.msra.mxu0 0
  %4173 = vmatprep.subr.bf16.mxu0 0
  %4174 = vmatpush1.bf16.msra.mxu0 0
  %4175 = vmatprep.subr.bf16.mxu0 0
  %4176 = vmatpush1.bf16.msra.mxu0 0
  %4177 = vmatprep.subr.bf16.mxu0 0
  %4178 = vmatpush1.bf16.msra.mxu0 0
  %4179 = vmatprep.subr.bf16.mxu0 0
  %4180 = vmatpush1.bf16.msra.mxu0 0
  %4181 = vmatprep.subr.bf16.mxu0 0
  %4182 = vmatpush1.bf16.msra.mxu0 0
  %4183 = vmatprep.subr.bf16.mxu0 0
  %4184 = vmatpush1.bf16.msra.mxu0 0
  %4185 = vmatprep.subr.bf16.mxu0 0
  %4186 = vmatpush1.bf16.msra.mxu0 0
  %4187 = vmatprep.mubr.bf16.mxu0 0
  %4188 = vmatmul.mubr.bf16.gmra.mrb[0].mxu0 %v4153
  %v4189 = vpop.f32.mrb[0].mxu0
  %v4190 = vadd.f32 0.0, %v4189
  %v4191 = vpop.f32.mrb[0].mxu0
  %v4192 = vpop.f32.mrb[0].mxu0
  %v4193 = vadd.f32 0.0, %v4192
  %v4194 = vpop.f32.mrb[0].mxu0
  %4195 = vdwg.mxu0
  %4196 = vrot.lane.b32.xlu0 %v654, 64
  %v4197 = vpop.permute.xlu0 %4196
  %v4200 = vsel %vm2425, %v3152, 0
  %4202 = vmatprep.subr.bf16.mxu0 0
  %4203 = vmatpush1.bf16.msra.mxu0 %v4197
  %4204 = vmatprep.subr.bf16.mxu0 0
  %4205 = vmatpush1.bf16.msra.mxu0 0
  %4206 = vmatprep.subr.bf16.mxu0 0
  %4207 = vmatpush1.bf16.msra.mxu0 0
  %4208 = vmatprep.subr.bf16.mxu0 0
  %4209 = vmatpush1.bf16.msra.mxu0 0
  %4210 = vmatprep.subr.bf16.mxu0 0
  %4211 = vmatpush1.bf16.msra.mxu0 0
  %4212 = vmatprep.subr.bf16.mxu0 0
  %4213 = vmatpush1.bf16.msra.mxu0 0
  %4214 = vmatprep.subr.bf16.mxu0 0
  %4215 = vmatpush1.bf16.msra.mxu0 0
  %4216 = vmatprep.subr.bf16.mxu0 0
  %4217 = vmatpush1.bf16.msra.mxu0 0
  %4218 = vmatprep.subr.bf16.mxu0 0
  %4219 = vmatpush1.bf16.msra.mxu0 0
  %4220 = vmatprep.subr.bf16.mxu0 0
  %4221 = vmatpush1.bf16.msra.mxu0 0
  %4222 = vmatprep.subr.bf16.mxu0 0
  %4223 = vmatpush1.bf16.msra.mxu0 0
  %4224 = vmatprep.subr.bf16.mxu0 0
  %4225 = vmatpush1.bf16.msra.mxu0 0
  %4226 = vmatprep.subr.bf16.mxu0 0
  %4227 = vmatpush1.bf16.msra.mxu0 0
  %4228 = vmatprep.subr.bf16.mxu0 0
  %4229 = vmatpush1.bf16.msra.mxu0 0
  %4230 = vmatprep.subr.bf16.mxu0 0
  %4231 = vmatpush1.bf16.msra.mxu0 0
  %4232 = vmatprep.subr.bf16.mxu0 0
  %4233 = vmatpush1.bf16.msra.mxu0 0
  %4234 = vmatprep.mubr.bf16.mxu0 0
  %4235 = vmatmul.mubr.bf16.gmra.mrb[0].mxu0 %v4200
  %v4236 = vpop.f32.mrb[0].mxu0
  %v4237 = vadd.f32 0.0, %v4236
  %v4238 = vpop.f32.mrb[0].mxu0
  %v4239 = vpop.f32.mrb[0].mxu0
  %v4240 = vadd.f32 0.0, %v4239
  %v4241 = vpop.f32.mrb[0].mxu0
  %4242 = vdwg.mxu0
  %4243 = vrot.lane.b32.xlu0 %v655, 64
  %v4244 = vpop.permute.xlu0 %4243
  %v4247 = vsel %vm2425, %v3153, 0
  %4249 = vmatprep.subr.bf16.mxu0 0
  %4250 = vmatpush1.bf16.msra.mxu0 %v4244
  %4251 = vmatprep.subr.bf16.mxu0 0
  %4252 = vmatpush1.bf16.msra.mxu0 0
  %4253 = vmatprep.subr.bf16.mxu0 0
  %4254 = vmatpush1.bf16.msra.mxu0 0
  %4255 = vmatprep.subr.bf16.mxu0 0
  %4256 = vmatpush1.bf16.msra.mxu0 0
  %4257 = vmatprep.subr.bf16.mxu0 0
  %4258 = vmatpush1.bf16.msra.mxu0 0
  %4259 = vmatprep.subr.bf16.mxu0 0
  %4260 = vmatpush1.bf16.msra.mxu0 0
  %4261 = vmatprep.subr.bf16.mxu0 0
  %4262 = vmatpush1.bf16.msra.mxu0 0
  %4263 = vmatprep.subr.bf16.mxu0 0
  %4264 = vmatpush1.bf16.msra.mxu0 0
  %4265 = vmatprep.subr.bf16.mxu0 0
  %4266 = vmatpush1.bf16.msra.mxu0 0
  %4267 = vmatprep.subr.bf16.mxu0 0
  %4268 = vmatpush1.bf16.msra.mxu0 0
  %4269 = vmatprep.subr.bf16.mxu0 0
  %4270 = vmatpush1.bf16.msra.mxu0 0
  %4271 = vmatprep.subr.bf16.mxu0 0
  %4272 = vmatpush1.bf16.msra.mxu0 0
  %4273 = vmatprep.subr.bf16.mxu0 0
  %4274 = vmatpush1.bf16.msra.mxu0 0
  %4275 = vmatprep.subr.bf16.mxu0 0
  %4276 = vmatpush1.bf16.msra.mxu0 0
  %4277 = vmatprep.subr.bf16.mxu0 0
  %4278 = vmatpush1.bf16.msra.mxu0 0
  %4279 = vmatprep.subr.bf16.mxu0 0
  %4280 = vmatpush1.bf16.msra.mxu0 0
  %4281 = vmatprep.mubr.bf16.mxu0 0
  %4282 = vmatmul.mubr.bf16.gmra.mrb[0].mxu0 %v4247
  %v4283 = vpop.f32.mrb[0].mxu0
  %v4284 = vadd.f32 0.0, %v4283
  %v4285 = vpop.f32.mrb[0].mxu0
  %v4286 = vpop.f32.mrb[0].mxu0
  %v4287 = vadd.f32 0.0, %v4286
  %v4288 = vpop.f32.mrb[0].mxu0
  %4289 = vdwg.mxu0
  %4290 = vrot.lane.b32.xlu0 %v656, 64
  %v4291 = vpop.permute.xlu0 %4290
  %v4294 = vsel %vm2425, %v3154, 0
  %4296 = vmatprep.subr.bf16.mxu0 0
  %4297 = vmatpush1.bf16.msra.mxu0 %v4291
  %4298 = vmatprep.subr.bf16.mxu0 0
  %4299 = vmatpush1.bf16.msra.mxu0 0
  %4300 = vmatprep.subr.bf16.mxu0 0
  %4301 = vmatpush1.bf16.msra.mxu0 0
  %4302 = vmatprep.subr.bf16.mxu0 0
  %4303 = vmatpush1.bf16.msra.mxu0 0
  %4304 = vmatprep.subr.bf16.mxu0 0
  %4305 = vmatpush1.bf16.msra.mxu0 0
  %4306 = vmatprep.subr.bf16.mxu0 0
  %4307 = vmatpush1.bf16.msra.mxu0 0
  %4308 = vmatprep.subr.bf16.mxu0 0
  %4309 = vmatpush1.bf16.msra.mxu0 0
  %4310 = vmatprep.subr.bf16.mxu0 0
  %4311 = vmatpush1.bf16.msra.mxu0 0
  %4312 = vmatprep.subr.bf16.mxu0 0
  %4313 = vmatpush1.bf16.msra.mxu0 0
  %4314 = vmatprep.subr.bf16.mxu0 0
  %4315 = vmatpush1.bf16.msra.mxu0 0
  %4316 = vmatprep.subr.bf16.mxu0 0
  %4317 = vmatpush1.bf16.msra.mxu0 0
  %4318 = vmatprep.subr.bf16.mxu0 0
  %4319 = vmatpush1.bf16.msra.mxu0 0
  %4320 = vmatprep.subr.bf16.mxu0 0
  %4321 = vmatpush1.bf16.msra.mxu0 0
  %4322 = vmatprep.subr.bf16.mxu0 0
  %4323 = vmatpush1.bf16.msra.mxu0 0
  %4324 = vmatprep.subr.bf16.mxu0 0
  %4325 = vmatpush1.bf16.msra.mxu0 0
  %4326 = vmatprep.subr.bf16.mxu0 0
  %4327 = vmatpush1.bf16.msra.mxu0 0
  %4328 = vmatprep.mubr.bf16.mxu0 0
  %4329 = vmatmul.mubr.bf16.gmra.mrb[0].mxu0 %v4294
  %v4330 = vpop.f32.mrb[0].mxu0
  %v4331 = vadd.f32 0.0, %v4330
  %v4332 = vpop.f32.mrb[0].mxu0
  %v4333 = vpop.f32.mrb[0].mxu0
  %v4334 = vadd.f32 0.0, %v4333
  %v4335 = vpop.f32.mrb[0].mxu0
  %4336 = vdwg.mxu0
  %4337 = vrot.lane.b32.xlu0 %v657, 64
  %v4338 = vpop.permute.xlu0 %4337
  %v4341 = vsel %vm2425, %v3155, 0
  %4343 = vmatprep.subr.bf16.mxu0 0
  %4344 = vmatpush1.bf16.msra.mxu0 %v4338
  %4345 = vmatprep.subr.bf16.mxu0 0
  %4346 = vmatpush1.bf16.msra.mxu0 0
  %4347 = vmatprep.subr.bf16.mxu0 0
  %4348 = vmatpush1.bf16.msra.mxu0 0
  %4349 = vmatprep.subr.bf16.mxu0 0
  %4350 = vmatpush1.bf16.msra.mxu0 0
  %4351 = vmatprep.subr.bf16.mxu0 0
  %4352 = vmatpush1.bf16.msra.mxu0 0
  %4353 = vmatprep.subr.bf16.mxu0 0
  %4354 = vmatpush1.bf16.msra.mxu0 0
  %4355 = vmatprep.subr.bf16.mxu0 0
  %4356 = vmatpush1.bf16.msra.mxu0 0
  %4357 = vmatprep.subr.bf16.mxu0 0
  %4358 = vmatpush1.bf16.msra.mxu0 0
  %4359 = vmatprep.subr.bf16.mxu0 0
  %4360 = vmatpush1.bf16.msra.mxu0 0
  %4361 = vmatprep.subr.bf16.mxu0 0
  %4362 = vmatpush1.bf16.msra.mxu0 0
  %4363 = vmatprep.subr.bf16.mxu0 0
  %4364 = vmatpush1.bf16.msra.mxu0 0
  %4365 = vmatprep.subr.bf16.mxu0 0
  %4366 = vmatpush1.bf16.msra.mxu0 0
  %4367 = vmatprep.subr.bf16.mxu0 0
  %4368 = vmatpush1.bf16.msra.mxu0 0
  %4369 = vmatprep.subr.bf16.mxu0 0
  %4370 = vmatpush1.bf16.msra.mxu0 0
  %4371 = vmatprep.subr.bf16.mxu0 0
  %4372 = vmatpush1.bf16.msra.mxu0 0
  %4373 = vmatprep.subr.bf16.mxu0 0
  %4374 = vmatpush1.bf16.msra.mxu0 0
  %4375 = vmatprep.mubr.bf16.mxu0 0
  %4376 = vmatmul.mubr.bf16.gmra.mrb[0].mxu0 %v4341
  %v4377 = vpop.f32.mrb[0].mxu0
  %v4378 = vadd.f32 0.0, %v4377
  %v4379 = vpop.f32.mrb[0].mxu0
  %v4380 = vpop.f32.mrb[0].mxu0
  %v4381 = vadd.f32 0.0, %v4380
  %v4382 = vpop.f32.mrb[0].mxu0
  %4383 = vdwg.mxu0
  %4384 = vrot.lane.b32.xlu0 %v658, 64
  %v4385 = vpop.permute.xlu0 %4384
  %v4388 = vsel %vm2425, %v3156, 0
  %4390 = vmatprep.subr.bf16.mxu0 0
  %4391 = vmatpush1.bf16.msra.mxu0 %v4385
  %4392 = vmatprep.subr.bf16.mxu0 0
  %4393 = vmatpush1.bf16.msra.mxu0 0
  %4394 = vmatprep.subr.bf16.mxu0 0
  %4395 = vmatpush1.bf16.msra.mxu0 0
  %4396 = vmatprep.subr.bf16.mxu0 0
  %4397 = vmatpush1.bf16.msra.mxu0 0
  %4398 = vmatprep.subr.bf16.mxu0 0
  %4399 = vmatpush1.bf16.msra.mxu0 0
  %4400 = vmatprep.subr.bf16.mxu0 0
  %4401 = vmatpush1.bf16.msra.mxu0 0
  %4402 = vmatprep.subr.bf16.mxu0 0
  %4403 = vmatpush1.bf16.msra.mxu0 0
  %4404 = vmatprep.subr.bf16.mxu0 0
  %4405 = vmatpush1.bf16.msra.mxu0 0
  %4406 = vmatprep.subr.bf16.mxu0 0
  %4407 = vmatpush1.bf16.msra.mxu0 0
  %4408 = vmatprep.subr.bf16.mxu0 0
  %4409 = vmatpush1.bf16.msra.mxu0 0
  %4410 = vmatprep.subr.bf16.mxu0 0
  %4411 = vmatpush1.bf16.msra.mxu0 0
  %4412 = vmatprep.subr.bf16.mxu0 0
  %4413 = vmatpush1.bf16.msra.mxu0 0
  %4414 = vmatprep.subr.bf16.mxu0 0
  %4415 = vmatpush1.bf16.msra.mxu0 0
  %4416 = vmatprep.subr.bf16.mxu0 0
  %4417 = vmatpush1.bf16.msra.mxu0 0
  %4418 = vmatprep.subr.bf16.mxu0 0
  %4419 = vmatpush1.bf16.msra.mxu0 0
  %4420 = vmatprep.subr.bf16.mxu0 0
  %4421 = vmatpush1.bf16.msra.mxu0 0
  %4422 = vmatprep.mubr.bf16.mxu0 0
  %4423 = vmatmul.mubr.bf16.gmra.mrb[0].mxu0 %v4388
  %v4424 = vpop.f32.mrb[0].mxu0
  %v4425 = vadd.f32 0.0, %v4424
  %v4426 = vpop.f32.mrb[0].mxu0
  %v4427 = vpop.f32.mrb[0].mxu0
  %v4428 = vadd.f32 0.0, %v4427
  %v4429 = vpop.f32.mrb[0].mxu0
  %4430 = vdwg.mxu0
  %4431 = vrot.lane.b32.xlu0 %v659, 64
  %v4432 = vpop.permute.xlu0 %4431
  %v4435 = vsel %vm2425, %v3157, 0
  %4437 = vmatprep.subr.bf16.mxu0 0
  %4438 = vmatpush1.bf16.msra.mxu0 %v4432
  %4439 = vmatprep.subr.bf16.mxu0 0
  %4440 = vmatpush1.bf16.msra.mxu0 0
  %4441 = vmatprep.subr.bf16.mxu0 0
  %4442 = vmatpush1.bf16.msra.mxu0 0
  %4443 = vmatprep.subr.bf16.mxu0 0
  %4444 = vmatpush1.bf16.msra.mxu0 0
  %4445 = vmatprep.subr.bf16.mxu0 0
  %4446 = vmatpush1.bf16.msra.mxu0 0
  %4447 = vmatprep.subr.bf16.mxu0 0
  %4448 = vmatpush1.bf16.msra.mxu0 0
  %4449 = vmatprep.subr.bf16.mxu0 0
  %4450 = vmatpush1.bf16.msra.mxu0 0
  %4451 = vmatprep.subr.bf16.mxu0 0
  %4452 = vmatpush1.bf16.msra.mxu0 0
  %4453 = vmatprep.subr.bf16.mxu0 0
  %4454 = vmatpush1.bf16.msra.mxu0 0
  %4455 = vmatprep.subr.bf16.mxu0 0
  %4456 = vmatpush1.bf16.msra.mxu0 0
  %4457 = vmatprep.subr.bf16.mxu0 0
  %4458 = vmatpush1.bf16.msra.mxu0 0
  %4459 = vmatprep.subr.bf16.mxu0 0
  %4460 = vmatpush1.bf16.msra.mxu0 0
  %4461 = vmatprep.subr.bf16.mxu0 0
  %4462 = vmatpush1.bf16.msra.mxu0 0
  %4463 = vmatprep.subr.bf16.mxu0 0
  %4464 = vmatpush1.bf16.msra.mxu0 0
  %4465 = vmatprep.subr.bf16.mxu0 0
  %4466 = vmatpush1.bf16.msra.mxu0 0
  %4467 = vmatprep.subr.bf16.mxu0 0
  %4468 = vmatpush1.bf16.msra.mxu0 0
  %4469 = vmatprep.mubr.bf16.mxu0 0
  %4470 = vmatmul.mubr.bf16.gmra.mrb[0].mxu0 %v4435
  %v4471 = vpop.f32.mrb[0].mxu0
  %v4472 = vadd.f32 0.0, %v4471
  %v4473 = vpop.f32.mrb[0].mxu0
  %v4474 = vpop.f32.mrb[0].mxu0
  %v4475 = vadd.f32 0.0, %v4474
  %v4476 = vpop.f32.mrb[0].mxu0
  %4477 = vdwg.mxu0
  %4478 = vrot.lane.b32.xlu0 %v660, 64
  %v4479 = vpop.permute.xlu0 %4478
  %v4482 = vsel %vm2425, %v3158, 0
  %4484 = vmatprep.subr.bf16.mxu0 0
  %4485 = vmatpush1.bf16.msra.mxu0 %v4479
  %4486 = vmatprep.subr.bf16.mxu0 0
  %4487 = vmatpush1.bf16.msra.mxu0 0
  %4488 = vmatprep.subr.bf16.mxu0 0
  %4489 = vmatpush1.bf16.msra.mxu0 0
  %4490 = vmatprep.subr.bf16.mxu0 0
  %4491 = vmatpush1.bf16.msra.mxu0 0
  %4492 = vmatprep.subr.bf16.mxu0 0
  %4493 = vmatpush1.bf16.msra.mxu0 0
  %4494 = vmatprep.subr.bf16.mxu0 0
  %4495 = vmatpush1.bf16.msra.mxu0 0
  %4496 = vmatprep.subr.bf16.mxu0 0
  %4497 = vmatpush1.bf16.msra.mxu0 0
  %4498 = vmatprep.subr.bf16.mxu0 0
  %4499 = vmatpush1.bf16.msra.mxu0 0
  %4500 = vmatprep.subr.bf16.mxu0 0
  %4501 = vmatpush1.bf16.msra.mxu0 0
  %4502 = vmatprep.subr.bf16.mxu0 0
  %4503 = vmatpush1.bf16.msra.mxu0 0
  %4504 = vmatprep.subr.bf16.mxu0 0
  %4505 = vmatpush1.bf16.msra.mxu0 0
  %4506 = vmatprep.subr.bf16.mxu0 0
  %4507 = vmatpush1.bf16.msra.mxu0 0
  %4508 = vmatprep.subr.bf16.mxu0 0
  %4509 = vmatpush1.bf16.msra.mxu0 0
  %4510 = vmatprep.subr.bf16.mxu0 0
  %4511 = vmatpush1.bf16.msra.mxu0 0
  %4512 = vmatprep.subr.bf16.mxu0 0
  %4513 = vmatpush1.bf16.msra.mxu0 0
  %4514 = vmatprep.subr.bf16.mxu0 0
  %4515 = vmatpush1.bf16.msra.mxu0 0
  %4516 = vmatprep.mubr.bf16.mxu0 0
  %4517 = vmatmul.mubr.bf16.gmra.mrb[0].mxu0 %v4482
  %v4518 = vpop.f32.mrb[0].mxu0
  %v4519 = vadd.f32 0.0, %v4518
  %v4520 = vpop.f32.mrb[0].mxu0
  %v4521 = vpop.f32.mrb[0].mxu0
  %v4522 = vadd.f32 0.0, %v4521
  %v4523 = vpop.f32.mrb[0].mxu0
  %4524 = vdwg.mxu0
  %4525 = vrot.lane.b32.xlu0 %v661, 64
  %v4526 = vpop.permute.xlu0 %4525
  %v4529 = vsel %vm2425, %v3159, 0
  %4531 = vmatprep.subr.bf16.mxu0 0
  %4532 = vmatpush1.bf16.msra.mxu0 %v4526
  %4533 = vmatprep.subr.bf16.mxu0 0
  %4534 = vmatpush1.bf16.msra.mxu0 0
  %4535 = vmatprep.subr.bf16.mxu0 0
  %4536 = vmatpush1.bf16.msra.mxu0 0
  %4537 = vmatprep.subr.bf16.mxu0 0
  %4538 = vmatpush1.bf16.msra.mxu0 0
  %4539 = vmatprep.subr.bf16.mxu0 0
  %4540 = vmatpush1.bf16.msra.mxu0 0
  %4541 = vmatprep.subr.bf16.mxu0 0
  %4542 = vmatpush1.bf16.msra.mxu0 0
  %4543 = vmatprep.subr.bf16.mxu0 0
  %4544 = vmatpush1.bf16.msra.mxu0 0
  %4545 = vmatprep.subr.bf16.mxu0 0
  %4546 = vmatpush1.bf16.msra.mxu0 0
  %4547 = vmatprep.subr.bf16.mxu0 0
  %4548 = vmatpush1.bf16.msra.mxu0 0
  %4549 = vmatprep.subr.bf16.mxu0 0
  %4550 = vmatpush1.bf16.msra.mxu0 0
  %4551 = vmatprep.subr.bf16.mxu0 0
  %4552 = vmatpush1.bf16.msra.mxu0 0
  %4553 = vmatprep.subr.bf16.mxu0 0
  %4554 = vmatpush1.bf16.msra.mxu0 0
  %4555 = vmatprep.subr.bf16.mxu0 0
  %4556 = vmatpush1.bf16.msra.mxu0 0
  %4557 = vmatprep.subr.bf16.mxu0 0
  %4558 = vmatpush1.bf16.msra.mxu0 0
  %4559 = vmatprep.subr.bf16.mxu0 0
  %4560 = vmatpush1.bf16.msra.mxu0 0
  %4561 = vmatprep.subr.bf16.mxu0 0
  %4562 = vmatpush1.bf16.msra.mxu0 0
  %4563 = vmatprep.mubr.bf16.mxu0 0
  %4564 = vmatmul.mubr.bf16.gmra.mrb[0].mxu0 %v4529
  %v4565 = vpop.f32.mrb[0].mxu0
  %v4566 = vadd.f32 0.0, %v4565
  %v4567 = vpop.f32.mrb[0].mxu0
  %v4568 = vpop.f32.mrb[0].mxu0
  %v4569 = vadd.f32 0.0, %v4568
  %v4570 = vpop.f32.mrb[0].mxu0
  %4571 = vdwg.mxu0
  %4572 = vrot.lane.b32.xlu0 %v662, 64
  %v4573 = vpop.permute.xlu0 %4572
  %v4576 = vsel %vm2425, %v3160, 0
  %4578 = vmatprep.subr.bf16.mxu0 0
  %4579 = vmatpush1.bf16.msra.mxu0 %v4573
  %4580 = vmatprep.subr.bf16.mxu0 0
  %4581 = vmatpush1.bf16.msra.mxu0 0
  %4582 = vmatprep.subr.bf16.mxu0 0
  %4583 = vmatpush1.bf16.msra.mxu0 0
  %4584 = vmatprep.subr.bf16.mxu0 0
  %4585 = vmatpush1.bf16.msra.mxu0 0
  %4586 = vmatprep.subr.bf16.mxu0 0
  %4587 = vmatpush1.bf16.msra.mxu0 0
  %4588 = vmatprep.subr.bf16.mxu0 0
  %4589 = vmatpush1.bf16.msra.mxu0 0
  %4590 = vmatprep.subr.bf16.mxu0 0
  %4591 = vmatpush1.bf16.msra.mxu0 0
  %4592 = vmatprep.subr.bf16.mxu0 0
  %4593 = vmatpush1.bf16.msra.mxu0 0
  %4594 = vmatprep.subr.bf16.mxu0 0
  %4595 = vmatpush1.bf16.msra.mxu0 0
  %4596 = vmatprep.subr.bf16.mxu0 0
  %4597 = vmatpush1.bf16.msra.mxu0 0
  %4598 = vmatprep.subr.bf16.mxu0 0
  %4599 = vmatpush1.bf16.msra.mxu0 0
  %4600 = vmatprep.subr.bf16.mxu0 0
  %4601 = vmatpush1.bf16.msra.mxu0 0
  %4602 = vmatprep.subr.bf16.mxu0 0
  %4603 = vmatpush1.bf16.msra.mxu0 0
  %4604 = vmatprep.subr.bf16.mxu0 0
  %4605 = vmatpush1.bf16.msra.mxu0 0
  %4606 = vmatprep.subr.bf16.mxu0 0
  %4607 = vmatpush1.bf16.msra.mxu0 0
  %4608 = vmatprep.subr.bf16.mxu0 0
  %4609 = vmatpush1.bf16.msra.mxu0 0
  %4610 = vmatprep.mubr.bf16.mxu0 0
  %4611 = vmatmul.mubr.bf16.gmra.mrb[0].mxu0 %v4576
  %v4612 = vpop.f32.mrb[0].mxu0
  %v4613 = vadd.f32 0.0, %v4612
  %v4614 = vpop.f32.mrb[0].mxu0
  %v4615 = vpop.f32.mrb[0].mxu0
  %v4616 = vadd.f32 0.0, %v4615
  %v4617 = vpop.f32.mrb[0].mxu0
  %4618 = vdwg.mxu0
  %4619 = vrot.lane.b32.xlu0 %v663, 64
  %v4620 = vpop.permute.xlu0 %4619
  %v4623 = vsel %vm2425, %v3161, 0
  %4625 = vmatprep.subr.bf16.mxu0 0
  %4626 = vmatpush1.bf16.msra.mxu0 %v4620
  %4627 = vmatprep.subr.bf16.mxu0 0
  %4628 = vmatpush1.bf16.msra.mxu0 0
  %4629 = vmatprep.subr.bf16.mxu0 0
  %4630 = vmatpush1.bf16.msra.mxu0 0
  %4631 = vmatprep.subr.bf16.mxu0 0
  %4632 = vmatpush1.bf16.msra.mxu0 0
  %4633 = vmatprep.subr.bf16.mxu0 0
  %4634 = vmatpush1.bf16.msra.mxu0 0
  %4635 = vmatprep.subr.bf16.mxu0 0
  %4636 = vmatpush1.bf16.msra.mxu0 0
  %4637 = vmatprep.subr.bf16.mxu0 0
  %4638 = vmatpush1.bf16.msra.mxu0 0
  %4639 = vmatprep.subr.bf16.mxu0 0
  %4640 = vmatpush1.bf16.msra.mxu0 0
  %4641 = vmatprep.subr.bf16.mxu0 0
  %4642 = vmatpush1.bf16.msra.mxu0 0
  %4643 = vmatprep.subr.bf16.mxu0 0
  %4644 = vmatpush1.bf16.msra.mxu0 0
  %4645 = vmatprep.subr.bf16.mxu0 0
  %4646 = vmatpush1.bf16.msra.mxu0 0
  %4647 = vmatprep.subr.bf16.mxu0 0
  %4648 = vmatpush1.bf16.msra.mxu0 0
  %4649 = vmatprep.subr.bf16.mxu0 0
  %4650 = vmatpush1.bf16.msra.mxu0 0
  %4651 = vmatprep.subr.bf16.mxu0 0
  %4652 = vmatpush1.bf16.msra.mxu0 0
  %4653 = vmatprep.subr.bf16.mxu0 0
  %4654 = vmatpush1.bf16.msra.mxu0 0
  %4655 = vmatprep.subr.bf16.mxu0 0
  %4656 = vmatpush1.bf16.msra.mxu0 0
  %4657 = vmatprep.mubr.bf16.mxu0 0
  %4658 = vmatmul.mubr.bf16.gmra.mrb[0].mxu0 %v4623
  %v4659 = vpop.f32.mrb[0].mxu0
  %v4660 = vadd.f32 0.0, %v4659
  %v4661 = vpop.f32.mrb[0].mxu0
  %v4662 = vpop.f32.mrb[0].mxu0
  %v4663 = vadd.f32 0.0, %v4662
  %v4664 = vpop.f32.mrb[0].mxu0
  %4665 = vdwg.mxu0
  %v4666 = vpack.c.bf16 %v3206, %v3203
  %v4667 = vpack.c.bf16 %v3253, %v3250
  %v4668 = vpack.c.bf16 %v3300, %v3297
  %v4669 = vpack.c.bf16 %v3347, %v3344
  %v4670 = vpack.c.bf16 %v3394, %v3391
  %v4671 = vpack.c.bf16 %v3441, %v3438
  %v4672 = vpack.c.bf16 %v3488, %v3485
  %v4673 = vpack.c.bf16 %v3535, %v3532
  %v4674 = vpack.c.bf16 %v3582, %v3579
  %v4675 = vpack.c.bf16 %v3629, %v3626
  %v4676 = vpack.c.bf16 %v3676, %v3673
  %v4677 = vpack.c.bf16 %v3723, %v3720
  %v4678 = vpack.c.bf16 %v3770, %v3767
  %v4679 = vpack.c.bf16 %v3817, %v3814
  %v4680 = vpack.c.bf16 %v3864, %v3861
  %v4681 = vpack.c.bf16 %v3911, %v3908
  %v4682 = vpack.c.bf16 %v3958, %v3955
  %v4683 = vpack.c.bf16 %v4005, %v4002
  %v4684 = vpack.c.bf16 %v4052, %v4049
  %v4685 = vpack.c.bf16 %v4099, %v4096
  %v4686 = vpack.c.bf16 %v4146, %v4143
  %v4687 = vpack.c.bf16 %v4193, %v4190
  %v4688 = vpack.c.bf16 %v4240, %v4237
  %v4689 = vpack.c.bf16 %v4287, %v4284
  %v4690 = vpack.c.bf16 %v4334, %v4331
  %v4691 = vpack.c.bf16 %v4381, %v4378
  %v4692 = vpack.c.bf16 %v4428, %v4425
  %v4693 = vpack.c.bf16 %v4475, %v4472
  %v4694 = vpack.c.bf16 %v4522, %v4519
  %v4695 = vpack.c.bf16 %v4569, %v4566
  %v4696 = vpack.c.bf16 %v4616, %v4613
  %v4697 = vpack.c.bf16 %v4663, %v4660
  %v4698 = vld [vmem:[%s6] sm:$0xf]
  %v4699 = vld [vmem:[%s6 + $0x4] sm:$0xf]
  %v4700 = vld [vmem:[%s6 + $0x8] sm:$0xf]
  %v4701 = vld [vmem:[%s6 + $0xc] sm:$0xf]
  %v4703 = vsel %vm667, %v4666, 0
  %v4706 = vsel %vm667, %v4667, 0
  %v4709 = vsel %vm667, %v4668, 0
  %v4712 = vsel %vm667, %v4669, 0
  %v4715 = vsel %vm667, %v4670, 0
  %v4718 = vsel %vm667, %v4671, 0
  %v4721 = vsel %vm667, %v4672, 0
  %v4724 = vsel %vm667, %v4673, 0
  %vm4726 = vcmask 1043456
  %v4728 = vsel %vm4726, %v4698, 0
  %4730 = vmatprep.subr.bf16.mxu0 0
  %4731 = vmatpush1.bf16.msra.mxu0 %v4728
  %4732 = vmatprep.subr.bf16.mxu0 0
  %4733 = vmatpush1.bf16.msra.mxu0 0
  %4734 = vmatprep.subr.bf16.mxu0 0
  %4735 = vmatpush1.bf16.msra.mxu0 0
  %4736 = vmatprep.subr.bf16.mxu0 0
  %4737 = vmatpush1.bf16.msra.mxu0 0
  %4738 = vmatprep.subr.bf16.mxu0 0
  %4739 = vmatpush1.bf16.msra.mxu0 0
  %4740 = vmatprep.subr.bf16.mxu0 0
  %4741 = vmatpush1.bf16.msra.mxu0 0
  %4742 = vmatprep.subr.bf16.mxu0 0
  %4743 = vmatpush1.bf16.msra.mxu0 0
  %4744 = vmatprep.subr.bf16.mxu0 0
  %4745 = vmatpush1.bf16.msra.mxu0 0
  %4746 = vmatprep.subr.bf16.mxu0 0
  %4747 = vmatpush1.bf16.msra.mxu0 0
  %4748 = vmatprep.subr.bf16.mxu0 0
  %4749 = vmatpush1.bf16.msra.mxu0 0
  %4750 = vmatprep.subr.bf16.mxu0 0
  %4751 = vmatpush1.bf16.msra.mxu0 0
  %4752 = vmatprep.subr.bf16.mxu0 0
  %4753 = vmatpush1.bf16.msra.mxu0 0
  %4754 = vmatprep.subr.bf16.mxu0 0
  %4755 = vmatpush1.bf16.msra.mxu0 0
  %4756 = vmatprep.subr.bf16.mxu0 0
  %4757 = vmatpush1.bf16.msra.mxu0 0
  %4758 = vmatprep.subr.bf16.mxu0 0
  %4759 = vmatpush1.bf16.msra.mxu0 0
  %4760 = vmatprep.subr.bf16.mxu0 0
  %4761 = vmatpush1.bf16.msra.mxu0 0
  %4762 = vmatprep.mubr.bf16.mxu0 0
  %4763 = vmatmul.mubr.bf16.gmra.mrb[0].mxu0 %v4703
  %v4764 = vpop.f32.mrb[0].mxu0
  %v4765 = vadd.f32 0.0, %v4764
  %v4766 = vpop.f32.mrb[0].mxu0
  %v4767 = vpop.f32.mrb[0].mxu0
  %v4768 = vadd.f32 0.0, %v4767
  %v4769 = vpop.f32.mrb[0].mxu0
  %4770 = vmatprep.mubr.bf16.mxu0 0
  %4771 = vmatmul.mubr.bf16.gmra.mrb[0].mxu0 %v4706
  %v4772 = vpop.f32.mrb[0].mxu0
  %v4773 = vadd.f32 0.0, %v4772
  %v4774 = vpop.f32.mrb[0].mxu0
  %v4775 = vpop.f32.mrb[0].mxu0
  %v4776 = vadd.f32 0.0, %v4775
  %v4777 = vpop.f32.mrb[0].mxu0
  %4778 = vmatprep.mubr.bf16.mxu0 0
  %4779 = vmatmul.mubr.bf16.gmra.mrb[0].mxu0 %v4709
  %v4780 = vpop.f32.mrb[0].mxu0
  %v4781 = vadd.f32 0.0, %v4780
  %v4782 = vpop.f32.mrb[0].mxu0
  %v4783 = vpop.f32.mrb[0].mxu0
  %v4784 = vadd.f32 0.0, %v4783
  %v4785 = vpop.f32.mrb[0].mxu0
  %4786 = vmatprep.mubr.bf16.mxu0 0
  %4787 = vmatmul.mubr.bf16.gmra.mrb[0].mxu0 %v4712
  %v4788 = vpop.f32.mrb[0].mxu0
  %v4789 = vadd.f32 0.0, %v4788
  %v4790 = vpop.f32.mrb[0].mxu0
  %v4791 = vpop.f32.mrb[0].mxu0
  %v4792 = vadd.f32 0.0, %v4791
  %v4793 = vpop.f32.mrb[0].mxu0
  %4794 = vmatprep.mubr.bf16.mxu0 0
  %4795 = vmatmul.mubr.bf16.gmra.mrb[0].mxu0 %v4715
  %v4796 = vpop.f32.mrb[0].mxu0
  %v4797 = vadd.f32 0.0, %v4796
  %v4798 = vpop.f32.mrb[0].mxu0
  %v4799 = vpop.f32.mrb[0].mxu0
  %v4800 = vadd.f32 0.0, %v4799
  %v4801 = vpop.f32.mrb[0].mxu0
  %4802 = vmatprep.mubr.bf16.mxu0 0
  %4803 = vmatmul.mubr.bf16.gmra.mrb[0].mxu0 %v4718
  %v4804 = vpop.f32.mrb[0].mxu0
  %v4805 = vadd.f32 0.0, %v4804
  %v4806 = vpop.f32.mrb[0].mxu0
  %v4807 = vpop.f32.mrb[0].mxu0
  %v4808 = vadd.f32 0.0, %v4807
  %v4809 = vpop.f32.mrb[0].mxu0
  %4810 = vmatprep.mubr.bf16.mxu0 0
  %4811 = vmatmul.mubr.bf16.gmra.mrb[0].mxu0 %v4721
  %v4812 = vpop.f32.mrb[0].mxu0
  %v4813 = vadd.f32 0.0, %v4812
  %v4814 = vpop.f32.mrb[0].mxu0
  %v4815 = vpop.f32.mrb[0].mxu0
  %v4816 = vadd.f32 0.0, %v4815
  %v4817 = vpop.f32.mrb[0].mxu0
  %4818 = vmatprep.mubr.bf16.mxu0 0
  %4819 = vmatmul.mubr.bf16.gmra.mrb[0].mxu0 %v4724
  %v4820 = vpop.f32.mrb[0].mxu0
  %v4821 = vadd.f32 0.0, %v4820
  %v4822 = vpop.f32.mrb[0].mxu0
  %v4823 = vpop.f32.mrb[0].mxu0
  %v4824 = vadd.f32 0.0, %v4823
  %v4825 = vpop.f32.mrb[0].mxu0
  %4826 = vdwg.mxu0
  %v4828 = vsel %vm667, %v4674, 0
  %v4831 = vsel %vm667, %v4675, 0
  %v4834 = vsel %vm667, %v4676, 0
  %v4837 = vsel %vm667, %v4677, 0
  %v4840 = vsel %vm667, %v4678, 0
  %v4843 = vsel %vm667, %v4679, 0
  %v4846 = vsel %vm667, %v4680, 0
  %v4849 = vsel %vm667, %v4681, 0
  %v4852 = vsel %vm4726, %v4699, 0
  %4854 = vmatprep.subr.bf16.mxu0 0
  %4855 = vmatpush1.bf16.msra.mxu0 %v4852
  %4856 = vmatprep.subr.bf16.mxu0 0
  %4857 = vmatpush1.bf16.msra.mxu0 0
  %4858 = vmatprep.subr.bf16.mxu0 0
  %4859 = vmatpush1.bf16.msra.mxu0 0
  %4860 = vmatprep.subr.bf16.mxu0 0
  %4861 = vmatpush1.bf16.msra.mxu0 0
  %4862 = vmatprep.subr.bf16.mxu0 0
  %4863 = vmatpush1.bf16.msra.mxu0 0
  %4864 = vmatprep.subr.bf16.mxu0 0
  %4865 = vmatpush1.bf16.msra.mxu0 0
  %4866 = vmatprep.subr.bf16.mxu0 0
  %4867 = vmatpush1.bf16.msra.mxu0 0
  %4868 = vmatprep.subr.bf16.mxu0 0
  %4869 = vmatpush1.bf16.msra.mxu0 0
  %4870 = vmatprep.subr.bf16.mxu0 0
  %4871 = vmatpush1.bf16.msra.mxu0 0
  %4872 = vmatprep.subr.bf16.mxu0 0
  %4873 = vmatpush1.bf16.msra.mxu0 0
  %4874 = vmatprep.subr.bf16.mxu0 0
  %4875 = vmatpush1.bf16.msra.mxu0 0
  %4876 = vmatprep.subr.bf16.mxu0 0
  %4877 = vmatpush1.bf16.msra.mxu0 0
  %4878 = vmatprep.subr.bf16.mxu0 0
  %4879 = vmatpush1.bf16.msra.mxu0 0
  %4880 = vmatprep.subr.bf16.mxu0 0
  %4881 = vmatpush1.bf16.msra.mxu0 0
  %4882 = vmatprep.subr.bf16.mxu0 0
  %4883 = vmatpush1.bf16.msra.mxu0 0
  %4884 = vmatprep.subr.bf16.mxu0 0
  %4885 = vmatpush1.bf16.msra.mxu0 0
  %4886 = vmatprep.mubr.bf16.mxu0 0
  %4887 = vmatmul.mubr.bf16.gmra.mrb[0].mxu0 %v4828
  %v4888 = vpop.f32.mrb[0].mxu0
  %v4889 = vadd.f32 0.0, %v4888
  %v4890 = vpop.f32.mrb[0].mxu0
  %v4891 = vpop.f32.mrb[0].mxu0
  %v4892 = vadd.f32 0.0, %v4891
  %v4893 = vpop.f32.mrb[0].mxu0
  %4894 = vmatprep.mubr.bf16.mxu0 0
  %4895 = vmatmul.mubr.bf16.gmra.mrb[0].mxu0 %v4831
  %v4896 = vpop.f32.mrb[0].mxu0
  %v4897 = vadd.f32 0.0, %v4896
  %v4898 = vpop.f32.mrb[0].mxu0
  %v4899 = vpop.f32.mrb[0].mxu0
  %v4900 = vadd.f32 0.0, %v4899
  %v4901 = vpop.f32.mrb[0].mxu0
  %4902 = vmatprep.mubr.bf16.mxu0 0
  %4903 = vmatmul.mubr.bf16.gmra.mrb[0].mxu0 %v4834
  %v4904 = vpop.f32.mrb[0].mxu0
  %v4905 = vadd.f32 0.0, %v4904
  %v4906 = vpop.f32.mrb[0].mxu0
  %v4907 = vpop.f32.mrb[0].mxu0
  %v4908 = vadd.f32 0.0, %v4907
  %v4909 = vpop.f32.mrb[0].mxu0
  %4910 = vmatprep.mubr.bf16.mxu0 0
  %4911 = vmatmul.mubr.bf16.gmra.mrb[0].mxu0 %v4837
  %v4912 = vpop.f32.mrb[0].mxu0
  %v4913 = vadd.f32 0.0, %v4912
  %v4914 = vpop.f32.mrb[0].mxu0
  %v4915 = vpop.f32.mrb[0].mxu0
  %v4916 = vadd.f32 0.0, %v4915
  %v4917 = vpop.f32.mrb[0].mxu0
  %4918 = vmatprep.mubr.bf16.mxu0 0
  %4919 = vmatmul.mubr.bf16.gmra.mrb[0].mxu0 %v4840
  %v4920 = vpop.f32.mrb[0].mxu0
  %v4921 = vadd.f32 0.0, %v4920
  %v4922 = vpop.f32.mrb[0].mxu0
  %v4923 = vpop.f32.mrb[0].mxu0
  %v4924 = vadd.f32 0.0, %v4923
  %v4925 = vpop.f32.mrb[0].mxu0
  %4926 = vmatprep.mubr.bf16.mxu0 0
  %4927 = vmatmul.mubr.bf16.gmra.mrb[0].mxu0 %v4843
  %v4928 = vpop.f32.mrb[0].mxu0
  %v4929 = vadd.f32 0.0, %v4928
  %v4930 = vpop.f32.mrb[0].mxu0
  %v4931 = vpop.f32.mrb[0].mxu0
  %v4932 = vadd.f32 0.0, %v4931
  %v4933 = vpop.f32.mrb[0].mxu0
  %4934 = vmatprep.mubr.bf16.mxu0 0
  %4935 = vmatmul.mubr.bf16.gmra.mrb[0].mxu0 %v4846
  %v4936 = vpop.f32.mrb[0].mxu0
  %v4937 = vadd.f32 0.0, %v4936
  %v4938 = vpop.f32.mrb[0].mxu0
  %v4939 = vpop.f32.mrb[0].mxu0
  %v4940 = vadd.f32 0.0, %v4939
  %v4941 = vpop.f32.mrb[0].mxu0
  %4942 = vmatprep.mubr.bf16.mxu0 0
  %4943 = vmatmul.mubr.bf16.gmra.mrb[0].mxu0 %v4849
  %v4944 = vpop.f32.mrb[0].mxu0
  %v4945 = vadd.f32 0.0, %v4944
  %v4946 = vpop.f32.mrb[0].mxu0
  %v4947 = vpop.f32.mrb[0].mxu0
  %v4948 = vadd.f32 0.0, %v4947
  %v4949 = vpop.f32.mrb[0].mxu0
  %4950 = vdwg.mxu0
  %v4952 = vsel %vm667, %v4682, 0
  %v4955 = vsel %vm667, %v4683, 0
  %v4958 = vsel %vm667, %v4684, 0
  %v4961 = vsel %vm667, %v4685, 0
  %v4964 = vsel %vm667, %v4686, 0
  %v4967 = vsel %vm667, %v4687, 0
  %v4970 = vsel %vm667, %v4688, 0
  %v4973 = vsel %vm667, %v4689, 0
  %v4976 = vsel %vm4726, %v4700, 0
  %4978 = vmatprep.subr.bf16.mxu0 0
  %4979 = vmatpush1.bf16.msra.mxu0 %v4976
  %4980 = vmatprep.subr.bf16.mxu0 0
  %4981 = vmatpush1.bf16.msra.mxu0 0
  %4982 = vmatprep.subr.bf16.mxu0 0
  %4983 = vmatpush1.bf16.msra.mxu0 0
  %4984 = vmatprep.subr.bf16.mxu0 0
  %4985 = vmatpush1.bf16.msra.mxu0 0
  %4986 = vmatprep.subr.bf16.mxu0 0
  %4987 = vmatpush1.bf16.msra.mxu0 0
  %4988 = vmatprep.subr.bf16.mxu0 0
  %4989 = vmatpush1.bf16.msra.mxu0 0
  %4990 = vmatprep.subr.bf16.mxu0 0
  %4991 = vmatpush1.bf16.msra.mxu0 0
  %4992 = vmatprep.subr.bf16.mxu0 0
  %4993 = vmatpush1.bf16.msra.mxu0 0
  %4994 = vmatprep.subr.bf16.mxu0 0
  %4995 = vmatpush1.bf16.msra.mxu0 0
  %4996 = vmatprep.subr.bf16.mxu0 0
  %4997 = vmatpush1.bf16.msra.mxu0 0
  %4998 = vmatprep.subr.bf16.mxu0 0
  %4999 = vmatpush1.bf16.msra.mxu0 0
  %5000 = vmatprep.subr.bf16.mxu0 0
  %5001 = vmatpush1.bf16.msra.mxu0 0
  %5002 = vmatprep.subr.bf16.mxu0 0
  %5003 = vmatpush1.bf16.msra.mxu0 0
  %5004 = vmatprep.subr.bf16.mxu0 0
  %5005 = vmatpush1.bf16.msra.mxu0 0
  %5006 = vmatprep.subr.bf16.mxu0 0
  %5007 = vmatpush1.bf16.msra.mxu0 0
  %5008 = vmatprep.subr.bf16.mxu0 0
  %5009 = vmatpush1.bf16.msra.mxu0 0
  %5010 = vmatprep.mubr.bf16.mxu0 0
  %5011 = vmatmul.mubr.bf16.gmra.mrb[0].mxu0 %v4952
  %v5012 = vpop.f32.mrb[0].mxu0
  %v5013 = vadd.f32 0.0, %v5012
  %v5014 = vpop.f32.mrb[0].mxu0
  %v5015 = vpop.f32.mrb[0].mxu0
  %v5016 = vadd.f32 0.0, %v5015
  %v5017 = vpop.f32.mrb[0].mxu0
  %5018 = vmatprep.mubr.bf16.mxu0 0
  %5019 = vmatmul.mubr.bf16.gmra.mrb[0].mxu0 %v4955
  %v5020 = vpop.f32.mrb[0].mxu0
  %v5021 = vadd.f32 0.0, %v5020
  %v5022 = vpop.f32.mrb[0].mxu0
  %v5023 = vpop.f32.mrb[0].mxu0
  %v5024 = vadd.f32 0.0, %v5023
  %v5025 = vpop.f32.mrb[0].mxu0
  %5026 = vmatprep.mubr.bf16.mxu0 0
  %5027 = vmatmul.mubr.bf16.gmra.mrb[0].mxu0 %v4958
  %v5028 = vpop.f32.mrb[0].mxu0
  %v5029 = vadd.f32 0.0, %v5028
  %v5030 = vpop.f32.mrb[0].mxu0
  %v5031 = vpop.f32.mrb[0].mxu0
  %v5032 = vadd.f32 0.0, %v5031
  %v5033 = vpop.f32.mrb[0].mxu0
  %5034 = vmatprep.mubr.bf16.mxu0 0
  %5035 = vmatmul.mubr.bf16.gmra.mrb[0].mxu0 %v4961
  %v5036 = vpop.f32.mrb[0].mxu0
  %v5037 = vadd.f32 0.0, %v5036
  %v5038 = vpop.f32.mrb[0].mxu0
  %v5039 = vpop.f32.mrb[0].mxu0
  %v5040 = vadd.f32 0.0, %v5039
  %v5041 = vpop.f32.mrb[0].mxu0
  %5042 = vmatprep.mubr.bf16.mxu0 0
  %5043 = vmatmul.mubr.bf16.gmra.mrb[0].mxu0 %v4964
  %v5044 = vpop.f32.mrb[0].mxu0
  %v5045 = vadd.f32 0.0, %v5044
  %v5046 = vpop.f32.mrb[0].mxu0
  %v5047 = vpop.f32.mrb[0].mxu0
  %v5048 = vadd.f32 0.0, %v5047
  %v5049 = vpop.f32.mrb[0].mxu0
  %5050 = vmatprep.mubr.bf16.mxu0 0
  %5051 = vmatmul.mubr.bf16.gmra.mrb[0].mxu0 %v4967
  %v5052 = vpop.f32.mrb[0].mxu0
  %v5053 = vadd.f32 0.0, %v5052
  %v5054 = vpop.f32.mrb[0].mxu0
  %v5055 = vpop.f32.mrb[0].mxu0
  %v5056 = vadd.f32 0.0, %v5055
  %v5057 = vpop.f32.mrb[0].mxu0
  %5058 = vmatprep.mubr.bf16.mxu0 0
  %5059 = vmatmul.mubr.bf16.gmra.mrb[0].mxu0 %v4970
  %v5060 = vpop.f32.mrb[0].mxu0
  %v5061 = vadd.f32 0.0, %v5060
  %v5062 = vpop.f32.mrb[0].mxu0
  %v5063 = vpop.f32.mrb[0].mxu0
  %v5064 = vadd.f32 0.0, %v5063
  %v5065 = vpop.f32.mrb[0].mxu0
  %5066 = vmatprep.mubr.bf16.mxu0 0
  %5067 = vmatmul.mubr.bf16.gmra.mrb[0].mxu0 %v4973
  %v5068 = vpop.f32.mrb[0].mxu0
  %v5069 = vadd.f32 0.0, %v5068
  %v5070 = vpop.f32.mrb[0].mxu0
  %v5071 = vpop.f32.mrb[0].mxu0
  %v5072 = vadd.f32 0.0, %v5071
  %v5073 = vpop.f32.mrb[0].mxu0
  %5074 = vdwg.mxu0
  %v5076 = vsel %vm667, %v4690, 0
  %v5079 = vsel %vm667, %v4691, 0
  %v5082 = vsel %vm667, %v4692, 0
  %v5085 = vsel %vm667, %v4693, 0
  %v5088 = vsel %vm667, %v4694, 0
  %v5091 = vsel %vm667, %v4695, 0
  %v5094 = vsel %vm667, %v4696, 0
  %v5097 = vsel %vm667, %v4697, 0
  %v5100 = vsel %vm4726, %v4701, 0
  %5102 = vmatprep.subr.bf16.mxu0 0
  %5103 = vmatpush1.bf16.msra.mxu0 %v5100
  %5104 = vmatprep.subr.bf16.mxu0 0
  %5105 = vmatpush1.bf16.msra.mxu0 0
  %5106 = vmatprep.subr.bf16.mxu0 0
  %5107 = vmatpush1.bf16.msra.mxu0 0
  %5108 = vmatprep.subr.bf16.mxu0 0
  %5109 = vmatpush1.bf16.msra.mxu0 0
  %5110 = vmatprep.subr.bf16.mxu0 0
  %5111 = vmatpush1.bf16.msra.mxu0 0
  %5112 = vmatprep.subr.bf16.mxu0 0
  %5113 = vmatpush1.bf16.msra.mxu0 0
  %5114 = vmatprep.subr.bf16.mxu0 0
  %5115 = vmatpush1.bf16.msra.mxu0 0
  %5116 = vmatprep.subr.bf16.mxu0 0
  %5117 = vmatpush1.bf16.msra.mxu0 0
  %5118 = vmatprep.subr.bf16.mxu0 0
  %5119 = vmatpush1.bf16.msra.mxu0 0
  %5120 = vmatprep.subr.bf16.mxu0 0
  %5121 = vmatpush1.bf16.msra.mxu0 0
  %5122 = vmatprep.subr.bf16.mxu0 0
  %5123 = vmatpush1.bf16.msra.mxu0 0
  %5124 = vmatprep.subr.bf16.mxu0 0
  %5125 = vmatpush1.bf16.msra.mxu0 0
  %5126 = vmatprep.subr.bf16.mxu0 0
  %5127 = vmatpush1.bf16.msra.mxu0 0
  %5128 = vmatprep.subr.bf16.mxu0 0
  %5129 = vmatpush1.bf16.msra.mxu0 0
  %5130 = vmatprep.subr.bf16.mxu0 0
  %5131 = vmatpush1.bf16.msra.mxu0 0
  %5132 = vmatprep.subr.bf16.mxu0 0
  %5133 = vmatpush1.bf16.msra.mxu0 0
  %5134 = vmatprep.mubr.bf16.mxu0 0
  %5135 = vmatmul.mubr.bf16.gmra.mrb[0].mxu0 %v5076
  %v5136 = vpop.f32.mrb[0].mxu0
  %v5137 = vadd.f32 0.0, %v5136
  %v5138 = vpop.f32.mrb[0].mxu0
  %v5139 = vpop.f32.mrb[0].mxu0
  %v5140 = vadd.f32 0.0, %v5139
  %v5141 = vpop.f32.mrb[0].mxu0
  %5142 = vmatprep.mubr.bf16.mxu0 0
  %5143 = vmatmul.mubr.bf16.gmra.mrb[0].mxu0 %v5079
  %v5144 = vpop.f32.mrb[0].mxu0
  %v5145 = vadd.f32 0.0, %v5144
  %v5146 = vpop.f32.mrb[0].mxu0
  %v5147 = vpop.f32.mrb[0].mxu0
  %v5148 = vadd.f32 0.0, %v5147
  %v5149 = vpop.f32.mrb[0].mxu0
  %5150 = vmatprep.mubr.bf16.mxu0 0
  %5151 = vmatmul.mubr.bf16.gmra.mrb[0].mxu0 %v5082
  %v5152 = vpop.f32.mrb[0].mxu0
  %v5153 = vadd.f32 0.0, %v5152
  %v5154 = vpop.f32.mrb[0].mxu0
  %v5155 = vpop.f32.mrb[0].mxu0
  %v5156 = vadd.f32 0.0, %v5155
  %v5157 = vpop.f32.mrb[0].mxu0
  %5158 = vmatprep.mubr.bf16.mxu0 0
  %5159 = vmatmul.mubr.bf16.gmra.mrb[0].mxu0 %v5085
  %v5160 = vpop.f32.mrb[0].mxu0
  %v5161 = vadd.f32 0.0, %v5160
  %v5162 = vpop.f32.mrb[0].mxu0
  %v5163 = vpop.f32.mrb[0].mxu0
  %v5164 = vadd.f32 0.0, %v5163
  %v5165 = vpop.f32.mrb[0].mxu0
  %5166 = vmatprep.mubr.bf16.mxu0 0
  %5167 = vmatmul.mubr.bf16.gmra.mrb[0].mxu0 %v5088
  %v5168 = vpop.f32.mrb[0].mxu0
  %v5169 = vadd.f32 0.0, %v5168
  %v5170 = vpop.f32.mrb[0].mxu0
  %v5171 = vpop.f32.mrb[0].mxu0
  %v5172 = vadd.f32 0.0, %v5171
  %v5173 = vpop.f32.mrb[0].mxu0
  %5174 = vmatprep.mubr.bf16.mxu0 0
  %5175 = vmatmul.mubr.bf16.gmra.mrb[0].mxu0 %v5091
  %v5176 = vpop.f32.mrb[0].mxu0
  %v5177 = vadd.f32 0.0, %v5176
  %v5178 = vpop.f32.mrb[0].mxu0
  %v5179 = vpop.f32.mrb[0].mxu0
  %v5180 = vadd.f32 0.0, %v5179
  %v5181 = vpop.f32.mrb[0].mxu0
  %5182 = vmatprep.mubr.bf16.mxu0 0
  %5183 = vmatmul.mubr.bf16.gmra.mrb[0].mxu0 %v5094
  %v5184 = vpop.f32.mrb[0].mxu0
  %v5185 = vadd.f32 0.0, %v5184
  %v5186 = vpop.f32.mrb[0].mxu0
  %v5187 = vpop.f32.mrb[0].mxu0
  %v5188 = vadd.f32 0.0, %v5187
  %v5189 = vpop.f32.mrb[0].mxu0
  %5190 = vmatprep.mubr.bf16.mxu0 0
  %5191 = vmatmul.mubr.bf16.gmra.mrb[0].mxu0 %v5097
  %v5192 = vpop.f32.mrb[0].mxu0
  %v5193 = vadd.f32 0.0, %v5192
  %v5194 = vpop.f32.mrb[0].mxu0
  %v5195 = vpop.f32.mrb[0].mxu0
  %v5196 = vadd.f32 0.0, %v5195
  %v5197 = vpop.f32.mrb[0].mxu0
  %5198 = vdwg.mxu0
  %v5199 = vsel %vm66, %v4765, 0.0
  %v5200 = vsel %vm66, %v4889, 0.0
  %v5201 = vadd.f32 %v5199, %v5200
  %v5202 = vsel %vm66, %v5013, 0.0
  %v5203 = vadd.f32 %v5201, %v5202
  %v5204 = vsel %vm66, %v5137, 0.0
  %v5205 = vadd.f32 %v5203, %v5204
  %v5206 = vsel %vm66, %v4768, 0.0
  %v5207 = vsel %vm66, %v4892, 0.0
  %v5208 = vadd.f32 %v5206, %v5207
  %v5209 = vsel %vm66, %v5016, 0.0
  %v5210 = vadd.f32 %v5208, %v5209
  %v5211 = vsel %vm66, %v5140, 0.0
  %v5212 = vadd.f32 %v5210, %v5211
  %v5213 = vsel %vm66, %v4773, 0.0
  %v5214 = vsel %vm66, %v4897, 0.0
  %v5215 = vadd.f32 %v5213, %v5214
  %v5216 = vsel %vm66, %v5021, 0.0
  %v5217 = vadd.f32 %v5215, %v5216
  %v5218 = vsel %vm66, %v5145, 0.0
  %v5219 = vadd.f32 %v5217, %v5218
  %v5220 = vsel %vm66, %v4776, 0.0
  %v5221 = vsel %vm66, %v4900, 0.0
  %v5222 = vadd.f32 %v5220, %v5221
  %v5223 = vsel %vm66, %v5024, 0.0
  %v5224 = vadd.f32 %v5222, %v5223
  %v5225 = vsel %vm66, %v5148, 0.0
  %v5226 = vadd.f32 %v5224, %v5225
  %v5227 = vsel %vm66, %v4781, 0.0
  %v5228 = vsel %vm66, %v4905, 0.0
  %v5229 = vadd.f32 %v5227, %v5228
  %v5230 = vsel %vm66, %v5029, 0.0
  %v5231 = vadd.f32 %v5229, %v5230
  %v5232 = vsel %vm66, %v5153, 0.0
  %v5233 = vadd.f32 %v5231, %v5232
  %v5234 = vsel %vm66, %v4784, 0.0
  %v5235 = vsel %vm66, %v4908, 0.0
  %v5236 = vadd.f32 %v5234, %v5235
  %v5237 = vsel %vm66, %v5032, 0.0
  %v5238 = vadd.f32 %v5236, %v5237
  %v5239 = vsel %vm66, %v5156, 0.0
  %v5240 = vadd.f32 %v5238, %v5239
  %v5241 = vsel %vm66, %v4789, 0.0
  %v5242 = vsel %vm66, %v4913, 0.0
  %v5243 = vadd.f32 %v5241, %v5242
  %v5244 = vsel %vm66, %v5037, 0.0
  %v5245 = vadd.f32 %v5243, %v5244
  %v5246 = vsel %vm66, %v5161, 0.0
  %v5247 = vadd.f32 %v5245, %v5246
  %v5248 = vsel %vm66, %v4792, 0.0
  %v5249 = vsel %vm66, %v4916, 0.0
  %v5250 = vadd.f32 %v5248, %v5249
  %v5251 = vsel %vm66, %v5040, 0.0
  %v5252 = vadd.f32 %v5250, %v5251
  %v5253 = vsel %vm66, %v5164, 0.0
  %v5254 = vadd.f32 %v5252, %v5253
  %v5255 = vsel %vm66, %v4797, 0.0
  %v5256 = vsel %vm66, %v4921, 0.0
  %v5257 = vadd.f32 %v5255, %v5256
  %v5258 = vsel %vm66, %v5045, 0.0
  %v5259 = vadd.f32 %v5257, %v5258
  %v5260 = vsel %vm66, %v5169, 0.0
  %v5261 = vadd.f32 %v5259, %v5260
  %v5262 = vsel %vm66, %v4800, 0.0
  %v5263 = vsel %vm66, %v4924, 0.0
  %v5264 = vadd.f32 %v5262, %v5263
  %v5265 = vsel %vm66, %v5048, 0.0
  %v5266 = vadd.f32 %v5264, %v5265
  %v5267 = vsel %vm66, %v5172, 0.0
  %v5268 = vadd.f32 %v5266, %v5267
  %v5269 = vsel %vm66, %v4805, 0.0
  %v5270 = vsel %vm66, %v4929, 0.0
  %v5271 = vadd.f32 %v5269, %v5270
  %v5272 = vsel %vm66, %v5053, 0.0
  %v5273 = vadd.f32 %v5271, %v5272
  %v5274 = vsel %vm66, %v5177, 0.0
  %v5275 = vadd.f32 %v5273, %v5274
  %v5276 = vsel %vm66, %v4808, 0.0
  %v5277 = vsel %vm66, %v4932, 0.0
  %v5278 = vadd.f32 %v5276, %v5277
  %v5279 = vsel %vm66, %v5056, 0.0
  %v5280 = vadd.f32 %v5278, %v5279
  %v5281 = vsel %vm66, %v5180, 0.0
  %v5282 = vadd.f32 %v5280, %v5281
  %v5283 = vsel %vm66, %v4813, 0.0
  %v5284 = vsel %vm66, %v4937, 0.0
  %v5285 = vadd.f32 %v5283, %v5284
  %v5286 = vsel %vm66, %v5061, 0.0
  %v5287 = vadd.f32 %v5285, %v5286
  %v5288 = vsel %vm66, %v5185, 0.0
  %v5289 = vadd.f32 %v5287, %v5288
  %v5290 = vsel %vm66, %v4816, 0.0
  %v5291 = vsel %vm66, %v4940, 0.0
  %v5292 = vadd.f32 %v5290, %v5291
  %v5293 = vsel %vm66, %v5064, 0.0
  %v5294 = vadd.f32 %v5292, %v5293
  %v5295 = vsel %vm66, %v5188, 0.0
  %v5296 = vadd.f32 %v5294, %v5295
  %v5297 = vsel %vm66, %v4821, 0.0
  %v5298 = vsel %vm66, %v4945, 0.0
  %v5299 = vadd.f32 %v5297, %v5298
  %v5300 = vsel %vm66, %v5069, 0.0
  %v5301 = vadd.f32 %v5299, %v5300
  %v5302 = vsel %vm66, %v5193, 0.0
  %v5303 = vadd.f32 %v5301, %v5302
  %v5304 = vsel %vm66, %v4824, 0.0
  %v5305 = vsel %vm66, %v4948, 0.0
  %v5306 = vadd.f32 %v5304, %v5305
  %v5307 = vsel %vm66, %v5072, 0.0
  %v5308 = vadd.f32 %v5306, %v5307
  %v5309 = vsel %vm66, %v5196, 0.0
  %v5310 = vadd.f32 %v5308, %v5309
  %v5311 = vld [vmem:[%s7] sm:$0x1]
  %v5313 = vlaneseq
  %v5314 = vshrl.u32 %v5313, 7
  %v5315 = vsub.s32 0, %v5314
  %v5316 = vrot.slane %v5311, %v5315
  %v5318 = vadd.f32 %v5205, %v5316
  %v5319 = vadd.f32 %v5212, %v5316
  %v5320 = vadd.f32 %v5219, %v5316
  %v5321 = vadd.f32 %v5226, %v5316
  %v5322 = vadd.f32 %v5233, %v5316
  %v5323 = vadd.f32 %v5240, %v5316
  %v5324 = vadd.f32 %v5247, %v5316
  %v5325 = vadd.f32 %v5254, %v5316
  %v5326 = vadd.f32 %v5261, %v5316
  %v5327 = vadd.f32 %v5268, %v5316
  %v5328 = vadd.f32 %v5275, %v5316
  %v5329 = vadd.f32 %v5282, %v5316
  %v5330 = vadd.f32 %v5289, %v5316
  %v5331 = vadd.f32 %v5296, %v5316
  %v5332 = vadd.f32 %v5303, %v5316
  %v5333 = vadd.f32 %v5310, %v5316
  %v5334 = vadd.f32 %v48, %v5318
  %v5335 = vadd.f32 %v49, %v5319
  %v5336 = vadd.f32 %v50, %v5320
  %v5337 = vadd.f32 %v51, %v5321
  %v5338 = vadd.f32 %v52, %v5322
  %v5339 = vadd.f32 %v53, %v5323
  %v5340 = vadd.f32 %v54, %v5324
  %v5341 = vadd.f32 %v55, %v5325
  %v5342 = vadd.f32 %v56, %v5326
  %v5343 = vadd.f32 %v57, %v5327
  %v5344 = vadd.f32 %v58, %v5328
  %v5345 = vadd.f32 %v59, %v5329
  %v5346 = vadd.f32 %v60, %v5330
  %v5347 = vadd.f32 %v61, %v5331
  %v5348 = vadd.f32 %v62, %v5332
  %v5349 = vadd.f32 %v63, %v5333
  %v5350 = vld [vmem:[%s8] sm:$0x1]
  %v5351 = vld [vmem:[%s9] sm:$0x1]
  %v5352 = vsel %vm66, %v5334, 0.0
  %5353 = vadd.xlane.f32.xlu0 %v5352
  %v5354 = vpop.xlane.xlu0 %5353
  %v5355 = vsel %vm66, %v5335, 0.0
  %5356 = vadd.xlane.f32.xlu0 %v5355
  %v5357 = vpop.xlane.xlu0 %5356
  %v5358 = vsel %vm66, %v5336, 0.0
  %5359 = vadd.xlane.f32.xlu0 %v5358
  %v5360 = vpop.xlane.xlu0 %5359
  %v5361 = vsel %vm66, %v5337, 0.0
  %5362 = vadd.xlane.f32.xlu0 %v5361
  %v5363 = vpop.xlane.xlu0 %5362
  %v5364 = vsel %vm66, %v5338, 0.0
  %5365 = vadd.xlane.f32.xlu0 %v5364
  %v5366 = vpop.xlane.xlu0 %5365
  %v5367 = vsel %vm66, %v5339, 0.0
  %5368 = vadd.xlane.f32.xlu0 %v5367
  %v5369 = vpop.xlane.xlu0 %5368
  %v5370 = vsel %vm66, %v5340, 0.0
  %5371 = vadd.xlane.f32.xlu0 %v5370
  %v5372 = vpop.xlane.xlu0 %5371
  %v5373 = vsel %vm66, %v5341, 0.0
  %5374 = vadd.xlane.f32.xlu0 %v5373
  %v5375 = vpop.xlane.xlu0 %5374
  %v5376 = vsel %vm66, %v5342, 0.0
  %5377 = vadd.xlane.f32.xlu0 %v5376
  %v5378 = vpop.xlane.xlu0 %5377
  %v5379 = vsel %vm66, %v5343, 0.0
  %5380 = vadd.xlane.f32.xlu0 %v5379
  %v5381 = vpop.xlane.xlu0 %5380
  %v5382 = vsel %vm66, %v5344, 0.0
  %5383 = vadd.xlane.f32.xlu0 %v5382
  %v5384 = vpop.xlane.xlu0 %5383
  %v5385 = vsel %vm66, %v5345, 0.0
  %5386 = vadd.xlane.f32.xlu0 %v5385
  %v5387 = vpop.xlane.xlu0 %5386
  %v5388 = vsel %vm66, %v5346, 0.0
  %5389 = vadd.xlane.f32.xlu0 %v5388
  %v5390 = vpop.xlane.xlu0 %5389
  %v5391 = vsel %vm66, %v5347, 0.0
  %5392 = vadd.xlane.f32.xlu0 %v5391
  %v5393 = vpop.xlane.xlu0 %5392
  %v5394 = vsel %vm66, %v5348, 0.0
  %5395 = vadd.xlane.f32.xlu0 %v5394
  %v5396 = vpop.xlane.xlu0 %5395
  %v5397 = vsel %vm66, %v5349, 0.0
  %5398 = vadd.xlane.f32.xlu0 %v5397
  %v5399 = vpop.xlane.xlu0 %5398
  %v5400 = vmul.f32 %v5354, %v115
  %v5401 = vmul.f32 %v5357, %v115
  %v5402 = vmul.f32 %v5360, %v115
  %v5403 = vmul.f32 %v5363, %v115
  %v5404 = vmul.f32 %v5366, %v115
  %v5405 = vmul.f32 %v5369, %v115
  %v5406 = vmul.f32 %v5372, %v115
  %v5407 = vmul.f32 %v5375, %v115
  %v5408 = vmul.f32 %v5378, %v115
  %v5409 = vmul.f32 %v5381, %v115
  %v5410 = vmul.f32 %v5384, %v115
  %v5411 = vmul.f32 %v5387, %v115
  %v5412 = vmul.f32 %v5390, %v115
  %v5413 = vmul.f32 %v5393, %v115
  %v5414 = vmul.f32 %v5396, %v115
  %v5415 = vmul.f32 %v5399, %v115
  %v5416 = vsub.f32 %v5334, %v5400
  %v5417 = vsub.f32 %v5335, %v5401
  %v5418 = vsub.f32 %v5336, %v5402
  %v5419 = vsub.f32 %v5337, %v5403
  %v5420 = vsub.f32 %v5338, %v5404
  %v5421 = vsub.f32 %v5339, %v5405
  %v5422 = vsub.f32 %v5340, %v5406
  %v5423 = vsub.f32 %v5341, %v5407
  %v5424 = vsub.f32 %v5342, %v5408
  %v5425 = vsub.f32 %v5343, %v5409
  %v5426 = vsub.f32 %v5344, %v5410
  %v5427 = vsub.f32 %v5345, %v5411
  %v5428 = vsub.f32 %v5346, %v5412
  %v5429 = vsub.f32 %v5347, %v5413
  %v5430 = vsub.f32 %v5348, %v5414
  %v5431 = vsub.f32 %v5349, %v5415
  %v5432 = vmul.f32 %v5416, %v5416
  %v5433 = vmul.f32 %v5417, %v5417
  %v5434 = vmul.f32 %v5418, %v5418
  %v5435 = vmul.f32 %v5419, %v5419
  %v5436 = vmul.f32 %v5420, %v5420
  %v5437 = vmul.f32 %v5421, %v5421
  %v5438 = vmul.f32 %v5422, %v5422
  %v5439 = vmul.f32 %v5423, %v5423
  %v5440 = vmul.f32 %v5424, %v5424
  %v5441 = vmul.f32 %v5425, %v5425
  %v5442 = vmul.f32 %v5426, %v5426
  %v5443 = vmul.f32 %v5427, %v5427
  %v5444 = vmul.f32 %v5428, %v5428
  %v5445 = vmul.f32 %v5429, %v5429
  %v5446 = vmul.f32 %v5430, %v5430
  %v5447 = vmul.f32 %v5431, %v5431
  %v5448 = vsel %vm66, %v5432, 0.0
  %5449 = vadd.xlane.f32.xlu0 %v5448
  %v5450 = vpop.xlane.xlu0 %5449
  %v5451 = vsel %vm66, %v5433, 0.0
  %5452 = vadd.xlane.f32.xlu0 %v5451
  %v5453 = vpop.xlane.xlu0 %5452
  %v5454 = vsel %vm66, %v5434, 0.0
  %5455 = vadd.xlane.f32.xlu0 %v5454
  %v5456 = vpop.xlane.xlu0 %5455
  %v5457 = vsel %vm66, %v5435, 0.0
  %5458 = vadd.xlane.f32.xlu0 %v5457
  %v5459 = vpop.xlane.xlu0 %5458
  %v5460 = vsel %vm66, %v5436, 0.0
  %5461 = vadd.xlane.f32.xlu0 %v5460
  %v5462 = vpop.xlane.xlu0 %5461
  %v5463 = vsel %vm66, %v5437, 0.0
  %5464 = vadd.xlane.f32.xlu0 %v5463
  %v5465 = vpop.xlane.xlu0 %5464
  %v5466 = vsel %vm66, %v5438, 0.0
  %5467 = vadd.xlane.f32.xlu0 %v5466
  %v5468 = vpop.xlane.xlu0 %5467
  %v5469 = vsel %vm66, %v5439, 0.0
  %5470 = vadd.xlane.f32.xlu0 %v5469
  %v5471 = vpop.xlane.xlu0 %5470
  %v5472 = vsel %vm66, %v5440, 0.0
  %5473 = vadd.xlane.f32.xlu0 %v5472
  %v5474 = vpop.xlane.xlu0 %5473
  %v5475 = vsel %vm66, %v5441, 0.0
  %5476 = vadd.xlane.f32.xlu0 %v5475
  %v5477 = vpop.xlane.xlu0 %5476
  %v5478 = vsel %vm66, %v5442, 0.0
  %5479 = vadd.xlane.f32.xlu0 %v5478
  %v5480 = vpop.xlane.xlu0 %5479
  %v5481 = vsel %vm66, %v5443, 0.0
  %5482 = vadd.xlane.f32.xlu0 %v5481
  %v5483 = vpop.xlane.xlu0 %5482
  %v5484 = vsel %vm66, %v5444, 0.0
  %5485 = vadd.xlane.f32.xlu0 %v5484
  %v5486 = vpop.xlane.xlu0 %5485
  %v5487 = vsel %vm66, %v5445, 0.0
  %5488 = vadd.xlane.f32.xlu0 %v5487
  %v5489 = vpop.xlane.xlu0 %5488
  %v5490 = vsel %vm66, %v5446, 0.0
  %5491 = vadd.xlane.f32.xlu0 %v5490
  %v5492 = vpop.xlane.xlu0 %5491
  %v5493 = vsel %vm66, %v5447, 0.0
  %5494 = vadd.xlane.f32.xlu0 %v5493
  %v5495 = vpop.xlane.xlu0 %5494
  %v5496 = vmul.f32 %v5450, %v115
  %v5497 = vmul.f32 %v5453, %v115
  %v5498 = vmul.f32 %v5456, %v115
  %v5499 = vmul.f32 %v5459, %v115
  %v5500 = vmul.f32 %v5462, %v115
  %v5501 = vmul.f32 %v5465, %v115
  %v5502 = vmul.f32 %v5468, %v115
  %v5503 = vmul.f32 %v5471, %v115
  %v5504 = vmul.f32 %v5474, %v115
  %v5505 = vmul.f32 %v5477, %v115
  %v5506 = vmul.f32 %v5480, %v115
  %v5507 = vmul.f32 %v5483, %v115
  %v5508 = vmul.f32 %v5486, %v115
  %v5509 = vmul.f32 %v5489, %v115
  %v5510 = vmul.f32 %v5492, %v115
  %v5511 = vmul.f32 %v5495, %v115
  %v5512 = vadd.f32 %v5496, 1e-05
  %v5513 = vadd.f32 %v5497, 1e-05
  %v5514 = vadd.f32 %v5498, 1e-05
  %v5515 = vadd.f32 %v5499, 1e-05
  %v5516 = vadd.f32 %v5500, 1e-05
  %v5517 = vadd.f32 %v5501, 1e-05
  %v5518 = vadd.f32 %v5502, 1e-05
  %v5519 = vadd.f32 %v5503, 1e-05
  %v5520 = vadd.f32 %v5504, 1e-05
  %v5521 = vadd.f32 %v5505, 1e-05
  %v5522 = vadd.f32 %v5506, 1e-05
  %v5523 = vadd.f32 %v5507, 1e-05
  %v5524 = vadd.f32 %v5508, 1e-05
  %v5525 = vadd.f32 %v5509, 1e-05
  %v5526 = vadd.f32 %v5510, 1e-05
  %v5527 = vadd.f32 %v5511, 1e-05
  %v5528 = vrsqrt.pop %v5512
  %v5529 = vrsqrt.pop %v5513
  %v5530 = vrsqrt.pop %v5514
  %v5531 = vrsqrt.pop %v5515
  %v5532 = vrsqrt.pop %v5516
  %v5533 = vrsqrt.pop %v5517
  %v5534 = vrsqrt.pop %v5518
  %v5535 = vrsqrt.pop %v5519
  %v5536 = vrsqrt.pop %v5520
  %v5537 = vrsqrt.pop %v5521
  %v5538 = vrsqrt.pop %v5522
  %v5539 = vrsqrt.pop %v5523
  %v5540 = vrsqrt.pop %v5524
  %v5541 = vrsqrt.pop %v5525
  %v5542 = vrsqrt.pop %v5526
  %v5543 = vrsqrt.pop %v5527
  %v5544 = vmul.f32 %v5416, %v5528
  %v5545 = vmul.f32 %v5417, %v5529
  %v5546 = vmul.f32 %v5418, %v5530
  %v5547 = vmul.f32 %v5419, %v5531
  %v5548 = vmul.f32 %v5420, %v5532
  %v5549 = vmul.f32 %v5421, %v5533
  %v5550 = vmul.f32 %v5422, %v5534
  %v5551 = vmul.f32 %v5423, %v5535
  %v5552 = vmul.f32 %v5424, %v5536
  %v5553 = vmul.f32 %v5425, %v5537
  %v5554 = vmul.f32 %v5426, %v5538
  %v5555 = vmul.f32 %v5427, %v5539
  %v5556 = vmul.f32 %v5428, %v5540
  %v5557 = vmul.f32 %v5429, %v5541
  %v5558 = vmul.f32 %v5430, %v5542
  %v5559 = vmul.f32 %v5431, %v5543
  %v5561 = vlaneseq
  %v5562 = vshrl.u32 %v5561, 7
  %v5563 = vsub.s32 0, %v5562
  %v5564 = vrot.slane %v5350, %v5563
  %v5566 = vmul.f32 %v5544, %v5564
  %v5567 = vmul.f32 %v5545, %v5564
  %v5568 = vmul.f32 %v5546, %v5564
  %v5569 = vmul.f32 %v5547, %v5564
  %v5570 = vmul.f32 %v5548, %v5564
  %v5571 = vmul.f32 %v5549, %v5564
  %v5572 = vmul.f32 %v5550, %v5564
  %v5573 = vmul.f32 %v5551, %v5564
  %v5574 = vmul.f32 %v5552, %v5564
  %v5575 = vmul.f32 %v5553, %v5564
  %v5576 = vmul.f32 %v5554, %v5564
  %v5577 = vmul.f32 %v5555, %v5564
  %v5578 = vmul.f32 %v5556, %v5564
  %v5579 = vmul.f32 %v5557, %v5564
  %v5580 = vmul.f32 %v5558, %v5564
  %v5581 = vmul.f32 %v5559, %v5564
  %v5583 = vlaneseq
  %v5584 = vshrl.u32 %v5583, 7
  %v5585 = vsub.s32 0, %v5584
  %v5586 = vrot.slane %v5351, %v5585
  %v5588 = vadd.f32 %v5566, %v5586
  %v5589 = vadd.f32 %v5567, %v5586
  %v5590 = vadd.f32 %v5568, %v5586
  %v5591 = vadd.f32 %v5569, %v5586
  %v5592 = vadd.f32 %v5570, %v5586
  %v5593 = vadd.f32 %v5571, %v5586
  %v5594 = vadd.f32 %v5572, %v5586
  %v5595 = vadd.f32 %v5573, %v5586
  %v5596 = vadd.f32 %v5574, %v5586
  %v5597 = vadd.f32 %v5575, %v5586
  %v5598 = vadd.f32 %v5576, %v5586
  %v5599 = vadd.f32 %v5577, %v5586
  %v5600 = vadd.f32 %v5578, %v5586
  %v5601 = vadd.f32 %v5579, %v5586
  %v5602 = vadd.f32 %v5580, %v5586
  %v5603 = vadd.f32 %v5581, %v5586
  %v5604 = vpack.c.bf16 %v5589, %v5588
  %v5605 = vpack.c.bf16 %v5591, %v5590
  %v5606 = vpack.c.bf16 %v5593, %v5592
  %v5607 = vpack.c.bf16 %v5595, %v5594
  %v5608 = vpack.c.bf16 %v5597, %v5596
  %v5609 = vpack.c.bf16 %v5599, %v5598
  %v5610 = vpack.c.bf16 %v5601, %v5600
  %v5611 = vpack.c.bf16 %v5603, %v5602
  %v5612 = vld [vmem:[%s10] sm:$0xf]
  %v5613 = vld [vmem:[%s10 + $0x4] sm:$0xf]
  %v5614 = vld [vmem:[%s10 + $0x8] sm:$0xf]
  %v5615 = vld [vmem:[%s10 + $0xc] sm:$0xf]
  %v5616 = vld [vmem:[%s11] sm:$0x1]
  %v5618 = vlaneseq
  %v5619 = vshrl.u32 %v5618, 7
  %v5620 = vsub.s32 0, %v5619
  %v5621 = vrot.slane %v5616, %v5620
  %v5627 = vunpack.c.l.b16 %v5612
  %v5628 = vunpack.c.l.b16 %v5613
  %v5629 = vunpack.c.l.b16 %v5614
  %v5630 = vunpack.c.l.b16 %v5615
  %v5631 = vpack.c.b16 %v5628, %v5627
  %v5632 = vpack.c.b16 %v5630, %v5629
  %v5636 = vsel %vm66, %v5604, 0
  %v5639 = vsel %vm66, %v5605, 0
  %v5642 = vsel %vm66, %v5606, 0
  %v5645 = vsel %vm66, %v5607, 0
  %v5648 = vsel %vm66, %v5608, 0
  %v5651 = vsel %vm66, %v5609, 0
  %v5654 = vsel %vm66, %v5610, 0
  %v5657 = vsel %vm66, %v5611, 0
  %5659 = vmatprep.subr.bf16.mxu0 0
  %5660 = vmatpush1.bf16.msra.mxu0 %v5631
  %5661 = vmatprep.subr.bf16.mxu0 0
  %5662 = vmatpush1.bf16.msra.mxu0 %v5632
  %5663 = vmatprep.subr.bf16.mxu0 0
  %5664 = vmatpush1.bf16.msra.mxu0 0
  %5665 = vmatprep.subr.bf16.mxu0 0
  %5666 = vmatpush1.bf16.msra.mxu0 0
  %5667 = vmatprep.subr.bf16.mxu0 0
  %5668 = vmatpush1.bf16.msra.mxu0 0
  %5669 = vmatprep.subr.bf16.mxu0 0
  %5670 = vmatpush1.bf16.msra.mxu0 0
  %5671 = vmatprep.subr.bf16.mxu0 0
  %5672 = vmatpush1.bf16.msra.mxu0 0
  %5673 = vmatprep.subr.bf16.mxu0 0
  %5674 = vmatpush1.bf16.msra.mxu0 0
  %5675 = vmatprep.subr.bf16.mxu0 0
  %5676 = vmatpush1.bf16.msra.mxu0 0
  %5677 = vmatprep.subr.bf16.mxu0 0
  %5678 = vmatpush1.bf16.msra.mxu0 0
  %5679 = vmatprep.subr.bf16.mxu0 0
  %5680 = vmatpush1.bf16.msra.mxu0 0
  %5681 = vmatprep.subr.bf16.mxu0 0
  %5682 = vmatpush1.bf16.msra.mxu0 0
  %5683 = vmatprep.subr.bf16.mxu0 0
  %5684 = vmatpush1.bf16.msra.mxu0 0
  %5685 = vmatprep.subr.bf16.mxu0 0
  %5686 = vmatpush1.bf16.msra.mxu0 0
  %5687 = vmatprep.subr.bf16.mxu0 0
  %5688 = vmatpush1.bf16.msra.mxu0 0
  %5689 = vmatprep.subr.bf16.mxu0 0
  %5690 = vmatpush1.bf16.msra.mxu0 0
  %5691 = vmatprep.mubr.bf16.mxu0 0
  %5692 = vmatmul.mubr.bf16.gmra.mrb[0].mxu0 %v5636
  %v5693 = vpop.f32.mrb[0].mxu0
  %v5694 = vadd.f32 %v5621, %v5693
  %v5695 = vpop.f32.mrb[0].mxu0
  %v5696 = vpop.f32.mrb[0].mxu0
  %v5697 = vadd.f32 %v5621, %v5696
  %v5698 = vpop.f32.mrb[0].mxu0
  %5699 = vmatprep.mubr.bf16.mxu0 0
  %5700 = vmatmul.mubr.bf16.gmra.mrb[0].mxu0 %v5639
  %v5701 = vpop.f32.mrb[0].mxu0
  %v5702 = vadd.f32 %v5621, %v5701
  %v5703 = vpop.f32.mrb[0].mxu0
  %v5704 = vpop.f32.mrb[0].mxu0
  %v5705 = vadd.f32 %v5621, %v5704
  %v5706 = vpop.f32.mrb[0].mxu0
  %5707 = vmatprep.mubr.bf16.mxu0 0
  %5708 = vmatmul.mubr.bf16.gmra.mrb[0].mxu0 %v5642
  %v5709 = vpop.f32.mrb[0].mxu0
  %v5710 = vadd.f32 %v5621, %v5709
  %v5711 = vpop.f32.mrb[0].mxu0
  %v5712 = vpop.f32.mrb[0].mxu0
  %v5713 = vadd.f32 %v5621, %v5712
  %v5714 = vpop.f32.mrb[0].mxu0
  %5715 = vmatprep.mubr.bf16.mxu0 0
  %5716 = vmatmul.mubr.bf16.gmra.mrb[0].mxu0 %v5645
  %v5717 = vpop.f32.mrb[0].mxu0
  %v5718 = vadd.f32 %v5621, %v5717
  %v5719 = vpop.f32.mrb[0].mxu0
  %v5720 = vpop.f32.mrb[0].mxu0
  %v5721 = vadd.f32 %v5621, %v5720
  %v5722 = vpop.f32.mrb[0].mxu0
  %5723 = vmatprep.mubr.bf16.mxu0 0
  %5724 = vmatmul.mubr.bf16.gmra.mrb[0].mxu0 %v5648
  %v5725 = vpop.f32.mrb[0].mxu0
  %v5726 = vadd.f32 %v5621, %v5725
  %v5727 = vpop.f32.mrb[0].mxu0
  %v5728 = vpop.f32.mrb[0].mxu0
  %v5729 = vadd.f32 %v5621, %v5728
  %v5730 = vpop.f32.mrb[0].mxu0
  %5731 = vmatprep.mubr.bf16.mxu0 0
  %5732 = vmatmul.mubr.bf16.gmra.mrb[0].mxu0 %v5651
  %v5733 = vpop.f32.mrb[0].mxu0
  %v5734 = vadd.f32 %v5621, %v5733
  %v5735 = vpop.f32.mrb[0].mxu0
  %v5736 = vpop.f32.mrb[0].mxu0
  %v5737 = vadd.f32 %v5621, %v5736
  %v5738 = vpop.f32.mrb[0].mxu0
  %5739 = vmatprep.mubr.bf16.mxu0 0
  %5740 = vmatmul.mubr.bf16.gmra.mrb[0].mxu0 %v5654
  %v5741 = vpop.f32.mrb[0].mxu0
  %v5742 = vadd.f32 %v5621, %v5741
  %v5743 = vpop.f32.mrb[0].mxu0
  %v5744 = vpop.f32.mrb[0].mxu0
  %v5745 = vadd.f32 %v5621, %v5744
  %v5746 = vpop.f32.mrb[0].mxu0
  %5747 = vmatprep.mubr.bf16.mxu0 0
  %5748 = vmatmul.mubr.bf16.gmra.mrb[0].mxu0 %v5657
  %v5749 = vpop.f32.mrb[0].mxu0
  %v5750 = vadd.f32 %v5621, %v5749
  %v5751 = vpop.f32.mrb[0].mxu0
  %v5752 = vpop.f32.mrb[0].mxu0
  %v5753 = vadd.f32 %v5621, %v5752
  %v5754 = vpop.f32.mrb[0].mxu0
  %5755 = vdwg.mxu0
  %v5756 = vmul.f32 %v5694, 0.5
  %v5757 = vmul.f32 %v5697, 0.5
  %v5758 = vmul.f32 %v5702, 0.5
  %v5759 = vmul.f32 %v5705, 0.5
  %v5760 = vmul.f32 %v5710, 0.5
  %v5761 = vmul.f32 %v5713, 0.5
  %v5762 = vmul.f32 %v5718, 0.5
  %v5763 = vmul.f32 %v5721, 0.5
  %v5764 = vmul.f32 %v5726, 0.5
  %v5765 = vmul.f32 %v5729, 0.5
  %v5766 = vmul.f32 %v5734, 0.5
  %v5767 = vmul.f32 %v5737, 0.5
  %v5768 = vmul.f32 %v5742, 0.5
  %v5769 = vmul.f32 %v5745, 0.5
  %v5770 = vmul.f32 %v5750, 0.5
  %v5771 = vmul.f32 %v5753, 0.5
  %v5772 = vmul.f32 %v5694, 0.70710677
  %v5773 = vmul.f32 %v5697, 0.70710677
  %v5774 = vmul.f32 %v5702, 0.70710677
  %v5775 = vmul.f32 %v5705, 0.70710677
  %v5776 = vmul.f32 %v5710, 0.70710677
  %v5777 = vmul.f32 %v5713, 0.70710677
  %v5778 = vmul.f32 %v5718, 0.70710677
  %v5779 = vmul.f32 %v5721, 0.70710677
  %v5780 = vmul.f32 %v5726, 0.70710677
  %v5781 = vmul.f32 %v5729, 0.70710677
  %v5782 = vmul.f32 %v5734, 0.70710677
  %v5783 = vmul.f32 %v5737, 0.70710677
  %v5784 = vmul.f32 %v5742, 0.70710677
  %v5785 = vmul.f32 %v5745, 0.70710677
  %v5786 = vmul.f32 %v5750, 0.70710677
  %v5787 = vmul.f32 %v5753, 0.70710677
  %v5788 = verf.f32.pop %v5772
  %v5789 = verf.f32.pop %v5773
  %v5790 = verf.f32.pop %v5774
  %v5791 = verf.f32.pop %v5775
  %v5792 = verf.f32.pop %v5776
  %v5793 = verf.f32.pop %v5777
  %v5794 = verf.f32.pop %v5778
  %v5795 = verf.f32.pop %v5779
  %v5796 = verf.f32.pop %v5780
  %v5797 = verf.f32.pop %v5781
  %v5798 = verf.f32.pop %v5782
  %v5799 = verf.f32.pop %v5783
  %v5800 = verf.f32.pop %v5784
  %v5801 = verf.f32.pop %v5785
  %v5802 = verf.f32.pop %v5786
  %v5803 = verf.f32.pop %v5787
  %v5804 = vadd.f32 %v5788, 1.0
  %v5805 = vadd.f32 %v5789, 1.0
  %v5806 = vadd.f32 %v5790, 1.0
  %v5807 = vadd.f32 %v5791, 1.0
  %v5808 = vadd.f32 %v5792, 1.0
  %v5809 = vadd.f32 %v5793, 1.0
  %v5810 = vadd.f32 %v5794, 1.0
  %v5811 = vadd.f32 %v5795, 1.0
  %v5812 = vadd.f32 %v5796, 1.0
  %v5813 = vadd.f32 %v5797, 1.0
  %v5814 = vadd.f32 %v5798, 1.0
  %v5815 = vadd.f32 %v5799, 1.0
  %v5816 = vadd.f32 %v5800, 1.0
  %v5817 = vadd.f32 %v5801, 1.0
  %v5818 = vadd.f32 %v5802, 1.0
  %v5819 = vadd.f32 %v5803, 1.0
  %v5820 = vmul.f32 %v5756, %v5804
  %v5821 = vmul.f32 %v5757, %v5805
  %v5822 = vmul.f32 %v5758, %v5806
  %v5823 = vmul.f32 %v5759, %v5807
  %v5824 = vmul.f32 %v5760, %v5808
  %v5825 = vmul.f32 %v5761, %v5809
  %v5826 = vmul.f32 %v5762, %v5810
  %v5827 = vmul.f32 %v5763, %v5811
  %v5828 = vmul.f32 %v5764, %v5812
  %v5829 = vmul.f32 %v5765, %v5813
  %v5830 = vmul.f32 %v5766, %v5814
  %v5831 = vmul.f32 %v5767, %v5815
  %v5832 = vmul.f32 %v5768, %v5816
  %v5833 = vmul.f32 %v5769, %v5817
  %v5834 = vmul.f32 %v5770, %v5818
  %v5835 = vmul.f32 %v5771, %v5819
  %v5836 = vpack.c.bf16 %v5821, %v5820
  %v5837 = vpack.c.bf16 %v5823, %v5822
  %v5838 = vpack.c.bf16 %v5825, %v5824
  %v5839 = vpack.c.bf16 %v5827, %v5826
  %v5840 = vpack.c.bf16 %v5829, %v5828
  %v5841 = vpack.c.bf16 %v5831, %v5830
  %v5842 = vpack.c.bf16 %v5833, %v5832
  %v5843 = vpack.c.bf16 %v5835, %v5834
  %v5844 = vld [vmem:[%s12] sm:$0xf]
  %v5845 = vld [vmem:[%s12 + $0x4] sm:$0xf]
  %v5846 = vld [vmem:[%s12 + $0x8] sm:$0xf]
  %v5847 = vld [vmem:[%s12 + $0xc] sm:$0xf]
  %v5848 = vld [vmem:[%s12 + $0x10] sm:$0xf]
  %v5849 = vld [vmem:[%s12 + $0x14] sm:$0xf]
  %v5850 = vld [vmem:[%s12 + $0x18] sm:$0xf]
  %v5851 = vld [vmem:[%s12 + $0x1c] sm:$0xf]
  %v5852 = vld [vmem:[%s12 + $0x20] sm:$0xf]
  %v5853 = vld [vmem:[%s12 + $0x24] sm:$0xf]
  %v5854 = vld [vmem:[%s12 + $0x28] sm:$0xf]
  %v5855 = vld [vmem:[%s12 + $0x2c] sm:$0xf]
  %v5856 = vld [vmem:[%s12 + $0x30] sm:$0xf]
  %v5857 = vld [vmem:[%s12 + $0x34] sm:$0xf]
  %v5858 = vld [vmem:[%s12 + $0x38] sm:$0xf]
  %v5859 = vld [vmem:[%s12 + $0x3c] sm:$0xf]
  %v5860 = vld [vmem:[%s13] sm:$0x1]
  %v5862 = vlaneseq
  %v5863 = vshrl.u32 %v5862, 7
  %v5864 = vsub.s32 0, %v5863
  %v5865 = vrot.slane %v5860, %v5864
  %v5883 = vunpack.c.l.b16 %v5844
  %v5884 = vunpack.c.l.b16 %v5845
  %v5885 = vunpack.c.l.b16 %v5846
  %v5886 = vunpack.c.l.b16 %v5847
  %v5887 = vunpack.c.l.b16 %v5848
  %v5888 = vunpack.c.l.b16 %v5849
  %v5889 = vunpack.c.l.b16 %v5850
  %v5890 = vunpack.c.l.b16 %v5851
  %v5891 = vunpack.c.l.b16 %v5852
  %v5892 = vunpack.c.l.b16 %v5853
  %v5893 = vunpack.c.l.b16 %v5854
  %v5894 = vunpack.c.l.b16 %v5855
  %v5895 = vunpack.c.l.b16 %v5856
  %v5896 = vunpack.c.l.b16 %v5857
  %v5897 = vunpack.c.l.b16 %v5858
  %v5898 = vunpack.c.l.b16 %v5859
  %v5899 = vpack.c.b16 %v5884, %v5883
  %v5900 = vpack.c.b16 %v5886, %v5885
  %v5901 = vpack.c.b16 %v5888, %v5887
  %v5902 = vpack.c.b16 %v5890, %v5889
  %v5903 = vpack.c.b16 %v5892, %v5891
  %v5904 = vpack.c.b16 %v5894, %v5893
  %v5905 = vpack.c.b16 %v5896, %v5895
  %v5906 = vpack.c.b16 %v5898, %v5897
  %5915 = vmatprep.subr.bf16.mxu0 0
  %5916 = vmatpush1.bf16.msra.mxu0 %v5899
  %5917 = vmatprep.subr.bf16.mxu0 0
  %5918 = vmatpush1.bf16.msra.mxu0 %v5900
  %5919 = vmatprep.subr.bf16.mxu0 0
  %5920 = vmatpush1.bf16.msra.mxu0 %v5901
  %5921 = vmatprep.subr.bf16.mxu0 0
  %5922 = vmatpush1.bf16.msra.mxu0 %v5902
  %5923 = vmatprep.subr.bf16.mxu0 0
  %5924 = vmatpush1.bf16.msra.mxu0 %v5903
  %5925 = vmatprep.subr.bf16.mxu0 0
  %5926 = vmatpush1.bf16.msra.mxu0 %v5904
  %5927 = vmatprep.subr.bf16.mxu0 0
  %5928 = vmatpush1.bf16.msra.mxu0 %v5905
  %5929 = vmatprep.subr.bf16.mxu0 0
  %5930 = vmatpush1.bf16.msra.mxu0 %v5906
  %5931 = vmatprep.subr.bf16.mxu0 0
  %5932 = vmatpush1.bf16.msra.mxu0 0
  %5933 = vmatprep.subr.bf16.mxu0 0
  %5934 = vmatpush1.bf16.msra.mxu0 0
  %5935 = vmatprep.subr.bf16.mxu0 0
  %5936 = vmatpush1.bf16.msra.mxu0 0
  %5937 = vmatprep.subr.bf16.mxu0 0
  %5938 = vmatpush1.bf16.msra.mxu0 0
  %5939 = vmatprep.subr.bf16.mxu0 0
  %5940 = vmatpush1.bf16.msra.mxu0 0
  %5941 = vmatprep.subr.bf16.mxu0 0
  %5942 = vmatpush1.bf16.msra.mxu0 0
  %5943 = vmatprep.subr.bf16.mxu0 0
  %5944 = vmatpush1.bf16.msra.mxu0 0
  %5945 = vmatprep.subr.bf16.mxu0 0
  %5946 = vmatpush1.bf16.msra.mxu0 0
  %5947 = vmatprep.mubr.bf16.mxu0 0
  %5948 = vmatmul.mubr.bf16.gmra.mrb[0].mxu0 %v5836
  %v5949 = vpop.f32.mrb[0].mxu0
  %v5950 = vadd.f32 %v5865, %v5949
  %v5951 = vpop.f32.mrb[0].mxu0
  %v5952 = vpop.f32.mrb[0].mxu0
  %v5953 = vadd.f32 %v5865, %v5952
  %v5954 = vpop.f32.mrb[0].mxu0
  %5955 = vmatprep.mubr.bf16.mxu0 0
  %5956 = vmatmul.mubr.bf16.gmra.mrb[0].mxu0 %v5837
  %v5957 = vpop.f32.mrb[0].mxu0
  %v5958 = vadd.f32 %v5865, %v5957
  %v5959 = vpop.f32.mrb[0].mxu0
  %v5960 = vpop.f32.mrb[0].mxu0
  %v5961 = vadd.f32 %v5865, %v5960
  %v5962 = vpop.f32.mrb[0].mxu0
  %5963 = vmatprep.mubr.bf16.mxu0 0
  %5964 = vmatmul.mubr.bf16.gmra.mrb[0].mxu0 %v5838
  %v5965 = vpop.f32.mrb[0].mxu0
  %v5966 = vadd.f32 %v5865, %v5965
  %v5967 = vpop.f32.mrb[0].mxu0
  %v5968 = vpop.f32.mrb[0].mxu0
  %v5969 = vadd.f32 %v5865, %v5968
  %v5970 = vpop.f32.mrb[0].mxu0
  %5971 = vmatprep.mubr.bf16.mxu0 0
  %5972 = vmatmul.mubr.bf16.gmra.mrb[0].mxu0 %v5839
  %v5973 = vpop.f32.mrb[0].mxu0
  %v5974 = vadd.f32 %v5865, %v5973
  %v5975 = vpop.f32.mrb[0].mxu0
  %v5976 = vpop.f32.mrb[0].mxu0
  %v5977 = vadd.f32 %v5865, %v5976
  %v5978 = vpop.f32.mrb[0].mxu0
  %5979 = vmatprep.mubr.bf16.mxu0 0
  %5980 = vmatmul.mubr.bf16.gmra.mrb[0].mxu0 %v5840
  %v5981 = vpop.f32.mrb[0].mxu0
  %v5982 = vadd.f32 %v5865, %v5981
  %v5983 = vpop.f32.mrb[0].mxu0
  %v5984 = vpop.f32.mrb[0].mxu0
  %v5985 = vadd.f32 %v5865, %v5984
  %v5986 = vpop.f32.mrb[0].mxu0
  %5987 = vmatprep.mubr.bf16.mxu0 0
  %5988 = vmatmul.mubr.bf16.gmra.mrb[0].mxu0 %v5841
  %v5989 = vpop.f32.mrb[0].mxu0
  %v5990 = vadd.f32 %v5865, %v5989
  %v5991 = vpop.f32.mrb[0].mxu0
  %v5992 = vpop.f32.mrb[0].mxu0
  %v5993 = vadd.f32 %v5865, %v5992
  %v5994 = vpop.f32.mrb[0].mxu0
  %5995 = vmatprep.mubr.bf16.mxu0 0
  %5996 = vmatmul.mubr.bf16.gmra.mrb[0].mxu0 %v5842
  %v5997 = vpop.f32.mrb[0].mxu0
  %v5998 = vadd.f32 %v5865, %v5997
  %v5999 = vpop.f32.mrb[0].mxu0
  %v6000 = vpop.f32.mrb[0].mxu0
  %v6001 = vadd.f32 %v5865, %v6000
  %v6002 = vpop.f32.mrb[0].mxu0
  %6003 = vmatprep.mubr.bf16.mxu0 0
  %6004 = vmatmul.mubr.bf16.gmra.mrb[0].mxu0 %v5843
  %v6005 = vpop.f32.mrb[0].mxu0
  %v6006 = vadd.f32 %v5865, %v6005
  %v6007 = vpop.f32.mrb[0].mxu0
  %v6008 = vpop.f32.mrb[0].mxu0
  %v6009 = vadd.f32 %v5865, %v6008
  %v6010 = vpop.f32.mrb[0].mxu0
  %6011 = vdwg.mxu0
  %v6012 = vadd.f32 %v5334, %v5950
  %v6013 = vadd.f32 %v5335, %v5953
  %v6014 = vadd.f32 %v5336, %v5958
  %v6015 = vadd.f32 %v5337, %v5961
  %v6016 = vadd.f32 %v5338, %v5966
  %v6017 = vadd.f32 %v5339, %v5969
  %v6018 = vadd.f32 %v5340, %v5974
  %v6019 = vadd.f32 %v5341, %v5977
  %v6020 = vadd.f32 %v5342, %v5982
  %v6021 = vadd.f32 %v5343, %v5985
  %v6022 = vadd.f32 %v5344, %v5990
  %v6023 = vadd.f32 %v5345, %v5993
  %v6024 = vadd.f32 %v5346, %v5998
  %v6025 = vadd.f32 %v5347, %v6001
  %v6026 = vadd.f32 %v5348, %v6006
  %v6027 = vadd.f32 %v5349, %v6009
  %6028 = vxpose.xlu0.b32.start [1/16] %v6012, 128
  %6029 = vxpose.xlu0.b32.cont [2/16] %v6013, 128
  %6030 = vxpose.xlu0.b32.cont [3/16] %v6014, 128
  %6031 = vxpose.xlu0.b32.cont [4/16] %v6015, 128
  %6032 = vxpose.xlu0.b32.cont [5/16] %v6016, 128
  %6033 = vxpose.xlu0.b32.cont [6/16] %v6017, 128
  %6034 = vxpose.xlu0.b32.cont [7/16] %v6018, 128
  %6035 = vxpose.xlu0.b32.cont [8/16] %v6019, 128
  %6036 = vxpose.xlu0.b32.cont [9/16] %v6020, 128
  %6037 = vxpose.xlu0.b32.cont [10/16] %v6021, 128
  %6038 = vxpose.xlu0.b32.cont [11/16] %v6022, 128
  %6039 = vxpose.xlu0.b32.cont [12/16] %v6023, 128
  %6040 = vxpose.xlu0.b32.cont [13/16] %v6024, 128
  %6041 = vxpose.xlu0.b32.cont [14/16] %v6025, 128
  %6042 = vxpose.xlu0.b32.cont [15/16] %v6026, 128
  %6043 = vxpose.xlu0.b32.end [16/16] %v6027, 128
  %v6044 = vpop.trf.xlu0
  %v6045 = vpop.trf.xlu0
  %v6046 = vpop.trf.xlu0
  %v6047 = vpop.trf.xlu0
  %v6048 = vpop.trf.xlu0
  %v6049 = vpop.trf.xlu0
  %v6050 = vpop.trf.xlu0
  %v6051 = vpop.trf.xlu0
  %v6052 = vpop.trf.xlu0
  %v6053 = vpop.trf.xlu0
  %v6054 = vpop.trf.xlu0
  %v6055 = vpop.trf.xlu0
  %v6056 = vpop.trf.xlu0
  %v6057 = vpop.trf.xlu0
  %v6058 = vpop.trf.xlu0
  %v6059 = vpop.trf.xlu0
  %6060 = vst [vmem:[%s14] sm:$0xff] %v6044
  %6061 = vst [vmem:[%s14 + $0x8] sm:$0xff] %v6045
  %6062 = vst [vmem:[%s14 + $0x10] sm:$0xff] %v6046
  %6063 = vst [vmem:[%s14 + $0x18] sm:$0xff] %v6047
  // Predicated region
  $region58: #{basic_layer_up_forward.2} parent=0 // pred_check
    _
  $region59: #{basic_layer_up_forward.2} parent=0 // pred_check_branch
    %6065 = sbr.rel (0) target = $region61
  $region60: #{basic_layer_up_forward.2} parent=0 // pred_region
    _
  $region61: #{basic_layer_up_forward.2} parent=0 // pred_fallthru
    _
  // Predicated region
  $region62: #{basic_layer_up_forward.2} parent=0 // pred_check
    _
  $region63: #{basic_layer_up_forward.2} parent=0 // pred_check_branch
    %6067 = sbr.rel (0) target = $region65
  $region64: #{basic_layer_up_forward.2} parent=0 // pred_region
    _
  $region65: #{basic_layer_up_forward.2} parent=0 // pred_fallthru
    _

// kernel: basic_layer_up_forward.3
$region0: #{basic_layer_up_forward.3}
  #allocation0 [shape = 'u32[]', space=smem, size = 0x4, offset = 0x4, fixed_abs, tag = 'smem constant byte address 0x4 - core index']
  #allocation1 [shape = 'u32[144,128]{1,0:T(1,128)}', space=vmem, size = 0x12000, scoped, tag = 'internal scratch']
  %s0 = inlined_call_operand.vmem [shape: f32[128,32], index: 0, kind: input, shape index: {}]
  %s1 = inlined_call_operand.vmem [shape: f32[4,4,16,16], index: 1, kind: input, shape index: {}]
  %s2 = inlined_call_operand.vmem [shape: f32[1,32], index: 2, kind: input, shape index: {}]
  %s3 = inlined_call_operand.vmem [shape: f32[1,32], index: 3, kind: input, shape index: {}]
  %s4 = inlined_call_operand.vmem [shape: bf16[32,96], index: 4, kind: input, shape index: {}]
  %s5 = inlined_call_operand.vmem [shape: f32[1,96], index: 5, kind: input, shape index: {}]
  %s6 = inlined_call_operand.vmem [shape: bf16[32,32], index: 6, kind: input, shape index: {}]
  %s7 = inlined_call_operand.vmem [shape: f32[1,32], index: 7, kind: input, shape index: {}]
  %s8 = inlined_call_operand.vmem [shape: f32[1,32], index: 8, kind: input, shape index: {}]
  %s9 = inlined_call_operand.vmem [shape: f32[1,32], index: 9, kind: input, shape index: {}]
  %s10 = inlined_call_operand.vmem [shape: bf16[32,128], index: 10, kind: input, shape index: {}]
  %s11 = inlined_call_operand.vmem [shape: f32[1,128], index: 11, kind: input, shape index: {}]
  %s12 = inlined_call_operand.vmem [shape: bf16[128,32], index: 12, kind: input, shape index: {}]
  %s13 = inlined_call_operand.vmem [shape: f32[1,32], index: 13, kind: input, shape index: {}]
  %s14 = inlined_call_operand.vmem [shape: bf16[32,64], index: 14, kind: input, shape index: {}]
  %s15 = inlined_call_operand.vmem [shape: f32[1,64], index: 15, kind: input, shape index: {}]
  %s16 = inlined_call_operand.vmem [shape: f32[1,64], index: 16, kind: input, shape index: {}]
  %s17 = inlined_call_operand.vmem [shape: f32[64,128], index: 17, kind: output, shape index: {}]
  %s18 = sld [smem:[#allocation0]]
  $region78: #{basic_layer_up_forward.3} parent=0
    _
  %s20 = ssub.s32 1, %s18
  %s21 = scalar_select 0, %s20, %s18
  // Predicated region
  $region2: #{basic_layer_up_forward.3} parent=0 // pred_check
    _
  $region3: #{basic_layer_up_forward.3} parent=0 // pred_check_branch
    %23 = sbr.rel (0) target = $region5
  $region4: #{basic_layer_up_forward.3} parent=0 // pred_region
    _
  $region5: #{basic_layer_up_forward.3} parent=0 // pred_fallthru
    _
  // Predicated region
  $region6: #{basic_layer_up_forward.3} parent=0 // pred_check
    _
  $region7: #{basic_layer_up_forward.3} parent=0 // pred_check_branch
    %25 = sbr.rel (0) target = $region9
  $region8: #{basic_layer_up_forward.3} parent=0 // pred_region
    _
  $region9: #{basic_layer_up_forward.3} parent=0 // pred_fallthru
    _
  // Predicated region
  $region10: #{basic_layer_up_forward.3} parent=0 // pred_check
    _
  $region11: #{basic_layer_up_forward.3} parent=0 // pred_check_branch
    %27 = sbr.rel (0) target = $region13
  $region12: #{basic_layer_up_forward.3} parent=0 // pred_region
    _
  $region13: #{basic_layer_up_forward.3} parent=0 // pred_fallthru
    _
  // Predicated region
  $region14: #{basic_layer_up_forward.3} parent=0 // pred_check
    _
  $region15: #{basic_layer_up_forward.3} parent=0 // pred_check_branch
    %29 = sbr.rel (0) target = $region17
  $region16: #{basic_layer_up_forward.3} parent=0 // pred_region
    _
  $region17: #{basic_layer_up_forward.3} parent=0 // pred_fallthru
    _
  // Predicated region
  $region18: #{basic_layer_up_forward.3} parent=0 // pred_check
    _
  $region19: #{basic_layer_up_forward.3} parent=0 // pred_check_branch
    %31 = sbr.rel (0) target = $region21
  $region20: #{basic_layer_up_forward.3} parent=0 // pred_region
    _
  $region21: #{basic_layer_up_forward.3} parent=0 // pred_fallthru
    _
  // Predicated region
  $region22: #{basic_layer_up_forward.3} parent=0 // pred_check
    _
  $region23: #{basic_layer_up_forward.3} parent=0 // pred_check_branch
    %33 = sbr.rel (0) target = $region25
  $region24: #{basic_layer_up_forward.3} parent=0 // pred_region
    _
  $region25: #{basic_layer_up_forward.3} parent=0 // pred_fallthru
    _
  // Predicated region
  $region26: #{basic_layer_up_forward.3} parent=0 // pred_check
    _
  $region27: #{basic_layer_up_forward.3} parent=0 // pred_check_branch
    %35 = sbr.rel (0) target = $region29
  $region28: #{basic_layer_up_forward.3} parent=0 // pred_region
    _
  $region29: #{basic_layer_up_forward.3} parent=0 // pred_fallthru
    _
  // Predicated region
  $region30: #{basic_layer_up_forward.3} parent=0 // pred_check
    _
  $region31: #{basic_layer_up_forward.3} parent=0 // pred_check_branch
    %37 = sbr.rel (0) target = $region33
  $region32: #{basic_layer_up_forward.3} parent=0 // pred_region
    _
  $region33: #{basic_layer_up_forward.3} parent=0 // pred_fallthru
    _
  // Predicated region
  $region34: #{basic_layer_up_forward.3} parent=0 // pred_check
    _
  $region35: #{basic_layer_up_forward.3} parent=0 // pred_check_branch
    %39 = sbr.rel (0) target = $region37
  $region36: #{basic_layer_up_forward.3} parent=0 // pred_region
    _
  $region37: #{basic_layer_up_forward.3} parent=0 // pred_fallthru
    _
  // Predicated region
  $region38: #{basic_layer_up_forward.3} parent=0 // pred_check
    _
  $region39: #{basic_layer_up_forward.3} parent=0 // pred_check_branch
    %41 = sbr.rel (0) target = $region41
  $region40: #{basic_layer_up_forward.3} parent=0 // pred_region
    _
  $region41: #{basic_layer_up_forward.3} parent=0 // pred_fallthru
    _
  // Predicated region
  $region42: #{basic_layer_up_forward.3} parent=0 // pred_check
    _
  $region43: #{basic_layer_up_forward.3} parent=0 // pred_check_branch
    %43 = sbr.rel (0) target = $region45
  $region44: #{basic_layer_up_forward.3} parent=0 // pred_region
    _
  $region45: #{basic_layer_up_forward.3} parent=0 // pred_fallthru
    _
  // Predicated region
  $region46: #{basic_layer_up_forward.3} parent=0 // pred_check
    _
  $region47: #{basic_layer_up_forward.3} parent=0 // pred_check_branch
    %45 = sbr.rel (0) target = $region49
  $region48: #{basic_layer_up_forward.3} parent=0 // pred_region
    _
  $region49: #{basic_layer_up_forward.3} parent=0 // pred_fallthru
    _
  // Predicated region
  $region50: #{basic_layer_up_forward.3} parent=0 // pred_check
    _
  $region51: #{basic_layer_up_forward.3} parent=0 // pred_check_branch
    %47 = sbr.rel (0) target = $region53
  $region52: #{basic_layer_up_forward.3} parent=0 // pred_region
    _
  $region53: #{basic_layer_up_forward.3} parent=0 // pred_fallthru
    _
  // Predicated region
  $region54: #{basic_layer_up_forward.3} parent=0 // pred_check
    _
  $region55: #{basic_layer_up_forward.3} parent=0 // pred_check_branch
    %49 = sbr.rel (0) target = $region57
  $region56: #{basic_layer_up_forward.3} parent=0 // pred_region
    _
  $region57: #{basic_layer_up_forward.3} parent=0 // pred_fallthru
    _
  // Predicated region
  $region58: #{basic_layer_up_forward.3} parent=0 // pred_check
    _
  $region59: #{basic_layer_up_forward.3} parent=0 // pred_check_branch
    %51 = sbr.rel (0) target = $region61
  $region60: #{basic_layer_up_forward.3} parent=0 // pred_region
    _
  $region61: #{basic_layer_up_forward.3} parent=0 // pred_fallthru
    _
  // Predicated region
  $region62: #{basic_layer_up_forward.3} parent=0 // pred_check
    _
  $region63: #{basic_layer_up_forward.3} parent=0 // pred_check_branch
    %53 = sbr.rel (0) target = $region65
  $region64: #{basic_layer_up_forward.3} parent=0 // pred_region
    _
  $region65: #{basic_layer_up_forward.3} parent=0 // pred_fallthru
    _
  // Predicated region
  $region66: #{basic_layer_up_forward.3} parent=0 // pred_check
    _
  $region67: #{basic_layer_up_forward.3} parent=0 // pred_check_branch
    %55 = sbr.rel (0) target = $region69
  $region68: #{basic_layer_up_forward.3} parent=0 // pred_region
    _
  $region69: #{basic_layer_up_forward.3} parent=0 // pred_fallthru
    _
  %v57 = vld [vmem:[%s0] sm:$0xff]
  %v58 = vld [vmem:[%s0 + $0x8] sm:$0xff]
  %v59 = vld [vmem:[%s0 + $0x10] sm:$0xff]
  %v60 = vld [vmem:[%s0 + $0x18] sm:$0xff]
  %v61 = vld [vmem:[%s0 + $0x20] sm:$0xff]
  %v62 = vld [vmem:[%s0 + $0x28] sm:$0xff]
  %v63 = vld [vmem:[%s0 + $0x30] sm:$0xff]
  %v64 = vld [vmem:[%s0 + $0x38] sm:$0xff]
  %v65 = vld [vmem:[%s0 + $0x40] sm:$0xff]
  %v66 = vld [vmem:[%s0 + $0x48] sm:$0xff]
  %v67 = vld [vmem:[%s0 + $0x50] sm:$0xff]
  %v68 = vld [vmem:[%s0 + $0x58] sm:$0xff]
  %v69 = vld [vmem:[%s0 + $0x60] sm:$0xff]
  %v70 = vld [vmem:[%s0 + $0x68] sm:$0xff]
  %v71 = vld [vmem:[%s0 + $0x70] sm:$0xff]
  %v72 = vld [vmem:[%s0 + $0x78] sm:$0xff]
  %v73 = vld [vmem:[%s2] sm:$0x1]
  %v74 = vld [vmem:[%s3] sm:$0x1]
  %vm75 = vcmask 261120
  %v76 = vsel %vm75, %v57, 0.0
  %77 = vadd.xlane.f32.xlu0 %v76
  %v78 = vpop.xlane.xlu0 %77
  %v79 = vsel %vm75, %v58, 0.0
  %80 = vadd.xlane.f32.xlu0 %v79
  %v81 = vpop.xlane.xlu0 %80
  %v82 = vsel %vm75, %v59, 0.0
  %83 = vadd.xlane.f32.xlu0 %v82
  %v84 = vpop.xlane.xlu0 %83
  %v85 = vsel %vm75, %v60, 0.0
  %86 = vadd.xlane.f32.xlu0 %v85
  %v87 = vpop.xlane.xlu0 %86
  %v88 = vsel %vm75, %v61, 0.0
  %89 = vadd.xlane.f32.xlu0 %v88
  %v90 = vpop.xlane.xlu0 %89
  %v91 = vsel %vm75, %v62, 0.0
  %92 = vadd.xlane.f32.xlu0 %v91
  %v93 = vpop.xlane.xlu0 %92
  %v94 = vsel %vm75, %v63, 0.0
  %95 = vadd.xlane.f32.xlu0 %v94
  %v96 = vpop.xlane.xlu0 %95
  %v97 = vsel %vm75, %v64, 0.0
  %98 = vadd.xlane.f32.xlu0 %v97
  %v99 = vpop.xlane.xlu0 %98
  %v100 = vsel %vm75, %v65, 0.0
  %101 = vadd.xlane.f32.xlu0 %v100
  %v102 = vpop.xlane.xlu0 %101
  %v103 = vsel %vm75, %v66, 0.0
  %104 = vadd.xlane.f32.xlu0 %v103
  %v105 = vpop.xlane.xlu0 %104
  %v106 = vsel %vm75, %v67, 0.0
  %107 = vadd.xlane.f32.xlu0 %v106
  %v108 = vpop.xlane.xlu0 %107
  %v109 = vsel %vm75, %v68, 0.0
  %110 = vadd.xlane.f32.xlu0 %v109
  %v111 = vpop.xlane.xlu0 %110
  %v112 = vsel %vm75, %v69, 0.0
  %113 = vadd.xlane.f32.xlu0 %v112
  %v114 = vpop.xlane.xlu0 %113
  %v115 = vsel %vm75, %v70, 0.0
  %116 = vadd.xlane.f32.xlu0 %v115
  %v117 = vpop.xlane.xlu0 %116
  %v118 = vsel %vm75, %v71, 0.0
  %119 = vadd.xlane.f32.xlu0 %v118
  %v120 = vpop.xlane.xlu0 %119
  %v121 = vsel %vm75, %v72, 0.0
  %122 = vadd.xlane.f32.xlu0 %v121
  %v123 = vpop.xlane.xlu0 %122
  %v124 = vrcp.pop 32.0
  %v125 = vmul.f32 %v78, %v124
  %v126 = vmul.f32 %v81, %v124
  %v127 = vmul.f32 %v84, %v124
  %v128 = vmul.f32 %v87, %v124
  %v129 = vmul.f32 %v90, %v124
  %v130 = vmul.f32 %v93, %v124
  %v131 = vmul.f32 %v96, %v124
  %v132 = vmul.f32 %v99, %v124
  %v133 = vmul.f32 %v102, %v124
  %v134 = vmul.f32 %v105, %v124
  %v135 = vmul.f32 %v108, %v124
  %v136 = vmul.f32 %v111, %v124
  %v137 = vmul.f32 %v114, %v124
  %v138 = vmul.f32 %v117, %v124
  %v139 = vmul.f32 %v120, %v124
  %v140 = vmul.f32 %v123, %v124
  %v141 = vsub.f32 %v57, %v125
  %v142 = vsub.f32 %v58, %v126
  %v143 = vsub.f32 %v59, %v127
  %v144 = vsub.f32 %v60, %v128
  %v145 = vsub.f32 %v61, %v129
  %v146 = vsub.f32 %v62, %v130
  %v147 = vsub.f32 %v63, %v131
  %v148 = vsub.f32 %v64, %v132
  %v149 = vsub.f32 %v65, %v133
  %v150 = vsub.f32 %v66, %v134
  %v151 = vsub.f32 %v67, %v135
  %v152 = vsub.f32 %v68, %v136
  %v153 = vsub.f32 %v69, %v137
  %v154 = vsub.f32 %v70, %v138
  %v155 = vsub.f32 %v71, %v139
  %v156 = vsub.f32 %v72, %v140
  %v157 = vmul.f32 %v141, %v141
  %v158 = vmul.f32 %v142, %v142
  %v159 = vmul.f32 %v143, %v143
  %v160 = vmul.f32 %v144, %v144
  %v161 = vmul.f32 %v145, %v145
  %v162 = vmul.f32 %v146, %v146
  %v163 = vmul.f32 %v147, %v147
  %v164 = vmul.f32 %v148, %v148
  %v165 = vmul.f32 %v149, %v149
  %v166 = vmul.f32 %v150, %v150
  %v167 = vmul.f32 %v151, %v151
  %v168 = vmul.f32 %v152, %v152
  %v169 = vmul.f32 %v153, %v153
  %v170 = vmul.f32 %v154, %v154
  %v171 = vmul.f32 %v155, %v155
  %v172 = vmul.f32 %v156, %v156
  %v173 = vsel %vm75, %v157, 0.0
  %174 = vadd.xlane.f32.xlu0 %v173
  %v175 = vpop.xlane.xlu0 %174
  %v176 = vsel %vm75, %v158, 0.0
  %177 = vadd.xlane.f32.xlu0 %v176
  %v178 = vpop.xlane.xlu0 %177
  %v179 = vsel %vm75, %v159, 0.0
  %180 = vadd.xlane.f32.xlu0 %v179
  %v181 = vpop.xlane.xlu0 %180
  %v182 = vsel %vm75, %v160, 0.0
  %183 = vadd.xlane.f32.xlu0 %v182
  %v184 = vpop.xlane.xlu0 %183
  %v185 = vsel %vm75, %v161, 0.0
  %186 = vadd.xlane.f32.xlu0 %v185
  %v187 = vpop.xlane.xlu0 %186
  %v188 = vsel %vm75, %v162, 0.0
  %189 = vadd.xlane.f32.xlu0 %v188
  %v190 = vpop.xlane.xlu0 %189
  %v191 = vsel %vm75, %v163, 0.0
  %192 = vadd.xlane.f32.xlu0 %v191
  %v193 = vpop.xlane.xlu0 %192
  %v194 = vsel %vm75, %v164, 0.0
  %195 = vadd.xlane.f32.xlu0 %v194
  %v196 = vpop.xlane.xlu0 %195
  %v197 = vsel %vm75, %v165, 0.0
  %198 = vadd.xlane.f32.xlu0 %v197
  %v199 = vpop.xlane.xlu0 %198
  %v200 = vsel %vm75, %v166, 0.0
  %201 = vadd.xlane.f32.xlu0 %v200
  %v202 = vpop.xlane.xlu0 %201
  %v203 = vsel %vm75, %v167, 0.0
  %204 = vadd.xlane.f32.xlu0 %v203
  %v205 = vpop.xlane.xlu0 %204
  %v206 = vsel %vm75, %v168, 0.0
  %207 = vadd.xlane.f32.xlu0 %v206
  %v208 = vpop.xlane.xlu0 %207
  %v209 = vsel %vm75, %v169, 0.0
  %210 = vadd.xlane.f32.xlu0 %v209
  %v211 = vpop.xlane.xlu0 %210
  %v212 = vsel %vm75, %v170, 0.0
  %213 = vadd.xlane.f32.xlu0 %v212
  %v214 = vpop.xlane.xlu0 %213
  %v215 = vsel %vm75, %v171, 0.0
  %216 = vadd.xlane.f32.xlu0 %v215
  %v217 = vpop.xlane.xlu0 %216
  %v218 = vsel %vm75, %v172, 0.0
  %219 = vadd.xlane.f32.xlu0 %v218
  %v220 = vpop.xlane.xlu0 %219
  %v221 = vmul.f32 %v175, %v124
  %v222 = vmul.f32 %v178, %v124
  %v223 = vmul.f32 %v181, %v124
  %v224 = vmul.f32 %v184, %v124
  %v225 = vmul.f32 %v187, %v124
  %v226 = vmul.f32 %v190, %v124
  %v227 = vmul.f32 %v193, %v124
  %v228 = vmul.f32 %v196, %v124
  %v229 = vmul.f32 %v199, %v124
  %v230 = vmul.f32 %v202, %v124
  %v231 = vmul.f32 %v205, %v124
  %v232 = vmul.f32 %v208, %v124
  %v233 = vmul.f32 %v211, %v124
  %v234 = vmul.f32 %v214, %v124
  %v235 = vmul.f32 %v217, %v124
  %v236 = vmul.f32 %v220, %v124
  %v237 = vadd.f32 %v221, 1e-05
  %v238 = vadd.f32 %v222, 1e-05
  %v239 = vadd.f32 %v223, 1e-05
  %v240 = vadd.f32 %v224, 1e-05
  %v241 = vadd.f32 %v225, 1e-05
  %v242 = vadd.f32 %v226, 1e-05
  %v243 = vadd.f32 %v227, 1e-05
  %v244 = vadd.f32 %v228, 1e-05
  %v245 = vadd.f32 %v229, 1e-05
  %v246 = vadd.f32 %v230, 1e-05
  %v247 = vadd.f32 %v231, 1e-05
  %v248 = vadd.f32 %v232, 1e-05
  %v249 = vadd.f32 %v233, 1e-05
  %v250 = vadd.f32 %v234, 1e-05
  %v251 = vadd.f32 %v235, 1e-05
  %v252 = vadd.f32 %v236, 1e-05
  %v253 = vrsqrt.pop %v237
  %v254 = vrsqrt.pop %v238
  %v255 = vrsqrt.pop %v239
  %v256 = vrsqrt.pop %v240
  %v257 = vrsqrt.pop %v241
  %v258 = vrsqrt.pop %v242
  %v259 = vrsqrt.pop %v243
  %v260 = vrsqrt.pop %v244
  %v261 = vrsqrt.pop %v245
  %v262 = vrsqrt.pop %v246
  %v263 = vrsqrt.pop %v247
  %v264 = vrsqrt.pop %v248
  %v265 = vrsqrt.pop %v249
  %v266 = vrsqrt.pop %v250
  %v267 = vrsqrt.pop %v251
  %v268 = vrsqrt.pop %v252
  %v269 = vmul.f32 %v141, %v253
  %v270 = vmul.f32 %v142, %v254
  %v271 = vmul.f32 %v143, %v255
  %v272 = vmul.f32 %v144, %v256
  %v273 = vmul.f32 %v145, %v257
  %v274 = vmul.f32 %v146, %v258
  %v275 = vmul.f32 %v147, %v259
  %v276 = vmul.f32 %v148, %v260
  %v277 = vmul.f32 %v149, %v261
  %v278 = vmul.f32 %v150, %v262
  %v279 = vmul.f32 %v151, %v263
  %v280 = vmul.f32 %v152, %v264
  %v281 = vmul.f32 %v153, %v265
  %v282 = vmul.f32 %v154, %v266
  %v283 = vmul.f32 %v155, %v267
  %v284 = vmul.f32 %v156, %v268
  %v286 = vlaneseq
  %v287 = vshrl.u32 %v286, 7
  %v288 = vsub.s32 0, %v287
  %v289 = vrot.slane %v73, %v288
  %v291 = vmul.f32 %v269, %v289
  %v292 = vmul.f32 %v270, %v289
  %v293 = vmul.f32 %v271, %v289
  %v294 = vmul.f32 %v272, %v289
  %v295 = vmul.f32 %v273, %v289
  %v296 = vmul.f32 %v274, %v289
  %v297 = vmul.f32 %v275, %v289
  %v298 = vmul.f32 %v276, %v289
  %v299 = vmul.f32 %v277, %v289
  %v300 = vmul.f32 %v278, %v289
  %v301 = vmul.f32 %v279, %v289
  %v302 = vmul.f32 %v280, %v289
  %v303 = vmul.f32 %v281, %v289
  %v304 = vmul.f32 %v282, %v289
  %v305 = vmul.f32 %v283, %v289
  %v306 = vmul.f32 %v284, %v289
  %v308 = vlaneseq
  %v309 = vshrl.u32 %v308, 7
  %v310 = vsub.s32 0, %v309
  %v311 = vrot.slane %v74, %v310
  %v313 = vadd.f32 %v291, %v311
  %v314 = vadd.f32 %v292, %v311
  %v315 = vadd.f32 %v293, %v311
  %v316 = vadd.f32 %v294, %v311
  %v317 = vadd.f32 %v295, %v311
  %v318 = vadd.f32 %v296, %v311
  %v319 = vadd.f32 %v297, %v311
  %v320 = vadd.f32 %v298, %v311
  %v321 = vadd.f32 %v299, %v311
  %v322 = vadd.f32 %v300, %v311
  %v323 = vadd.f32 %v301, %v311
  %v324 = vadd.f32 %v302, %v311
  %v325 = vadd.f32 %v303, %v311
  %v326 = vadd.f32 %v304, %v311
  %v327 = vadd.f32 %v305, %v311
  %v328 = vadd.f32 %v306, %v311
  %v329 = vpack.c.bf16 %v314, %v313
  %v330 = vpack.c.bf16 %v316, %v315
  %v331 = vpack.c.bf16 %v318, %v317
  %v332 = vpack.c.bf16 %v320, %v319
  %v333 = vpack.c.bf16 %v322, %v321
  %v334 = vpack.c.bf16 %v324, %v323
  %v335 = vpack.c.bf16 %v326, %v325
  %v336 = vpack.c.bf16 %v328, %v327
  %v337 = vld [vmem:[%s4] sm:$0xf]
  %v338 = vld [vmem:[%s4 + $0x4] sm:$0xf]
  %v339 = vld [vmem:[%s4 + $0x8] sm:$0xf]
  %v340 = vld [vmem:[%s4 + $0xc] sm:$0xf]
  %v341 = vld [vmem:[%s5] sm:$0x1]
  %v343 = vlaneseq
  %v344 = vshrl.u32 %v343, 7
  %v345 = vsub.s32 0, %v344
  %v346 = vrot.slane %v341, %v345
  %v352 = vunpack.c.l.b16 %v337
  %v353 = vunpack.c.l.b16 %v338
  %v354 = vunpack.c.l.b16 %v339
  %v355 = vunpack.c.l.b16 %v340
  %v356 = vpack.c.b16 %v353, %v352
  %v357 = vpack.c.b16 %v355, %v354
  %v361 = vsel %vm75, %v329, 0
  %v364 = vsel %vm75, %v330, 0
  %v367 = vsel %vm75, %v331, 0
  %v370 = vsel %vm75, %v332, 0
  %v373 = vsel %vm75, %v333, 0
  %v376 = vsel %vm75, %v334, 0
  %v379 = vsel %vm75, %v335, 0
  %v382 = vsel %vm75, %v336, 0
  %384 = vmatprep.subr.bf16.mxu0 0
  %385 = vmatpush1.bf16.msra.mxu0 %v356
  %386 = vmatprep.subr.bf16.mxu0 0
  %387 = vmatpush1.bf16.msra.mxu0 %v357
  %388 = vmatprep.subr.bf16.mxu0 0
  %389 = vmatpush1.bf16.msra.mxu0 0
  %390 = vmatprep.subr.bf16.mxu0 0
  %391 = vmatpush1.bf16.msra.mxu0 0
  %392 = vmatprep.subr.bf16.mxu0 0
  %393 = vmatpush1.bf16.msra.mxu0 0
  %394 = vmatprep.subr.bf16.mxu0 0
  %395 = vmatpush1.bf16.msra.mxu0 0
  %396 = vmatprep.subr.bf16.mxu0 0
  %397 = vmatpush1.bf16.msra.mxu0 0
  %398 = vmatprep.subr.bf16.mxu0 0
  %399 = vmatpush1.bf16.msra.mxu0 0
  %400 = vmatprep.subr.bf16.mxu0 0
  %401 = vmatpush1.bf16.msra.mxu0 0
  %402 = vmatprep.subr.bf16.mxu0 0
  %403 = vmatpush1.bf16.msra.mxu0 0
  %404 = vmatprep.subr.bf16.mxu0 0
  %405 = vmatpush1.bf16.msra.mxu0 0
  %406 = vmatprep.subr.bf16.mxu0 0
  %407 = vmatpush1.bf16.msra.mxu0 0
  %408 = vmatprep.subr.bf16.mxu0 0
  %409 = vmatpush1.bf16.msra.mxu0 0
  %410 = vmatprep.subr.bf16.mxu0 0
  %411 = vmatpush1.bf16.msra.mxu0 0
  %412 = vmatprep.subr.bf16.mxu0 0
  %413 = vmatpush1.bf16.msra.mxu0 0
  %414 = vmatprep.subr.bf16.mxu0 0
  %415 = vmatpush1.bf16.msra.mxu0 0
  %416 = vmatprep.mubr.bf16.mxu0 0
  %417 = vmatmul.mubr.bf16.gmra.mrb[0].mxu0 %v361
  %v418 = vpop.f32.mrb[0].mxu0
  %v419 = vadd.f32 %v346, %v418
  %v420 = vpop.f32.mrb[0].mxu0
  %v421 = vpop.f32.mrb[0].mxu0
  %v422 = vadd.f32 %v346, %v421
  %v423 = vpop.f32.mrb[0].mxu0
  %424 = vmatprep.mubr.bf16.mxu0 0
  %425 = vmatmul.mubr.bf16.gmra.mrb[0].mxu0 %v364
  %v426 = vpop.f32.mrb[0].mxu0
  %v427 = vadd.f32 %v346, %v426
  %v428 = vpop.f32.mrb[0].mxu0
  %v429 = vpop.f32.mrb[0].mxu0
  %v430 = vadd.f32 %v346, %v429
  %v431 = vpop.f32.mrb[0].mxu0
  %432 = vmatprep.mubr.bf16.mxu0 0
  %433 = vmatmul.mubr.bf16.gmra.mrb[0].mxu0 %v367
  %v434 = vpop.f32.mrb[0].mxu0
  %v435 = vadd.f32 %v346, %v434
  %v436 = vpop.f32.mrb[0].mxu0
  %v437 = vpop.f32.mrb[0].mxu0
  %v438 = vadd.f32 %v346, %v437
  %v439 = vpop.f32.mrb[0].mxu0
  %440 = vmatprep.mubr.bf16.mxu0 0
  %441 = vmatmul.mubr.bf16.gmra.mrb[0].mxu0 %v370
  %v442 = vpop.f32.mrb[0].mxu0
  %v443 = vadd.f32 %v346, %v442
  %v444 = vpop.f32.mrb[0].mxu0
  %v445 = vpop.f32.mrb[0].mxu0
  %v446 = vadd.f32 %v346, %v445
  %v447 = vpop.f32.mrb[0].mxu0
  %448 = vmatprep.mubr.bf16.mxu0 0
  %449 = vmatmul.mubr.bf16.gmra.mrb[0].mxu0 %v373
  %v450 = vpop.f32.mrb[0].mxu0
  %v451 = vadd.f32 %v346, %v450
  %v452 = vpop.f32.mrb[0].mxu0
  %v453 = vpop.f32.mrb[0].mxu0
  %v454 = vadd.f32 %v346, %v453
  %v455 = vpop.f32.mrb[0].mxu0
  %456 = vmatprep.mubr.bf16.mxu0 0
  %457 = vmatmul.mubr.bf16.gmra.mrb[0].mxu0 %v376
  %v458 = vpop.f32.mrb[0].mxu0
  %v459 = vadd.f32 %v346, %v458
  %v460 = vpop.f32.mrb[0].mxu0
  %v461 = vpop.f32.mrb[0].mxu0
  %v462 = vadd.f32 %v346, %v461
  %v463 = vpop.f32.mrb[0].mxu0
  %464 = vmatprep.mubr.bf16.mxu0 0
  %465 = vmatmul.mubr.bf16.gmra.mrb[0].mxu0 %v379
  %v466 = vpop.f32.mrb[0].mxu0
  %v467 = vadd.f32 %v346, %v466
  %v468 = vpop.f32.mrb[0].mxu0
  %v469 = vpop.f32.mrb[0].mxu0
  %v470 = vadd.f32 %v346, %v469
  %v471 = vpop.f32.mrb[0].mxu0
  %472 = vmatprep.mubr.bf16.mxu0 0
  %473 = vmatmul.mubr.bf16.gmra.mrb[0].mxu0 %v382
  %v474 = vpop.f32.mrb[0].mxu0
  %v475 = vadd.f32 %v346, %v474
  %v476 = vpop.f32.mrb[0].mxu0
  %v477 = vpop.f32.mrb[0].mxu0
  %v478 = vadd.f32 %v346, %v477
  %v479 = vpop.f32.mrb[0].mxu0
  %480 = vdwg.mxu0
  %497 = vrot.lane.b32.xlu0 %v419, 120
  %v498 = vpop.permute.xlu0 %497
  %499 = vrot.lane.b32.xlu0 %v422, 120
  %v500 = vpop.permute.xlu0 %499
  %501 = vrot.lane.b32.xlu0 %v427, 120
  %v502 = vpop.permute.xlu0 %501
  %503 = vrot.lane.b32.xlu0 %v430, 120
  %v504 = vpop.permute.xlu0 %503
  %505 = vrot.lane.b32.xlu0 %v435, 120
  %v506 = vpop.permute.xlu0 %505
  %507 = vrot.lane.b32.xlu0 %v438, 120
  %v508 = vpop.permute.xlu0 %507
  %509 = vrot.lane.b32.xlu0 %v443, 120
  %v510 = vpop.permute.xlu0 %509
  %511 = vrot.lane.b32.xlu0 %v446, 120
  %v512 = vpop.permute.xlu0 %511
  %513 = vrot.lane.b32.xlu0 %v451, 120
  %v514 = vpop.permute.xlu0 %513
  %515 = vrot.lane.b32.xlu0 %v454, 120
  %v516 = vpop.permute.xlu0 %515
  %517 = vrot.lane.b32.xlu0 %v459, 120
  %v518 = vpop.permute.xlu0 %517
  %519 = vrot.lane.b32.xlu0 %v462, 120
  %v520 = vpop.permute.xlu0 %519
  %521 = vrot.lane.b32.xlu0 %v467, 120
  %v522 = vpop.permute.xlu0 %521
  %523 = vrot.lane.b32.xlu0 %v470, 120
  %v524 = vpop.permute.xlu0 %523
  %525 = vrot.lane.b32.xlu0 %v475, 120
  %v526 = vpop.permute.xlu0 %525
  %527 = vrot.lane.b32.xlu0 %v478, 120
  %v528 = vpop.permute.xlu0 %527
  %545 = vrot.lane.b32.xlu0 %v419, 112
  %v546 = vpop.permute.xlu0 %545
  %547 = vrot.lane.b32.xlu0 %v422, 112
  %v548 = vpop.permute.xlu0 %547
  %549 = vrot.lane.b32.xlu0 %v427, 112
  %v550 = vpop.permute.xlu0 %549
  %551 = vrot.lane.b32.xlu0 %v430, 112
  %v552 = vpop.permute.xlu0 %551
  %553 = vrot.lane.b32.xlu0 %v435, 112
  %v554 = vpop.permute.xlu0 %553
  %555 = vrot.lane.b32.xlu0 %v438, 112
  %v556 = vpop.permute.xlu0 %555
  %557 = vrot.lane.b32.xlu0 %v443, 112
  %v558 = vpop.permute.xlu0 %557
  %559 = vrot.lane.b32.xlu0 %v446, 112
  %v560 = vpop.permute.xlu0 %559
  %561 = vrot.lane.b32.xlu0 %v451, 112
  %v562 = vpop.permute.xlu0 %561
  %563 = vrot.lane.b32.xlu0 %v454, 112
  %v564 = vpop.permute.xlu0 %563
  %565 = vrot.lane.b32.xlu0 %v459, 112
  %v566 = vpop.permute.xlu0 %565
  %567 = vrot.lane.b32.xlu0 %v462, 112
  %v568 = vpop.permute.xlu0 %567
  %569 = vrot.lane.b32.xlu0 %v467, 112
  %v570 = vpop.permute.xlu0 %569
  %571 = vrot.lane.b32.xlu0 %v470, 112
  %v572 = vpop.permute.xlu0 %571
  %573 = vrot.lane.b32.xlu0 %v475, 112
  %v574 = vpop.permute.xlu0 %573
  %575 = vrot.lane.b32.xlu0 %v478, 112
  %v576 = vpop.permute.xlu0 %575
  %593 = vrot.lane.b32.xlu0 %v419, 104
  %v594 = vpop.permute.xlu0 %593
  %595 = vrot.lane.b32.xlu0 %v422, 104
  %v596 = vpop.permute.xlu0 %595
  %597 = vrot.lane.b32.xlu0 %v427, 104
  %v598 = vpop.permute.xlu0 %597
  %599 = vrot.lane.b32.xlu0 %v430, 104
  %v600 = vpop.permute.xlu0 %599
  %601 = vrot.lane.b32.xlu0 %v435, 104
  %v602 = vpop.permute.xlu0 %601
  %603 = vrot.lane.b32.xlu0 %v438, 104
  %v604 = vpop.permute.xlu0 %603
  %605 = vrot.lane.b32.xlu0 %v443, 104
  %v606 = vpop.permute.xlu0 %605
  %607 = vrot.lane.b32.xlu0 %v446, 104
  %v608 = vpop.permute.xlu0 %607
  %609 = vrot.lane.b32.xlu0 %v451, 104
  %v610 = vpop.permute.xlu0 %609
  %611 = vrot.lane.b32.xlu0 %v454, 104
  %v612 = vpop.permute.xlu0 %611
  %613 = vrot.lane.b32.xlu0 %v459, 104
  %v614 = vpop.permute.xlu0 %613
  %615 = vrot.lane.b32.xlu0 %v462, 104
  %v616 = vpop.permute.xlu0 %615
  %617 = vrot.lane.b32.xlu0 %v467, 104
  %v618 = vpop.permute.xlu0 %617
  %619 = vrot.lane.b32.xlu0 %v470, 104
  %v620 = vpop.permute.xlu0 %619
  %621 = vrot.lane.b32.xlu0 %v475, 104
  %v622 = vpop.permute.xlu0 %621
  %623 = vrot.lane.b32.xlu0 %v478, 104
  %v624 = vpop.permute.xlu0 %623
  %v641 = vpack.c.bf16 %v422, %v419
  %v642 = vpack.c.bf16 %v430, %v427
  %v643 = vpack.c.bf16 %v438, %v435
  %v644 = vpack.c.bf16 %v446, %v443
  %v645 = vpack.c.bf16 %v454, %v451
  %v646 = vpack.c.bf16 %v462, %v459
  %v647 = vpack.c.bf16 %v470, %v467
  %v648 = vpack.c.bf16 %v478, %v475
  %v649 = vpack.c.bf16 %v500, %v498
  %v650 = vpack.c.bf16 %v504, %v502
  %v651 = vpack.c.bf16 %v508, %v506
  %v652 = vpack.c.bf16 %v512, %v510
  %v653 = vpack.c.bf16 %v516, %v514
  %v654 = vpack.c.bf16 %v520, %v518
  %v655 = vpack.c.bf16 %v524, %v522
  %v656 = vpack.c.bf16 %v528, %v526
  %v657 = vpack.c.bf16 %v548, %v546
  %v658 = vpack.c.bf16 %v552, %v550
  %v659 = vpack.c.bf16 %v556, %v554
  %v660 = vpack.c.bf16 %v560, %v558
  %v661 = vpack.c.bf16 %v564, %v562
  %v662 = vpack.c.bf16 %v568, %v566
  %v663 = vpack.c.bf16 %v572, %v570
  %v664 = vpack.c.bf16 %v576, %v574
  %v665 = vpack.c.bf16 %v596, %v594
  %v666 = vpack.c.bf16 %v600, %v598
  %v667 = vpack.c.bf16 %v604, %v602
  %v668 = vpack.c.bf16 %v608, %v606
  %v669 = vpack.c.bf16 %v612, %v610
  %v670 = vpack.c.bf16 %v616, %v614
  %v671 = vpack.c.bf16 %v620, %v618
  %v672 = vpack.c.bf16 %v624, %v622
  %674 = vrot.lane.b32.xlu0 %v641, 96
  %v675 = vpop.permute.xlu0 %674
  %vm676 = vcmask 64512
  %v678 = vsel %vm676, %v641, 0
  %v681 = vsel %vm676, %v675, 0
  %683 = vmatprep.subr.bf16.mxu0 0
  %684 = vmatpush1.bf16.xpose.msra.mxu0 %v681
  %685 = vmatprep.subr.bf16.mxu0 0
  %686 = vmatpush1.bf16.xpose.msra.mxu0 0
  %687 = vmatprep.subr.bf16.mxu0 0
  %688 = vmatpush1.bf16.xpose.msra.mxu0 0
  %689 = vmatprep.subr.bf16.mxu0 0
  %690 = vmatpush1.bf16.xpose.msra.mxu0 0
  %691 = vmatprep.subr.bf16.mxu0 0
  %692 = vmatpush1.bf16.xpose.msra.mxu0 0
  %693 = vmatprep.subr.bf16.mxu0 0
  %694 = vmatpush1.bf16.xpose.msra.mxu0 0
  %695 = vmatprep.subr.bf16.mxu0 0
  %696 = vmatpush1.bf16.xpose.msra.mxu0 0
  %697 = vmatprep.subr.bf16.mxu0 0
  %698 = vmatpush1.bf16.xpose.msra.mxu0 0
  %699 = vmatprep.subr.bf16.mxu0 0
  %700 = vmatpush1.bf16.xpose.msra.mxu0 0
  %701 = vmatprep.subr.bf16.mxu0 0
  %702 = vmatpush1.bf16.xpose.msra.mxu0 0
  %703 = vmatprep.subr.bf16.mxu0 0
  %704 = vmatpush1.bf16.xpose.msra.mxu0 0
  %705 = vmatprep.subr.bf16.mxu0 0
  %706 = vmatpush1.bf16.xpose.msra.mxu0 0
  %707 = vmatprep.subr.bf16.mxu0 0
  %708 = vmatpush1.bf16.xpose.msra.mxu0 0
  %709 = vmatprep.subr.bf16.mxu0 0
  %710 = vmatpush1.bf16.xpose.msra.mxu0 0
  %711 = vmatprep.subr.bf16.mxu0 0
  %712 = vmatpush1.bf16.xpose.msra.mxu0 0
  %713 = vmatprep.subr.bf16.mxu0 0
  %714 = vmatpush1.bf16.xpose.msra.mxu0 0
  %715 = vmatprep.mubr.bf16.mxu0 0
  %716 = vmatmul.mubr.bf16.gmra.mrb[0].mxu0 %v678
  %v717 = vpop.f32.mrb[0].mxu0
  %v718 = vadd.f32 0.0, %v717
  %v719 = vpop.f32.mrb[0].mxu0
  %v720 = vpop.f32.mrb[0].mxu0
  %v721 = vadd.f32 0.0, %v720
  %v722 = vpop.f32.mrb[0].mxu0
  %723 = vdwg.mxu0
  %725 = vrot.lane.b32.xlu0 %v642, 96
  %v726 = vpop.permute.xlu0 %725
  %v728 = vsel %vm676, %v642, 0
  %v731 = vsel %vm676, %v726, 0
  %733 = vmatprep.subr.bf16.mxu0 0
  %734 = vmatpush1.bf16.xpose.msra.mxu0 %v731
  %735 = vmatprep.subr.bf16.mxu0 0
  %736 = vmatpush1.bf16.xpose.msra.mxu0 0
  %737 = vmatprep.subr.bf16.mxu0 0
  %738 = vmatpush1.bf16.xpose.msra.mxu0 0
  %739 = vmatprep.subr.bf16.mxu0 0
  %740 = vmatpush1.bf16.xpose.msra.mxu0 0
  %741 = vmatprep.subr.bf16.mxu0 0
  %742 = vmatpush1.bf16.xpose.msra.mxu0 0
  %743 = vmatprep.subr.bf16.mxu0 0
  %744 = vmatpush1.bf16.xpose.msra.mxu0 0
  %745 = vmatprep.subr.bf16.mxu0 0
  %746 = vmatpush1.bf16.xpose.msra.mxu0 0
  %747 = vmatprep.subr.bf16.mxu0 0
  %748 = vmatpush1.bf16.xpose.msra.mxu0 0
  %749 = vmatprep.subr.bf16.mxu0 0
  %750 = vmatpush1.bf16.xpose.msra.mxu0 0
  %751 = vmatprep.subr.bf16.mxu0 0
  %752 = vmatpush1.bf16.xpose.msra.mxu0 0
  %753 = vmatprep.subr.bf16.mxu0 0
  %754 = vmatpush1.bf16.xpose.msra.mxu0 0
  %755 = vmatprep.subr.bf16.mxu0 0
  %756 = vmatpush1.bf16.xpose.msra.mxu0 0
  %757 = vmatprep.subr.bf16.mxu0 0
  %758 = vmatpush1.bf16.xpose.msra.mxu0 0
  %759 = vmatprep.subr.bf16.mxu0 0
  %760 = vmatpush1.bf16.xpose.msra.mxu0 0
  %761 = vmatprep.subr.bf16.mxu0 0
  %762 = vmatpush1.bf16.xpose.msra.mxu0 0
  %763 = vmatprep.subr.bf16.mxu0 0
  %764 = vmatpush1.bf16.xpose.msra.mxu0 0
  %765 = vmatprep.mubr.bf16.mxu0 0
  %766 = vmatmul.mubr.bf16.gmra.mrb[0].mxu0 %v728
  %v767 = vpop.f32.mrb[0].mxu0
  %v768 = vadd.f32 0.0, %v767
  %v769 = vpop.f32.mrb[0].mxu0
  %v770 = vpop.f32.mrb[0].mxu0
  %v771 = vadd.f32 0.0, %v770
  %v772 = vpop.f32.mrb[0].mxu0
  %773 = vdwg.mxu0
  %775 = vrot.lane.b32.xlu0 %v643, 96
  %v776 = vpop.permute.xlu0 %775
  %v778 = vsel %vm676, %v643, 0
  %v781 = vsel %vm676, %v776, 0
  %783 = vmatprep.subr.bf16.mxu0 0
  %784 = vmatpush1.bf16.xpose.msra.mxu0 %v781
  %785 = vmatprep.subr.bf16.mxu0 0
  %786 = vmatpush1.bf16.xpose.msra.mxu0 0
  %787 = vmatprep.subr.bf16.mxu0 0
  %788 = vmatpush1.bf16.xpose.msra.mxu0 0
  %789 = vmatprep.subr.bf16.mxu0 0
  %790 = vmatpush1.bf16.xpose.msra.mxu0 0
  %791 = vmatprep.subr.bf16.mxu0 0
  %792 = vmatpush1.bf16.xpose.msra.mxu0 0
  %793 = vmatprep.subr.bf16.mxu0 0
  %794 = vmatpush1.bf16.xpose.msra.mxu0 0
  %795 = vmatprep.subr.bf16.mxu0 0
  %796 = vmatpush1.bf16.xpose.msra.mxu0 0
  %797 = vmatprep.subr.bf16.mxu0 0
  %798 = vmatpush1.bf16.xpose.msra.mxu0 0
  %799 = vmatprep.subr.bf16.mxu0 0
  %800 = vmatpush1.bf16.xpose.msra.mxu0 0
  %801 = vmatprep.subr.bf16.mxu0 0
  %802 = vmatpush1.bf16.xpose.msra.mxu0 0
  %803 = vmatprep.subr.bf16.mxu0 0
  %804 = vmatpush1.bf16.xpose.msra.mxu0 0
  %805 = vmatprep.subr.bf16.mxu0 0
  %806 = vmatpush1.bf16.xpose.msra.mxu0 0
  %807 = vmatprep.subr.bf16.mxu0 0
  %808 = vmatpush1.bf16.xpose.msra.mxu0 0
  %809 = vmatprep.subr.bf16.mxu0 0
  %810 = vmatpush1.bf16.xpose.msra.mxu0 0
  %811 = vmatprep.subr.bf16.mxu0 0
  %812 = vmatpush1.bf16.xpose.msra.mxu0 0
  %813 = vmatprep.subr.bf16.mxu0 0
  %814 = vmatpush1.bf16.xpose.msra.mxu0 0
  %815 = vmatprep.mubr.bf16.mxu0 0
  %816 = vmatmul.mubr.bf16.gmra.mrb[0].mxu0 %v778
  %v817 = vpop.f32.mrb[0].mxu0
  %v818 = vadd.f32 0.0, %v817
  %v819 = vpop.f32.mrb[0].mxu0
  %v820 = vpop.f32.mrb[0].mxu0
  %v821 = vadd.f32 0.0, %v820
  %v822 = vpop.f32.mrb[0].mxu0
  %823 = vdwg.mxu0
  %825 = vrot.lane.b32.xlu0 %v644, 96
  %v826 = vpop.permute.xlu0 %825
  %v828 = vsel %vm676, %v644, 0
  %v831 = vsel %vm676, %v826, 0
  %833 = vmatprep.subr.bf16.mxu0 0
  %834 = vmatpush1.bf16.xpose.msra.mxu0 %v831
  %835 = vmatprep.subr.bf16.mxu0 0
  %836 = vmatpush1.bf16.xpose.msra.mxu0 0
  %837 = vmatprep.subr.bf16.mxu0 0
  %838 = vmatpush1.bf16.xpose.msra.mxu0 0
  %839 = vmatprep.subr.bf16.mxu0 0
  %840 = vmatpush1.bf16.xpose.msra.mxu0 0
  %841 = vmatprep.subr.bf16.mxu0 0
  %842 = vmatpush1.bf16.xpose.msra.mxu0 0
  %843 = vmatprep.subr.bf16.mxu0 0
  %844 = vmatpush1.bf16.xpose.msra.mxu0 0
  %845 = vmatprep.subr.bf16.mxu0 0
  %846 = vmatpush1.bf16.xpose.msra.mxu0 0
  %847 = vmatprep.subr.bf16.mxu0 0
  %848 = vmatpush1.bf16.xpose.msra.mxu0 0
  %849 = vmatprep.subr.bf16.mxu0 0
  %850 = vmatpush1.bf16.xpose.msra.mxu0 0
  %851 = vmatprep.subr.bf16.mxu0 0
  %852 = vmatpush1.bf16.xpose.msra.mxu0 0
  %853 = vmatprep.subr.bf16.mxu0 0
  %854 = vmatpush1.bf16.xpose.msra.mxu0 0
  %855 = vmatprep.subr.bf16.mxu0 0
  %856 = vmatpush1.bf16.xpose.msra.mxu0 0
  %857 = vmatprep.subr.bf16.mxu0 0
  %858 = vmatpush1.bf16.xpose.msra.mxu0 0
  %859 = vmatprep.subr.bf16.mxu0 0
  %860 = vmatpush1.bf16.xpose.msra.mxu0 0
  %861 = vmatprep.subr.bf16.mxu0 0
  %862 = vmatpush1.bf16.xpose.msra.mxu0 0
  %863 = vmatprep.subr.bf16.mxu0 0
  %864 = vmatpush1.bf16.xpose.msra.mxu0 0
  %865 = vmatprep.mubr.bf16.mxu0 0
  %866 = vmatmul.mubr.bf16.gmra.mrb[0].mxu0 %v828
  %v867 = vpop.f32.mrb[0].mxu0
  %v868 = vadd.f32 0.0, %v867
  %v869 = vpop.f32.mrb[0].mxu0
  %v870 = vpop.f32.mrb[0].mxu0
  %v871 = vadd.f32 0.0, %v870
  %v872 = vpop.f32.mrb[0].mxu0
  %873 = vdwg.mxu0
  %875 = vrot.lane.b32.xlu0 %v645, 96
  %v876 = vpop.permute.xlu0 %875
  %v878 = vsel %vm676, %v645, 0
  %v881 = vsel %vm676, %v876, 0
  %883 = vmatprep.subr.bf16.mxu0 0
  %884 = vmatpush1.bf16.xpose.msra.mxu0 %v881
  %885 = vmatprep.subr.bf16.mxu0 0
  %886 = vmatpush1.bf16.xpose.msra.mxu0 0
  %887 = vmatprep.subr.bf16.mxu0 0
  %888 = vmatpush1.bf16.xpose.msra.mxu0 0
  %889 = vmatprep.subr.bf16.mxu0 0
  %890 = vmatpush1.bf16.xpose.msra.mxu0 0
  %891 = vmatprep.subr.bf16.mxu0 0
  %892 = vmatpush1.bf16.xpose.msra.mxu0 0
  %893 = vmatprep.subr.bf16.mxu0 0
  %894 = vmatpush1.bf16.xpose.msra.mxu0 0
  %895 = vmatprep.subr.bf16.mxu0 0
  %896 = vmatpush1.bf16.xpose.msra.mxu0 0
  %897 = vmatprep.subr.bf16.mxu0 0
  %898 = vmatpush1.bf16.xpose.msra.mxu0 0
  %899 = vmatprep.subr.bf16.mxu0 0
  %900 = vmatpush1.bf16.xpose.msra.mxu0 0
  %901 = vmatprep.subr.bf16.mxu0 0
  %902 = vmatpush1.bf16.xpose.msra.mxu0 0
  %903 = vmatprep.subr.bf16.mxu0 0
  %904 = vmatpush1.bf16.xpose.msra.mxu0 0
  %905 = vmatprep.subr.bf16.mxu0 0
  %906 = vmatpush1.bf16.xpose.msra.mxu0 0
  %907 = vmatprep.subr.bf16.mxu0 0
  %908 = vmatpush1.bf16.xpose.msra.mxu0 0
  %909 = vmatprep.subr.bf16.mxu0 0
  %910 = vmatpush1.bf16.xpose.msra.mxu0 0
  %911 = vmatprep.subr.bf16.mxu0 0
  %912 = vmatpush1.bf16.xpose.msra.mxu0 0
  %913 = vmatprep.subr.bf16.mxu0 0
  %914 = vmatpush1.bf16.xpose.msra.mxu0 0
  %915 = vmatprep.mubr.bf16.mxu0 0
  %916 = vmatmul.mubr.bf16.gmra.mrb[0].mxu0 %v878
  %v917 = vpop.f32.mrb[0].mxu0
  %v918 = vadd.f32 0.0, %v917
  %v919 = vpop.f32.mrb[0].mxu0
  %v920 = vpop.f32.mrb[0].mxu0
  %v921 = vadd.f32 0.0, %v920
  %v922 = vpop.f32.mrb[0].mxu0
  %923 = vdwg.mxu0
  %925 = vrot.lane.b32.xlu0 %v646, 96
  %v926 = vpop.permute.xlu0 %925
  %v928 = vsel %vm676, %v646, 0
  %v931 = vsel %vm676, %v926, 0
  %933 = vmatprep.subr.bf16.mxu0 0
  %934 = vmatpush1.bf16.xpose.msra.mxu0 %v931
  %935 = vmatprep.subr.bf16.mxu0 0
  %936 = vmatpush1.bf16.xpose.msra.mxu0 0
  %937 = vmatprep.subr.bf16.mxu0 0
  %938 = vmatpush1.bf16.xpose.msra.mxu0 0
  %939 = vmatprep.subr.bf16.mxu0 0
  %940 = vmatpush1.bf16.xpose.msra.mxu0 0
  %941 = vmatprep.subr.bf16.mxu0 0
  %942 = vmatpush1.bf16.xpose.msra.mxu0 0
  %943 = vmatprep.subr.bf16.mxu0 0
  %944 = vmatpush1.bf16.xpose.msra.mxu0 0
  %945 = vmatprep.subr.bf16.mxu0 0
  %946 = vmatpush1.bf16.xpose.msra.mxu0 0
  %947 = vmatprep.subr.bf16.mxu0 0
  %948 = vmatpush1.bf16.xpose.msra.mxu0 0
  %949 = vmatprep.subr.bf16.mxu0 0
  %950 = vmatpush1.bf16.xpose.msra.mxu0 0
  %951 = vmatprep.subr.bf16.mxu0 0
  %952 = vmatpush1.bf16.xpose.msra.mxu0 0
  %953 = vmatprep.subr.bf16.mxu0 0
  %954 = vmatpush1.bf16.xpose.msra.mxu0 0
  %955 = vmatprep.subr.bf16.mxu0 0
  %956 = vmatpush1.bf16.xpose.msra.mxu0 0
  %957 = vmatprep.subr.bf16.mxu0 0
  %958 = vmatpush1.bf16.xpose.msra.mxu0 0
  %959 = vmatprep.subr.bf16.mxu0 0
  %960 = vmatpush1.bf16.xpose.msra.mxu0 0
  %961 = vmatprep.subr.bf16.mxu0 0
  %962 = vmatpush1.bf16.xpose.msra.mxu0 0
  %963 = vmatprep.subr.bf16.mxu0 0
  %964 = vmatpush1.bf16.xpose.msra.mxu0 0
  %965 = vmatprep.mubr.bf16.mxu0 0
  %966 = vmatmul.mubr.bf16.gmra.mrb[0].mxu0 %v928
  %v967 = vpop.f32.mrb[0].mxu0
  %v968 = vadd.f32 0.0, %v967
  %v969 = vpop.f32.mrb[0].mxu0
  %v970 = vpop.f32.mrb[0].mxu0
  %v971 = vadd.f32 0.0, %v970
  %v972 = vpop.f32.mrb[0].mxu0
  %973 = vdwg.mxu0
  %975 = vrot.lane.b32.xlu0 %v647, 96
  %v976 = vpop.permute.xlu0 %975
  %v978 = vsel %vm676, %v647, 0
  %v981 = vsel %vm676, %v976, 0
  %983 = vmatprep.subr.bf16.mxu0 0
  %984 = vmatpush1.bf16.xpose.msra.mxu0 %v981
  %985 = vmatprep.subr.bf16.mxu0 0
  %986 = vmatpush1.bf16.xpose.msra.mxu0 0
  %987 = vmatprep.subr.bf16.mxu0 0
  %988 = vmatpush1.bf16.xpose.msra.mxu0 0
  %989 = vmatprep.subr.bf16.mxu0 0
  %990 = vmatpush1.bf16.xpose.msra.mxu0 0
  %991 = vmatprep.subr.bf16.mxu0 0
  %992 = vmatpush1.bf16.xpose.msra.mxu0 0
  %993 = vmatprep.subr.bf16.mxu0 0
  %994 = vmatpush1.bf16.xpose.msra.mxu0 0
  %995 = vmatprep.subr.bf16.mxu0 0
  %996 = vmatpush1.bf16.xpose.msra.mxu0 0
  %997 = vmatprep.subr.bf16.mxu0 0
  %998 = vmatpush1.bf16.xpose.msra.mxu0 0
  %999 = vmatprep.subr.bf16.mxu0 0
  %1000 = vmatpush1.bf16.xpose.msra.mxu0 0
  %1001 = vmatprep.subr.bf16.mxu0 0
  %1002 = vmatpush1.bf16.xpose.msra.mxu0 0
  %1003 = vmatprep.subr.bf16.mxu0 0
  %1004 = vmatpush1.bf16.xpose.msra.mxu0 0
  %1005 = vmatprep.subr.bf16.mxu0 0
  %1006 = vmatpush1.bf16.xpose.msra.mxu0 0
  %1007 = vmatprep.subr.bf16.mxu0 0
  %1008 = vmatpush1.bf16.xpose.msra.mxu0 0
  %1009 = vmatprep.subr.bf16.mxu0 0
  %1010 = vmatpush1.bf16.xpose.msra.mxu0 0
  %1011 = vmatprep.subr.bf16.mxu0 0
  %1012 = vmatpush1.bf16.xpose.msra.mxu0 0
  %1013 = vmatprep.subr.bf16.mxu0 0
  %1014 = vmatpush1.bf16.xpose.msra.mxu0 0
  %1015 = vmatprep.mubr.bf16.mxu0 0
  %1016 = vmatmul.mubr.bf16.gmra.mrb[0].mxu0 %v978
  %v1017 = vpop.f32.mrb[0].mxu0
  %v1018 = vadd.f32 0.0, %v1017
  %v1019 = vpop.f32.mrb[0].mxu0
  %v1020 = vpop.f32.mrb[0].mxu0
  %v1021 = vadd.f32 0.0, %v1020
  %v1022 = vpop.f32.mrb[0].mxu0
  %1023 = vdwg.mxu0
  %1025 = vrot.lane.b32.xlu0 %v648, 96
  %v1026 = vpop.permute.xlu0 %1025
  %v1028 = vsel %vm676, %v648, 0
  %v1031 = vsel %vm676, %v1026, 0
  %1033 = vmatprep.subr.bf16.mxu0 0
  %1034 = vmatpush1.bf16.xpose.msra.mxu0 %v1031
  %1035 = vmatprep.subr.bf16.mxu0 0
  %1036 = vmatpush1.bf16.xpose.msra.mxu0 0
  %1037 = vmatprep.subr.bf16.mxu0 0
  %1038 = vmatpush1.bf16.xpose.msra.mxu0 0
  %1039 = vmatprep.subr.bf16.mxu0 0
  %1040 = vmatpush1.bf16.xpose.msra.mxu0 0
  %1041 = vmatprep.subr.bf16.mxu0 0
  %1042 = vmatpush1.bf16.xpose.msra.mxu0 0
  %1043 = vmatprep.subr.bf16.mxu0 0
  %1044 = vmatpush1.bf16.xpose.msra.mxu0 0
  %1045 = vmatprep.subr.bf16.mxu0 0
  %1046 = vmatpush1.bf16.xpose.msra.mxu0 0
  %1047 = vmatprep.subr.bf16.mxu0 0
  %1048 = vmatpush1.bf16.xpose.msra.mxu0 0
  %1049 = vmatprep.subr.bf16.mxu0 0
  %1050 = vmatpush1.bf16.xpose.msra.mxu0 0
  %1051 = vmatprep.subr.bf16.mxu0 0
  %1052 = vmatpush1.bf16.xpose.msra.mxu0 0
  %1053 = vmatprep.subr.bf16.mxu0 0
  %1054 = vmatpush1.bf16.xpose.msra.mxu0 0
  %1055 = vmatprep.subr.bf16.mxu0 0
  %1056 = vmatpush1.bf16.xpose.msra.mxu0 0
  %1057 = vmatprep.subr.bf16.mxu0 0
  %1058 = vmatpush1.bf16.xpose.msra.mxu0 0
  %1059 = vmatprep.subr.bf16.mxu0 0
  %1060 = vmatpush1.bf16.xpose.msra.mxu0 0
  %1061 = vmatprep.subr.bf16.mxu0 0
  %1062 = vmatpush1.bf16.xpose.msra.mxu0 0
  %1063 = vmatprep.subr.bf16.mxu0 0
  %1064 = vmatpush1.bf16.xpose.msra.mxu0 0
  %1065 = vmatprep.mubr.bf16.mxu0 0
  %1066 = vmatmul.mubr.bf16.gmra.mrb[0].mxu0 %v1028
  %v1067 = vpop.f32.mrb[0].mxu0
  %v1068 = vadd.f32 0.0, %v1067
  %v1069 = vpop.f32.mrb[0].mxu0
  %v1070 = vpop.f32.mrb[0].mxu0
  %v1071 = vadd.f32 0.0, %v1070
  %v1072 = vpop.f32.mrb[0].mxu0
  %1073 = vdwg.mxu0
  %1075 = vrot.lane.b32.xlu0 %v649, 96
  %v1076 = vpop.permute.xlu0 %1075
  %v1078 = vsel %vm676, %v649, 0
  %v1081 = vsel %vm676, %v1076, 0
  %1083 = vmatprep.subr.bf16.mxu0 0
  %1084 = vmatpush1.bf16.xpose.msra.mxu0 %v1081
  %1085 = vmatprep.subr.bf16.mxu0 0
  %1086 = vmatpush1.bf16.xpose.msra.mxu0 0
  %1087 = vmatprep.subr.bf16.mxu0 0
  %1088 = vmatpush1.bf16.xpose.msra.mxu0 0
  %1089 = vmatprep.subr.bf16.mxu0 0
  %1090 = vmatpush1.bf16.xpose.msra.mxu0 0
  %1091 = vmatprep.subr.bf16.mxu0 0
  %1092 = vmatpush1.bf16.xpose.msra.mxu0 0
  %1093 = vmatprep.subr.bf16.mxu0 0
  %1094 = vmatpush1.bf16.xpose.msra.mxu0 0
  %1095 = vmatprep.subr.bf16.mxu0 0
  %1096 = vmatpush1.bf16.xpose.msra.mxu0 0
  %1097 = vmatprep.subr.bf16.mxu0 0
  %1098 = vmatpush1.bf16.xpose.msra.mxu0 0
  %1099 = vmatprep.subr.bf16.mxu0 0
  %1100 = vmatpush1.bf16.xpose.msra.mxu0 0
  %1101 = vmatprep.subr.bf16.mxu0 0
  %1102 = vmatpush1.bf16.xpose.msra.mxu0 0
  %1103 = vmatprep.subr.bf16.mxu0 0
  %1104 = vmatpush1.bf16.xpose.msra.mxu0 0
  %1105 = vmatprep.subr.bf16.mxu0 0
  %1106 = vmatpush1.bf16.xpose.msra.mxu0 0
  %1107 = vmatprep.subr.bf16.mxu0 0
  %1108 = vmatpush1.bf16.xpose.msra.mxu0 0
  %1109 = vmatprep.subr.bf16.mxu0 0
  %1110 = vmatpush1.bf16.xpose.msra.mxu0 0
  %1111 = vmatprep.subr.bf16.mxu0 0
  %1112 = vmatpush1.bf16.xpose.msra.mxu0 0
  %1113 = vmatprep.subr.bf16.mxu0 0
  %1114 = vmatpush1.bf16.xpose.msra.mxu0 0
  %1115 = vmatprep.mubr.bf16.mxu0 0
  %1116 = vmatmul.mubr.bf16.gmra.mrb[0].mxu0 %v1078
  %v1117 = vpop.f32.mrb[0].mxu0
  %v1118 = vadd.f32 0.0, %v1117
  %v1119 = vpop.f32.mrb[0].mxu0
  %v1120 = vpop.f32.mrb[0].mxu0
  %v1121 = vadd.f32 0.0, %v1120
  %v1122 = vpop.f32.mrb[0].mxu0
  %1123 = vdwg.mxu0
  %1125 = vrot.lane.b32.xlu0 %v650, 96
  %v1126 = vpop.permute.xlu0 %1125
  %v1128 = vsel %vm676, %v650, 0
  %v1131 = vsel %vm676, %v1126, 0
  %1133 = vmatprep.subr.bf16.mxu0 0
  %1134 = vmatpush1.bf16.xpose.msra.mxu0 %v1131
  %1135 = vmatprep.subr.bf16.mxu0 0
  %1136 = vmatpush1.bf16.xpose.msra.mxu0 0
  %1137 = vmatprep.subr.bf16.mxu0 0
  %1138 = vmatpush1.bf16.xpose.msra.mxu0 0
  %1139 = vmatprep.subr.bf16.mxu0 0
  %1140 = vmatpush1.bf16.xpose.msra.mxu0 0
  %1141 = vmatprep.subr.bf16.mxu0 0
  %1142 = vmatpush1.bf16.xpose.msra.mxu0 0
  %1143 = vmatprep.subr.bf16.mxu0 0
  %1144 = vmatpush1.bf16.xpose.msra.mxu0 0
  %1145 = vmatprep.subr.bf16.mxu0 0
  %1146 = vmatpush1.bf16.xpose.msra.mxu0 0
  %1147 = vmatprep.subr.bf16.mxu0 0
  %1148 = vmatpush1.bf16.xpose.msra.mxu0 0
  %1149 = vmatprep.subr.bf16.mxu0 0
  %1150 = vmatpush1.bf16.xpose.msra.mxu0 0
  %1151 = vmatprep.subr.bf16.mxu0 0
  %1152 = vmatpush1.bf16.xpose.msra.mxu0 0
  %1153 = vmatprep.subr.bf16.mxu0 0
  %1154 = vmatpush1.bf16.xpose.msra.mxu0 0
  %1155 = vmatprep.subr.bf16.mxu0 0
  %1156 = vmatpush1.bf16.xpose.msra.mxu0 0
  %1157 = vmatprep.subr.bf16.mxu0 0
  %1158 = vmatpush1.bf16.xpose.msra.mxu0 0
  %1159 = vmatprep.subr.bf16.mxu0 0
  %1160 = vmatpush1.bf16.xpose.msra.mxu0 0
  %1161 = vmatprep.subr.bf16.mxu0 0
  %1162 = vmatpush1.bf16.xpose.msra.mxu0 0
  %1163 = vmatprep.subr.bf16.mxu0 0
  %1164 = vmatpush1.bf16.xpose.msra.mxu0 0
  %1165 = vmatprep.mubr.bf16.mxu0 0
  %1166 = vmatmul.mubr.bf16.gmra.mrb[0].mxu0 %v1128
  %v1167 = vpop.f32.mrb[0].mxu0
  %v1168 = vadd.f32 0.0, %v1167
  %v1169 = vpop.f32.mrb[0].mxu0
  %v1170 = vpop.f32.mrb[0].mxu0
  %v1171 = vadd.f32 0.0, %v1170
  %v1172 = vpop.f32.mrb[0].mxu0
  %1173 = vdwg.mxu0
  %1175 = vrot.lane.b32.xlu0 %v651, 96
  %v1176 = vpop.permute.xlu0 %1175
  %v1178 = vsel %vm676, %v651, 0
  %v1181 = vsel %vm676, %v1176, 0
  %1183 = vmatprep.subr.bf16.mxu0 0
  %1184 = vmatpush1.bf16.xpose.msra.mxu0 %v1181
  %1185 = vmatprep.subr.bf16.mxu0 0
  %1186 = vmatpush1.bf16.xpose.msra.mxu0 0
  %1187 = vmatprep.subr.bf16.mxu0 0
  %1188 = vmatpush1.bf16.xpose.msra.mxu0 0
  %1189 = vmatprep.subr.bf16.mxu0 0
  %1190 = vmatpush1.bf16.xpose.msra.mxu0 0
  %1191 = vmatprep.subr.bf16.mxu0 0
  %1192 = vmatpush1.bf16.xpose.msra.mxu0 0
  %1193 = vmatprep.subr.bf16.mxu0 0
  %1194 = vmatpush1.bf16.xpose.msra.mxu0 0
  %1195 = vmatprep.subr.bf16.mxu0 0
  %1196 = vmatpush1.bf16.xpose.msra.mxu0 0
  %1197 = vmatprep.subr.bf16.mxu0 0
  %1198 = vmatpush1.bf16.xpose.msra.mxu0 0
  %1199 = vmatprep.subr.bf16.mxu0 0
  %1200 = vmatpush1.bf16.xpose.msra.mxu0 0
  %1201 = vmatprep.subr.bf16.mxu0 0
  %1202 = vmatpush1.bf16.xpose.msra.mxu0 0
  %1203 = vmatprep.subr.bf16.mxu0 0
  %1204 = vmatpush1.bf16.xpose.msra.mxu0 0
  %1205 = vmatprep.subr.bf16.mxu0 0
  %1206 = vmatpush1.bf16.xpose.msra.mxu0 0
  %1207 = vmatprep.subr.bf16.mxu0 0
  %1208 = vmatpush1.bf16.xpose.msra.mxu0 0
  %1209 = vmatprep.subr.bf16.mxu0 0
  %1210 = vmatpush1.bf16.xpose.msra.mxu0 0
  %1211 = vmatprep.subr.bf16.mxu0 0
  %1212 = vmatpush1.bf16.xpose.msra.mxu0 0
  %1213 = vmatprep.subr.bf16.mxu0 0
  %1214 = vmatpush1.bf16.xpose.msra.mxu0 0
  %1215 = vmatprep.mubr.bf16.mxu0 0
  %1216 = vmatmul.mubr.bf16.gmra.mrb[0].mxu0 %v1178
  %v1217 = vpop.f32.mrb[0].mxu0
  %v1218 = vadd.f32 0.0, %v1217
  %v1219 = vpop.f32.mrb[0].mxu0
  %v1220 = vpop.f32.mrb[0].mxu0
  %v1221 = vadd.f32 0.0, %v1220
  %v1222 = vpop.f32.mrb[0].mxu0
  %1223 = vdwg.mxu0
  %1225 = vrot.lane.b32.xlu0 %v652, 96
  %v1226 = vpop.permute.xlu0 %1225
  %v1228 = vsel %vm676, %v652, 0
  %v1231 = vsel %vm676, %v1226, 0
  %1233 = vmatprep.subr.bf16.mxu0 0
  %1234 = vmatpush1.bf16.xpose.msra.mxu0 %v1231
  %1235 = vmatprep.subr.bf16.mxu0 0
  %1236 = vmatpush1.bf16.xpose.msra.mxu0 0
  %1237 = vmatprep.subr.bf16.mxu0 0
  %1238 = vmatpush1.bf16.xpose.msra.mxu0 0
  %1239 = vmatprep.subr.bf16.mxu0 0
  %1240 = vmatpush1.bf16.xpose.msra.mxu0 0
  %1241 = vmatprep.subr.bf16.mxu0 0
  %1242 = vmatpush1.bf16.xpose.msra.mxu0 0
  %1243 = vmatprep.subr.bf16.mxu0 0
  %1244 = vmatpush1.bf16.xpose.msra.mxu0 0
  %1245 = vmatprep.subr.bf16.mxu0 0
  %1246 = vmatpush1.bf16.xpose.msra.mxu0 0
  %1247 = vmatprep.subr.bf16.mxu0 0
  %1248 = vmatpush1.bf16.xpose.msra.mxu0 0
  %1249 = vmatprep.subr.bf16.mxu0 0
  %1250 = vmatpush1.bf16.xpose.msra.mxu0 0
  %1251 = vmatprep.subr.bf16.mxu0 0
  %1252 = vmatpush1.bf16.xpose.msra.mxu0 0
  %1253 = vmatprep.subr.bf16.mxu0 0
  %1254 = vmatpush1.bf16.xpose.msra.mxu0 0
  %1255 = vmatprep.subr.bf16.mxu0 0
  %1256 = vmatpush1.bf16.xpose.msra.mxu0 0
  %1257 = vmatprep.subr.bf16.mxu0 0
  %1258 = vmatpush1.bf16.xpose.msra.mxu0 0
  %1259 = vmatprep.subr.bf16.mxu0 0
  %1260 = vmatpush1.bf16.xpose.msra.mxu0 0
  %1261 = vmatprep.subr.bf16.mxu0 0
  %1262 = vmatpush1.bf16.xpose.msra.mxu0 0
  %1263 = vmatprep.subr.bf16.mxu0 0
  %1264 = vmatpush1.bf16.xpose.msra.mxu0 0
  %1265 = vmatprep.mubr.bf16.mxu0 0
  %1266 = vmatmul.mubr.bf16.gmra.mrb[0].mxu0 %v1228
  %v1267 = vpop.f32.mrb[0].mxu0
  %v1268 = vadd.f32 0.0, %v1267
  %v1269 = vpop.f32.mrb[0].mxu0
  %v1270 = vpop.f32.mrb[0].mxu0
  %v1271 = vadd.f32 0.0, %v1270
  %v1272 = vpop.f32.mrb[0].mxu0
  %1273 = vdwg.mxu0
  %1275 = vrot.lane.b32.xlu0 %v653, 96
  %v1276 = vpop.permute.xlu0 %1275
  %v1278 = vsel %vm676, %v653, 0
  %v1281 = vsel %vm676, %v1276, 0
  %1283 = vmatprep.subr.bf16.mxu0 0
  %1284 = vmatpush1.bf16.xpose.msra.mxu0 %v1281
  %1285 = vmatprep.subr.bf16.mxu0 0
  %1286 = vmatpush1.bf16.xpose.msra.mxu0 0
  %1287 = vmatprep.subr.bf16.mxu0 0
  %1288 = vmatpush1.bf16.xpose.msra.mxu0 0
  %1289 = vmatprep.subr.bf16.mxu0 0
  %1290 = vmatpush1.bf16.xpose.msra.mxu0 0
  %1291 = vmatprep.subr.bf16.mxu0 0
  %1292 = vmatpush1.bf16.xpose.msra.mxu0 0
  %1293 = vmatprep.subr.bf16.mxu0 0
  %1294 = vmatpush1.bf16.xpose.msra.mxu0 0
  %1295 = vmatprep.subr.bf16.mxu0 0
  %1296 = vmatpush1.bf16.xpose.msra.mxu0 0
  %1297 = vmatprep.subr.bf16.mxu0 0
  %1298 = vmatpush1.bf16.xpose.msra.mxu0 0
  %1299 = vmatprep.subr.bf16.mxu0 0
  %1300 = vmatpush1.bf16.xpose.msra.mxu0 0
  %1301 = vmatprep.subr.bf16.mxu0 0
  %1302 = vmatpush1.bf16.xpose.msra.mxu0 0
  %1303 = vmatprep.subr.bf16.mxu0 0
  %1304 = vmatpush1.bf16.xpose.msra.mxu0 0
  %1305 = vmatprep.subr.bf16.mxu0 0
  %1306 = vmatpush1.bf16.xpose.msra.mxu0 0
  %1307 = vmatprep.subr.bf16.mxu0 0
  %1308 = vmatpush1.bf16.xpose.msra.mxu0 0
  %1309 = vmatprep.subr.bf16.mxu0 0
  %1310 = vmatpush1.bf16.xpose.msra.mxu0 0
  %1311 = vmatprep.subr.bf16.mxu0 0
  %1312 = vmatpush1.bf16.xpose.msra.mxu0 0
  %1313 = vmatprep.subr.bf16.mxu0 0
  %1314 = vmatpush1.bf16.xpose.msra.mxu0 0
  %1315 = vmatprep.mubr.bf16.mxu0 0
  %1316 = vmatmul.mubr.bf16.gmra.mrb[0].mxu0 %v1278
  %v1317 = vpop.f32.mrb[0].mxu0
  %v1318 = vadd.f32 0.0, %v1317
  %v1319 = vpop.f32.mrb[0].mxu0
  %v1320 = vpop.f32.mrb[0].mxu0
  %v1321 = vadd.f32 0.0, %v1320
  %v1322 = vpop.f32.mrb[0].mxu0
  %1323 = vdwg.mxu0
  %1325 = vrot.lane.b32.xlu0 %v654, 96
  %v1326 = vpop.permute.xlu0 %1325
  %v1328 = vsel %vm676, %v654, 0
  %v1331 = vsel %vm676, %v1326, 0
  %1333 = vmatprep.subr.bf16.mxu0 0
  %1334 = vmatpush1.bf16.xpose.msra.mxu0 %v1331
  %1335 = vmatprep.subr.bf16.mxu0 0
  %1336 = vmatpush1.bf16.xpose.msra.mxu0 0
  %1337 = vmatprep.subr.bf16.mxu0 0
  %1338 = vmatpush1.bf16.xpose.msra.mxu0 0
  %1339 = vmatprep.subr.bf16.mxu0 0
  %1340 = vmatpush1.bf16.xpose.msra.mxu0 0
  %1341 = vmatprep.subr.bf16.mxu0 0
  %1342 = vmatpush1.bf16.xpose.msra.mxu0 0
  %1343 = vmatprep.subr.bf16.mxu0 0
  %1344 = vmatpush1.bf16.xpose.msra.mxu0 0
  %1345 = vmatprep.subr.bf16.mxu0 0
  %1346 = vmatpush1.bf16.xpose.msra.mxu0 0
  %1347 = vmatprep.subr.bf16.mxu0 0
  %1348 = vmatpush1.bf16.xpose.msra.mxu0 0
  %1349 = vmatprep.subr.bf16.mxu0 0
  %1350 = vmatpush1.bf16.xpose.msra.mxu0 0
  %1351 = vmatprep.subr.bf16.mxu0 0
  %1352 = vmatpush1.bf16.xpose.msra.mxu0 0
  %1353 = vmatprep.subr.bf16.mxu0 0
  %1354 = vmatpush1.bf16.xpose.msra.mxu0 0
  %1355 = vmatprep.subr.bf16.mxu0 0
  %1356 = vmatpush1.bf16.xpose.msra.mxu0 0
  %1357 = vmatprep.subr.bf16.mxu0 0
  %1358 = vmatpush1.bf16.xpose.msra.mxu0 0
  %1359 = vmatprep.subr.bf16.mxu0 0
  %1360 = vmatpush1.bf16.xpose.msra.mxu0 0
  %1361 = vmatprep.subr.bf16.mxu0 0
  %1362 = vmatpush1.bf16.xpose.msra.mxu0 0
  %1363 = vmatprep.subr.bf16.mxu0 0
  %1364 = vmatpush1.bf16.xpose.msra.mxu0 0
  %1365 = vmatprep.mubr.bf16.mxu0 0
  %1366 = vmatmul.mubr.bf16.gmra.mrb[0].mxu0 %v1328
  %v1367 = vpop.f32.mrb[0].mxu0
  %v1368 = vadd.f32 0.0, %v1367
  %v1369 = vpop.f32.mrb[0].mxu0
  %v1370 = vpop.f32.mrb[0].mxu0
  %v1371 = vadd.f32 0.0, %v1370
  %v1372 = vpop.f32.mrb[0].mxu0
  %1373 = vdwg.mxu0
  %1375 = vrot.lane.b32.xlu0 %v655, 96
  %v1376 = vpop.permute.xlu0 %1375
  %v1378 = vsel %vm676, %v655, 0
  %v1381 = vsel %vm676, %v1376, 0
  %1383 = vmatprep.subr.bf16.mxu0 0
  %1384 = vmatpush1.bf16.xpose.msra.mxu0 %v1381
  %1385 = vmatprep.subr.bf16.mxu0 0
  %1386 = vmatpush1.bf16.xpose.msra.mxu0 0
  %1387 = vmatprep.subr.bf16.mxu0 0
  %1388 = vmatpush1.bf16.xpose.msra.mxu0 0
  %1389 = vmatprep.subr.bf16.mxu0 0
  %1390 = vmatpush1.bf16.xpose.msra.mxu0 0
  %1391 = vmatprep.subr.bf16.mxu0 0
  %1392 = vmatpush1.bf16.xpose.msra.mxu0 0
  %1393 = vmatprep.subr.bf16.mxu0 0
  %1394 = vmatpush1.bf16.xpose.msra.mxu0 0
  %1395 = vmatprep.subr.bf16.mxu0 0
  %1396 = vmatpush1.bf16.xpose.msra.mxu0 0
  %1397 = vmatprep.subr.bf16.mxu0 0
  %1398 = vmatpush1.bf16.xpose.msra.mxu0 0
  %1399 = vmatprep.subr.bf16.mxu0 0
  %1400 = vmatpush1.bf16.xpose.msra.mxu0 0
  %1401 = vmatprep.subr.bf16.mxu0 0
  %1402 = vmatpush1.bf16.xpose.msra.mxu0 0
  %1403 = vmatprep.subr.bf16.mxu0 0
  %1404 = vmatpush1.bf16.xpose.msra.mxu0 0
  %1405 = vmatprep.subr.bf16.mxu0 0
  %1406 = vmatpush1.bf16.xpose.msra.mxu0 0
  %1407 = vmatprep.subr.bf16.mxu0 0
  %1408 = vmatpush1.bf16.xpose.msra.mxu0 0
  %1409 = vmatprep.subr.bf16.mxu0 0
  %1410 = vmatpush1.bf16.xpose.msra.mxu0 0
  %1411 = vmatprep.subr.bf16.mxu0 0
  %1412 = vmatpush1.bf16.xpose.msra.mxu0 0
  %1413 = vmatprep.subr.bf16.mxu0 0
  %1414 = vmatpush1.bf16.xpose.msra.mxu0 0
  %1415 = vmatprep.mubr.bf16.mxu0 0
  %1416 = vmatmul.mubr.bf16.gmra.mrb[0].mxu0 %v1378
  %v1417 = vpop.f32.mrb[0].mxu0
  %v1418 = vadd.f32 0.0, %v1417
  %v1419 = vpop.f32.mrb[0].mxu0
  %v1420 = vpop.f32.mrb[0].mxu0
  %v1421 = vadd.f32 0.0, %v1420
  %v1422 = vpop.f32.mrb[0].mxu0
  %1423 = vdwg.mxu0
  %1425 = vrot.lane.b32.xlu0 %v656, 96
  %v1426 = vpop.permute.xlu0 %1425
  %v1428 = vsel %vm676, %v656, 0
  %v1431 = vsel %vm676, %v1426, 0
  %1433 = vmatprep.subr.bf16.mxu0 0
  %1434 = vmatpush1.bf16.xpose.msra.mxu0 %v1431
  %1435 = vmatprep.subr.bf16.mxu0 0
  %1436 = vmatpush1.bf16.xpose.msra.mxu0 0
  %1437 = vmatprep.subr.bf16.mxu0 0
  %1438 = vmatpush1.bf16.xpose.msra.mxu0 0
  %1439 = vmatprep.subr.bf16.mxu0 0
  %1440 = vmatpush1.bf16.xpose.msra.mxu0 0
  %1441 = vmatprep.subr.bf16.mxu0 0
  %1442 = vmatpush1.bf16.xpose.msra.mxu0 0
  %1443 = vmatprep.subr.bf16.mxu0 0
  %1444 = vmatpush1.bf16.xpose.msra.mxu0 0
  %1445 = vmatprep.subr.bf16.mxu0 0
  %1446 = vmatpush1.bf16.xpose.msra.mxu0 0
  %1447 = vmatprep.subr.bf16.mxu0 0
  %1448 = vmatpush1.bf16.xpose.msra.mxu0 0
  %1449 = vmatprep.subr.bf16.mxu0 0
  %1450 = vmatpush1.bf16.xpose.msra.mxu0 0
  %1451 = vmatprep.subr.bf16.mxu0 0
  %1452 = vmatpush1.bf16.xpose.msra.mxu0 0
  %1453 = vmatprep.subr.bf16.mxu0 0
  %1454 = vmatpush1.bf16.xpose.msra.mxu0 0
  %1455 = vmatprep.subr.bf16.mxu0 0
  %1456 = vmatpush1.bf16.xpose.msra.mxu0 0
  %1457 = vmatprep.subr.bf16.mxu0 0
  %1458 = vmatpush1.bf16.xpose.msra.mxu0 0
  %1459 = vmatprep.subr.bf16.mxu0 0
  %1460 = vmatpush1.bf16.xpose.msra.mxu0 0
  %1461 = vmatprep.subr.bf16.mxu0 0
  %1462 = vmatpush1.bf16.xpose.msra.mxu0 0
  %1463 = vmatprep.subr.bf16.mxu0 0
  %1464 = vmatpush1.bf16.xpose.msra.mxu0 0
  %1465 = vmatprep.mubr.bf16.mxu0 0
  %1466 = vmatmul.mubr.bf16.gmra.mrb[0].mxu0 %v1428
  %v1467 = vpop.f32.mrb[0].mxu0
  %v1468 = vadd.f32 0.0, %v1467
  %v1469 = vpop.f32.mrb[0].mxu0
  %v1470 = vpop.f32.mrb[0].mxu0
  %v1471 = vadd.f32 0.0, %v1470
  %v1472 = vpop.f32.mrb[0].mxu0
  %1473 = vdwg.mxu0
  %1475 = vrot.lane.b32.xlu0 %v657, 96
  %v1476 = vpop.permute.xlu0 %1475
  %v1478 = vsel %vm676, %v657, 0
  %v1481 = vsel %vm676, %v1476, 0
  %1483 = vmatprep.subr.bf16.mxu0 0
  %1484 = vmatpush1.bf16.xpose.msra.mxu0 %v1481
  %1485 = vmatprep.subr.bf16.mxu0 0
  %1486 = vmatpush1.bf16.xpose.msra.mxu0 0
  %1487 = vmatprep.subr.bf16.mxu0 0
  %1488 = vmatpush1.bf16.xpose.msra.mxu0 0
  %1489 = vmatprep.subr.bf16.mxu0 0
  %1490 = vmatpush1.bf16.xpose.msra.mxu0 0
  %1491 = vmatprep.subr.bf16.mxu0 0
  %1492 = vmatpush1.bf16.xpose.msra.mxu0 0
  %1493 = vmatprep.subr.bf16.mxu0 0
  %1494 = vmatpush1.bf16.xpose.msra.mxu0 0
  %1495 = vmatprep.subr.bf16.mxu0 0
  %1496 = vmatpush1.bf16.xpose.msra.mxu0 0
  %1497 = vmatprep.subr.bf16.mxu0 0
  %1498 = vmatpush1.bf16.xpose.msra.mxu0 0
  %1499 = vmatprep.subr.bf16.mxu0 0
  %1500 = vmatpush1.bf16.xpose.msra.mxu0 0
  %1501 = vmatprep.subr.bf16.mxu0 0
  %1502 = vmatpush1.bf16.xpose.msra.mxu0 0
  %1503 = vmatprep.subr.bf16.mxu0 0
  %1504 = vmatpush1.bf16.xpose.msra.mxu0 0
  %1505 = vmatprep.subr.bf16.mxu0 0
  %1506 = vmatpush1.bf16.xpose.msra.mxu0 0
  %1507 = vmatprep.subr.bf16.mxu0 0
  %1508 = vmatpush1.bf16.xpose.msra.mxu0 0
  %1509 = vmatprep.subr.bf16.mxu0 0
  %1510 = vmatpush1.bf16.xpose.msra.mxu0 0
  %1511 = vmatprep.subr.bf16.mxu0 0
  %1512 = vmatpush1.bf16.xpose.msra.mxu0 0
  %1513 = vmatprep.subr.bf16.mxu0 0
  %1514 = vmatpush1.bf16.xpose.msra.mxu0 0
  %1515 = vmatprep.mubr.bf16.mxu0 0
  %1516 = vmatmul.mubr.bf16.gmra.mrb[0].mxu0 %v1478
  %v1517 = vpop.f32.mrb[0].mxu0
  %v1518 = vadd.f32 0.0, %v1517
  %v1519 = vpop.f32.mrb[0].mxu0
  %v1520 = vpop.f32.mrb[0].mxu0
  %v1521 = vadd.f32 0.0, %v1520
  %v1522 = vpop.f32.mrb[0].mxu0
  %1523 = vdwg.mxu0
  %1525 = vrot.lane.b32.xlu0 %v658, 96
  %v1526 = vpop.permute.xlu0 %1525
  %v1528 = vsel %vm676, %v658, 0
  %v1531 = vsel %vm676, %v1526, 0
  %1533 = vmatprep.subr.bf16.mxu0 0
  %1534 = vmatpush1.bf16.xpose.msra.mxu0 %v1531
  %1535 = vmatprep.subr.bf16.mxu0 0
  %1536 = vmatpush1.bf16.xpose.msra.mxu0 0
  %1537 = vmatprep.subr.bf16.mxu0 0
  %1538 = vmatpush1.bf16.xpose.msra.mxu0 0
  %1539 = vmatprep.subr.bf16.mxu0 0
  %1540 = vmatpush1.bf16.xpose.msra.mxu0 0
  %1541 = vmatprep.subr.bf16.mxu0 0
  %1542 = vmatpush1.bf16.xpose.msra.mxu0 0
  %1543 = vmatprep.subr.bf16.mxu0 0
  %1544 = vmatpush1.bf16.xpose.msra.mxu0 0
  %1545 = vmatprep.subr.bf16.mxu0 0
  %1546 = vmatpush1.bf16.xpose.msra.mxu0 0
  %1547 = vmatprep.subr.bf16.mxu0 0
  %1548 = vmatpush1.bf16.xpose.msra.mxu0 0
  %1549 = vmatprep.subr.bf16.mxu0 0
  %1550 = vmatpush1.bf16.xpose.msra.mxu0 0
  %1551 = vmatprep.subr.bf16.mxu0 0
  %1552 = vmatpush1.bf16.xpose.msra.mxu0 0
  %1553 = vmatprep.subr.bf16.mxu0 0
  %1554 = vmatpush1.bf16.xpose.msra.mxu0 0
  %1555 = vmatprep.subr.bf16.mxu0 0
  %1556 = vmatpush1.bf16.xpose.msra.mxu0 0
  %1557 = vmatprep.subr.bf16.mxu0 0
  %1558 = vmatpush1.bf16.xpose.msra.mxu0 0
  %1559 = vmatprep.subr.bf16.mxu0 0
  %1560 = vmatpush1.bf16.xpose.msra.mxu0 0
  %1561 = vmatprep.subr.bf16.mxu0 0
  %1562 = vmatpush1.bf16.xpose.msra.mxu0 0
  %1563 = vmatprep.subr.bf16.mxu0 0
  %1564 = vmatpush1.bf16.xpose.msra.mxu0 0
  %1565 = vmatprep.mubr.bf16.mxu0 0
  %1566 = vmatmul.mubr.bf16.gmra.mrb[0].mxu0 %v1528
  %v1567 = vpop.f32.mrb[0].mxu0
  %v1568 = vadd.f32 0.0, %v1567
  %v1569 = vpop.f32.mrb[0].mxu0
  %v1570 = vpop.f32.mrb[0].mxu0
  %v1571 = vadd.f32 0.0, %v1570
  %v1572 = vpop.f32.mrb[0].mxu0
  %1573 = vdwg.mxu0
  %1575 = vrot.lane.b32.xlu0 %v659, 96
  %v1576 = vpop.permute.xlu0 %1575
  %v1578 = vsel %vm676, %v659, 0
  %v1581 = vsel %vm676, %v1576, 0
  %1583 = vmatprep.subr.bf16.mxu0 0
  %1584 = vmatpush1.bf16.xpose.msra.mxu0 %v1581
  %1585 = vmatprep.subr.bf16.mxu0 0
  %1586 = vmatpush1.bf16.xpose.msra.mxu0 0
  %1587 = vmatprep.subr.bf16.mxu0 0
  %1588 = vmatpush1.bf16.xpose.msra.mxu0 0
  %1589 = vmatprep.subr.bf16.mxu0 0
  %1590 = vmatpush1.bf16.xpose.msra.mxu0 0
  %1591 = vmatprep.subr.bf16.mxu0 0
  %1592 = vmatpush1.bf16.xpose.msra.mxu0 0
  %1593 = vmatprep.subr.bf16.mxu0 0
  %1594 = vmatpush1.bf16.xpose.msra.mxu0 0
  %1595 = vmatprep.subr.bf16.mxu0 0
  %1596 = vmatpush1.bf16.xpose.msra.mxu0 0
  %1597 = vmatprep.subr.bf16.mxu0 0
  %1598 = vmatpush1.bf16.xpose.msra.mxu0 0
  %1599 = vmatprep.subr.bf16.mxu0 0
  %1600 = vmatpush1.bf16.xpose.msra.mxu0 0
  %1601 = vmatprep.subr.bf16.mxu0 0
  %1602 = vmatpush1.bf16.xpose.msra.mxu0 0
  %1603 = vmatprep.subr.bf16.mxu0 0
  %1604 = vmatpush1.bf16.xpose.msra.mxu0 0
  %1605 = vmatprep.subr.bf16.mxu0 0
  %1606 = vmatpush1.bf16.xpose.msra.mxu0 0
  %1607 = vmatprep.subr.bf16.mxu0 0
  %1608 = vmatpush1.bf16.xpose.msra.mxu0 0
  %1609 = vmatprep.subr.bf16.mxu0 0
  %1610 = vmatpush1.bf16.xpose.msra.mxu0 0
  %1611 = vmatprep.subr.bf16.mxu0 0
  %1612 = vmatpush1.bf16.xpose.msra.mxu0 0
  %1613 = vmatprep.subr.bf16.mxu0 0
  %1614 = vmatpush1.bf16.xpose.msra.mxu0 0
  %1615 = vmatprep.mubr.bf16.mxu0 0
  %1616 = vmatmul.mubr.bf16.gmra.mrb[0].mxu0 %v1578
  %v1617 = vpop.f32.mrb[0].mxu0
  %v1618 = vadd.f32 0.0, %v1617
  %v1619 = vpop.f32.mrb[0].mxu0
  %v1620 = vpop.f32.mrb[0].mxu0
  %v1621 = vadd.f32 0.0, %v1620
  %v1622 = vpop.f32.mrb[0].mxu0
  %1623 = vdwg.mxu0
  %1625 = vrot.lane.b32.xlu0 %v660, 96
  %v1626 = vpop.permute.xlu0 %1625
  %v1628 = vsel %vm676, %v660, 0
  %v1631 = vsel %vm676, %v1626, 0
  %1633 = vmatprep.subr.bf16.mxu0 0
  %1634 = vmatpush1.bf16.xpose.msra.mxu0 %v1631
  %1635 = vmatprep.subr.bf16.mxu0 0
  %1636 = vmatpush1.bf16.xpose.msra.mxu0 0
  %1637 = vmatprep.subr.bf16.mxu0 0
  %1638 = vmatpush1.bf16.xpose.msra.mxu0 0
  %1639 = vmatprep.subr.bf16.mxu0 0
  %1640 = vmatpush1.bf16.xpose.msra.mxu0 0
  %1641 = vmatprep.subr.bf16.mxu0 0
  %1642 = vmatpush1.bf16.xpose.msra.mxu0 0
  %1643 = vmatprep.subr.bf16.mxu0 0
  %1644 = vmatpush1.bf16.xpose.msra.mxu0 0
  %1645 = vmatprep.subr.bf16.mxu0 0
  %1646 = vmatpush1.bf16.xpose.msra.mxu0 0
  %1647 = vmatprep.subr.bf16.mxu0 0
  %1648 = vmatpush1.bf16.xpose.msra.mxu0 0
  %1649 = vmatprep.subr.bf16.mxu0 0
  %1650 = vmatpush1.bf16.xpose.msra.mxu0 0
  %1651 = vmatprep.subr.bf16.mxu0 0
  %1652 = vmatpush1.bf16.xpose.msra.mxu0 0
  %1653 = vmatprep.subr.bf16.mxu0 0
  %1654 = vmatpush1.bf16.xpose.msra.mxu0 0
  %1655 = vmatprep.subr.bf16.mxu0 0
  %1656 = vmatpush1.bf16.xpose.msra.mxu0 0
  %1657 = vmatprep.subr.bf16.mxu0 0
  %1658 = vmatpush1.bf16.xpose.msra.mxu0 0
  %1659 = vmatprep.subr.bf16.mxu0 0
  %1660 = vmatpush1.bf16.xpose.msra.mxu0 0
  %1661 = vmatprep.subr.bf16.mxu0 0
  %1662 = vmatpush1.bf16.xpose.msra.mxu0 0
  %1663 = vmatprep.subr.bf16.mxu0 0
  %1664 = vmatpush1.bf16.xpose.msra.mxu0 0
  %1665 = vmatprep.mubr.bf16.mxu0 0
  %1666 = vmatmul.mubr.bf16.gmra.mrb[0].mxu0 %v1628
  %v1667 = vpop.f32.mrb[0].mxu0
  %v1668 = vadd.f32 0.0, %v1667
  %v1669 = vpop.f32.mrb[0].mxu0
  %v1670 = vpop.f32.mrb[0].mxu0
  %v1671 = vadd.f32 0.0, %v1670
  %v1672 = vpop.f32.mrb[0].mxu0
  %1673 = vdwg.mxu0
  %1675 = vrot.lane.b32.xlu0 %v661, 96
  %v1676 = vpop.permute.xlu0 %1675
  %v1678 = vsel %vm676, %v661, 0
  %v1681 = vsel %vm676, %v1676, 0
  %1683 = vmatprep.subr.bf16.mxu0 0
  %1684 = vmatpush1.bf16.xpose.msra.mxu0 %v1681
  %1685 = vmatprep.subr.bf16.mxu0 0
  %1686 = vmatpush1.bf16.xpose.msra.mxu0 0
  %1687 = vmatprep.subr.bf16.mxu0 0
  %1688 = vmatpush1.bf16.xpose.msra.mxu0 0
  %1689 = vmatprep.subr.bf16.mxu0 0
  %1690 = vmatpush1.bf16.xpose.msra.mxu0 0
  %1691 = vmatprep.subr.bf16.mxu0 0
  %1692 = vmatpush1.bf16.xpose.msra.mxu0 0
  %1693 = vmatprep.subr.bf16.mxu0 0
  %1694 = vmatpush1.bf16.xpose.msra.mxu0 0
  %1695 = vmatprep.subr.bf16.mxu0 0
  %1696 = vmatpush1.bf16.xpose.msra.mxu0 0
  %1697 = vmatprep.subr.bf16.mxu0 0
  %1698 = vmatpush1.bf16.xpose.msra.mxu0 0
  %1699 = vmatprep.subr.bf16.mxu0 0
  %1700 = vmatpush1.bf16.xpose.msra.mxu0 0
  %1701 = vmatprep.subr.bf16.mxu0 0
  %1702 = vmatpush1.bf16.xpose.msra.mxu0 0
  %1703 = vmatprep.subr.bf16.mxu0 0
  %1704 = vmatpush1.bf16.xpose.msra.mxu0 0
  %1705 = vmatprep.subr.bf16.mxu0 0
  %1706 = vmatpush1.bf16.xpose.msra.mxu0 0
  %1707 = vmatprep.subr.bf16.mxu0 0
  %1708 = vmatpush1.bf16.xpose.msra.mxu0 0
  %1709 = vmatprep.subr.bf16.mxu0 0
  %1710 = vmatpush1.bf16.xpose.msra.mxu0 0
  %1711 = vmatprep.subr.bf16.mxu0 0
  %1712 = vmatpush1.bf16.xpose.msra.mxu0 0
  %1713 = vmatprep.subr.bf16.mxu0 0
  %1714 = vmatpush1.bf16.xpose.msra.mxu0 0
  %1715 = vmatprep.mubr.bf16.mxu0 0
  %1716 = vmatmul.mubr.bf16.gmra.mrb[0].mxu0 %v1678
  %v1717 = vpop.f32.mrb[0].mxu0
  %v1718 = vadd.f32 0.0, %v1717
  %v1719 = vpop.f32.mrb[0].mxu0
  %v1720 = vpop.f32.mrb[0].mxu0
  %v1721 = vadd.f32 0.0, %v1720
  %v1722 = vpop.f32.mrb[0].mxu0
  %1723 = vdwg.mxu0
  %1725 = vrot.lane.b32.xlu0 %v662, 96
  %v1726 = vpop.permute.xlu0 %1725
  %v1728 = vsel %vm676, %v662, 0
  %v1731 = vsel %vm676, %v1726, 0
  %1733 = vmatprep.subr.bf16.mxu0 0
  %1734 = vmatpush1.bf16.xpose.msra.mxu0 %v1731
  %1735 = vmatprep.subr.bf16.mxu0 0
  %1736 = vmatpush1.bf16.xpose.msra.mxu0 0
  %1737 = vmatprep.subr.bf16.mxu0 0
  %1738 = vmatpush1.bf16.xpose.msra.mxu0 0
  %1739 = vmatprep.subr.bf16.mxu0 0
  %1740 = vmatpush1.bf16.xpose.msra.mxu0 0
  %1741 = vmatprep.subr.bf16.mxu0 0
  %1742 = vmatpush1.bf16.xpose.msra.mxu0 0
  %1743 = vmatprep.subr.bf16.mxu0 0
  %1744 = vmatpush1.bf16.xpose.msra.mxu0 0
  %1745 = vmatprep.subr.bf16.mxu0 0
  %1746 = vmatpush1.bf16.xpose.msra.mxu0 0
  %1747 = vmatprep.subr.bf16.mxu0 0
  %1748 = vmatpush1.bf16.xpose.msra.mxu0 0
  %1749 = vmatprep.subr.bf16.mxu0 0
  %1750 = vmatpush1.bf16.xpose.msra.mxu0 0
  %1751 = vmatprep.subr.bf16.mxu0 0
  %1752 = vmatpush1.bf16.xpose.msra.mxu0 0
  %1753 = vmatprep.subr.bf16.mxu0 0
  %1754 = vmatpush1.bf16.xpose.msra.mxu0 0
  %1755 = vmatprep.subr.bf16.mxu0 0
  %1756 = vmatpush1.bf16.xpose.msra.mxu0 0
  %1757 = vmatprep.subr.bf16.mxu0 0
  %1758 = vmatpush1.bf16.xpose.msra.mxu0 0
  %1759 = vmatprep.subr.bf16.mxu0 0
  %1760 = vmatpush1.bf16.xpose.msra.mxu0 0
  %1761 = vmatprep.subr.bf16.mxu0 0
  %1762 = vmatpush1.bf16.xpose.msra.mxu0 0
  %1763 = vmatprep.subr.bf16.mxu0 0
  %1764 = vmatpush1.bf16.xpose.msra.mxu0 0
  %1765 = vmatprep.mubr.bf16.mxu0 0
  %1766 = vmatmul.mubr.bf16.gmra.mrb[0].mxu0 %v1728
  %v1767 = vpop.f32.mrb[0].mxu0
  %v1768 = vadd.f32 0.0, %v1767
  %v1769 = vpop.f32.mrb[0].mxu0
  %v1770 = vpop.f32.mrb[0].mxu0
  %v1771 = vadd.f32 0.0, %v1770
  %v1772 = vpop.f32.mrb[0].mxu0
  %1773 = vdwg.mxu0
  %1775 = vrot.lane.b32.xlu0 %v663, 96
  %v1776 = vpop.permute.xlu0 %1775
  %v1778 = vsel %vm676, %v663, 0
  %v1781 = vsel %vm676, %v1776, 0
  %1783 = vmatprep.subr.bf16.mxu0 0
  %1784 = vmatpush1.bf16.xpose.msra.mxu0 %v1781
  %1785 = vmatprep.subr.bf16.mxu0 0
  %1786 = vmatpush1.bf16.xpose.msra.mxu0 0
  %1787 = vmatprep.subr.bf16.mxu0 0
  %1788 = vmatpush1.bf16.xpose.msra.mxu0 0
  %1789 = vmatprep.subr.bf16.mxu0 0
  %1790 = vmatpush1.bf16.xpose.msra.mxu0 0
  %1791 = vmatprep.subr.bf16.mxu0 0
  %1792 = vmatpush1.bf16.xpose.msra.mxu0 0
  %1793 = vmatprep.subr.bf16.mxu0 0
  %1794 = vmatpush1.bf16.xpose.msra.mxu0 0
  %1795 = vmatprep.subr.bf16.mxu0 0
  %1796 = vmatpush1.bf16.xpose.msra.mxu0 0
  %1797 = vmatprep.subr.bf16.mxu0 0
  %1798 = vmatpush1.bf16.xpose.msra.mxu0 0
  %1799 = vmatprep.subr.bf16.mxu0 0
  %1800 = vmatpush1.bf16.xpose.msra.mxu0 0
  %1801 = vmatprep.subr.bf16.mxu0 0
  %1802 = vmatpush1.bf16.xpose.msra.mxu0 0
  %1803 = vmatprep.subr.bf16.mxu0 0
  %1804 = vmatpush1.bf16.xpose.msra.mxu0 0
  %1805 = vmatprep.subr.bf16.mxu0 0
  %1806 = vmatpush1.bf16.xpose.msra.mxu0 0
  %1807 = vmatprep.subr.bf16.mxu0 0
  %1808 = vmatpush1.bf16.xpose.msra.mxu0 0
  %1809 = vmatprep.subr.bf16.mxu0 0
  %1810 = vmatpush1.bf16.xpose.msra.mxu0 0
  %1811 = vmatprep.subr.bf16.mxu0 0
  %1812 = vmatpush1.bf16.xpose.msra.mxu0 0
  %1813 = vmatprep.subr.bf16.mxu0 0
  %1814 = vmatpush1.bf16.xpose.msra.mxu0 0
  %1815 = vmatprep.mubr.bf16.mxu0 0
  %1816 = vmatmul.mubr.bf16.gmra.mrb[0].mxu0 %v1778
  %v1817 = vpop.f32.mrb[0].mxu0
  %v1818 = vadd.f32 0.0, %v1817
  %v1819 = vpop.f32.mrb[0].mxu0
  %v1820 = vpop.f32.mrb[0].mxu0
  %v1821 = vadd.f32 0.0, %v1820
  %v1822 = vpop.f32.mrb[0].mxu0
  %1823 = vdwg.mxu0
  %1825 = vrot.lane.b32.xlu0 %v664, 96
  %v1826 = vpop.permute.xlu0 %1825
  %v1828 = vsel %vm676, %v664, 0
  %v1831 = vsel %vm676, %v1826, 0
  %1833 = vmatprep.subr.bf16.mxu0 0
  %1834 = vmatpush1.bf16.xpose.msra.mxu0 %v1831
  %1835 = vmatprep.subr.bf16.mxu0 0
  %1836 = vmatpush1.bf16.xpose.msra.mxu0 0
  %1837 = vmatprep.subr.bf16.mxu0 0
  %1838 = vmatpush1.bf16.xpose.msra.mxu0 0
  %1839 = vmatprep.subr.bf16.mxu0 0
  %1840 = vmatpush1.bf16.xpose.msra.mxu0 0
  %1841 = vmatprep.subr.bf16.mxu0 0
  %1842 = vmatpush1.bf16.xpose.msra.mxu0 0
  %1843 = vmatprep.subr.bf16.mxu0 0
  %1844 = vmatpush1.bf16.xpose.msra.mxu0 0
  %1845 = vmatprep.subr.bf16.mxu0 0
  %1846 = vmatpush1.bf16.xpose.msra.mxu0 0
  %1847 = vmatprep.subr.bf16.mxu0 0
  %1848 = vmatpush1.bf16.xpose.msra.mxu0 0
  %1849 = vmatprep.subr.bf16.mxu0 0
  %1850 = vmatpush1.bf16.xpose.msra.mxu0 0
  %1851 = vmatprep.subr.bf16.mxu0 0
  %1852 = vmatpush1.bf16.xpose.msra.mxu0 0
  %1853 = vmatprep.subr.bf16.mxu0 0
  %1854 = vmatpush1.bf16.xpose.msra.mxu0 0
  %1855 = vmatprep.subr.bf16.mxu0 0
  %1856 = vmatpush1.bf16.xpose.msra.mxu0 0
  %1857 = vmatprep.subr.bf16.mxu0 0
  %1858 = vmatpush1.bf16.xpose.msra.mxu0 0
  %1859 = vmatprep.subr.bf16.mxu0 0
  %1860 = vmatpush1.bf16.xpose.msra.mxu0 0
  %1861 = vmatprep.subr.bf16.mxu0 0
  %1862 = vmatpush1.bf16.xpose.msra.mxu0 0
  %1863 = vmatprep.subr.bf16.mxu0 0
  %1864 = vmatpush1.bf16.xpose.msra.mxu0 0
  %1865 = vmatprep.mubr.bf16.mxu0 0
  %1866 = vmatmul.mubr.bf16.gmra.mrb[0].mxu0 %v1828
  %v1867 = vpop.f32.mrb[0].mxu0
  %v1868 = vadd.f32 0.0, %v1867
  %v1869 = vpop.f32.mrb[0].mxu0
  %v1870 = vpop.f32.mrb[0].mxu0
  %v1871 = vadd.f32 0.0, %v1870
  %v1872 = vpop.f32.mrb[0].mxu0
  %1873 = vdwg.mxu0
  %1875 = vrot.lane.b32.xlu0 %v665, 96
  %v1876 = vpop.permute.xlu0 %1875
  %v1878 = vsel %vm676, %v665, 0
  %v1881 = vsel %vm676, %v1876, 0
  %1883 = vmatprep.subr.bf16.mxu0 0
  %1884 = vmatpush1.bf16.xpose.msra.mxu0 %v1881
  %1885 = vmatprep.subr.bf16.mxu0 0
  %1886 = vmatpush1.bf16.xpose.msra.mxu0 0
  %1887 = vmatprep.subr.bf16.mxu0 0
  %1888 = vmatpush1.bf16.xpose.msra.mxu0 0
  %1889 = vmatprep.subr.bf16.mxu0 0
  %1890 = vmatpush1.bf16.xpose.msra.mxu0 0
  %1891 = vmatprep.subr.bf16.mxu0 0
  %1892 = vmatpush1.bf16.xpose.msra.mxu0 0
  %1893 = vmatprep.subr.bf16.mxu0 0
  %1894 = vmatpush1.bf16.xpose.msra.mxu0 0
  %1895 = vmatprep.subr.bf16.mxu0 0
  %1896 = vmatpush1.bf16.xpose.msra.mxu0 0
  %1897 = vmatprep.subr.bf16.mxu0 0
  %1898 = vmatpush1.bf16.xpose.msra.mxu0 0
  %1899 = vmatprep.subr.bf16.mxu0 0
  %1900 = vmatpush1.bf16.xpose.msra.mxu0 0
  %1901 = vmatprep.subr.bf16.mxu0 0
  %1902 = vmatpush1.bf16.xpose.msra.mxu0 0
  %1903 = vmatprep.subr.bf16.mxu0 0
  %1904 = vmatpush1.bf16.xpose.msra.mxu0 0
  %1905 = vmatprep.subr.bf16.mxu0 0
  %1906 = vmatpush1.bf16.xpose.msra.mxu0 0
  %1907 = vmatprep.subr.bf16.mxu0 0
  %1908 = vmatpush1.bf16.xpose.msra.mxu0 0
  %1909 = vmatprep.subr.bf16.mxu0 0
  %1910 = vmatpush1.bf16.xpose.msra.mxu0 0
  %1911 = vmatprep.subr.bf16.mxu0 0
  %1912 = vmatpush1.bf16.xpose.msra.mxu0 0
  %1913 = vmatprep.subr.bf16.mxu0 0
  %1914 = vmatpush1.bf16.xpose.msra.mxu0 0
  %1915 = vmatprep.mubr.bf16.mxu0 0
  %1916 = vmatmul.mubr.bf16.gmra.mrb[0].mxu0 %v1878
  %v1917 = vpop.f32.mrb[0].mxu0
  %v1918 = vadd.f32 0.0, %v1917
  %v1919 = vpop.f32.mrb[0].mxu0
  %v1920 = vpop.f32.mrb[0].mxu0
  %v1921 = vadd.f32 0.0, %v1920
  %v1922 = vpop.f32.mrb[0].mxu0
  %1923 = vdwg.mxu0
  %1925 = vrot.lane.b32.xlu0 %v666, 96
  %v1926 = vpop.permute.xlu0 %1925
  %v1928 = vsel %vm676, %v666, 0
  %v1931 = vsel %vm676, %v1926, 0
  %1933 = vmatprep.subr.bf16.mxu0 0
  %1934 = vmatpush1.bf16.xpose.msra.mxu0 %v1931
  %1935 = vmatprep.subr.bf16.mxu0 0
  %1936 = vmatpush1.bf16.xpose.msra.mxu0 0
  %1937 = vmatprep.subr.bf16.mxu0 0
  %1938 = vmatpush1.bf16.xpose.msra.mxu0 0
  %1939 = vmatprep.subr.bf16.mxu0 0
  %1940 = vmatpush1.bf16.xpose.msra.mxu0 0
  %1941 = vmatprep.subr.bf16.mxu0 0
  %1942 = vmatpush1.bf16.xpose.msra.mxu0 0
  %1943 = vmatprep.subr.bf16.mxu0 0
  %1944 = vmatpush1.bf16.xpose.msra.mxu0 0
  %1945 = vmatprep.subr.bf16.mxu0 0
  %1946 = vmatpush1.bf16.xpose.msra.mxu0 0
  %1947 = vmatprep.subr.bf16.mxu0 0
  %1948 = vmatpush1.bf16.xpose.msra.mxu0 0
  %1949 = vmatprep.subr.bf16.mxu0 0
  %1950 = vmatpush1.bf16.xpose.msra.mxu0 0
  %1951 = vmatprep.subr.bf16.mxu0 0
  %1952 = vmatpush1.bf16.xpose.msra.mxu0 0
  %1953 = vmatprep.subr.bf16.mxu0 0
  %1954 = vmatpush1.bf16.xpose.msra.mxu0 0
  %1955 = vmatprep.subr.bf16.mxu0 0
  %1956 = vmatpush1.bf16.xpose.msra.mxu0 0
  %1957 = vmatprep.subr.bf16.mxu0 0
  %1958 = vmatpush1.bf16.xpose.msra.mxu0 0
  %1959 = vmatprep.subr.bf16.mxu0 0
  %1960 = vmatpush1.bf16.xpose.msra.mxu0 0
  %1961 = vmatprep.subr.bf16.mxu0 0
  %1962 = vmatpush1.bf16.xpose.msra.mxu0 0
  %1963 = vmatprep.subr.bf16.mxu0 0
  %1964 = vmatpush1.bf16.xpose.msra.mxu0 0
  %1965 = vmatprep.mubr.bf16.mxu0 0
  %1966 = vmatmul.mubr.bf16.gmra.mrb[0].mxu0 %v1928
  %v1967 = vpop.f32.mrb[0].mxu0
  %v1968 = vadd.f32 0.0, %v1967
  %v1969 = vpop.f32.mrb[0].mxu0
  %v1970 = vpop.f32.mrb[0].mxu0
  %v1971 = vadd.f32 0.0, %v1970
  %v1972 = vpop.f32.mrb[0].mxu0
  %1973 = vdwg.mxu0
  %1975 = vrot.lane.b32.xlu0 %v667, 96
  %v1976 = vpop.permute.xlu0 %1975
  %v1978 = vsel %vm676, %v667, 0
  %v1981 = vsel %vm676, %v1976, 0
  %1983 = vmatprep.subr.bf16.mxu0 0
  %1984 = vmatpush1.bf16.xpose.msra.mxu0 %v1981
  %1985 = vmatprep.subr.bf16.mxu0 0
  %1986 = vmatpush1.bf16.xpose.msra.mxu0 0
  %1987 = vmatprep.subr.bf16.mxu0 0
  %1988 = vmatpush1.bf16.xpose.msra.mxu0 0
  %1989 = vmatprep.subr.bf16.mxu0 0
  %1990 = vmatpush1.bf16.xpose.msra.mxu0 0
  %1991 = vmatprep.subr.bf16.mxu0 0
  %1992 = vmatpush1.bf16.xpose.msra.mxu0 0
  %1993 = vmatprep.subr.bf16.mxu0 0
  %1994 = vmatpush1.bf16.xpose.msra.mxu0 0
  %1995 = vmatprep.subr.bf16.mxu0 0
  %1996 = vmatpush1.bf16.xpose.msra.mxu0 0
  %1997 = vmatprep.subr.bf16.mxu0 0
  %1998 = vmatpush1.bf16.xpose.msra.mxu0 0
  %1999 = vmatprep.subr.bf16.mxu0 0
  %2000 = vmatpush1.bf16.xpose.msra.mxu0 0
  %2001 = vmatprep.subr.bf16.mxu0 0
  %2002 = vmatpush1.bf16.xpose.msra.mxu0 0
  %2003 = vmatprep.subr.bf16.mxu0 0
  %2004 = vmatpush1.bf16.xpose.msra.mxu0 0
  %2005 = vmatprep.subr.bf16.mxu0 0
  %2006 = vmatpush1.bf16.xpose.msra.mxu0 0
  %2007 = vmatprep.subr.bf16.mxu0 0
  %2008 = vmatpush1.bf16.xpose.msra.mxu0 0
  %2009 = vmatprep.subr.bf16.mxu0 0
  %2010 = vmatpush1.bf16.xpose.msra.mxu0 0
  %2011 = vmatprep.subr.bf16.mxu0 0
  %2012 = vmatpush1.bf16.xpose.msra.mxu0 0
  %2013 = vmatprep.subr.bf16.mxu0 0
  %2014 = vmatpush1.bf16.xpose.msra.mxu0 0
  %2015 = vmatprep.mubr.bf16.mxu0 0
  %2016 = vmatmul.mubr.bf16.gmra.mrb[0].mxu0 %v1978
  %v2017 = vpop.f32.mrb[0].mxu0
  %v2018 = vadd.f32 0.0, %v2017
  %v2019 = vpop.f32.mrb[0].mxu0
  %v2020 = vpop.f32.mrb[0].mxu0
  %v2021 = vadd.f32 0.0, %v2020
  %v2022 = vpop.f32.mrb[0].mxu0
  %2023 = vdwg.mxu0
  %2025 = vrot.lane.b32.xlu0 %v668, 96
  %v2026 = vpop.permute.xlu0 %2025
  %v2028 = vsel %vm676, %v668, 0
  %v2031 = vsel %vm676, %v2026, 0
  %2033 = vmatprep.subr.bf16.mxu0 0
  %2034 = vmatpush1.bf16.xpose.msra.mxu0 %v2031
  %2035 = vmatprep.subr.bf16.mxu0 0
  %2036 = vmatpush1.bf16.xpose.msra.mxu0 0
  %2037 = vmatprep.subr.bf16.mxu0 0
  %2038 = vmatpush1.bf16.xpose.msra.mxu0 0
  %2039 = vmatprep.subr.bf16.mxu0 0
  %2040 = vmatpush1.bf16.xpose.msra.mxu0 0
  %2041 = vmatprep.subr.bf16.mxu0 0
  %2042 = vmatpush1.bf16.xpose.msra.mxu0 0
  %2043 = vmatprep.subr.bf16.mxu0 0
  %2044 = vmatpush1.bf16.xpose.msra.mxu0 0
  %2045 = vmatprep.subr.bf16.mxu0 0
  %2046 = vmatpush1.bf16.xpose.msra.mxu0 0
  %2047 = vmatprep.subr.bf16.mxu0 0
  %2048 = vmatpush1.bf16.xpose.msra.mxu0 0
  %2049 = vmatprep.subr.bf16.mxu0 0
  %2050 = vmatpush1.bf16.xpose.msra.mxu0 0
  %2051 = vmatprep.subr.bf16.mxu0 0
  %2052 = vmatpush1.bf16.xpose.msra.mxu0 0
  %2053 = vmatprep.subr.bf16.mxu0 0
  %2054 = vmatpush1.bf16.xpose.msra.mxu0 0
  %2055 = vmatprep.subr.bf16.mxu0 0
  %2056 = vmatpush1.bf16.xpose.msra.mxu0 0
  %2057 = vmatprep.subr.bf16.mxu0 0
  %2058 = vmatpush1.bf16.xpose.msra.mxu0 0
  %2059 = vmatprep.subr.bf16.mxu0 0
  %2060 = vmatpush1.bf16.xpose.msra.mxu0 0
  %2061 = vmatprep.subr.bf16.mxu0 0
  %2062 = vmatpush1.bf16.xpose.msra.mxu0 0
  %2063 = vmatprep.subr.bf16.mxu0 0
  %2064 = vmatpush1.bf16.xpose.msra.mxu0 0
  %2065 = vmatprep.mubr.bf16.mxu0 0
  %2066 = vmatmul.mubr.bf16.gmra.mrb[0].mxu0 %v2028
  %v2067 = vpop.f32.mrb[0].mxu0
  %v2068 = vadd.f32 0.0, %v2067
  %v2069 = vpop.f32.mrb[0].mxu0
  %v2070 = vpop.f32.mrb[0].mxu0
  %v2071 = vadd.f32 0.0, %v2070
  %v2072 = vpop.f32.mrb[0].mxu0
  %2073 = vdwg.mxu0
  %2075 = vrot.lane.b32.xlu0 %v669, 96
  %v2076 = vpop.permute.xlu0 %2075
  %v2078 = vsel %vm676, %v669, 0
  %v2081 = vsel %vm676, %v2076, 0
  %2083 = vmatprep.subr.bf16.mxu0 0
  %2084 = vmatpush1.bf16.xpose.msra.mxu0 %v2081
  %2085 = vmatprep.subr.bf16.mxu0 0
  %2086 = vmatpush1.bf16.xpose.msra.mxu0 0
  %2087 = vmatprep.subr.bf16.mxu0 0
  %2088 = vmatpush1.bf16.xpose.msra.mxu0 0
  %2089 = vmatprep.subr.bf16.mxu0 0
  %2090 = vmatpush1.bf16.xpose.msra.mxu0 0
  %2091 = vmatprep.subr.bf16.mxu0 0
  %2092 = vmatpush1.bf16.xpose.msra.mxu0 0
  %2093 = vmatprep.subr.bf16.mxu0 0
  %2094 = vmatpush1.bf16.xpose.msra.mxu0 0
  %2095 = vmatprep.subr.bf16.mxu0 0
  %2096 = vmatpush1.bf16.xpose.msra.mxu0 0
  %2097 = vmatprep.subr.bf16.mxu0 0
  %2098 = vmatpush1.bf16.xpose.msra.mxu0 0
  %2099 = vmatprep.subr.bf16.mxu0 0
  %2100 = vmatpush1.bf16.xpose.msra.mxu0 0
  %2101 = vmatprep.subr.bf16.mxu0 0
  %2102 = vmatpush1.bf16.xpose.msra.mxu0 0
  %2103 = vmatprep.subr.bf16.mxu0 0
  %2104 = vmatpush1.bf16.xpose.msra.mxu0 0
  %2105 = vmatprep.subr.bf16.mxu0 0
  %2106 = vmatpush1.bf16.xpose.msra.mxu0 0
  %2107 = vmatprep.subr.bf16.mxu0 0
  %2108 = vmatpush1.bf16.xpose.msra.mxu0 0
  %2109 = vmatprep.subr.bf16.mxu0 0
  %2110 = vmatpush1.bf16.xpose.msra.mxu0 0
  %2111 = vmatprep.subr.bf16.mxu0 0
  %2112 = vmatpush1.bf16.xpose.msra.mxu0 0
  %2113 = vmatprep.subr.bf16.mxu0 0
  %2114 = vmatpush1.bf16.xpose.msra.mxu0 0
  %2115 = vmatprep.mubr.bf16.mxu0 0
  %2116 = vmatmul.mubr.bf16.gmra.mrb[0].mxu0 %v2078
  %v2117 = vpop.f32.mrb[0].mxu0
  %v2118 = vadd.f32 0.0, %v2117
  %v2119 = vpop.f32.mrb[0].mxu0
  %v2120 = vpop.f32.mrb[0].mxu0
  %v2121 = vadd.f32 0.0, %v2120
  %v2122 = vpop.f32.mrb[0].mxu0
  %2123 = vdwg.mxu0
  %2125 = vrot.lane.b32.xlu0 %v670, 96
  %v2126 = vpop.permute.xlu0 %2125
  %v2128 = vsel %vm676, %v670, 0
  %v2131 = vsel %vm676, %v2126, 0
  %2133 = vmatprep.subr.bf16.mxu0 0
  %2134 = vmatpush1.bf16.xpose.msra.mxu0 %v2131
  %2135 = vmatprep.subr.bf16.mxu0 0
  %2136 = vmatpush1.bf16.xpose.msra.mxu0 0
  %2137 = vmatprep.subr.bf16.mxu0 0
  %2138 = vmatpush1.bf16.xpose.msra.mxu0 0
  %2139 = vmatprep.subr.bf16.mxu0 0
  %2140 = vmatpush1.bf16.xpose.msra.mxu0 0
  %2141 = vmatprep.subr.bf16.mxu0 0
  %2142 = vmatpush1.bf16.xpose.msra.mxu0 0
  %2143 = vmatprep.subr.bf16.mxu0 0
  %2144 = vmatpush1.bf16.xpose.msra.mxu0 0
  %2145 = vmatprep.subr.bf16.mxu0 0
  %2146 = vmatpush1.bf16.xpose.msra.mxu0 0
  %2147 = vmatprep.subr.bf16.mxu0 0
  %2148 = vmatpush1.bf16.xpose.msra.mxu0 0
  %2149 = vmatprep.subr.bf16.mxu0 0
  %2150 = vmatpush1.bf16.xpose.msra.mxu0 0
  %2151 = vmatprep.subr.bf16.mxu0 0
  %2152 = vmatpush1.bf16.xpose.msra.mxu0 0
  %2153 = vmatprep.subr.bf16.mxu0 0
  %2154 = vmatpush1.bf16.xpose.msra.mxu0 0
  %2155 = vmatprep.subr.bf16.mxu0 0
  %2156 = vmatpush1.bf16.xpose.msra.mxu0 0
  %2157 = vmatprep.subr.bf16.mxu0 0
  %2158 = vmatpush1.bf16.xpose.msra.mxu0 0
  %2159 = vmatprep.subr.bf16.mxu0 0
  %2160 = vmatpush1.bf16.xpose.msra.mxu0 0
  %2161 = vmatprep.subr.bf16.mxu0 0
  %2162 = vmatpush1.bf16.xpose.msra.mxu0 0
  %2163 = vmatprep.subr.bf16.mxu0 0
  %2164 = vmatpush1.bf16.xpose.msra.mxu0 0
  %2165 = vmatprep.mubr.bf16.mxu0 0
  %2166 = vmatmul.mubr.bf16.gmra.mrb[0].mxu0 %v2128
  %v2167 = vpop.f32.mrb[0].mxu0
  %v2168 = vadd.f32 0.0, %v2167
  %v2169 = vpop.f32.mrb[0].mxu0
  %v2170 = vpop.f32.mrb[0].mxu0
  %v2171 = vadd.f32 0.0, %v2170
  %v2172 = vpop.f32.mrb[0].mxu0
  %2173 = vdwg.mxu0
  %2175 = vrot.lane.b32.xlu0 %v671, 96
  %v2176 = vpop.permute.xlu0 %2175
  %v2178 = vsel %vm676, %v671, 0
  %v2181 = vsel %vm676, %v2176, 0
  %2183 = vmatprep.subr.bf16.mxu0 0
  %2184 = vmatpush1.bf16.xpose.msra.mxu0 %v2181
  %2185 = vmatprep.subr.bf16.mxu0 0
  %2186 = vmatpush1.bf16.xpose.msra.mxu0 0
  %2187 = vmatprep.subr.bf16.mxu0 0
  %2188 = vmatpush1.bf16.xpose.msra.mxu0 0
  %2189 = vmatprep.subr.bf16.mxu0 0
  %2190 = vmatpush1.bf16.xpose.msra.mxu0 0
  %2191 = vmatprep.subr.bf16.mxu0 0
  %2192 = vmatpush1.bf16.xpose.msra.mxu0 0
  %2193 = vmatprep.subr.bf16.mxu0 0
  %2194 = vmatpush1.bf16.xpose.msra.mxu0 0
  %2195 = vmatprep.subr.bf16.mxu0 0
  %2196 = vmatpush1.bf16.xpose.msra.mxu0 0
  %2197 = vmatprep.subr.bf16.mxu0 0
  %2198 = vmatpush1.bf16.xpose.msra.mxu0 0
  %2199 = vmatprep.subr.bf16.mxu0 0
  %2200 = vmatpush1.bf16.xpose.msra.mxu0 0
  %2201 = vmatprep.subr.bf16.mxu0 0
  %2202 = vmatpush1.bf16.xpose.msra.mxu0 0
  %2203 = vmatprep.subr.bf16.mxu0 0
  %2204 = vmatpush1.bf16.xpose.msra.mxu0 0
  %2205 = vmatprep.subr.bf16.mxu0 0
  %2206 = vmatpush1.bf16.xpose.msra.mxu0 0
  %2207 = vmatprep.subr.bf16.mxu0 0
  %2208 = vmatpush1.bf16.xpose.msra.mxu0 0
  %2209 = vmatprep.subr.bf16.mxu0 0
  %2210 = vmatpush1.bf16.xpose.msra.mxu0 0
  %2211 = vmatprep.subr.bf16.mxu0 0
  %2212 = vmatpush1.bf16.xpose.msra.mxu0 0
  %2213 = vmatprep.subr.bf16.mxu0 0
  %2214 = vmatpush1.bf16.xpose.msra.mxu0 0
  %2215 = vmatprep.mubr.bf16.mxu0 0
  %2216 = vmatmul.mubr.bf16.gmra.mrb[0].mxu0 %v2178
  %v2217 = vpop.f32.mrb[0].mxu0
  %v2218 = vadd.f32 0.0, %v2217
  %v2219 = vpop.f32.mrb[0].mxu0
  %v2220 = vpop.f32.mrb[0].mxu0
  %v2221 = vadd.f32 0.0, %v2220
  %v2222 = vpop.f32.mrb[0].mxu0
  %2223 = vdwg.mxu0
  %2225 = vrot.lane.b32.xlu0 %v672, 96
  %v2226 = vpop.permute.xlu0 %2225
  %v2228 = vsel %vm676, %v672, 0
  %v2231 = vsel %vm676, %v2226, 0
  %2233 = vmatprep.subr.bf16.mxu0 0
  %2234 = vmatpush1.bf16.xpose.msra.mxu0 %v2231
  %2235 = vmatprep.subr.bf16.mxu0 0
  %2236 = vmatpush1.bf16.xpose.msra.mxu0 0
  %2237 = vmatprep.subr.bf16.mxu0 0
  %2238 = vmatpush1.bf16.xpose.msra.mxu0 0
  %2239 = vmatprep.subr.bf16.mxu0 0
  %2240 = vmatpush1.bf16.xpose.msra.mxu0 0
  %2241 = vmatprep.subr.bf16.mxu0 0
  %2242 = vmatpush1.bf16.xpose.msra.mxu0 0
  %2243 = vmatprep.subr.bf16.mxu0 0
  %2244 = vmatpush1.bf16.xpose.msra.mxu0 0
  %2245 = vmatprep.subr.bf16.mxu0 0
  %2246 = vmatpush1.bf16.xpose.msra.mxu0 0
  %2247 = vmatprep.subr.bf16.mxu0 0
  %2248 = vmatpush1.bf16.xpose.msra.mxu0 0
  %2249 = vmatprep.subr.bf16.mxu0 0
  %2250 = vmatpush1.bf16.xpose.msra.mxu0 0
  %2251 = vmatprep.subr.bf16.mxu0 0
  %2252 = vmatpush1.bf16.xpose.msra.mxu0 0
  %2253 = vmatprep.subr.bf16.mxu0 0
  %2254 = vmatpush1.bf16.xpose.msra.mxu0 0
  %2255 = vmatprep.subr.bf16.mxu0 0
  %2256 = vmatpush1.bf16.xpose.msra.mxu0 0
  %2257 = vmatprep.subr.bf16.mxu0 0
  %2258 = vmatpush1.bf16.xpose.msra.mxu0 0
  %2259 = vmatprep.subr.bf16.mxu0 0
  %2260 = vmatpush1.bf16.xpose.msra.mxu0 0
  %2261 = vmatprep.subr.bf16.mxu0 0
  %2262 = vmatpush1.bf16.xpose.msra.mxu0 0
  %2263 = vmatprep.subr.bf16.mxu0 0
  %2264 = vmatpush1.bf16.xpose.msra.mxu0 0
  %2265 = vmatprep.mubr.bf16.mxu0 0
  %2266 = vmatmul.mubr.bf16.gmra.mrb[0].mxu0 %v2228
  %v2267 = vpop.f32.mrb[0].mxu0
  %v2268 = vadd.f32 0.0, %v2267
  %v2269 = vpop.f32.mrb[0].mxu0
  %v2270 = vpop.f32.mrb[0].mxu0
  %v2271 = vadd.f32 0.0, %v2270
  %v2272 = vpop.f32.mrb[0].mxu0
  %2273 = vdwg.mxu0
  %v2274 = vmul.f32 %v718, 0.35355338
  %v2275 = vmul.f32 %v721, 0.35355338
  %v2276 = vmul.f32 %v768, 0.35355338
  %v2277 = vmul.f32 %v771, 0.35355338
  %v2278 = vmul.f32 %v818, 0.35355338
  %v2279 = vmul.f32 %v821, 0.35355338
  %v2280 = vmul.f32 %v868, 0.35355338
  %v2281 = vmul.f32 %v871, 0.35355338
  %v2282 = vmul.f32 %v918, 0.35355338
  %v2283 = vmul.f32 %v921, 0.35355338
  %v2284 = vmul.f32 %v968, 0.35355338
  %v2285 = vmul.f32 %v971, 0.35355338
  %v2286 = vmul.f32 %v1018, 0.35355338
  %v2287 = vmul.f32 %v1021, 0.35355338
  %v2288 = vmul.f32 %v1068, 0.35355338
  %v2289 = vmul.f32 %v1071, 0.35355338
  %v2290 = vmul.f32 %v1118, 0.35355338
  %v2291 = vmul.f32 %v1121, 0.35355338
  %v2292 = vmul.f32 %v1168, 0.35355338
  %v2293 = vmul.f32 %v1171, 0.35355338
  %v2294 = vmul.f32 %v1218, 0.35355338
  %v2295 = vmul.f32 %v1221, 0.35355338
  %v2296 = vmul.f32 %v1268, 0.35355338
  %v2297 = vmul.f32 %v1271, 0.35355338
  %v2298 = vmul.f32 %v1318, 0.35355338
  %v2299 = vmul.f32 %v1321, 0.35355338
  %v2300 = vmul.f32 %v1368, 0.35355338
  %v2301 = vmul.f32 %v1371, 0.35355338
  %v2302 = vmul.f32 %v1418, 0.35355338
  %v2303 = vmul.f32 %v1421, 0.35355338
  %v2304 = vmul.f32 %v1468, 0.35355338
  %v2305 = vmul.f32 %v1471, 0.35355338
  %v2306 = vmul.f32 %v1518, 0.35355338
  %v2307 = vmul.f32 %v1521, 0.35355338
  %v2308 = vmul.f32 %v1568, 0.35355338
  %v2309 = vmul.f32 %v1571, 0.35355338
  %v2310 = vmul.f32 %v1618, 0.35355338
  %v2311 = vmul.f32 %v1621, 0.35355338
  %v2312 = vmul.f32 %v1668, 0.35355338
  %v2313 = vmul.f32 %v1671, 0.35355338
  %v2314 = vmul.f32 %v1718, 0.35355338
  %v2315 = vmul.f32 %v1721, 0.35355338
  %v2316 = vmul.f32 %v1768, 0.35355338
  %v2317 = vmul.f32 %v1771, 0.35355338
  %v2318 = vmul.f32 %v1818, 0.35355338
  %v2319 = vmul.f32 %v1821, 0.35355338
  %v2320 = vmul.f32 %v1868, 0.35355338
  %v2321 = vmul.f32 %v1871, 0.35355338
  %v2322 = vmul.f32 %v1918, 0.35355338
  %v2323 = vmul.f32 %v1921, 0.35355338
  %v2324 = vmul.f32 %v1968, 0.35355338
  %v2325 = vmul.f32 %v1971, 0.35355338
  %v2326 = vmul.f32 %v2018, 0.35355338
  %v2327 = vmul.f32 %v2021, 0.35355338
  %v2328 = vmul.f32 %v2068, 0.35355338
  %v2329 = vmul.f32 %v2071, 0.35355338
  %v2330 = vmul.f32 %v2118, 0.35355338
  %v2331 = vmul.f32 %v2121, 0.35355338
  %v2332 = vmul.f32 %v2168, 0.35355338
  %v2333 = vmul.f32 %v2171, 0.35355338
  %v2334 = vmul.f32 %v2218, 0.35355338
  %v2335 = vmul.f32 %v2221, 0.35355338
  %v2336 = vmul.f32 %v2268, 0.35355338
  %v2337 = vmul.f32 %v2271, 0.35355338
  %v2338 = vld [vmem:[%s1] sm:$0xff]
  %v2339 = vld [vmem:[%s1 + $0x8] sm:$0xff]
  %v2340 = vld [vmem:[%s1 + $0x10] sm:$0xff]
  %v2341 = vld [vmem:[%s1 + $0x18] sm:$0xff]
  %v2342 = vld [vmem:[%s1 + $0x20] sm:$0xff]
  %v2343 = vld [vmem:[%s1 + $0x28] sm:$0xff]
  %v2344 = vld [vmem:[%s1 + $0x30] sm:$0xff]
  %v2345 = vld [vmem:[%s1 + $0x38] sm:$0xff]
  %v2346 = vld [vmem:[%s1 + $0x40] sm:$0xff]
  %v2347 = vld [vmem:[%s1 + $0x48] sm:$0xff]
  %v2348 = vld [vmem:[%s1 + $0x50] sm:$0xff]
  %v2349 = vld [vmem:[%s1 + $0x58] sm:$0xff]
  %v2350 = vld [vmem:[%s1 + $0x60] sm:$0xff]
  %v2351 = vld [vmem:[%s1 + $0x68] sm:$0xff]
  %v2352 = vld [vmem:[%s1 + $0x70] sm:$0xff]
  %v2353 = vld [vmem:[%s1 + $0x78] sm:$0xff]
  %v2354 = vld [vmem:[%s1 + $0x80] sm:$0xff]
  %v2355 = vld [vmem:[%s1 + $0x88] sm:$0xff]
  %v2356 = vld [vmem:[%s1 + $0x90] sm:$0xff]
  %v2357 = vld [vmem:[%s1 + $0x98] sm:$0xff]
  %v2358 = vld [vmem:[%s1 + $0xa0] sm:$0xff]
  %v2359 = vld [vmem:[%s1 + $0xa8] sm:$0xff]
  %v2360 = vld [vmem:[%s1 + $0xb0] sm:$0xff]
  %v2361 = vld [vmem:[%s1 + $0xb8] sm:$0xff]
  %v2362 = vld [vmem:[%s1 + $0xc0] sm:$0xff]
  %v2363 = vld [vmem:[%s1 + $0xc8] sm:$0xff]
  %v2364 = vld [vmem:[%s1 + $0xd0] sm:$0xff]
  %v2365 = vld [vmem:[%s1 + $0xd8] sm:$0xff]
  %v2366 = vld [vmem:[%s1 + $0xe0] sm:$0xff]
  %v2367 = vld [vmem:[%s1 + $0xe8] sm:$0xff]
  %v2368 = vld [vmem:[%s1 + $0xf0] sm:$0xff]
  %v2369 = vld [vmem:[%s1 + $0xf8] sm:$0xff]
  %v2370 = vadd.f32 %v2274, %v2338
  %v2371 = vadd.f32 %v2275, %v2339
  %v2372 = vadd.f32 %v2276, %v2340
  %v2373 = vadd.f32 %v2277, %v2341
  %v2374 = vadd.f32 %v2278, %v2342
  %v2375 = vadd.f32 %v2279, %v2343
  %v2376 = vadd.f32 %v2280, %v2344
  %v2377 = vadd.f32 %v2281, %v2345
  %v2378 = vadd.f32 %v2282, %v2338
  %v2379 = vadd.f32 %v2283, %v2339
  %v2380 = vadd.f32 %v2284, %v2340
  %v2381 = vadd.f32 %v2285, %v2341
  %v2382 = vadd.f32 %v2286, %v2342
  %v2383 = vadd.f32 %v2287, %v2343
  %v2384 = vadd.f32 %v2288, %v2344
  %v2385 = vadd.f32 %v2289, %v2345
  %v2386 = vadd.f32 %v2290, %v2346
  %v2387 = vadd.f32 %v2291, %v2347
  %v2388 = vadd.f32 %v2292, %v2348
  %v2389 = vadd.f32 %v2293, %v2349
  %v2390 = vadd.f32 %v2294, %v2350
  %v2391 = vadd.f32 %v2295, %v2351
  %v2392 = vadd.f32 %v2296, %v2352
  %v2393 = vadd.f32 %v2297, %v2353
  %v2394 = vadd.f32 %v2298, %v2346
  %v2395 = vadd.f32 %v2299, %v2347
  %v2396 = vadd.f32 %v2300, %v2348
  %v2397 = vadd.f32 %v2301, %v2349
  %v2398 = vadd.f32 %v2302, %v2350
  %v2399 = vadd.f32 %v2303, %v2351
  %v2400 = vadd.f32 %v2304, %v2352
  %v2401 = vadd.f32 %v2305, %v2353
  %v2402 = vadd.f32 %v2306, %v2354
  %v2403 = vadd.f32 %v2307, %v2355
  %v2404 = vadd.f32 %v2308, %v2356
  %v2405 = vadd.f32 %v2309, %v2357
  %v2406 = vadd.f32 %v2310, %v2358
  %v2407 = vadd.f32 %v2311, %v2359
  %v2408 = vadd.f32 %v2312, %v2360
  %v2409 = vadd.f32 %v2313, %v2361
  %v2410 = vadd.f32 %v2314, %v2354
  %v2411 = vadd.f32 %v2315, %v2355
  %v2412 = vadd.f32 %v2316, %v2356
  %v2413 = vadd.f32 %v2317, %v2357
  %v2414 = vadd.f32 %v2318, %v2358
  %v2415 = vadd.f32 %v2319, %v2359
  %v2416 = vadd.f32 %v2320, %v2360
  %v2417 = vadd.f32 %v2321, %v2361
  %v2418 = vadd.f32 %v2322, %v2362
  %v2419 = vadd.f32 %v2323, %v2363
  %v2420 = vadd.f32 %v2324, %v2364
  %v2421 = vadd.f32 %v2325, %v2365
  %v2422 = vadd.f32 %v2326, %v2366
  %v2423 = vadd.f32 %v2327, %v2367
  %v2424 = vadd.f32 %v2328, %v2368
  %v2425 = vadd.f32 %v2329, %v2369
  %v2426 = vadd.f32 %v2330, %v2362
  %v2427 = vadd.f32 %v2331, %v2363
  %v2428 = vadd.f32 %v2332, %v2364
  %v2429 = vadd.f32 %v2333, %v2365
  %v2430 = vadd.f32 %v2334, %v2366
  %v2431 = vadd.f32 %v2335, %v2367
  %v2432 = vadd.f32 %v2336, %v2368
  %v2433 = vadd.f32 %v2337, %v2369
  %vm2434 = vcmask 130048
  %v2435 = vsel %vm2434, %v2370, -inf
  %2436 = vmax.xlane.f32.xlu0 %v2435
  %v2437 = vpop.xlane.xlu0 %2436
  %v2438 = vsel %vm2434, %v2371, -inf
  %2439 = vmax.xlane.f32.xlu0 %v2438
  %v2440 = vpop.xlane.xlu0 %2439
  %v2441 = vsel %vm2434, %v2372, -inf
  %2442 = vmax.xlane.f32.xlu0 %v2441
  %v2443 = vpop.xlane.xlu0 %2442
  %v2444 = vsel %vm2434, %v2373, -inf
  %2445 = vmax.xlane.f32.xlu0 %v2444
  %v2446 = vpop.xlane.xlu0 %2445
  %v2447 = vsel %vm2434, %v2374, -inf
  %2448 = vmax.xlane.f32.xlu0 %v2447
  %v2449 = vpop.xlane.xlu0 %2448
  %v2450 = vsel %vm2434, %v2375, -inf
  %2451 = vmax.xlane.f32.xlu0 %v2450
  %v2452 = vpop.xlane.xlu0 %2451
  %v2453 = vsel %vm2434, %v2376, -inf
  %2454 = vmax.xlane.f32.xlu0 %v2453
  %v2455 = vpop.xlane.xlu0 %2454
  %v2456 = vsel %vm2434, %v2377, -inf
  %2457 = vmax.xlane.f32.xlu0 %v2456
  %v2458 = vpop.xlane.xlu0 %2457
  %v2459 = vsel %vm2434, %v2378, -inf
  %2460 = vmax.xlane.f32.xlu0 %v2459
  %v2461 = vpop.xlane.xlu0 %2460
  %v2462 = vsel %vm2434, %v2379, -inf
  %2463 = vmax.xlane.f32.xlu0 %v2462
  %v2464 = vpop.xlane.xlu0 %2463
  %v2465 = vsel %vm2434, %v2380, -inf
  %2466 = vmax.xlane.f32.xlu0 %v2465
  %v2467 = vpop.xlane.xlu0 %2466
  %v2468 = vsel %vm2434, %v2381, -inf
  %2469 = vmax.xlane.f32.xlu0 %v2468
  %v2470 = vpop.xlane.xlu0 %2469
  %v2471 = vsel %vm2434, %v2382, -inf
  %2472 = vmax.xlane.f32.xlu0 %v2471
  %v2473 = vpop.xlane.xlu0 %2472
  %v2474 = vsel %vm2434, %v2383, -inf
  %2475 = vmax.xlane.f32.xlu0 %v2474
  %v2476 = vpop.xlane.xlu0 %2475
  %v2477 = vsel %vm2434, %v2384, -inf
  %2478 = vmax.xlane.f32.xlu0 %v2477
  %v2479 = vpop.xlane.xlu0 %2478
  %v2480 = vsel %vm2434, %v2385, -inf
  %2481 = vmax.xlane.f32.xlu0 %v2480
  %v2482 = vpop.xlane.xlu0 %2481
  %v2483 = vsel %vm2434, %v2386, -inf
  %2484 = vmax.xlane.f32.xlu0 %v2483
  %v2485 = vpop.xlane.xlu0 %2484
  %v2486 = vsel %vm2434, %v2387, -inf
  %2487 = vmax.xlane.f32.xlu0 %v2486
  %v2488 = vpop.xlane.xlu0 %2487
  %v2489 = vsel %vm2434, %v2388, -inf
  %2490 = vmax.xlane.f32.xlu0 %v2489
  %v2491 = vpop.xlane.xlu0 %2490
  %v2492 = vsel %vm2434, %v2389, -inf
  %2493 = vmax.xlane.f32.xlu0 %v2492
  %v2494 = vpop.xlane.xlu0 %2493
  %v2495 = vsel %vm2434, %v2390, -inf
  %2496 = vmax.xlane.f32.xlu0 %v2495
  %v2497 = vpop.xlane.xlu0 %2496
  %v2498 = vsel %vm2434, %v2391, -inf
  %2499 = vmax.xlane.f32.xlu0 %v2498
  %v2500 = vpop.xlane.xlu0 %2499
  %v2501 = vsel %vm2434, %v2392, -inf
  %2502 = vmax.xlane.f32.xlu0 %v2501
  %v2503 = vpop.xlane.xlu0 %2502
  %v2504 = vsel %vm2434, %v2393, -inf
  %2505 = vmax.xlane.f32.xlu0 %v2504
  %v2506 = vpop.xlane.xlu0 %2505
  %v2507 = vsel %vm2434, %v2394, -inf
  %2508 = vmax.xlane.f32.xlu0 %v2507
  %v2509 = vpop.xlane.xlu0 %2508
  %v2510 = vsel %vm2434, %v2395, -inf
  %2511 = vmax.xlane.f32.xlu0 %v2510
  %v2512 = vpop.xlane.xlu0 %2511
  %v2513 = vsel %vm2434, %v2396, -inf
  %2514 = vmax.xlane.f32.xlu0 %v2513
  %v2515 = vpop.xlane.xlu0 %2514
  %v2516 = vsel %vm2434, %v2397, -inf
  %2517 = vmax.xlane.f32.xlu0 %v2516
  %v2518 = vpop.xlane.xlu0 %2517
  %v2519 = vsel %vm2434, %v2398, -inf
  %2520 = vmax.xlane.f32.xlu0 %v2519
  %v2521 = vpop.xlane.xlu0 %2520
  %v2522 = vsel %vm2434, %v2399, -inf
  %2523 = vmax.xlane.f32.xlu0 %v2522
  %v2524 = vpop.xlane.xlu0 %2523
  %v2525 = vsel %vm2434, %v2400, -inf
  %2526 = vmax.xlane.f32.xlu0 %v2525
  %v2527 = vpop.xlane.xlu0 %2526
  %v2528 = vsel %vm2434, %v2401, -inf
  %2529 = vmax.xlane.f32.xlu0 %v2528
  %v2530 = vpop.xlane.xlu0 %2529
  %v2531 = vsel %vm2434, %v2402, -inf
  %2532 = vmax.xlane.f32.xlu0 %v2531
  %v2533 = vpop.xlane.xlu0 %2532
  %v2534 = vsel %vm2434, %v2403, -inf
  %2535 = vmax.xlane.f32.xlu0 %v2534
  %v2536 = vpop.xlane.xlu0 %2535
  %v2537 = vsel %vm2434, %v2404, -inf
  %2538 = vmax.xlane.f32.xlu0 %v2537
  %v2539 = vpop.xlane.xlu0 %2538
  %v2540 = vsel %vm2434, %v2405, -inf
  %2541 = vmax.xlane.f32.xlu0 %v2540
  %v2542 = vpop.xlane.xlu0 %2541
  %v2543 = vsel %vm2434, %v2406, -inf
  %2544 = vmax.xlane.f32.xlu0 %v2543
  %v2545 = vpop.xlane.xlu0 %2544
  %v2546 = vsel %vm2434, %v2407, -inf
  %2547 = vmax.xlane.f32.xlu0 %v2546
  %v2548 = vpop.xlane.xlu0 %2547
  %v2549 = vsel %vm2434, %v2408, -inf
  %2550 = vmax.xlane.f32.xlu0 %v2549
  %v2551 = vpop.xlane.xlu0 %2550
  %v2552 = vsel %vm2434, %v2409, -inf
  %2553 = vmax.xlane.f32.xlu0 %v2552
  %v2554 = vpop.xlane.xlu0 %2553
  %v2555 = vsel %vm2434, %v2410, -inf
  %2556 = vmax.xlane.f32.xlu0 %v2555
  %v2557 = vpop.xlane.xlu0 %2556
  %v2558 = vsel %vm2434, %v2411, -inf
  %2559 = vmax.xlane.f32.xlu0 %v2558
  %v2560 = vpop.xlane.xlu0 %2559
  %v2561 = vsel %vm2434, %v2412, -inf
  %2562 = vmax.xlane.f32.xlu0 %v2561
  %v2563 = vpop.xlane.xlu0 %2562
  %v2564 = vsel %vm2434, %v2413, -inf
  %2565 = vmax.xlane.f32.xlu0 %v2564
  %v2566 = vpop.xlane.xlu0 %2565
  %v2567 = vsel %vm2434, %v2414, -inf
  %2568 = vmax.xlane.f32.xlu0 %v2567
  %v2569 = vpop.xlane.xlu0 %2568
  %v2570 = vsel %vm2434, %v2415, -inf
  %2571 = vmax.xlane.f32.xlu0 %v2570
  %v2572 = vpop.xlane.xlu0 %2571
  %v2573 = vsel %vm2434, %v2416, -inf
  %2574 = vmax.xlane.f32.xlu0 %v2573
  %v2575 = vpop.xlane.xlu0 %2574
  %v2576 = vsel %vm2434, %v2417, -inf
  %2577 = vmax.xlane.f32.xlu0 %v2576
  %v2578 = vpop.xlane.xlu0 %2577
  %v2579 = vsel %vm2434, %v2418, -inf
  %2580 = vmax.xlane.f32.xlu0 %v2579
  %v2581 = vpop.xlane.xlu0 %2580
  %v2582 = vsel %vm2434, %v2419, -inf
  %2583 = vmax.xlane.f32.xlu0 %v2582
  %v2584 = vpop.xlane.xlu0 %2583
  %v2585 = vsel %vm2434, %v2420, -inf
  %2586 = vmax.xlane.f32.xlu0 %v2585
  %v2587 = vpop.xlane.xlu0 %2586
  %v2588 = vsel %vm2434, %v2421, -inf
  %2589 = vmax.xlane.f32.xlu0 %v2588
  %v2590 = vpop.xlane.xlu0 %2589
  %v2591 = vsel %vm2434, %v2422, -inf
  %2592 = vmax.xlane.f32.xlu0 %v2591
  %v2593 = vpop.xlane.xlu0 %2592
  %v2594 = vsel %vm2434, %v2423, -inf
  %2595 = vmax.xlane.f32.xlu0 %v2594
  %v2596 = vpop.xlane.xlu0 %2595
  %v2597 = vsel %vm2434, %v2424, -inf
  %2598 = vmax.xlane.f32.xlu0 %v2597
  %v2599 = vpop.xlane.xlu0 %2598
  %v2600 = vsel %vm2434, %v2425, -inf
  %2601 = vmax.xlane.f32.xlu0 %v2600
  %v2602 = vpop.xlane.xlu0 %2601
  %v2603 = vsel %vm2434, %v2426, -inf
  %2604 = vmax.xlane.f32.xlu0 %v2603
  %v2605 = vpop.xlane.xlu0 %2604
  %v2606 = vsel %vm2434, %v2427, -inf
  %2607 = vmax.xlane.f32.xlu0 %v2606
  %v2608 = vpop.xlane.xlu0 %2607
  %v2609 = vsel %vm2434, %v2428, -inf
  %2610 = vmax.xlane.f32.xlu0 %v2609
  %v2611 = vpop.xlane.xlu0 %2610
  %v2612 = vsel %vm2434, %v2429, -inf
  %2613 = vmax.xlane.f32.xlu0 %v2612
  %v2614 = vpop.xlane.xlu0 %2613
  %v2615 = vsel %vm2434, %v2430, -inf
  %2616 = vmax.xlane.f32.xlu0 %v2615
  %v2617 = vpop.xlane.xlu0 %2616
  %v2618 = vsel %vm2434, %v2431, -inf
  %2619 = vmax.xlane.f32.xlu0 %v2618
  %v2620 = vpop.xlane.xlu0 %2619
  %v2621 = vsel %vm2434, %v2432, -inf
  %2622 = vmax.xlane.f32.xlu0 %v2621
  %v2623 = vpop.xlane.xlu0 %2622
  %v2624 = vsel %vm2434, %v2433, -inf
  %2625 = vmax.xlane.f32.xlu0 %v2624
  %v2626 = vpop.xlane.xlu0 %2625
  %v2627 = vsub.f32 %v2370, %v2437
  %v2628 = vsub.f32 %v2371, %v2440
  %v2629 = vsub.f32 %v2372, %v2443
  %v2630 = vsub.f32 %v2373, %v2446
  %v2631 = vsub.f32 %v2374, %v2449
  %v2632 = vsub.f32 %v2375, %v2452
  %v2633 = vsub.f32 %v2376, %v2455
  %v2634 = vsub.f32 %v2377, %v2458
  %v2635 = vsub.f32 %v2378, %v2461
  %v2636 = vsub.f32 %v2379, %v2464
  %v2637 = vsub.f32 %v2380, %v2467
  %v2638 = vsub.f32 %v2381, %v2470
  %v2639 = vsub.f32 %v2382, %v2473
  %v2640 = vsub.f32 %v2383, %v2476
  %v2641 = vsub.f32 %v2384, %v2479
  %v2642 = vsub.f32 %v2385, %v2482
  %v2643 = vsub.f32 %v2386, %v2485
  %v2644 = vsub.f32 %v2387, %v2488
  %v2645 = vsub.f32 %v2388, %v2491
  %v2646 = vsub.f32 %v2389, %v2494
  %v2647 = vsub.f32 %v2390, %v2497
  %v2648 = vsub.f32 %v2391, %v2500
  %v2649 = vsub.f32 %v2392, %v2503
  %v2650 = vsub.f32 %v2393, %v2506
  %v2651 = vsub.f32 %v2394, %v2509
  %v2652 = vsub.f32 %v2395, %v2512
  %v2653 = vsub.f32 %v2396, %v2515
  %v2654 = vsub.f32 %v2397, %v2518
  %v2655 = vsub.f32 %v2398, %v2521
  %v2656 = vsub.f32 %v2399, %v2524
  %v2657 = vsub.f32 %v2400, %v2527
  %v2658 = vsub.f32 %v2401, %v2530
  %v2659 = vsub.f32 %v2402, %v2533
  %v2660 = vsub.f32 %v2403, %v2536
  %v2661 = vsub.f32 %v2404, %v2539
  %v2662 = vsub.f32 %v2405, %v2542
  %v2663 = vsub.f32 %v2406, %v2545
  %v2664 = vsub.f32 %v2407, %v2548
  %v2665 = vsub.f32 %v2408, %v2551
  %v2666 = vsub.f32 %v2409, %v2554
  %v2667 = vsub.f32 %v2410, %v2557
  %v2668 = vsub.f32 %v2411, %v2560
  %v2669 = vsub.f32 %v2412, %v2563
  %v2670 = vsub.f32 %v2413, %v2566
  %v2671 = vsub.f32 %v2414, %v2569
  %v2672 = vsub.f32 %v2415, %v2572
  %v2673 = vsub.f32 %v2416, %v2575
  %v2674 = vsub.f32 %v2417, %v2578
  %v2675 = vsub.f32 %v2418, %v2581
  %v2676 = vsub.f32 %v2419, %v2584
  %v2677 = vsub.f32 %v2420, %v2587
  %v2678 = vsub.f32 %v2421, %v2590
  %v2679 = vsub.f32 %v2422, %v2593
  %v2680 = vsub.f32 %v2423, %v2596
  %v2681 = vsub.f32 %v2424, %v2599
  %v2682 = vsub.f32 %v2425, %v2602
  %v2683 = vsub.f32 %v2426, %v2605
  %v2684 = vsub.f32 %v2427, %v2608
  %v2685 = vsub.f32 %v2428, %v2611
  %v2686 = vsub.f32 %v2429, %v2614
  %v2687 = vsub.f32 %v2430, %v2617
  %v2688 = vsub.f32 %v2431, %v2620
  %v2689 = vsub.f32 %v2432, %v2623
  %v2690 = vsub.f32 %v2433, %v2626
  %v2691 = vmul.f32 %v2627, 1.442695
  %v2692 = vpow.pop %v2691
  %v2693 = vmul.f32 %v2628, 1.442695
  %v2694 = vpow.pop %v2693
  %v2695 = vmul.f32 %v2629, 1.442695
  %v2696 = vpow.pop %v2695
  %v2697 = vmul.f32 %v2630, 1.442695
  %v2698 = vpow.pop %v2697
  %v2699 = vmul.f32 %v2631, 1.442695
  %v2700 = vpow.pop %v2699
  %v2701 = vmul.f32 %v2632, 1.442695
  %v2702 = vpow.pop %v2701
  %v2703 = vmul.f32 %v2633, 1.442695
  %v2704 = vpow.pop %v2703
  %v2705 = vmul.f32 %v2634, 1.442695
  %v2706 = vpow.pop %v2705
  %v2707 = vmul.f32 %v2635, 1.442695
  %v2708 = vpow.pop %v2707
  %v2709 = vmul.f32 %v2636, 1.442695
  %v2710 = vpow.pop %v2709
  %v2711 = vmul.f32 %v2637, 1.442695
  %v2712 = vpow.pop %v2711
  %v2713 = vmul.f32 %v2638, 1.442695
  %v2714 = vpow.pop %v2713
  %v2715 = vmul.f32 %v2639, 1.442695
  %v2716 = vpow.pop %v2715
  %v2717 = vmul.f32 %v2640, 1.442695
  %v2718 = vpow.pop %v2717
  %v2719 = vmul.f32 %v2641, 1.442695
  %v2720 = vpow.pop %v2719
  %v2721 = vmul.f32 %v2642, 1.442695
  %v2722 = vpow.pop %v2721
  %v2723 = vmul.f32 %v2643, 1.442695
  %v2724 = vpow.pop %v2723
  %v2725 = vmul.f32 %v2644, 1.442695
  %v2726 = vpow.pop %v2725
  %v2727 = vmul.f32 %v2645, 1.442695
  %v2728 = vpow.pop %v2727
  %v2729 = vmul.f32 %v2646, 1.442695
  %v2730 = vpow.pop %v2729
  %v2731 = vmul.f32 %v2647, 1.442695
  %v2732 = vpow.pop %v2731
  %v2733 = vmul.f32 %v2648, 1.442695
  %v2734 = vpow.pop %v2733
  %v2735 = vmul.f32 %v2649, 1.442695
  %v2736 = vpow.pop %v2735
  %v2737 = vmul.f32 %v2650, 1.442695
  %v2738 = vpow.pop %v2737
  %v2739 = vmul.f32 %v2651, 1.442695
  %v2740 = vpow.pop %v2739
  %v2741 = vmul.f32 %v2652, 1.442695
  %v2742 = vpow.pop %v2741
  %v2743 = vmul.f32 %v2653, 1.442695
  %v2744 = vpow.pop %v2743
  %v2745 = vmul.f32 %v2654, 1.442695
  %v2746 = vpow.pop %v2745
  %v2747 = vmul.f32 %v2655, 1.442695
  %v2748 = vpow.pop %v2747
  %v2749 = vmul.f32 %v2656, 1.442695
  %v2750 = vpow.pop %v2749
  %v2751 = vmul.f32 %v2657, 1.442695
  %v2752 = vpow.pop %v2751
  %v2753 = vmul.f32 %v2658, 1.442695
  %v2754 = vpow.pop %v2753
  %v2755 = vmul.f32 %v2659, 1.442695
  %v2756 = vpow.pop %v2755
  %v2757 = vmul.f32 %v2660, 1.442695
  %v2758 = vpow.pop %v2757
  %v2759 = vmul.f32 %v2661, 1.442695
  %v2760 = vpow.pop %v2759
  %v2761 = vmul.f32 %v2662, 1.442695
  %v2762 = vpow.pop %v2761
  %v2763 = vmul.f32 %v2663, 1.442695
  %v2764 = vpow.pop %v2763
  %v2765 = vmul.f32 %v2664, 1.442695
  %v2766 = vpow.pop %v2765
  %v2767 = vmul.f32 %v2665, 1.442695
  %v2768 = vpow.pop %v2767
  %v2769 = vmul.f32 %v2666, 1.442695
  %v2770 = vpow.pop %v2769
  %v2771 = vmul.f32 %v2667, 1.442695
  %v2772 = vpow.pop %v2771
  %v2773 = vmul.f32 %v2668, 1.442695
  %v2774 = vpow.pop %v2773
  %v2775 = vmul.f32 %v2669, 1.442695
  %v2776 = vpow.pop %v2775
  %v2777 = vmul.f32 %v2670, 1.442695
  %v2778 = vpow.pop %v2777
  %v2779 = vmul.f32 %v2671, 1.442695
  %v2780 = vpow.pop %v2779
  %v2781 = vmul.f32 %v2672, 1.442695
  %v2782 = vpow.pop %v2781
  %v2783 = vmul.f32 %v2673, 1.442695
  %v2784 = vpow.pop %v2783
  %v2785 = vmul.f32 %v2674, 1.442695
  %v2786 = vpow.pop %v2785
  %v2787 = vmul.f32 %v2675, 1.442695
  %v2788 = vpow.pop %v2787
  %v2789 = vmul.f32 %v2676, 1.442695
  %v2790 = vpow.pop %v2789
  %v2791 = vmul.f32 %v2677, 1.442695
  %v2792 = vpow.pop %v2791
  %v2793 = vmul.f32 %v2678, 1.442695
  %v2794 = vpow.pop %v2793
  %v2795 = vmul.f32 %v2679, 1.442695
  %v2796 = vpow.pop %v2795
  %v2797 = vmul.f32 %v2680, 1.442695
  %v2798 = vpow.pop %v2797
  %v2799 = vmul.f32 %v2681, 1.442695
  %v2800 = vpow.pop %v2799
  %v2801 = vmul.f32 %v2682, 1.442695
  %v2802 = vpow.pop %v2801
  %v2803 = vmul.f32 %v2683, 1.442695
  %v2804 = vpow.pop %v2803
  %v2805 = vmul.f32 %v2684, 1.442695
  %v2806 = vpow.pop %v2805
  %v2807 = vmul.f32 %v2685, 1.442695
  %v2808 = vpow.pop %v2807
  %v2809 = vmul.f32 %v2686, 1.442695
  %v2810 = vpow.pop %v2809
  %v2811 = vmul.f32 %v2687, 1.442695
  %v2812 = vpow.pop %v2811
  %v2813 = vmul.f32 %v2688, 1.442695
  %v2814 = vpow.pop %v2813
  %v2815 = vmul.f32 %v2689, 1.442695
  %v2816 = vpow.pop %v2815
  %v2817 = vmul.f32 %v2690, 1.442695
  %v2818 = vpow.pop %v2817
  %v2819 = vsel %vm2434, %v2692, 0.0
  %2820 = vadd.xlane.f32.xlu0 %v2819
  %v2821 = vpop.xlane.xlu0 %2820
  %v2822 = vsel %vm2434, %v2694, 0.0
  %2823 = vadd.xlane.f32.xlu0 %v2822
  %v2824 = vpop.xlane.xlu0 %2823
  %v2825 = vsel %vm2434, %v2696, 0.0
  %2826 = vadd.xlane.f32.xlu0 %v2825
  %v2827 = vpop.xlane.xlu0 %2826
  %v2828 = vsel %vm2434, %v2698, 0.0
  %2829 = vadd.xlane.f32.xlu0 %v2828
  %v2830 = vpop.xlane.xlu0 %2829
  %v2831 = vsel %vm2434, %v2700, 0.0
  %2832 = vadd.xlane.f32.xlu0 %v2831
  %v2833 = vpop.xlane.xlu0 %2832
  %v2834 = vsel %vm2434, %v2702, 0.0
  %2835 = vadd.xlane.f32.xlu0 %v2834
  %v2836 = vpop.xlane.xlu0 %2835
  %v2837 = vsel %vm2434, %v2704, 0.0
  %2838 = vadd.xlane.f32.xlu0 %v2837
  %v2839 = vpop.xlane.xlu0 %2838
  %v2840 = vsel %vm2434, %v2706, 0.0
  %2841 = vadd.xlane.f32.xlu0 %v2840
  %v2842 = vpop.xlane.xlu0 %2841
  %v2843 = vsel %vm2434, %v2708, 0.0
  %2844 = vadd.xlane.f32.xlu0 %v2843
  %v2845 = vpop.xlane.xlu0 %2844
  %v2846 = vsel %vm2434, %v2710, 0.0
  %2847 = vadd.xlane.f32.xlu0 %v2846
  %v2848 = vpop.xlane.xlu0 %2847
  %v2849 = vsel %vm2434, %v2712, 0.0
  %2850 = vadd.xlane.f32.xlu0 %v2849
  %v2851 = vpop.xlane.xlu0 %2850
  %v2852 = vsel %vm2434, %v2714, 0.0
  %2853 = vadd.xlane.f32.xlu0 %v2852
  %v2854 = vpop.xlane.xlu0 %2853
  %v2855 = vsel %vm2434, %v2716, 0.0
  %2856 = vadd.xlane.f32.xlu0 %v2855
  %v2857 = vpop.xlane.xlu0 %2856
  %v2858 = vsel %vm2434, %v2718, 0.0
  %2859 = vadd.xlane.f32.xlu0 %v2858
  %v2860 = vpop.xlane.xlu0 %2859
  %v2861 = vsel %vm2434, %v2720, 0.0
  %2862 = vadd.xlane.f32.xlu0 %v2861
  %v2863 = vpop.xlane.xlu0 %2862
  %v2864 = vsel %vm2434, %v2722, 0.0
  %2865 = vadd.xlane.f32.xlu0 %v2864
  %v2866 = vpop.xlane.xlu0 %2865
  %v2867 = vsel %vm2434, %v2724, 0.0
  %2868 = vadd.xlane.f32.xlu0 %v2867
  %v2869 = vpop.xlane.xlu0 %2868
  %v2870 = vsel %vm2434, %v2726, 0.0
  %2871 = vadd.xlane.f32.xlu0 %v2870
  %v2872 = vpop.xlane.xlu0 %2871
  %v2873 = vsel %vm2434, %v2728, 0.0
  %2874 = vadd.xlane.f32.xlu0 %v2873
  %v2875 = vpop.xlane.xlu0 %2874
  %v2876 = vsel %vm2434, %v2730, 0.0
  %2877 = vadd.xlane.f32.xlu0 %v2876
  %v2878 = vpop.xlane.xlu0 %2877
  %v2879 = vsel %vm2434, %v2732, 0.0
  %2880 = vadd.xlane.f32.xlu0 %v2879
  %v2881 = vpop.xlane.xlu0 %2880
  %v2882 = vsel %vm2434, %v2734, 0.0
  %2883 = vadd.xlane.f32.xlu0 %v2882
  %v2884 = vpop.xlane.xlu0 %2883
  %v2885 = vsel %vm2434, %v2736, 0.0
  %2886 = vadd.xlane.f32.xlu0 %v2885
  %v2887 = vpop.xlane.xlu0 %2886
  %v2888 = vsel %vm2434, %v2738, 0.0
  %2889 = vadd.xlane.f32.xlu0 %v2888
  %v2890 = vpop.xlane.xlu0 %2889
  %v2891 = vsel %vm2434, %v2740, 0.0
  %2892 = vadd.xlane.f32.xlu0 %v2891
  %v2893 = vpop.xlane.xlu0 %2892
  %v2894 = vsel %vm2434, %v2742, 0.0
  %2895 = vadd.xlane.f32.xlu0 %v2894
  %v2896 = vpop.xlane.xlu0 %2895
  %v2897 = vsel %vm2434, %v2744, 0.0
  %2898 = vadd.xlane.f32.xlu0 %v2897
  %v2899 = vpop.xlane.xlu0 %2898
  %v2900 = vsel %vm2434, %v2746, 0.0
  %2901 = vadd.xlane.f32.xlu0 %v2900
  %v2902 = vpop.xlane.xlu0 %2901
  %v2903 = vsel %vm2434, %v2748, 0.0
  %2904 = vadd.xlane.f32.xlu0 %v2903
  %v2905 = vpop.xlane.xlu0 %2904
  %v2906 = vsel %vm2434, %v2750, 0.0
  %2907 = vadd.xlane.f32.xlu0 %v2906
  %v2908 = vpop.xlane.xlu0 %2907
  %v2909 = vsel %vm2434, %v2752, 0.0
  %2910 = vadd.xlane.f32.xlu0 %v2909
  %v2911 = vpop.xlane.xlu0 %2910
  %v2912 = vsel %vm2434, %v2754, 0.0
  %2913 = vadd.xlane.f32.xlu0 %v2912
  %v2914 = vpop.xlane.xlu0 %2913
  %v2915 = vsel %vm2434, %v2756, 0.0
  %2916 = vadd.xlane.f32.xlu0 %v2915
  %v2917 = vpop.xlane.xlu0 %2916
  %v2918 = vsel %vm2434, %v2758, 0.0
  %2919 = vadd.xlane.f32.xlu0 %v2918
  %v2920 = vpop.xlane.xlu0 %2919
  %v2921 = vsel %vm2434, %v2760, 0.0
  %2922 = vadd.xlane.f32.xlu0 %v2921
  %v2923 = vpop.xlane.xlu0 %2922
  %v2924 = vsel %vm2434, %v2762, 0.0
  %2925 = vadd.xlane.f32.xlu0 %v2924
  %v2926 = vpop.xlane.xlu0 %2925
  %v2927 = vsel %vm2434, %v2764, 0.0
  %2928 = vadd.xlane.f32.xlu0 %v2927
  %v2929 = vpop.xlane.xlu0 %2928
  %v2930 = vsel %vm2434, %v2766, 0.0
  %2931 = vadd.xlane.f32.xlu0 %v2930
  %v2932 = vpop.xlane.xlu0 %2931
  %v2933 = vsel %vm2434, %v2768, 0.0
  %2934 = vadd.xlane.f32.xlu0 %v2933
  %v2935 = vpop.xlane.xlu0 %2934
  %v2936 = vsel %vm2434, %v2770, 0.0
  %2937 = vadd.xlane.f32.xlu0 %v2936
  %v2938 = vpop.xlane.xlu0 %2937
  %v2939 = vsel %vm2434, %v2772, 0.0
  %2940 = vadd.xlane.f32.xlu0 %v2939
  %v2941 = vpop.xlane.xlu0 %2940
  %v2942 = vsel %vm2434, %v2774, 0.0
  %2943 = vadd.xlane.f32.xlu0 %v2942
  %v2944 = vpop.xlane.xlu0 %2943
  %v2945 = vsel %vm2434, %v2776, 0.0
  %2946 = vadd.xlane.f32.xlu0 %v2945
  %v2947 = vpop.xlane.xlu0 %2946
  %v2948 = vsel %vm2434, %v2778, 0.0
  %2949 = vadd.xlane.f32.xlu0 %v2948
  %v2950 = vpop.xlane.xlu0 %2949
  %v2951 = vsel %vm2434, %v2780, 0.0
  %2952 = vadd.xlane.f32.xlu0 %v2951
  %v2953 = vpop.xlane.xlu0 %2952
  %v2954 = vsel %vm2434, %v2782, 0.0
  %2955 = vadd.xlane.f32.xlu0 %v2954
  %v2956 = vpop.xlane.xlu0 %2955
  %v2957 = vsel %vm2434, %v2784, 0.0
  %2958 = vadd.xlane.f32.xlu0 %v2957
  %v2959 = vpop.xlane.xlu0 %2958
  %v2960 = vsel %vm2434, %v2786, 0.0
  %2961 = vadd.xlane.f32.xlu0 %v2960
  %v2962 = vpop.xlane.xlu0 %2961
  %v2963 = vsel %vm2434, %v2788, 0.0
  %2964 = vadd.xlane.f32.xlu0 %v2963
  %v2965 = vpop.xlane.xlu0 %2964
  %v2966 = vsel %vm2434, %v2790, 0.0
  %2967 = vadd.xlane.f32.xlu0 %v2966
  %v2968 = vpop.xlane.xlu0 %2967
  %v2969 = vsel %vm2434, %v2792, 0.0
  %2970 = vadd.xlane.f32.xlu0 %v2969
  %v2971 = vpop.xlane.xlu0 %2970
  %v2972 = vsel %vm2434, %v2794, 0.0
  %2973 = vadd.xlane.f32.xlu0 %v2972
  %v2974 = vpop.xlane.xlu0 %2973
  %v2975 = vsel %vm2434, %v2796, 0.0
  %2976 = vadd.xlane.f32.xlu0 %v2975
  %v2977 = vpop.xlane.xlu0 %2976
  %v2978 = vsel %vm2434, %v2798, 0.0
  %2979 = vadd.xlane.f32.xlu0 %v2978
  %v2980 = vpop.xlane.xlu0 %2979
  %v2981 = vsel %vm2434, %v2800, 0.0
  %2982 = vadd.xlane.f32.xlu0 %v2981
  %v2983 = vpop.xlane.xlu0 %2982
  %v2984 = vsel %vm2434, %v2802, 0.0
  %2985 = vadd.xlane.f32.xlu0 %v2984
  %v2986 = vpop.xlane.xlu0 %2985
  %v2987 = vsel %vm2434, %v2804, 0.0
  %2988 = vadd.xlane.f32.xlu0 %v2987
  %v2989 = vpop.xlane.xlu0 %2988
  %v2990 = vsel %vm2434, %v2806, 0.0
  %2991 = vadd.xlane.f32.xlu0 %v2990
  %v2992 = vpop.xlane.xlu0 %2991
  %v2993 = vsel %vm2434, %v2808, 0.0
  %2994 = vadd.xlane.f32.xlu0 %v2993
  %v2995 = vpop.xlane.xlu0 %2994
  %v2996 = vsel %vm2434, %v2810, 0.0
  %2997 = vadd.xlane.f32.xlu0 %v2996
  %v2998 = vpop.xlane.xlu0 %2997
  %v2999 = vsel %vm2434, %v2812, 0.0
  %3000 = vadd.xlane.f32.xlu0 %v2999
  %v3001 = vpop.xlane.xlu0 %3000
  %v3002 = vsel %vm2434, %v2814, 0.0
  %3003 = vadd.xlane.f32.xlu0 %v3002
  %v3004 = vpop.xlane.xlu0 %3003
  %v3005 = vsel %vm2434, %v2816, 0.0
  %3006 = vadd.xlane.f32.xlu0 %v3005
  %v3007 = vpop.xlane.xlu0 %3006
  %v3008 = vsel %vm2434, %v2818, 0.0
  %3009 = vadd.xlane.f32.xlu0 %v3008
  %v3010 = vpop.xlane.xlu0 %3009
  %v3011 = vrcp.pop %v2821
  %v3012 = vrcp.pop %v2824
  %v3013 = vrcp.pop %v2827
  %v3014 = vrcp.pop %v2830
  %v3015 = vrcp.pop %v2833
  %v3016 = vrcp.pop %v2836
  %v3017 = vrcp.pop %v2839
  %v3018 = vrcp.pop %v2842
  %v3019 = vrcp.pop %v2845
  %v3020 = vrcp.pop %v2848
  %v3021 = vrcp.pop %v2851
  %v3022 = vrcp.pop %v2854
  %v3023 = vrcp.pop %v2857
  %v3024 = vrcp.pop %v2860
  %v3025 = vrcp.pop %v2863
  %v3026 = vrcp.pop %v2866
  %v3027 = vrcp.pop %v2869
  %v3028 = vrcp.pop %v2872
  %v3029 = vrcp.pop %v2875
  %v3030 = vrcp.pop %v2878
  %v3031 = vrcp.pop %v2881
  %v3032 = vrcp.pop %v2884
  %v3033 = vrcp.pop %v2887
  %v3034 = vrcp.pop %v2890
  %v3035 = vrcp.pop %v2893
  %v3036 = vrcp.pop %v2896
  %v3037 = vrcp.pop %v2899
  %v3038 = vrcp.pop %v2902
  %v3039 = vrcp.pop %v2905
  %v3040 = vrcp.pop %v2908
  %v3041 = vrcp.pop %v2911
  %v3042 = vrcp.pop %v2914
  %v3043 = vrcp.pop %v2917
  %v3044 = vrcp.pop %v2920
  %v3045 = vrcp.pop %v2923
  %v3046 = vrcp.pop %v2926
  %v3047 = vrcp.pop %v2929
  %v3048 = vrcp.pop %v2932
  %v3049 = vrcp.pop %v2935
  %v3050 = vrcp.pop %v2938
  %v3051 = vrcp.pop %v2941
  %v3052 = vrcp.pop %v2944
  %v3053 = vrcp.pop %v2947
  %v3054 = vrcp.pop %v2950
  %v3055 = vrcp.pop %v2953
  %v3056 = vrcp.pop %v2956
  %v3057 = vrcp.pop %v2959
  %v3058 = vrcp.pop %v2962
  %v3059 = vrcp.pop %v2965
  %v3060 = vrcp.pop %v2968
  %v3061 = vrcp.pop %v2971
  %v3062 = vrcp.pop %v2974
  %v3063 = vrcp.pop %v2977
  %v3064 = vrcp.pop %v2980
  %v3065 = vrcp.pop %v2983
  %v3066 = vrcp.pop %v2986
  %v3067 = vrcp.pop %v2989
  %v3068 = vrcp.pop %v2992
  %v3069 = vrcp.pop %v2995
  %v3070 = vrcp.pop %v2998
  %v3071 = vrcp.pop %v3001
  %v3072 = vrcp.pop %v3004
  %v3073 = vrcp.pop %v3007
  %v3074 = vrcp.pop %v3010
  %v3075 = vmul.f32 %v2692, %v3011
  %v3076 = vmul.f32 %v2694, %v3012
  %v3077 = vmul.f32 %v2696, %v3013
  %v3078 = vmul.f32 %v2698, %v3014
  %v3079 = vmul.f32 %v2700, %v3015
  %v3080 = vmul.f32 %v2702, %v3016
  %v3081 = vmul.f32 %v2704, %v3017
  %v3082 = vmul.f32 %v2706, %v3018
  %v3083 = vmul.f32 %v2708, %v3019
  %v3084 = vmul.f32 %v2710, %v3020
  %v3085 = vmul.f32 %v2712, %v3021
  %v3086 = vmul.f32 %v2714, %v3022
  %v3087 = vmul.f32 %v2716, %v3023
  %v3088 = vmul.f32 %v2718, %v3024
  %v3089 = vmul.f32 %v2720, %v3025
  %v3090 = vmul.f32 %v2722, %v3026
  %v3091 = vmul.f32 %v2724, %v3027
  %v3092 = vmul.f32 %v2726, %v3028
  %v3093 = vmul.f32 %v2728, %v3029
  %v3094 = vmul.f32 %v2730, %v3030
  %v3095 = vmul.f32 %v2732, %v3031
  %v3096 = vmul.f32 %v2734, %v3032
  %v3097 = vmul.f32 %v2736, %v3033
  %v3098 = vmul.f32 %v2738, %v3034
  %v3099 = vmul.f32 %v2740, %v3035
  %v3100 = vmul.f32 %v2742, %v3036
  %v3101 = vmul.f32 %v2744, %v3037
  %v3102 = vmul.f32 %v2746, %v3038
  %v3103 = vmul.f32 %v2748, %v3039
  %v3104 = vmul.f32 %v2750, %v3040
  %v3105 = vmul.f32 %v2752, %v3041
  %v3106 = vmul.f32 %v2754, %v3042
  %v3107 = vmul.f32 %v2756, %v3043
  %v3108 = vmul.f32 %v2758, %v3044
  %v3109 = vmul.f32 %v2760, %v3045
  %v3110 = vmul.f32 %v2762, %v3046
  %v3111 = vmul.f32 %v2764, %v3047
  %v3112 = vmul.f32 %v2766, %v3048
  %v3113 = vmul.f32 %v2768, %v3049
  %v3114 = vmul.f32 %v2770, %v3050
  %v3115 = vmul.f32 %v2772, %v3051
  %v3116 = vmul.f32 %v2774, %v3052
  %v3117 = vmul.f32 %v2776, %v3053
  %v3118 = vmul.f32 %v2778, %v3054
  %v3119 = vmul.f32 %v2780, %v3055
  %v3120 = vmul.f32 %v2782, %v3056
  %v3121 = vmul.f32 %v2784, %v3057
  %v3122 = vmul.f32 %v2786, %v3058
  %v3123 = vmul.f32 %v2788, %v3059
  %v3124 = vmul.f32 %v2790, %v3060
  %v3125 = vmul.f32 %v2792, %v3061
  %v3126 = vmul.f32 %v2794, %v3062
  %v3127 = vmul.f32 %v2796, %v3063
  %v3128 = vmul.f32 %v2798, %v3064
  %v3129 = vmul.f32 %v2800, %v3065
  %v3130 = vmul.f32 %v2802, %v3066
  %v3131 = vmul.f32 %v2804, %v3067
  %v3132 = vmul.f32 %v2806, %v3068
  %v3133 = vmul.f32 %v2808, %v3069
  %v3134 = vmul.f32 %v2810, %v3070
  %v3135 = vmul.f32 %v2812, %v3071
  %v3136 = vmul.f32 %v2814, %v3072
  %v3137 = vmul.f32 %v2816, %v3073
  %v3138 = vmul.f32 %v2818, %v3074
  %v3139 = vpack.c.bf16 %v3076, %v3075
  %v3140 = vpack.c.bf16 %v3078, %v3077
  %v3141 = vpack.c.bf16 %v3080, %v3079
  %v3142 = vpack.c.bf16 %v3082, %v3081
  %v3143 = vpack.c.bf16 %v3084, %v3083
  %v3144 = vpack.c.bf16 %v3086, %v3085
  %v3145 = vpack.c.bf16 %v3088, %v3087
  %v3146 = vpack.c.bf16 %v3090, %v3089
  %v3147 = vpack.c.bf16 %v3092, %v3091
  %v3148 = vpack.c.bf16 %v3094, %v3093
  %v3149 = vpack.c.bf16 %v3096, %v3095
  %v3150 = vpack.c.bf16 %v3098, %v3097
  %v3151 = vpack.c.bf16 %v3100, %v3099
  %v3152 = vpack.c.bf16 %v3102, %v3101
  %v3153 = vpack.c.bf16 %v3104, %v3103
  %v3154 = vpack.c.bf16 %v3106, %v3105
  %v3155 = vpack.c.bf16 %v3108, %v3107
  %v3156 = vpack.c.bf16 %v3110, %v3109
  %v3157 = vpack.c.bf16 %v3112, %v3111
  %v3158 = vpack.c.bf16 %v3114, %v3113
  %v3159 = vpack.c.bf16 %v3116, %v3115
  %v3160 = vpack.c.bf16 %v3118, %v3117
  %v3161 = vpack.c.bf16 %v3120, %v3119
  %v3162 = vpack.c.bf16 %v3122, %v3121
  %v3163 = vpack.c.bf16 %v3124, %v3123
  %v3164 = vpack.c.bf16 %v3126, %v3125
  %v3165 = vpack.c.bf16 %v3128, %v3127
  %v3166 = vpack.c.bf16 %v3130, %v3129
  %v3167 = vpack.c.bf16 %v3132, %v3131
  %v3168 = vpack.c.bf16 %v3134, %v3133
  %v3169 = vpack.c.bf16 %v3136, %v3135
  %v3170 = vpack.c.bf16 %v3138, %v3137
  %3171 = vrot.lane.b32.xlu0 %v641, 64
  %v3172 = vpop.permute.xlu0 %3171
  %v3175 = vsel %vm2434, %v3139, 0
  %3177 = vmatprep.subr.bf16.mxu0 0
  %3178 = vmatpush1.bf16.msra.mxu0 %v3172
  %3179 = vmatprep.subr.bf16.mxu0 0
  %3180 = vmatpush1.bf16.msra.mxu0 0
  %3181 = vmatprep.subr.bf16.mxu0 0
  %3182 = vmatpush1.bf16.msra.mxu0 0
  %3183 = vmatprep.subr.bf16.mxu0 0
  %3184 = vmatpush1.bf16.msra.mxu0 0
  %3185 = vmatprep.subr.bf16.mxu0 0
  %3186 = vmatpush1.bf16.msra.mxu0 0
  %3187 = vmatprep.subr.bf16.mxu0 0
  %3188 = vmatpush1.bf16.msra.mxu0 0
  %3189 = vmatprep.subr.bf16.mxu0 0
  %3190 = vmatpush1.bf16.msra.mxu0 0
  %3191 = vmatprep.subr.bf16.mxu0 0
  %3192 = vmatpush1.bf16.msra.mxu0 0
  %3193 = vmatprep.subr.bf16.mxu0 0
  %3194 = vmatpush1.bf16.msra.mxu0 0
  %3195 = vmatprep.subr.bf16.mxu0 0
  %3196 = vmatpush1.bf16.msra.mxu0 0
  %3197 = vmatprep.subr.bf16.mxu0 0
  %3198 = vmatpush1.bf16.msra.mxu0 0
  %3199 = vmatprep.subr.bf16.mxu0 0
  %3200 = vmatpush1.bf16.msra.mxu0 0
  %3201 = vmatprep.subr.bf16.mxu0 0
  %3202 = vmatpush1.bf16.msra.mxu0 0
  %3203 = vmatprep.subr.bf16.mxu0 0
  %3204 = vmatpush1.bf16.msra.mxu0 0
  %3205 = vmatprep.subr.bf16.mxu0 0
  %3206 = vmatpush1.bf16.msra.mxu0 0
  %3207 = vmatprep.subr.bf16.mxu0 0
  %3208 = vmatpush1.bf16.msra.mxu0 0
  %3209 = vmatprep.mubr.bf16.mxu0 0
  %3210 = vmatmul.mubr.bf16.gmra.mrb[0].mxu0 %v3175
  %v3211 = vpop.f32.mrb[0].mxu0
  %v3212 = vadd.f32 0.0, %v3211
  %v3213 = vpop.f32.mrb[0].mxu0
  %v3214 = vpop.f32.mrb[0].mxu0
  %v3215 = vadd.f32 0.0, %v3214
  %v3216 = vpop.f32.mrb[0].mxu0
  %3217 = vdwg.mxu0
  %3218 = vrot.lane.b32.xlu0 %v642, 64
  %v3219 = vpop.permute.xlu0 %3218
  %v3222 = vsel %vm2434, %v3140, 0
  %3224 = vmatprep.subr.bf16.mxu0 0
  %3225 = vmatpush1.bf16.msra.mxu0 %v3219
  %3226 = vmatprep.subr.bf16.mxu0 0
  %3227 = vmatpush1.bf16.msra.mxu0 0
  %3228 = vmatprep.subr.bf16.mxu0 0
  %3229 = vmatpush1.bf16.msra.mxu0 0
  %3230 = vmatprep.subr.bf16.mxu0 0
  %3231 = vmatpush1.bf16.msra.mxu0 0
  %3232 = vmatprep.subr.bf16.mxu0 0
  %3233 = vmatpush1.bf16.msra.mxu0 0
  %3234 = vmatprep.subr.bf16.mxu0 0
  %3235 = vmatpush1.bf16.msra.mxu0 0
  %3236 = vmatprep.subr.bf16.mxu0 0
  %3237 = vmatpush1.bf16.msra.mxu0 0
  %3238 = vmatprep.subr.bf16.mxu0 0
  %3239 = vmatpush1.bf16.msra.mxu0 0
  %3240 = vmatprep.subr.bf16.mxu0 0
  %3241 = vmatpush1.bf16.msra.mxu0 0
  %3242 = vmatprep.subr.bf16.mxu0 0
  %3243 = vmatpush1.bf16.msra.mxu0 0
  %3244 = vmatprep.subr.bf16.mxu0 0
  %3245 = vmatpush1.bf16.msra.mxu0 0
  %3246 = vmatprep.subr.bf16.mxu0 0
  %3247 = vmatpush1.bf16.msra.mxu0 0
  %3248 = vmatprep.subr.bf16.mxu0 0
  %3249 = vmatpush1.bf16.msra.mxu0 0
  %3250 = vmatprep.subr.bf16.mxu0 0
  %3251 = vmatpush1.bf16.msra.mxu0 0
  %3252 = vmatprep.subr.bf16.mxu0 0
  %3253 = vmatpush1.bf16.msra.mxu0 0
  %3254 = vmatprep.subr.bf16.mxu0 0
  %3255 = vmatpush1.bf16.msra.mxu0 0
  %3256 = vmatprep.mubr.bf16.mxu0 0
  %3257 = vmatmul.mubr.bf16.gmra.mrb[0].mxu0 %v3222
  %v3258 = vpop.f32.mrb[0].mxu0
  %v3259 = vadd.f32 0.0, %v3258
  %v3260 = vpop.f32.mrb[0].mxu0
  %v3261 = vpop.f32.mrb[0].mxu0
  %v3262 = vadd.f32 0.0, %v3261
  %v3263 = vpop.f32.mrb[0].mxu0
  %3264 = vdwg.mxu0
  %3265 = vrot.lane.b32.xlu0 %v643, 64
  %v3266 = vpop.permute.xlu0 %3265
  %v3269 = vsel %vm2434, %v3141, 0
  %3271 = vmatprep.subr.bf16.mxu0 0
  %3272 = vmatpush1.bf16.msra.mxu0 %v3266
  %3273 = vmatprep.subr.bf16.mxu0 0
  %3274 = vmatpush1.bf16.msra.mxu0 0
  %3275 = vmatprep.subr.bf16.mxu0 0
  %3276 = vmatpush1.bf16.msra.mxu0 0
  %3277 = vmatprep.subr.bf16.mxu0 0
  %3278 = vmatpush1.bf16.msra.mxu0 0
  %3279 = vmatprep.subr.bf16.mxu0 0
  %3280 = vmatpush1.bf16.msra.mxu0 0
  %3281 = vmatprep.subr.bf16.mxu0 0
  %3282 = vmatpush1.bf16.msra.mxu0 0
  %3283 = vmatprep.subr.bf16.mxu0 0
  %3284 = vmatpush1.bf16.msra.mxu0 0
  %3285 = vmatprep.subr.bf16.mxu0 0
  %3286 = vmatpush1.bf16.msra.mxu0 0
  %3287 = vmatprep.subr.bf16.mxu0 0
  %3288 = vmatpush1.bf16.msra.mxu0 0
  %3289 = vmatprep.subr.bf16.mxu0 0
  %3290 = vmatpush1.bf16.msra.mxu0 0
  %3291 = vmatprep.subr.bf16.mxu0 0
  %3292 = vmatpush1.bf16.msra.mxu0 0
  %3293 = vmatprep.subr.bf16.mxu0 0
  %3294 = vmatpush1.bf16.msra.mxu0 0
  %3295 = vmatprep.subr.bf16.mxu0 0
  %3296 = vmatpush1.bf16.msra.mxu0 0
  %3297 = vmatprep.subr.bf16.mxu0 0
  %3298 = vmatpush1.bf16.msra.mxu0 0
  %3299 = vmatprep.subr.bf16.mxu0 0
  %3300 = vmatpush1.bf16.msra.mxu0 0
  %3301 = vmatprep.subr.bf16.mxu0 0
  %3302 = vmatpush1.bf16.msra.mxu0 0
  %3303 = vmatprep.mubr.bf16.mxu0 0
  %3304 = vmatmul.mubr.bf16.gmra.mrb[0].mxu0 %v3269
  %v3305 = vpop.f32.mrb[0].mxu0
  %v3306 = vadd.f32 0.0, %v3305
  %v3307 = vpop.f32.mrb[0].mxu0
  %v3308 = vpop.f32.mrb[0].mxu0
  %v3309 = vadd.f32 0.0, %v3308
  %v3310 = vpop.f32.mrb[0].mxu0
  %3311 = vdwg.mxu0
  %3312 = vrot.lane.b32.xlu0 %v644, 64
  %v3313 = vpop.permute.xlu0 %3312
  %v3316 = vsel %vm2434, %v3142, 0
  %3318 = vmatprep.subr.bf16.mxu0 0
  %3319 = vmatpush1.bf16.msra.mxu0 %v3313
  %3320 = vmatprep.subr.bf16.mxu0 0
  %3321 = vmatpush1.bf16.msra.mxu0 0
  %3322 = vmatprep.subr.bf16.mxu0 0
  %3323 = vmatpush1.bf16.msra.mxu0 0
  %3324 = vmatprep.subr.bf16.mxu0 0
  %3325 = vmatpush1.bf16.msra.mxu0 0
  %3326 = vmatprep.subr.bf16.mxu0 0
  %3327 = vmatpush1.bf16.msra.mxu0 0
  %3328 = vmatprep.subr.bf16.mxu0 0
  %3329 = vmatpush1.bf16.msra.mxu0 0
  %3330 = vmatprep.subr.bf16.mxu0 0
  %3331 = vmatpush1.bf16.msra.mxu0 0
  %3332 = vmatprep.subr.bf16.mxu0 0
  %3333 = vmatpush1.bf16.msra.mxu0 0
  %3334 = vmatprep.subr.bf16.mxu0 0
  %3335 = vmatpush1.bf16.msra.mxu0 0
  %3336 = vmatprep.subr.bf16.mxu0 0
  %3337 = vmatpush1.bf16.msra.mxu0 0
  %3338 = vmatprep.subr.bf16.mxu0 0
  %3339 = vmatpush1.bf16.msra.mxu0 0
  %3340 = vmatprep.subr.bf16.mxu0 0
  %3341 = vmatpush1.bf16.msra.mxu0 0
  %3342 = vmatprep.subr.bf16.mxu0 0
  %3343 = vmatpush1.bf16.msra.mxu0 0
  %3344 = vmatprep.subr.bf16.mxu0 0
  %3345 = vmatpush1.bf16.msra.mxu0 0
  %3346 = vmatprep.subr.bf16.mxu0 0
  %3347 = vmatpush1.bf16.msra.mxu0 0
  %3348 = vmatprep.subr.bf16.mxu0 0
  %3349 = vmatpush1.bf16.msra.mxu0 0
  %3350 = vmatprep.mubr.bf16.mxu0 0
  %3351 = vmatmul.mubr.bf16.gmra.mrb[0].mxu0 %v3316
  %v3352 = vpop.f32.mrb[0].mxu0
  %v3353 = vadd.f32 0.0, %v3352
  %v3354 = vpop.f32.mrb[0].mxu0
  %v3355 = vpop.f32.mrb[0].mxu0
  %v3356 = vadd.f32 0.0, %v3355
  %v3357 = vpop.f32.mrb[0].mxu0
  %3358 = vdwg.mxu0
  %3359 = vrot.lane.b32.xlu0 %v645, 64
  %v3360 = vpop.permute.xlu0 %3359
  %v3363 = vsel %vm2434, %v3143, 0
  %3365 = vmatprep.subr.bf16.mxu0 0
  %3366 = vmatpush1.bf16.msra.mxu0 %v3360
  %3367 = vmatprep.subr.bf16.mxu0 0
  %3368 = vmatpush1.bf16.msra.mxu0 0
  %3369 = vmatprep.subr.bf16.mxu0 0
  %3370 = vmatpush1.bf16.msra.mxu0 0
  %3371 = vmatprep.subr.bf16.mxu0 0
  %3372 = vmatpush1.bf16.msra.mxu0 0
  %3373 = vmatprep.subr.bf16.mxu0 0
  %3374 = vmatpush1.bf16.msra.mxu0 0
  %3375 = vmatprep.subr.bf16.mxu0 0
  %3376 = vmatpush1.bf16.msra.mxu0 0
  %3377 = vmatprep.subr.bf16.mxu0 0
  %3378 = vmatpush1.bf16.msra.mxu0 0
  %3379 = vmatprep.subr.bf16.mxu0 0
  %3380 = vmatpush1.bf16.msra.mxu0 0
  %3381 = vmatprep.subr.bf16.mxu0 0
  %3382 = vmatpush1.bf16.msra.mxu0 0
  %3383 = vmatprep.subr.bf16.mxu0 0
  %3384 = vmatpush1.bf16.msra.mxu0 0
  %3385 = vmatprep.subr.bf16.mxu0 0
  %3386 = vmatpush1.bf16.msra.mxu0 0
  %3387 = vmatprep.subr.bf16.mxu0 0
  %3388 = vmatpush1.bf16.msra.mxu0 0
  %3389 = vmatprep.subr.bf16.mxu0 0
  %3390 = vmatpush1.bf16.msra.mxu0 0
  %3391 = vmatprep.subr.bf16.mxu0 0
  %3392 = vmatpush1.bf16.msra.mxu0 0
  %3393 = vmatprep.subr.bf16.mxu0 0
  %3394 = vmatpush1.bf16.msra.mxu0 0
  %3395 = vmatprep.subr.bf16.mxu0 0
  %3396 = vmatpush1.bf16.msra.mxu0 0
  %3397 = vmatprep.mubr.bf16.mxu0 0
  %3398 = vmatmul.mubr.bf16.gmra.mrb[0].mxu0 %v3363
  %v3399 = vpop.f32.mrb[0].mxu0
  %v3400 = vadd.f32 0.0, %v3399
  %v3401 = vpop.f32.mrb[0].mxu0
  %v3402 = vpop.f32.mrb[0].mxu0
  %v3403 = vadd.f32 0.0, %v3402
  %v3404 = vpop.f32.mrb[0].mxu0
  %3405 = vdwg.mxu0
  %3406 = vrot.lane.b32.xlu0 %v646, 64
  %v3407 = vpop.permute.xlu0 %3406
  %v3410 = vsel %vm2434, %v3144, 0
  %3412 = vmatprep.subr.bf16.mxu0 0
  %3413 = vmatpush1.bf16.msra.mxu0 %v3407
  %3414 = vmatprep.subr.bf16.mxu0 0
  %3415 = vmatpush1.bf16.msra.mxu0 0
  %3416 = vmatprep.subr.bf16.mxu0 0
  %3417 = vmatpush1.bf16.msra.mxu0 0
  %3418 = vmatprep.subr.bf16.mxu0 0
  %3419 = vmatpush1.bf16.msra.mxu0 0
  %3420 = vmatprep.subr.bf16.mxu0 0
  %3421 = vmatpush1.bf16.msra.mxu0 0
  %3422 = vmatprep.subr.bf16.mxu0 0
  %3423 = vmatpush1.bf16.msra.mxu0 0
  %3424 = vmatprep.subr.bf16.mxu0 0
  %3425 = vmatpush1.bf16.msra.mxu0 0
  %3426 = vmatprep.subr.bf16.mxu0 0
  %3427 = vmatpush1.bf16.msra.mxu0 0
  %3428 = vmatprep.subr.bf16.mxu0 0
  %3429 = vmatpush1.bf16.msra.mxu0 0
  %3430 = vmatprep.subr.bf16.mxu0 0
  %3431 = vmatpush1.bf16.msra.mxu0 0
  %3432 = vmatprep.subr.bf16.mxu0 0
  %3433 = vmatpush1.bf16.msra.mxu0 0
  %3434 = vmatprep.subr.bf16.mxu0 0
  %3435 = vmatpush1.bf16.msra.mxu0 0
  %3436 = vmatprep.subr.bf16.mxu0 0
  %3437 = vmatpush1.bf16.msra.mxu0 0
  %3438 = vmatprep.subr.bf16.mxu0 0
  %3439 = vmatpush1.bf16.msra.mxu0 0
  %3440 = vmatprep.subr.bf16.mxu0 0
  %3441 = vmatpush1.bf16.msra.mxu0 0
  %3442 = vmatprep.subr.bf16.mxu0 0
  %3443 = vmatpush1.bf16.msra.mxu0 0
  %3444 = vmatprep.mubr.bf16.mxu0 0
  %3445 = vmatmul.mubr.bf16.gmra.mrb[0].mxu0 %v3410
  %v3446 = vpop.f32.mrb[0].mxu0
  %v3447 = vadd.f32 0.0, %v3446
  %v3448 = vpop.f32.mrb[0].mxu0
  %v3449 = vpop.f32.mrb[0].mxu0
  %v3450 = vadd.f32 0.0, %v3449
  %v3451 = vpop.f32.mrb[0].mxu0
  %3452 = vdwg.mxu0
  %3453 = vrot.lane.b32.xlu0 %v647, 64
  %v3454 = vpop.permute.xlu0 %3453
  %v3457 = vsel %vm2434, %v3145, 0
  %3459 = vmatprep.subr.bf16.mxu0 0
  %3460 = vmatpush1.bf16.msra.mxu0 %v3454
  %3461 = vmatprep.subr.bf16.mxu0 0
  %3462 = vmatpush1.bf16.msra.mxu0 0
  %3463 = vmatprep.subr.bf16.mxu0 0
  %3464 = vmatpush1.bf16.msra.mxu0 0
  %3465 = vmatprep.subr.bf16.mxu0 0
  %3466 = vmatpush1.bf16.msra.mxu0 0
  %3467 = vmatprep.subr.bf16.mxu0 0
  %3468 = vmatpush1.bf16.msra.mxu0 0
  %3469 = vmatprep.subr.bf16.mxu0 0
  %3470 = vmatpush1.bf16.msra.mxu0 0
  %3471 = vmatprep.subr.bf16.mxu0 0
  %3472 = vmatpush1.bf16.msra.mxu0 0
  %3473 = vmatprep.subr.bf16.mxu0 0
  %3474 = vmatpush1.bf16.msra.mxu0 0
  %3475 = vmatprep.subr.bf16.mxu0 0
  %3476 = vmatpush1.bf16.msra.mxu0 0
  %3477 = vmatprep.subr.bf16.mxu0 0
  %3478 = vmatpush1.bf16.msra.mxu0 0
  %3479 = vmatprep.subr.bf16.mxu0 0
  %3480 = vmatpush1.bf16.msra.mxu0 0
  %3481 = vmatprep.subr.bf16.mxu0 0
  %3482 = vmatpush1.bf16.msra.mxu0 0
  %3483 = vmatprep.subr.bf16.mxu0 0
  %3484 = vmatpush1.bf16.msra.mxu0 0
  %3485 = vmatprep.subr.bf16.mxu0 0
  %3486 = vmatpush1.bf16.msra.mxu0 0
  %3487 = vmatprep.subr.bf16.mxu0 0
  %3488 = vmatpush1.bf16.msra.mxu0 0
  %3489 = vmatprep.subr.bf16.mxu0 0
  %3490 = vmatpush1.bf16.msra.mxu0 0
  %3491 = vmatprep.mubr.bf16.mxu0 0
  %3492 = vmatmul.mubr.bf16.gmra.mrb[0].mxu0 %v3457
  %v3493 = vpop.f32.mrb[0].mxu0
  %v3494 = vadd.f32 0.0, %v3493
  %v3495 = vpop.f32.mrb[0].mxu0
  %v3496 = vpop.f32.mrb[0].mxu0
  %v3497 = vadd.f32 0.0, %v3496
  %v3498 = vpop.f32.mrb[0].mxu0
  %3499 = vdwg.mxu0
  %3500 = vrot.lane.b32.xlu0 %v648, 64
  %v3501 = vpop.permute.xlu0 %3500
  %v3504 = vsel %vm2434, %v3146, 0
  %3506 = vmatprep.subr.bf16.mxu0 0
  %3507 = vmatpush1.bf16.msra.mxu0 %v3501
  %3508 = vmatprep.subr.bf16.mxu0 0
  %3509 = vmatpush1.bf16.msra.mxu0 0
  %3510 = vmatprep.subr.bf16.mxu0 0
  %3511 = vmatpush1.bf16.msra.mxu0 0
  %3512 = vmatprep.subr.bf16.mxu0 0
  %3513 = vmatpush1.bf16.msra.mxu0 0
  %3514 = vmatprep.subr.bf16.mxu0 0
  %3515 = vmatpush1.bf16.msra.mxu0 0
  %3516 = vmatprep.subr.bf16.mxu0 0
  %3517 = vmatpush1.bf16.msra.mxu0 0
  %3518 = vmatprep.subr.bf16.mxu0 0
  %3519 = vmatpush1.bf16.msra.mxu0 0
  %3520 = vmatprep.subr.bf16.mxu0 0
  %3521 = vmatpush1.bf16.msra.mxu0 0
  %3522 = vmatprep.subr.bf16.mxu0 0
  %3523 = vmatpush1.bf16.msra.mxu0 0
  %3524 = vmatprep.subr.bf16.mxu0 0
  %3525 = vmatpush1.bf16.msra.mxu0 0
  %3526 = vmatprep.subr.bf16.mxu0 0
  %3527 = vmatpush1.bf16.msra.mxu0 0
  %3528 = vmatprep.subr.bf16.mxu0 0
  %3529 = vmatpush1.bf16.msra.mxu0 0
  %3530 = vmatprep.subr.bf16.mxu0 0
  %3531 = vmatpush1.bf16.msra.mxu0 0
  %3532 = vmatprep.subr.bf16.mxu0 0
  %3533 = vmatpush1.bf16.msra.mxu0 0
  %3534 = vmatprep.subr.bf16.mxu0 0
  %3535 = vmatpush1.bf16.msra.mxu0 0
  %3536 = vmatprep.subr.bf16.mxu0 0
  %3537 = vmatpush1.bf16.msra.mxu0 0
  %3538 = vmatprep.mubr.bf16.mxu0 0
  %3539 = vmatmul.mubr.bf16.gmra.mrb[0].mxu0 %v3504
  %v3540 = vpop.f32.mrb[0].mxu0
  %v3541 = vadd.f32 0.0, %v3540
  %v3542 = vpop.f32.mrb[0].mxu0
  %v3543 = vpop.f32.mrb[0].mxu0
  %v3544 = vadd.f32 0.0, %v3543
  %v3545 = vpop.f32.mrb[0].mxu0
  %3546 = vdwg.mxu0
  %3547 = vrot.lane.b32.xlu0 %v649, 64
  %v3548 = vpop.permute.xlu0 %3547
  %v3551 = vsel %vm2434, %v3147, 0
  %3553 = vmatprep.subr.bf16.mxu0 0
  %3554 = vmatpush1.bf16.msra.mxu0 %v3548
  %3555 = vmatprep.subr.bf16.mxu0 0
  %3556 = vmatpush1.bf16.msra.mxu0 0
  %3557 = vmatprep.subr.bf16.mxu0 0
  %3558 = vmatpush1.bf16.msra.mxu0 0
  %3559 = vmatprep.subr.bf16.mxu0 0
  %3560 = vmatpush1.bf16.msra.mxu0 0
  %3561 = vmatprep.subr.bf16.mxu0 0
  %3562 = vmatpush1.bf16.msra.mxu0 0
  %3563 = vmatprep.subr.bf16.mxu0 0
  %3564 = vmatpush1.bf16.msra.mxu0 0
  %3565 = vmatprep.subr.bf16.mxu0 0
  %3566 = vmatpush1.bf16.msra.mxu0 0
  %3567 = vmatprep.subr.bf16.mxu0 0
  %3568 = vmatpush1.bf16.msra.mxu0 0
  %3569 = vmatprep.subr.bf16.mxu0 0
  %3570 = vmatpush1.bf16.msra.mxu0 0
  %3571 = vmatprep.subr.bf16.mxu0 0
  %3572 = vmatpush1.bf16.msra.mxu0 0
  %3573 = vmatprep.subr.bf16.mxu0 0
  %3574 = vmatpush1.bf16.msra.mxu0 0
  %3575 = vmatprep.subr.bf16.mxu0 0
  %3576 = vmatpush1.bf16.msra.mxu0 0
  %3577 = vmatprep.subr.bf16.mxu0 0
  %3578 = vmatpush1.bf16.msra.mxu0 0
  %3579 = vmatprep.subr.bf16.mxu0 0
  %3580 = vmatpush1.bf16.msra.mxu0 0
  %3581 = vmatprep.subr.bf16.mxu0 0
  %3582 = vmatpush1.bf16.msra.mxu0 0
  %3583 = vmatprep.subr.bf16.mxu0 0
  %3584 = vmatpush1.bf16.msra.mxu0 0
  %3585 = vmatprep.mubr.bf16.mxu0 0
  %3586 = vmatmul.mubr.bf16.gmra.mrb[0].mxu0 %v3551
  %v3587 = vpop.f32.mrb[0].mxu0
  %v3588 = vadd.f32 0.0, %v3587
  %v3589 = vpop.f32.mrb[0].mxu0
  %v3590 = vpop.f32.mrb[0].mxu0
  %v3591 = vadd.f32 0.0, %v3590
  %v3592 = vpop.f32.mrb[0].mxu0
  %3593 = vdwg.mxu0
  %3594 = vrot.lane.b32.xlu0 %v650, 64
  %v3595 = vpop.permute.xlu0 %3594
  %v3598 = vsel %vm2434, %v3148, 0
  %3600 = vmatprep.subr.bf16.mxu0 0
  %3601 = vmatpush1.bf16.msra.mxu0 %v3595
  %3602 = vmatprep.subr.bf16.mxu0 0
  %3603 = vmatpush1.bf16.msra.mxu0 0
  %3604 = vmatprep.subr.bf16.mxu0 0
  %3605 = vmatpush1.bf16.msra.mxu0 0
  %3606 = vmatprep.subr.bf16.mxu0 0
  %3607 = vmatpush1.bf16.msra.mxu0 0
  %3608 = vmatprep.subr.bf16.mxu0 0
  %3609 = vmatpush1.bf16.msra.mxu0 0
  %3610 = vmatprep.subr.bf16.mxu0 0
  %3611 = vmatpush1.bf16.msra.mxu0 0
  %3612 = vmatprep.subr.bf16.mxu0 0
  %3613 = vmatpush1.bf16.msra.mxu0 0
  %3614 = vmatprep.subr.bf16.mxu0 0
  %3615 = vmatpush1.bf16.msra.mxu0 0
  %3616 = vmatprep.subr.bf16.mxu0 0
  %3617 = vmatpush1.bf16.msra.mxu0 0
  %3618 = vmatprep.subr.bf16.mxu0 0
  %3619 = vmatpush1.bf16.msra.mxu0 0
  %3620 = vmatprep.subr.bf16.mxu0 0
  %3621 = vmatpush1.bf16.msra.mxu0 0
  %3622 = vmatprep.subr.bf16.mxu0 0
  %3623 = vmatpush1.bf16.msra.mxu0 0
  %3624 = vmatprep.subr.bf16.mxu0 0
  %3625 = vmatpush1.bf16.msra.mxu0 0
  %3626 = vmatprep.subr.bf16.mxu0 0
  %3627 = vmatpush1.bf16.msra.mxu0 0
  %3628 = vmatprep.subr.bf16.mxu0 0
  %3629 = vmatpush1.bf16.msra.mxu0 0
  %3630 = vmatprep.subr.bf16.mxu0 0
  %3631 = vmatpush1.bf16.msra.mxu0 0
  %3632 = vmatprep.mubr.bf16.mxu0 0
  %3633 = vmatmul.mubr.bf16.gmra.mrb[0].mxu0 %v3598
  %v3634 = vpop.f32.mrb[0].mxu0
  %v3635 = vadd.f32 0.0, %v3634
  %v3636 = vpop.f32.mrb[0].mxu0
  %v3637 = vpop.f32.mrb[0].mxu0
  %v3638 = vadd.f32 0.0, %v3637
  %v3639 = vpop.f32.mrb[0].mxu0
  %3640 = vdwg.mxu0
  %3641 = vrot.lane.b32.xlu0 %v651, 64
  %v3642 = vpop.permute.xlu0 %3641
  %v3645 = vsel %vm2434, %v3149, 0
  %3647 = vmatprep.subr.bf16.mxu0 0
  %3648 = vmatpush1.bf16.msra.mxu0 %v3642
  %3649 = vmatprep.subr.bf16.mxu0 0
  %3650 = vmatpush1.bf16.msra.mxu0 0
  %3651 = vmatprep.subr.bf16.mxu0 0
  %3652 = vmatpush1.bf16.msra.mxu0 0
  %3653 = vmatprep.subr.bf16.mxu0 0
  %3654 = vmatpush1.bf16.msra.mxu0 0
  %3655 = vmatprep.subr.bf16.mxu0 0
  %3656 = vmatpush1.bf16.msra.mxu0 0
  %3657 = vmatprep.subr.bf16.mxu0 0
  %3658 = vmatpush1.bf16.msra.mxu0 0
  %3659 = vmatprep.subr.bf16.mxu0 0
  %3660 = vmatpush1.bf16.msra.mxu0 0
  %3661 = vmatprep.subr.bf16.mxu0 0
  %3662 = vmatpush1.bf16.msra.mxu0 0
  %3663 = vmatprep.subr.bf16.mxu0 0
  %3664 = vmatpush1.bf16.msra.mxu0 0
  %3665 = vmatprep.subr.bf16.mxu0 0
  %3666 = vmatpush1.bf16.msra.mxu0 0
  %3667 = vmatprep.subr.bf16.mxu0 0
  %3668 = vmatpush1.bf16.msra.mxu0 0
  %3669 = vmatprep.subr.bf16.mxu0 0
  %3670 = vmatpush1.bf16.msra.mxu0 0
  %3671 = vmatprep.subr.bf16.mxu0 0
  %3672 = vmatpush1.bf16.msra.mxu0 0
  %3673 = vmatprep.subr.bf16.mxu0 0
  %3674 = vmatpush1.bf16.msra.mxu0 0
  %3675 = vmatprep.subr.bf16.mxu0 0
  %3676 = vmatpush1.bf16.msra.mxu0 0
  %3677 = vmatprep.subr.bf16.mxu0 0
  %3678 = vmatpush1.bf16.msra.mxu0 0
  %3679 = vmatprep.mubr.bf16.mxu0 0
  %3680 = vmatmul.mubr.bf16.gmra.mrb[0].mxu0 %v3645
  %v3681 = vpop.f32.mrb[0].mxu0
  %v3682 = vadd.f32 0.0, %v3681
  %v3683 = vpop.f32.mrb[0].mxu0
  %v3684 = vpop.f32.mrb[0].mxu0
  %v3685 = vadd.f32 0.0, %v3684
  %v3686 = vpop.f32.mrb[0].mxu0
  %3687 = vdwg.mxu0
  %3688 = vrot.lane.b32.xlu0 %v652, 64
  %v3689 = vpop.permute.xlu0 %3688
  %v3692 = vsel %vm2434, %v3150, 0
  %3694 = vmatprep.subr.bf16.mxu0 0
  %3695 = vmatpush1.bf16.msra.mxu0 %v3689
  %3696 = vmatprep.subr.bf16.mxu0 0
  %3697 = vmatpush1.bf16.msra.mxu0 0
  %3698 = vmatprep.subr.bf16.mxu0 0
  %3699 = vmatpush1.bf16.msra.mxu0 0
  %3700 = vmatprep.subr.bf16.mxu0 0
  %3701 = vmatpush1.bf16.msra.mxu0 0
  %3702 = vmatprep.subr.bf16.mxu0 0
  %3703 = vmatpush1.bf16.msra.mxu0 0
  %3704 = vmatprep.subr.bf16.mxu0 0
  %3705 = vmatpush1.bf16.msra.mxu0 0
  %3706 = vmatprep.subr.bf16.mxu0 0
  %3707 = vmatpush1.bf16.msra.mxu0 0
  %3708 = vmatprep.subr.bf16.mxu0 0
  %3709 = vmatpush1.bf16.msra.mxu0 0
  %3710 = vmatprep.subr.bf16.mxu0 0
  %3711 = vmatpush1.bf16.msra.mxu0 0
  %3712 = vmatprep.subr.bf16.mxu0 0
  %3713 = vmatpush1.bf16.msra.mxu0 0
  %3714 = vmatprep.subr.bf16.mxu0 0
  %3715 = vmatpush1.bf16.msra.mxu0 0
  %3716 = vmatprep.subr.bf16.mxu0 0
  %3717 = vmatpush1.bf16.msra.mxu0 0
  %3718 = vmatprep.subr.bf16.mxu0 0
  %3719 = vmatpush1.bf16.msra.mxu0 0
  %3720 = vmatprep.subr.bf16.mxu0 0
  %3721 = vmatpush1.bf16.msra.mxu0 0
  %3722 = vmatprep.subr.bf16.mxu0 0
  %3723 = vmatpush1.bf16.msra.mxu0 0
  %3724 = vmatprep.subr.bf16.mxu0 0
  %3725 = vmatpush1.bf16.msra.mxu0 0
  %3726 = vmatprep.mubr.bf16.mxu0 0
  %3727 = vmatmul.mubr.bf16.gmra.mrb[0].mxu0 %v3692
  %v3728 = vpop.f32.mrb[0].mxu0
  %v3729 = vadd.f32 0.0, %v3728
  %v3730 = vpop.f32.mrb[0].mxu0
  %v3731 = vpop.f32.mrb[0].mxu0
  %v3732 = vadd.f32 0.0, %v3731
  %v3733 = vpop.f32.mrb[0].mxu0
  %3734 = vdwg.mxu0
  %3735 = vrot.lane.b32.xlu0 %v653, 64
  %v3736 = vpop.permute.xlu0 %3735
  %v3739 = vsel %vm2434, %v3151, 0
  %3741 = vmatprep.subr.bf16.mxu0 0
  %3742 = vmatpush1.bf16.msra.mxu0 %v3736
  %3743 = vmatprep.subr.bf16.mxu0 0
  %3744 = vmatpush1.bf16.msra.mxu0 0
  %3745 = vmatprep.subr.bf16.mxu0 0
  %3746 = vmatpush1.bf16.msra.mxu0 0
  %3747 = vmatprep.subr.bf16.mxu0 0
  %3748 = vmatpush1.bf16.msra.mxu0 0
  %3749 = vmatprep.subr.bf16.mxu0 0
  %3750 = vmatpush1.bf16.msra.mxu0 0
  %3751 = vmatprep.subr.bf16.mxu0 0
  %3752 = vmatpush1.bf16.msra.mxu0 0
  %3753 = vmatprep.subr.bf16.mxu0 0
  %3754 = vmatpush1.bf16.msra.mxu0 0
  %3755 = vmatprep.subr.bf16.mxu0 0
  %3756 = vmatpush1.bf16.msra.mxu0 0
  %3757 = vmatprep.subr.bf16.mxu0 0
  %3758 = vmatpush1.bf16.msra.mxu0 0
  %3759 = vmatprep.subr.bf16.mxu0 0
  %3760 = vmatpush1.bf16.msra.mxu0 0
  %3761 = vmatprep.subr.bf16.mxu0 0
  %3762 = vmatpush1.bf16.msra.mxu0 0
  %3763 = vmatprep.subr.bf16.mxu0 0
  %3764 = vmatpush1.bf16.msra.mxu0 0
  %3765 = vmatprep.subr.bf16.mxu0 0
  %3766 = vmatpush1.bf16.msra.mxu0 0
  %3767 = vmatprep.subr.bf16.mxu0 0
  %3768 = vmatpush1.bf16.msra.mxu0 0
  %3769 = vmatprep.subr.bf16.mxu0 0
  %3770 = vmatpush1.bf16.msra.mxu0 0
  %3771 = vmatprep.subr.bf16.mxu0 0
  %3772 = vmatpush1.bf16.msra.mxu0 0
  %3773 = vmatprep.mubr.bf16.mxu0 0
  %3774 = vmatmul.mubr.bf16.gmra.mrb[0].mxu0 %v3739
  %v3775 = vpop.f32.mrb[0].mxu0
  %v3776 = vadd.f32 0.0, %v3775
  %v3777 = vpop.f32.mrb[0].mxu0
  %v3778 = vpop.f32.mrb[0].mxu0
  %v3779 = vadd.f32 0.0, %v3778
  %v3780 = vpop.f32.mrb[0].mxu0
  %3781 = vdwg.mxu0
  %3782 = vrot.lane.b32.xlu0 %v654, 64
  %v3783 = vpop.permute.xlu0 %3782
  %v3786 = vsel %vm2434, %v3152, 0
  %3788 = vmatprep.subr.bf16.mxu0 0
  %3789 = vmatpush1.bf16.msra.mxu0 %v3783
  %3790 = vmatprep.subr.bf16.mxu0 0
  %3791 = vmatpush1.bf16.msra.mxu0 0
  %3792 = vmatprep.subr.bf16.mxu0 0
  %3793 = vmatpush1.bf16.msra.mxu0 0
  %3794 = vmatprep.subr.bf16.mxu0 0
  %3795 = vmatpush1.bf16.msra.mxu0 0
  %3796 = vmatprep.subr.bf16.mxu0 0
  %3797 = vmatpush1.bf16.msra.mxu0 0
  %3798 = vmatprep.subr.bf16.mxu0 0
  %3799 = vmatpush1.bf16.msra.mxu0 0
  %3800 = vmatprep.subr.bf16.mxu0 0
  %3801 = vmatpush1.bf16.msra.mxu0 0
  %3802 = vmatprep.subr.bf16.mxu0 0
  %3803 = vmatpush1.bf16.msra.mxu0 0
  %3804 = vmatprep.subr.bf16.mxu0 0
  %3805 = vmatpush1.bf16.msra.mxu0 0
  %3806 = vmatprep.subr.bf16.mxu0 0
  %3807 = vmatpush1.bf16.msra.mxu0 0
  %3808 = vmatprep.subr.bf16.mxu0 0
  %3809 = vmatpush1.bf16.msra.mxu0 0
  %3810 = vmatprep.subr.bf16.mxu0 0
  %3811 = vmatpush1.bf16.msra.mxu0 0
  %3812 = vmatprep.subr.bf16.mxu0 0
  %3813 = vmatpush1.bf16.msra.mxu0 0
  %3814 = vmatprep.subr.bf16.mxu0 0
  %3815 = vmatpush1.bf16.msra.mxu0 0
  %3816 = vmatprep.subr.bf16.mxu0 0
  %3817 = vmatpush1.bf16.msra.mxu0 0
  %3818 = vmatprep.subr.bf16.mxu0 0
  %3819 = vmatpush1.bf16.msra.mxu0 0
  %3820 = vmatprep.mubr.bf16.mxu0 0
  %3821 = vmatmul.mubr.bf16.gmra.mrb[0].mxu0 %v3786
  %v3822 = vpop.f32.mrb[0].mxu0
  %v3823 = vadd.f32 0.0, %v3822
  %v3824 = vpop.f32.mrb[0].mxu0
  %v3825 = vpop.f32.mrb[0].mxu0
  %v3826 = vadd.f32 0.0, %v3825
  %v3827 = vpop.f32.mrb[0].mxu0
  %3828 = vdwg.mxu0
  %3829 = vrot.lane.b32.xlu0 %v655, 64
  %v3830 = vpop.permute.xlu0 %3829
  %v3833 = vsel %vm2434, %v3153, 0
  %3835 = vmatprep.subr.bf16.mxu0 0
  %3836 = vmatpush1.bf16.msra.mxu0 %v3830
  %3837 = vmatprep.subr.bf16.mxu0 0
  %3838 = vmatpush1.bf16.msra.mxu0 0
  %3839 = vmatprep.subr.bf16.mxu0 0
  %3840 = vmatpush1.bf16.msra.mxu0 0
  %3841 = vmatprep.subr.bf16.mxu0 0
  %3842 = vmatpush1.bf16.msra.mxu0 0
  %3843 = vmatprep.subr.bf16.mxu0 0
  %3844 = vmatpush1.bf16.msra.mxu0 0
  %3845 = vmatprep.subr.bf16.mxu0 0
  %3846 = vmatpush1.bf16.msra.mxu0 0
  %3847 = vmatprep.subr.bf16.mxu0 0
  %3848 = vmatpush1.bf16.msra.mxu0 0
  %3849 = vmatprep.subr.bf16.mxu0 0
  %3850 = vmatpush1.bf16.msra.mxu0 0
  %3851 = vmatprep.subr.bf16.mxu0 0
  %3852 = vmatpush1.bf16.msra.mxu0 0
  %3853 = vmatprep.subr.bf16.mxu0 0
  %3854 = vmatpush1.bf16.msra.mxu0 0
  %3855 = vmatprep.subr.bf16.mxu0 0
  %3856 = vmatpush1.bf16.msra.mxu0 0
  %3857 = vmatprep.subr.bf16.mxu0 0
  %3858 = vmatpush1.bf16.msra.mxu0 0
  %3859 = vmatprep.subr.bf16.mxu0 0
  %3860 = vmatpush1.bf16.msra.mxu0 0
  %3861 = vmatprep.subr.bf16.mxu0 0
  %3862 = vmatpush1.bf16.msra.mxu0 0
  %3863 = vmatprep.subr.bf16.mxu0 0
  %3864 = vmatpush1.bf16.msra.mxu0 0
  %3865 = vmatprep.subr.bf16.mxu0 0
  %3866 = vmatpush1.bf16.msra.mxu0 0
  %3867 = vmatprep.mubr.bf16.mxu0 0
  %3868 = vmatmul.mubr.bf16.gmra.mrb[0].mxu0 %v3833
  %v3869 = vpop.f32.mrb[0].mxu0
  %v3870 = vadd.f32 0.0, %v3869
  %v3871 = vpop.f32.mrb[0].mxu0
  %v3872 = vpop.f32.mrb[0].mxu0
  %v3873 = vadd.f32 0.0, %v3872
  %v3874 = vpop.f32.mrb[0].mxu0
  %3875 = vdwg.mxu0
  %3876 = vrot.lane.b32.xlu0 %v656, 64
  %v3877 = vpop.permute.xlu0 %3876
  %v3880 = vsel %vm2434, %v3154, 0
  %3882 = vmatprep.subr.bf16.mxu0 0
  %3883 = vmatpush1.bf16.msra.mxu0 %v3877
  %3884 = vmatprep.subr.bf16.mxu0 0
  %3885 = vmatpush1.bf16.msra.mxu0 0
  %3886 = vmatprep.subr.bf16.mxu0 0
  %3887 = vmatpush1.bf16.msra.mxu0 0
  %3888 = vmatprep.subr.bf16.mxu0 0
  %3889 = vmatpush1.bf16.msra.mxu0 0
  %3890 = vmatprep.subr.bf16.mxu0 0
  %3891 = vmatpush1.bf16.msra.mxu0 0
  %3892 = vmatprep.subr.bf16.mxu0 0
  %3893 = vmatpush1.bf16.msra.mxu0 0
  %3894 = vmatprep.subr.bf16.mxu0 0
  %3895 = vmatpush1.bf16.msra.mxu0 0
  %3896 = vmatprep.subr.bf16.mxu0 0
  %3897 = vmatpush1.bf16.msra.mxu0 0
  %3898 = vmatprep.subr.bf16.mxu0 0
  %3899 = vmatpush1.bf16.msra.mxu0 0
  %3900 = vmatprep.subr.bf16.mxu0 0
  %3901 = vmatpush1.bf16.msra.mxu0 0
  %3902 = vmatprep.subr.bf16.mxu0 0
  %3903 = vmatpush1.bf16.msra.mxu0 0
  %3904 = vmatprep.subr.bf16.mxu0 0
  %3905 = vmatpush1.bf16.msra.mxu0 0
  %3906 = vmatprep.subr.bf16.mxu0 0
  %3907 = vmatpush1.bf16.msra.mxu0 0
  %3908 = vmatprep.subr.bf16.mxu0 0
  %3909 = vmatpush1.bf16.msra.mxu0 0
  %3910 = vmatprep.subr.bf16.mxu0 0
  %3911 = vmatpush1.bf16.msra.mxu0 0
  %3912 = vmatprep.subr.bf16.mxu0 0
  %3913 = vmatpush1.bf16.msra.mxu0 0
  %3914 = vmatprep.mubr.bf16.mxu0 0
  %3915 = vmatmul.mubr.bf16.gmra.mrb[0].mxu0 %v3880
  %v3916 = vpop.f32.mrb[0].mxu0
  %v3917 = vadd.f32 0.0, %v3916
  %v3918 = vpop.f32.mrb[0].mxu0
  %v3919 = vpop.f32.mrb[0].mxu0
  %v3920 = vadd.f32 0.0, %v3919
  %v3921 = vpop.f32.mrb[0].mxu0
  %3922 = vdwg.mxu0
  %3923 = vrot.lane.b32.xlu0 %v657, 64
  %v3924 = vpop.permute.xlu0 %3923
  %v3927 = vsel %vm2434, %v3155, 0
  %3929 = vmatprep.subr.bf16.mxu0 0
  %3930 = vmatpush1.bf16.msra.mxu0 %v3924
  %3931 = vmatprep.subr.bf16.mxu0 0
  %3932 = vmatpush1.bf16.msra.mxu0 0
  %3933 = vmatprep.subr.bf16.mxu0 0
  %3934 = vmatpush1.bf16.msra.mxu0 0
  %3935 = vmatprep.subr.bf16.mxu0 0
  %3936 = vmatpush1.bf16.msra.mxu0 0
  %3937 = vmatprep.subr.bf16.mxu0 0
  %3938 = vmatpush1.bf16.msra.mxu0 0
  %3939 = vmatprep.subr.bf16.mxu0 0
  %3940 = vmatpush1.bf16.msra.mxu0 0
  %3941 = vmatprep.subr.bf16.mxu0 0
  %3942 = vmatpush1.bf16.msra.mxu0 0
  %3943 = vmatprep.subr.bf16.mxu0 0
  %3944 = vmatpush1.bf16.msra.mxu0 0
  %3945 = vmatprep.subr.bf16.mxu0 0
  %3946 = vmatpush1.bf16.msra.mxu0 0
  %3947 = vmatprep.subr.bf16.mxu0 0
  %3948 = vmatpush1.bf16.msra.mxu0 0
  %3949 = vmatprep.subr.bf16.mxu0 0
  %3950 = vmatpush1.bf16.msra.mxu0 0
  %3951 = vmatprep.subr.bf16.mxu0 0
  %3952 = vmatpush1.bf16.msra.mxu0 0
  %3953 = vmatprep.subr.bf16.mxu0 0
  %3954 = vmatpush1.bf16.msra.mxu0 0
  %3955 = vmatprep.subr.bf16.mxu0 0
  %3956 = vmatpush1.bf16.msra.mxu0 0
  %3957 = vmatprep.subr.bf16.mxu0 0
  %3958 = vmatpush1.bf16.msra.mxu0 0
  %3959 = vmatprep.subr.bf16.mxu0 0
  %3960 = vmatpush1.bf16.msra.mxu0 0
  %3961 = vmatprep.mubr.bf16.mxu0 0
  %3962 = vmatmul.mubr.bf16.gmra.mrb[0].mxu0 %v3927
  %v3963 = vpop.f32.mrb[0].mxu0
  %v3964 = vadd.f32 0.0, %v3963
  %v3965 = vpop.f32.mrb[0].mxu0
  %v3966 = vpop.f32.mrb[0].mxu0
  %v3967 = vadd.f32 0.0, %v3966
  %v3968 = vpop.f32.mrb[0].mxu0
  %3969 = vdwg.mxu0
  %3970 = vrot.lane.b32.xlu0 %v658, 64
  %v3971 = vpop.permute.xlu0 %3970
  %v3974 = vsel %vm2434, %v3156, 0
  %3976 = vmatprep.subr.bf16.mxu0 0
  %3977 = vmatpush1.bf16.msra.mxu0 %v3971
  %3978 = vmatprep.subr.bf16.mxu0 0
  %3979 = vmatpush1.bf16.msra.mxu0 0
  %3980 = vmatprep.subr.bf16.mxu0 0
  %3981 = vmatpush1.bf16.msra.mxu0 0
  %3982 = vmatprep.subr.bf16.mxu0 0
  %3983 = vmatpush1.bf16.msra.mxu0 0
  %3984 = vmatprep.subr.bf16.mxu0 0
  %3985 = vmatpush1.bf16.msra.mxu0 0
  %3986 = vmatprep.subr.bf16.mxu0 0
  %3987 = vmatpush1.bf16.msra.mxu0 0
  %3988 = vmatprep.subr.bf16.mxu0 0
  %3989 = vmatpush1.bf16.msra.mxu0 0
  %3990 = vmatprep.subr.bf16.mxu0 0
  %3991 = vmatpush1.bf16.msra.mxu0 0
  %3992 = vmatprep.subr.bf16.mxu0 0
  %3993 = vmatpush1.bf16.msra.mxu0 0
  %3994 = vmatprep.subr.bf16.mxu0 0
  %3995 = vmatpush1.bf16.msra.mxu0 0
  %3996 = vmatprep.subr.bf16.mxu0 0
  %3997 = vmatpush1.bf16.msra.mxu0 0
  %3998 = vmatprep.subr.bf16.mxu0 0
  %3999 = vmatpush1.bf16.msra.mxu0 0
  %4000 = vmatprep.subr.bf16.mxu0 0
  %4001 = vmatpush1.bf16.msra.mxu0 0
  %4002 = vmatprep.subr.bf16.mxu0 0
  %4003 = vmatpush1.bf16.msra.mxu0 0
  %4004 = vmatprep.subr.bf16.mxu0 0
  %4005 = vmatpush1.bf16.msra.mxu0 0
  %4006 = vmatprep.subr.bf16.mxu0 0
  %4007 = vmatpush1.bf16.msra.mxu0 0
  %4008 = vmatprep.mubr.bf16.mxu0 0
  %4009 = vmatmul.mubr.bf16.gmra.mrb[0].mxu0 %v3974
  %v4010 = vpop.f32.mrb[0].mxu0
  %v4011 = vadd.f32 0.0, %v4010
  %v4012 = vpop.f32.mrb[0].mxu0
  %v4013 = vpop.f32.mrb[0].mxu0
  %v4014 = vadd.f32 0.0, %v4013
  %v4015 = vpop.f32.mrb[0].mxu0
  %4016 = vdwg.mxu0
  %4017 = vrot.lane.b32.xlu0 %v659, 64
  %v4018 = vpop.permute.xlu0 %4017
  %v4021 = vsel %vm2434, %v3157, 0
  %4023 = vmatprep.subr.bf16.mxu0 0
  %4024 = vmatpush1.bf16.msra.mxu0 %v4018
  %4025 = vmatprep.subr.bf16.mxu0 0
  %4026 = vmatpush1.bf16.msra.mxu0 0
  %4027 = vmatprep.subr.bf16.mxu0 0
  %4028 = vmatpush1.bf16.msra.mxu0 0
  %4029 = vmatprep.subr.bf16.mxu0 0
  %4030 = vmatpush1.bf16.msra.mxu0 0
  %4031 = vmatprep.subr.bf16.mxu0 0
  %4032 = vmatpush1.bf16.msra.mxu0 0
  %4033 = vmatprep.subr.bf16.mxu0 0
  %4034 = vmatpush1.bf16.msra.mxu0 0
  %4035 = vmatprep.subr.bf16.mxu0 0
  %4036 = vmatpush1.bf16.msra.mxu0 0
  %4037 = vmatprep.subr.bf16.mxu0 0
  %4038 = vmatpush1.bf16.msra.mxu0 0
  %4039 = vmatprep.subr.bf16.mxu0 0
  %4040 = vmatpush1.bf16.msra.mxu0 0
  %4041 = vmatprep.subr.bf16.mxu0 0
  %4042 = vmatpush1.bf16.msra.mxu0 0
  %4043 = vmatprep.subr.bf16.mxu0 0
  %4044 = vmatpush1.bf16.msra.mxu0 0
  %4045 = vmatprep.subr.bf16.mxu0 0
  %4046 = vmatpush1.bf16.msra.mxu0 0
  %4047 = vmatprep.subr.bf16.mxu0 0
  %4048 = vmatpush1.bf16.msra.mxu0 0
  %4049 = vmatprep.subr.bf16.mxu0 0
  %4050 = vmatpush1.bf16.msra.mxu0 0
  %4051 = vmatprep.subr.bf16.mxu0 0
  %4052 = vmatpush1.bf16.msra.mxu0 0
  %4053 = vmatprep.subr.bf16.mxu0 0
  %4054 = vmatpush1.bf16.msra.mxu0 0
  %4055 = vmatprep.mubr.bf16.mxu0 0
  %4056 = vmatmul.mubr.bf16.gmra.mrb[0].mxu0 %v4021
  %v4057 = vpop.f32.mrb[0].mxu0
  %v4058 = vadd.f32 0.0, %v4057
  %v4059 = vpop.f32.mrb[0].mxu0
  %v4060 = vpop.f32.mrb[0].mxu0
  %v4061 = vadd.f32 0.0, %v4060
  %v4062 = vpop.f32.mrb[0].mxu0
  %4063 = vdwg.mxu0
  %4064 = vrot.lane.b32.xlu0 %v660, 64
  %v4065 = vpop.permute.xlu0 %4064
  %v4068 = vsel %vm2434, %v3158, 0
  %4070 = vmatprep.subr.bf16.mxu0 0
  %4071 = vmatpush1.bf16.msra.mxu0 %v4065
  %4072 = vmatprep.subr.bf16.mxu0 0
  %4073 = vmatpush1.bf16.msra.mxu0 0
  %4074 = vmatprep.subr.bf16.mxu0 0
  %4075 = vmatpush1.bf16.msra.mxu0 0
  %4076 = vmatprep.subr.bf16.mxu0 0
  %4077 = vmatpush1.bf16.msra.mxu0 0
  %4078 = vmatprep.subr.bf16.mxu0 0
  %4079 = vmatpush1.bf16.msra.mxu0 0
  %4080 = vmatprep.subr.bf16.mxu0 0
  %4081 = vmatpush1.bf16.msra.mxu0 0
  %4082 = vmatprep.subr.bf16.mxu0 0
  %4083 = vmatpush1.bf16.msra.mxu0 0
  %4084 = vmatprep.subr.bf16.mxu0 0
  %4085 = vmatpush1.bf16.msra.mxu0 0
  %4086 = vmatprep.subr.bf16.mxu0 0
  %4087 = vmatpush1.bf16.msra.mxu0 0
  %4088 = vmatprep.subr.bf16.mxu0 0
  %4089 = vmatpush1.bf16.msra.mxu0 0
  %4090 = vmatprep.subr.bf16.mxu0 0
  %4091 = vmatpush1.bf16.msra.mxu0 0
  %4092 = vmatprep.subr.bf16.mxu0 0
  %4093 = vmatpush1.bf16.msra.mxu0 0
  %4094 = vmatprep.subr.bf16.mxu0 0
  %4095 = vmatpush1.bf16.msra.mxu0 0
  %4096 = vmatprep.subr.bf16.mxu0 0
  %4097 = vmatpush1.bf16.msra.mxu0 0
  %4098 = vmatprep.subr.bf16.mxu0 0
  %4099 = vmatpush1.bf16.msra.mxu0 0
  %4100 = vmatprep.subr.bf16.mxu0 0
  %4101 = vmatpush1.bf16.msra.mxu0 0
  %4102 = vmatprep.mubr.bf16.mxu0 0
  %4103 = vmatmul.mubr.bf16.gmra.mrb[0].mxu0 %v4068
  %v4104 = vpop.f32.mrb[0].mxu0
  %v4105 = vadd.f32 0.0, %v4104
  %v4106 = vpop.f32.mrb[0].mxu0
  %v4107 = vpop.f32.mrb[0].mxu0
  %v4108 = vadd.f32 0.0, %v4107
  %v4109 = vpop.f32.mrb[0].mxu0
  %4110 = vdwg.mxu0
  %4111 = vrot.lane.b32.xlu0 %v661, 64
  %v4112 = vpop.permute.xlu0 %4111
  %v4115 = vsel %vm2434, %v3159, 0
  %4117 = vmatprep.subr.bf16.mxu0 0
  %4118 = vmatpush1.bf16.msra.mxu0 %v4112
  %4119 = vmatprep.subr.bf16.mxu0 0
  %4120 = vmatpush1.bf16.msra.mxu0 0
  %4121 = vmatprep.subr.bf16.mxu0 0
  %4122 = vmatpush1.bf16.msra.mxu0 0
  %4123 = vmatprep.subr.bf16.mxu0 0
  %4124 = vmatpush1.bf16.msra.mxu0 0
  %4125 = vmatprep.subr.bf16.mxu0 0
  %4126 = vmatpush1.bf16.msra.mxu0 0
  %4127 = vmatprep.subr.bf16.mxu0 0
  %4128 = vmatpush1.bf16.msra.mxu0 0
  %4129 = vmatprep.subr.bf16.mxu0 0
  %4130 = vmatpush1.bf16.msra.mxu0 0
  %4131 = vmatprep.subr.bf16.mxu0 0
  %4132 = vmatpush1.bf16.msra.mxu0 0
  %4133 = vmatprep.subr.bf16.mxu0 0
  %4134 = vmatpush1.bf16.msra.mxu0 0
  %4135 = vmatprep.subr.bf16.mxu0 0
  %4136 = vmatpush1.bf16.msra.mxu0 0
  %4137 = vmatprep.subr.bf16.mxu0 0
  %4138 = vmatpush1.bf16.msra.mxu0 0
  %4139 = vmatprep.subr.bf16.mxu0 0
  %4140 = vmatpush1.bf16.msra.mxu0 0
  %4141 = vmatprep.subr.bf16.mxu0 0
  %4142 = vmatpush1.bf16.msra.mxu0 0
  %4143 = vmatprep.subr.bf16.mxu0 0
  %4144 = vmatpush1.bf16.msra.mxu0 0
  %4145 = vmatprep.subr.bf16.mxu0 0
  %4146 = vmatpush1.bf16.msra.mxu0 0
  %4147 = vmatprep.subr.bf16.mxu0 0
  %4148 = vmatpush1.bf16.msra.mxu0 0
  %4149 = vmatprep.mubr.bf16.mxu0 0
  %4150 = vmatmul.mubr.bf16.gmra.mrb[0].mxu0 %v4115
  %v4151 = vpop.f32.mrb[0].mxu0
  %v4152 = vadd.f32 0.0, %v4151
  %v4153 = vpop.f32.mrb[0].mxu0
  %v4154 = vpop.f32.mrb[0].mxu0
  %v4155 = vadd.f32 0.0, %v4154
  %v4156 = vpop.f32.mrb[0].mxu0
  %4157 = vdwg.mxu0
  %4158 = vrot.lane.b32.xlu0 %v662, 64
  %v4159 = vpop.permute.xlu0 %4158
  %v4162 = vsel %vm2434, %v3160, 0
  %4164 = vmatprep.subr.bf16.mxu0 0
  %4165 = vmatpush1.bf16.msra.mxu0 %v4159
  %4166 = vmatprep.subr.bf16.mxu0 0
  %4167 = vmatpush1.bf16.msra.mxu0 0
  %4168 = vmatprep.subr.bf16.mxu0 0
  %4169 = vmatpush1.bf16.msra.mxu0 0
  %4170 = vmatprep.subr.bf16.mxu0 0
  %4171 = vmatpush1.bf16.msra.mxu0 0
  %4172 = vmatprep.subr.bf16.mxu0 0
  %4173 = vmatpush1.bf16.msra.mxu0 0
  %4174 = vmatprep.subr.bf16.mxu0 0
  %4175 = vmatpush1.bf16.msra.mxu0 0
  %4176 = vmatprep.subr.bf16.mxu0 0
  %4177 = vmatpush1.bf16.msra.mxu0 0
  %4178 = vmatprep.subr.bf16.mxu0 0
  %4179 = vmatpush1.bf16.msra.mxu0 0
  %4180 = vmatprep.subr.bf16.mxu0 0
  %4181 = vmatpush1.bf16.msra.mxu0 0
  %4182 = vmatprep.subr.bf16.mxu0 0
  %4183 = vmatpush1.bf16.msra.mxu0 0
  %4184 = vmatprep.subr.bf16.mxu0 0
  %4185 = vmatpush1.bf16.msra.mxu0 0
  %4186 = vmatprep.subr.bf16.mxu0 0
  %4187 = vmatpush1.bf16.msra.mxu0 0
  %4188 = vmatprep.subr.bf16.mxu0 0
  %4189 = vmatpush1.bf16.msra.mxu0 0
  %4190 = vmatprep.subr.bf16.mxu0 0
  %4191 = vmatpush1.bf16.msra.mxu0 0
  %4192 = vmatprep.subr.bf16.mxu0 0
  %4193 = vmatpush1.bf16.msra.mxu0 0
  %4194 = vmatprep.subr.bf16.mxu0 0
  %4195 = vmatpush1.bf16.msra.mxu0 0
  %4196 = vmatprep.mubr.bf16.mxu0 0
  %4197 = vmatmul.mubr.bf16.gmra.mrb[0].mxu0 %v4162
  %v4198 = vpop.f32.mrb[0].mxu0
  %v4199 = vadd.f32 0.0, %v4198
  %v4200 = vpop.f32.mrb[0].mxu0
  %v4201 = vpop.f32.mrb[0].mxu0
  %v4202 = vadd.f32 0.0, %v4201
  %v4203 = vpop.f32.mrb[0].mxu0
  %4204 = vdwg.mxu0
  %4205 = vrot.lane.b32.xlu0 %v663, 64
  %v4206 = vpop.permute.xlu0 %4205
  %v4209 = vsel %vm2434, %v3161, 0
  %4211 = vmatprep.subr.bf16.mxu0 0
  %4212 = vmatpush1.bf16.msra.mxu0 %v4206
  %4213 = vmatprep.subr.bf16.mxu0 0
  %4214 = vmatpush1.bf16.msra.mxu0 0
  %4215 = vmatprep.subr.bf16.mxu0 0
  %4216 = vmatpush1.bf16.msra.mxu0 0
  %4217 = vmatprep.subr.bf16.mxu0 0
  %4218 = vmatpush1.bf16.msra.mxu0 0
  %4219 = vmatprep.subr.bf16.mxu0 0
  %4220 = vmatpush1.bf16.msra.mxu0 0
  %4221 = vmatprep.subr.bf16.mxu0 0
  %4222 = vmatpush1.bf16.msra.mxu0 0
  %4223 = vmatprep.subr.bf16.mxu0 0
  %4224 = vmatpush1.bf16.msra.mxu0 0
  %4225 = vmatprep.subr.bf16.mxu0 0
  %4226 = vmatpush1.bf16.msra.mxu0 0
  %4227 = vmatprep.subr.bf16.mxu0 0
  %4228 = vmatpush1.bf16.msra.mxu0 0
  %4229 = vmatprep.subr.bf16.mxu0 0
  %4230 = vmatpush1.bf16.msra.mxu0 0
  %4231 = vmatprep.subr.bf16.mxu0 0
  %4232 = vmatpush1.bf16.msra.mxu0 0
  %4233 = vmatprep.subr.bf16.mxu0 0
  %4234 = vmatpush1.bf16.msra.mxu0 0
  %4235 = vmatprep.subr.bf16.mxu0 0
  %4236 = vmatpush1.bf16.msra.mxu0 0
  %4237 = vmatprep.subr.bf16.mxu0 0
  %4238 = vmatpush1.bf16.msra.mxu0 0
  %4239 = vmatprep.subr.bf16.mxu0 0
  %4240 = vmatpush1.bf16.msra.mxu0 0
  %4241 = vmatprep.subr.bf16.mxu0 0
  %4242 = vmatpush1.bf16.msra.mxu0 0
  %4243 = vmatprep.mubr.bf16.mxu0 0
  %4244 = vmatmul.mubr.bf16.gmra.mrb[0].mxu0 %v4209
  %v4245 = vpop.f32.mrb[0].mxu0
  %v4246 = vadd.f32 0.0, %v4245
  %v4247 = vpop.f32.mrb[0].mxu0
  %v4248 = vpop.f32.mrb[0].mxu0
  %v4249 = vadd.f32 0.0, %v4248
  %v4250 = vpop.f32.mrb[0].mxu0
  %4251 = vdwg.mxu0
  %4252 = vrot.lane.b32.xlu0 %v664, 64
  %v4253 = vpop.permute.xlu0 %4252
  %v4256 = vsel %vm2434, %v3162, 0
  %4258 = vmatprep.subr.bf16.mxu0 0
  %4259 = vmatpush1.bf16.msra.mxu0 %v4253
  %4260 = vmatprep.subr.bf16.mxu0 0
  %4261 = vmatpush1.bf16.msra.mxu0 0
  %4262 = vmatprep.subr.bf16.mxu0 0
  %4263 = vmatpush1.bf16.msra.mxu0 0
  %4264 = vmatprep.subr.bf16.mxu0 0
  %4265 = vmatpush1.bf16.msra.mxu0 0
  %4266 = vmatprep.subr.bf16.mxu0 0
  %4267 = vmatpush1.bf16.msra.mxu0 0
  %4268 = vmatprep.subr.bf16.mxu0 0
  %4269 = vmatpush1.bf16.msra.mxu0 0
  %4270 = vmatprep.subr.bf16.mxu0 0
  %4271 = vmatpush1.bf16.msra.mxu0 0
  %4272 = vmatprep.subr.bf16.mxu0 0
  %4273 = vmatpush1.bf16.msra.mxu0 0
  %4274 = vmatprep.subr.bf16.mxu0 0
  %4275 = vmatpush1.bf16.msra.mxu0 0
  %4276 = vmatprep.subr.bf16.mxu0 0
  %4277 = vmatpush1.bf16.msra.mxu0 0
  %4278 = vmatprep.subr.bf16.mxu0 0
  %4279 = vmatpush1.bf16.msra.mxu0 0
  %4280 = vmatprep.subr.bf16.mxu0 0
  %4281 = vmatpush1.bf16.msra.mxu0 0
  %4282 = vmatprep.subr.bf16.mxu0 0
  %4283 = vmatpush1.bf16.msra.mxu0 0
  %4284 = vmatprep.subr.bf16.mxu0 0
  %4285 = vmatpush1.bf16.msra.mxu0 0
  %4286 = vmatprep.subr.bf16.mxu0 0
  %4287 = vmatpush1.bf16.msra.mxu0 0
  %4288 = vmatprep.subr.bf16.mxu0 0
  %4289 = vmatpush1.bf16.msra.mxu0 0
  %4290 = vmatprep.mubr.bf16.mxu0 0
  %4291 = vmatmul.mubr.bf16.gmra.mrb[0].mxu0 %v4256
  %v4292 = vpop.f32.mrb[0].mxu0
  %v4293 = vadd.f32 0.0, %v4292
  %v4294 = vpop.f32.mrb[0].mxu0
  %v4295 = vpop.f32.mrb[0].mxu0
  %v4296 = vadd.f32 0.0, %v4295
  %v4297 = vpop.f32.mrb[0].mxu0
  %4298 = vdwg.mxu0
  %4299 = vrot.lane.b32.xlu0 %v665, 64
  %v4300 = vpop.permute.xlu0 %4299
  %v4303 = vsel %vm2434, %v3163, 0
  %4305 = vmatprep.subr.bf16.mxu0 0
  %4306 = vmatpush1.bf16.msra.mxu0 %v4300
  %4307 = vmatprep.subr.bf16.mxu0 0
  %4308 = vmatpush1.bf16.msra.mxu0 0
  %4309 = vmatprep.subr.bf16.mxu0 0
  %4310 = vmatpush1.bf16.msra.mxu0 0
  %4311 = vmatprep.subr.bf16.mxu0 0
  %4312 = vmatpush1.bf16.msra.mxu0 0
  %4313 = vmatprep.subr.bf16.mxu0 0
  %4314 = vmatpush1.bf16.msra.mxu0 0
  %4315 = vmatprep.subr.bf16.mxu0 0
  %4316 = vmatpush1.bf16.msra.mxu0 0
  %4317 = vmatprep.subr.bf16.mxu0 0
  %4318 = vmatpush1.bf16.msra.mxu0 0
  %4319 = vmatprep.subr.bf16.mxu0 0
  %4320 = vmatpush1.bf16.msra.mxu0 0
  %4321 = vmatprep.subr.bf16.mxu0 0
  %4322 = vmatpush1.bf16.msra.mxu0 0
  %4323 = vmatprep.subr.bf16.mxu0 0
  %4324 = vmatpush1.bf16.msra.mxu0 0
  %4325 = vmatprep.subr.bf16.mxu0 0
  %4326 = vmatpush1.bf16.msra.mxu0 0
  %4327 = vmatprep.subr.bf16.mxu0 0
  %4328 = vmatpush1.bf16.msra.mxu0 0
  %4329 = vmatprep.subr.bf16.mxu0 0
  %4330 = vmatpush1.bf16.msra.mxu0 0
  %4331 = vmatprep.subr.bf16.mxu0 0
  %4332 = vmatpush1.bf16.msra.mxu0 0
  %4333 = vmatprep.subr.bf16.mxu0 0
  %4334 = vmatpush1.bf16.msra.mxu0 0
  %4335 = vmatprep.subr.bf16.mxu0 0
  %4336 = vmatpush1.bf16.msra.mxu0 0
  %4337 = vmatprep.mubr.bf16.mxu0 0
  %4338 = vmatmul.mubr.bf16.gmra.mrb[0].mxu0 %v4303
  %v4339 = vpop.f32.mrb[0].mxu0
  %v4340 = vadd.f32 0.0, %v4339
  %v4341 = vpop.f32.mrb[0].mxu0
  %v4342 = vpop.f32.mrb[0].mxu0
  %v4343 = vadd.f32 0.0, %v4342
  %v4344 = vpop.f32.mrb[0].mxu0
  %4345 = vdwg.mxu0
  %4346 = vrot.lane.b32.xlu0 %v666, 64
  %v4347 = vpop.permute.xlu0 %4346
  %v4350 = vsel %vm2434, %v3164, 0
  %4352 = vmatprep.subr.bf16.mxu0 0
  %4353 = vmatpush1.bf16.msra.mxu0 %v4347
  %4354 = vmatprep.subr.bf16.mxu0 0
  %4355 = vmatpush1.bf16.msra.mxu0 0
  %4356 = vmatprep.subr.bf16.mxu0 0
  %4357 = vmatpush1.bf16.msra.mxu0 0
  %4358 = vmatprep.subr.bf16.mxu0 0
  %4359 = vmatpush1.bf16.msra.mxu0 0
  %4360 = vmatprep.subr.bf16.mxu0 0
  %4361 = vmatpush1.bf16.msra.mxu0 0
  %4362 = vmatprep.subr.bf16.mxu0 0
  %4363 = vmatpush1.bf16.msra.mxu0 0
  %4364 = vmatprep.subr.bf16.mxu0 0
  %4365 = vmatpush1.bf16.msra.mxu0 0
  %4366 = vmatprep.subr.bf16.mxu0 0
  %4367 = vmatpush1.bf16.msra.mxu0 0
  %4368 = vmatprep.subr.bf16.mxu0 0
  %4369 = vmatpush1.bf16.msra.mxu0 0
  %4370 = vmatprep.subr.bf16.mxu0 0
  %4371 = vmatpush1.bf16.msra.mxu0 0
  %4372 = vmatprep.subr.bf16.mxu0 0
  %4373 = vmatpush1.bf16.msra.mxu0 0
  %4374 = vmatprep.subr.bf16.mxu0 0
  %4375 = vmatpush1.bf16.msra.mxu0 0
  %4376 = vmatprep.subr.bf16.mxu0 0
  %4377 = vmatpush1.bf16.msra.mxu0 0
  %4378 = vmatprep.subr.bf16.mxu0 0
  %4379 = vmatpush1.bf16.msra.mxu0 0
  %4380 = vmatprep.subr.bf16.mxu0 0
  %4381 = vmatpush1.bf16.msra.mxu0 0
  %4382 = vmatprep.subr.bf16.mxu0 0
  %4383 = vmatpush1.bf16.msra.mxu0 0
  %4384 = vmatprep.mubr.bf16.mxu0 0
  %4385 = vmatmul.mubr.bf16.gmra.mrb[0].mxu0 %v4350
  %v4386 = vpop.f32.mrb[0].mxu0
  %v4387 = vadd.f32 0.0, %v4386
  %v4388 = vpop.f32.mrb[0].mxu0
  %v4389 = vpop.f32.mrb[0].mxu0
  %v4390 = vadd.f32 0.0, %v4389
  %v4391 = vpop.f32.mrb[0].mxu0
  %4392 = vdwg.mxu0
  %4393 = vrot.lane.b32.xlu0 %v667, 64
  %v4394 = vpop.permute.xlu0 %4393
  %v4397 = vsel %vm2434, %v3165, 0
  %4399 = vmatprep.subr.bf16.mxu0 0
  %4400 = vmatpush1.bf16.msra.mxu0 %v4394
  %4401 = vmatprep.subr.bf16.mxu0 0
  %4402 = vmatpush1.bf16.msra.mxu0 0
  %4403 = vmatprep.subr.bf16.mxu0 0
  %4404 = vmatpush1.bf16.msra.mxu0 0
  %4405 = vmatprep.subr.bf16.mxu0 0
  %4406 = vmatpush1.bf16.msra.mxu0 0
  %4407 = vmatprep.subr.bf16.mxu0 0
  %4408 = vmatpush1.bf16.msra.mxu0 0
  %4409 = vmatprep.subr.bf16.mxu0 0
  %4410 = vmatpush1.bf16.msra.mxu0 0
  %4411 = vmatprep.subr.bf16.mxu0 0
  %4412 = vmatpush1.bf16.msra.mxu0 0
  %4413 = vmatprep.subr.bf16.mxu0 0
  %4414 = vmatpush1.bf16.msra.mxu0 0
  %4415 = vmatprep.subr.bf16.mxu0 0
  %4416 = vmatpush1.bf16.msra.mxu0 0
  %4417 = vmatprep.subr.bf16.mxu0 0
  %4418 = vmatpush1.bf16.msra.mxu0 0
  %4419 = vmatprep.subr.bf16.mxu0 0
  %4420 = vmatpush1.bf16.msra.mxu0 0
  %4421 = vmatprep.subr.bf16.mxu0 0
  %4422 = vmatpush1.bf16.msra.mxu0 0
  %4423 = vmatprep.subr.bf16.mxu0 0
  %4424 = vmatpush1.bf16.msra.mxu0 0
  %4425 = vmatprep.subr.bf16.mxu0 0
  %4426 = vmatpush1.bf16.msra.mxu0 0
  %4427 = vmatprep.subr.bf16.mxu0 0
  %4428 = vmatpush1.bf16.msra.mxu0 0
  %4429 = vmatprep.subr.bf16.mxu0 0
  %4430 = vmatpush1.bf16.msra.mxu0 0
  %4431 = vmatprep.mubr.bf16.mxu0 0
  %4432 = vmatmul.mubr.bf16.gmra.mrb[0].mxu0 %v4397
  %v4433 = vpop.f32.mrb[0].mxu0
  %v4434 = vadd.f32 0.0, %v4433
  %v4435 = vpop.f32.mrb[0].mxu0
  %v4436 = vpop.f32.mrb[0].mxu0
  %v4437 = vadd.f32 0.0, %v4436
  %v4438 = vpop.f32.mrb[0].mxu0
  %4439 = vdwg.mxu0
  %4440 = vrot.lane.b32.xlu0 %v668, 64
  %v4441 = vpop.permute.xlu0 %4440
  %v4444 = vsel %vm2434, %v3166, 0
  %4446 = vmatprep.subr.bf16.mxu0 0
  %4447 = vmatpush1.bf16.msra.mxu0 %v4441
  %4448 = vmatprep.subr.bf16.mxu0 0
  %4449 = vmatpush1.bf16.msra.mxu0 0
  %4450 = vmatprep.subr.bf16.mxu0 0
  %4451 = vmatpush1.bf16.msra.mxu0 0
  %4452 = vmatprep.subr.bf16.mxu0 0
  %4453 = vmatpush1.bf16.msra.mxu0 0
  %4454 = vmatprep.subr.bf16.mxu0 0
  %4455 = vmatpush1.bf16.msra.mxu0 0
  %4456 = vmatprep.subr.bf16.mxu0 0
  %4457 = vmatpush1.bf16.msra.mxu0 0
  %4458 = vmatprep.subr.bf16.mxu0 0
  %4459 = vmatpush1.bf16.msra.mxu0 0
  %4460 = vmatprep.subr.bf16.mxu0 0
  %4461 = vmatpush1.bf16.msra.mxu0 0
  %4462 = vmatprep.subr.bf16.mxu0 0
  %4463 = vmatpush1.bf16.msra.mxu0 0
  %4464 = vmatprep.subr.bf16.mxu0 0
  %4465 = vmatpush1.bf16.msra.mxu0 0
  %4466 = vmatprep.subr.bf16.mxu0 0
  %4467 = vmatpush1.bf16.msra.mxu0 0
  %4468 = vmatprep.subr.bf16.mxu0 0
  %4469 = vmatpush1.bf16.msra.mxu0 0
  %4470 = vmatprep.subr.bf16.mxu0 0
  %4471 = vmatpush1.bf16.msra.mxu0 0
  %4472 = vmatprep.subr.bf16.mxu0 0
  %4473 = vmatpush1.bf16.msra.mxu0 0
  %4474 = vmatprep.subr.bf16.mxu0 0
  %4475 = vmatpush1.bf16.msra.mxu0 0
  %4476 = vmatprep.subr.bf16.mxu0 0
  %4477 = vmatpush1.bf16.msra.mxu0 0
  %4478 = vmatprep.mubr.bf16.mxu0 0
  %4479 = vmatmul.mubr.bf16.gmra.mrb[0].mxu0 %v4444
  %v4480 = vpop.f32.mrb[0].mxu0
  %v4481 = vadd.f32 0.0, %v4480
  %v4482 = vpop.f32.mrb[0].mxu0
  %v4483 = vpop.f32.mrb[0].mxu0
  %v4484 = vadd.f32 0.0, %v4483
  %v4485 = vpop.f32.mrb[0].mxu0
  %4486 = vdwg.mxu0
  %4487 = vrot.lane.b32.xlu0 %v669, 64
  %v4488 = vpop.permute.xlu0 %4487
  %v4491 = vsel %vm2434, %v3167, 0
  %4493 = vmatprep.subr.bf16.mxu0 0
  %4494 = vmatpush1.bf16.msra.mxu0 %v4488
  %4495 = vmatprep.subr.bf16.mxu0 0
  %4496 = vmatpush1.bf16.msra.mxu0 0
  %4497 = vmatprep.subr.bf16.mxu0 0
  %4498 = vmatpush1.bf16.msra.mxu0 0
  %4499 = vmatprep.subr.bf16.mxu0 0
  %4500 = vmatpush1.bf16.msra.mxu0 0
  %4501 = vmatprep.subr.bf16.mxu0 0
  %4502 = vmatpush1.bf16.msra.mxu0 0
  %4503 = vmatprep.subr.bf16.mxu0 0
  %4504 = vmatpush1.bf16.msra.mxu0 0
  %4505 = vmatprep.subr.bf16.mxu0 0
  %4506 = vmatpush1.bf16.msra.mxu0 0
  %4507 = vmatprep.subr.bf16.mxu0 0
  %4508 = vmatpush1.bf16.msra.mxu0 0
  %4509 = vmatprep.subr.bf16.mxu0 0
  %4510 = vmatpush1.bf16.msra.mxu0 0
  %4511 = vmatprep.subr.bf16.mxu0 0
  %4512 = vmatpush1.bf16.msra.mxu0 0
  %4513 = vmatprep.subr.bf16.mxu0 0
  %4514 = vmatpush1.bf16.msra.mxu0 0
  %4515 = vmatprep.subr.bf16.mxu0 0
  %4516 = vmatpush1.bf16.msra.mxu0 0
  %4517 = vmatprep.subr.bf16.mxu0 0
  %4518 = vmatpush1.bf16.msra.mxu0 0
  %4519 = vmatprep.subr.bf16.mxu0 0
  %4520 = vmatpush1.bf16.msra.mxu0 0
  %4521 = vmatprep.subr.bf16.mxu0 0
  %4522 = vmatpush1.bf16.msra.mxu0 0
  %4523 = vmatprep.subr.bf16.mxu0 0
  %4524 = vmatpush1.bf16.msra.mxu0 0
  %4525 = vmatprep.mubr.bf16.mxu0 0
  %4526 = vmatmul.mubr.bf16.gmra.mrb[0].mxu0 %v4491
  %v4527 = vpop.f32.mrb[0].mxu0
  %v4528 = vadd.f32 0.0, %v4527
  %v4529 = vpop.f32.mrb[0].mxu0
  %v4530 = vpop.f32.mrb[0].mxu0
  %v4531 = vadd.f32 0.0, %v4530
  %v4532 = vpop.f32.mrb[0].mxu0
  %4533 = vdwg.mxu0
  %4534 = vrot.lane.b32.xlu0 %v670, 64
  %v4535 = vpop.permute.xlu0 %4534
  %v4538 = vsel %vm2434, %v3168, 0
  %4540 = vmatprep.subr.bf16.mxu0 0
  %4541 = vmatpush1.bf16.msra.mxu0 %v4535
  %4542 = vmatprep.subr.bf16.mxu0 0
  %4543 = vmatpush1.bf16.msra.mxu0 0
  %4544 = vmatprep.subr.bf16.mxu0 0
  %4545 = vmatpush1.bf16.msra.mxu0 0
  %4546 = vmatprep.subr.bf16.mxu0 0
  %4547 = vmatpush1.bf16.msra.mxu0 0
  %4548 = vmatprep.subr.bf16.mxu0 0
  %4549 = vmatpush1.bf16.msra.mxu0 0
  %4550 = vmatprep.subr.bf16.mxu0 0
  %4551 = vmatpush1.bf16.msra.mxu0 0
  %4552 = vmatprep.subr.bf16.mxu0 0
  %4553 = vmatpush1.bf16.msra.mxu0 0
  %4554 = vmatprep.subr.bf16.mxu0 0
  %4555 = vmatpush1.bf16.msra.mxu0 0
  %4556 = vmatprep.subr.bf16.mxu0 0
  %4557 = vmatpush1.bf16.msra.mxu0 0
  %4558 = vmatprep.subr.bf16.mxu0 0
  %4559 = vmatpush1.bf16.msra.mxu0 0
  %4560 = vmatprep.subr.bf16.mxu0 0
  %4561 = vmatpush1.bf16.msra.mxu0 0
  %4562 = vmatprep.subr.bf16.mxu0 0
  %4563 = vmatpush1.bf16.msra.mxu0 0
  %4564 = vmatprep.subr.bf16.mxu0 0
  %4565 = vmatpush1.bf16.msra.mxu0 0
  %4566 = vmatprep.subr.bf16.mxu0 0
  %4567 = vmatpush1.bf16.msra.mxu0 0
  %4568 = vmatprep.subr.bf16.mxu0 0
  %4569 = vmatpush1.bf16.msra.mxu0 0
  %4570 = vmatprep.subr.bf16.mxu0 0
  %4571 = vmatpush1.bf16.msra.mxu0 0
  %4572 = vmatprep.mubr.bf16.mxu0 0
  %4573 = vmatmul.mubr.bf16.gmra.mrb[0].mxu0 %v4538
  %v4574 = vpop.f32.mrb[0].mxu0
  %v4575 = vadd.f32 0.0, %v4574
  %v4576 = vpop.f32.mrb[0].mxu0
  %v4577 = vpop.f32.mrb[0].mxu0
  %v4578 = vadd.f32 0.0, %v4577
  %v4579 = vpop.f32.mrb[0].mxu0
  %4580 = vdwg.mxu0
  %4581 = vrot.lane.b32.xlu0 %v671, 64
  %v4582 = vpop.permute.xlu0 %4581
  %v4585 = vsel %vm2434, %v3169, 0
  %4587 = vmatprep.subr.bf16.mxu0 0
  %4588 = vmatpush1.bf16.msra.mxu0 %v4582
  %4589 = vmatprep.subr.bf16.mxu0 0
  %4590 = vmatpush1.bf16.msra.mxu0 0
  %4591 = vmatprep.subr.bf16.mxu0 0
  %4592 = vmatpush1.bf16.msra.mxu0 0
  %4593 = vmatprep.subr.bf16.mxu0 0
  %4594 = vmatpush1.bf16.msra.mxu0 0
  %4595 = vmatprep.subr.bf16.mxu0 0
  %4596 = vmatpush1.bf16.msra.mxu0 0
  %4597 = vmatprep.subr.bf16.mxu0 0
  %4598 = vmatpush1.bf16.msra.mxu0 0
  %4599 = vmatprep.subr.bf16.mxu0 0
  %4600 = vmatpush1.bf16.msra.mxu0 0
  %4601 = vmatprep.subr.bf16.mxu0 0
  %4602 = vmatpush1.bf16.msra.mxu0 0
  %4603 = vmatprep.subr.bf16.mxu0 0
  %4604 = vmatpush1.bf16.msra.mxu0 0
  %4605 = vmatprep.subr.bf16.mxu0 0
  %4606 = vmatpush1.bf16.msra.mxu0 0
  %4607 = vmatprep.subr.bf16.mxu0 0
  %4608 = vmatpush1.bf16.msra.mxu0 0
  %4609 = vmatprep.subr.bf16.mxu0 0
  %4610 = vmatpush1.bf16.msra.mxu0 0
  %4611 = vmatprep.subr.bf16.mxu0 0
  %4612 = vmatpush1.bf16.msra.mxu0 0
  %4613 = vmatprep.subr.bf16.mxu0 0
  %4614 = vmatpush1.bf16.msra.mxu0 0
  %4615 = vmatprep.subr.bf16.mxu0 0
  %4616 = vmatpush1.bf16.msra.mxu0 0
  %4617 = vmatprep.subr.bf16.mxu0 0
  %4618 = vmatpush1.bf16.msra.mxu0 0
  %4619 = vmatprep.mubr.bf16.mxu0 0
  %4620 = vmatmul.mubr.bf16.gmra.mrb[0].mxu0 %v4585
  %v4621 = vpop.f32.mrb[0].mxu0
  %v4622 = vadd.f32 0.0, %v4621
  %v4623 = vpop.f32.mrb[0].mxu0
  %v4624 = vpop.f32.mrb[0].mxu0
  %v4625 = vadd.f32 0.0, %v4624
  %v4626 = vpop.f32.mrb[0].mxu0
  %4627 = vdwg.mxu0
  %4628 = vrot.lane.b32.xlu0 %v672, 64
  %v4629 = vpop.permute.xlu0 %4628
  %v4632 = vsel %vm2434, %v3170, 0
  %4634 = vmatprep.subr.bf16.mxu0 0
  %4635 = vmatpush1.bf16.msra.mxu0 %v4629
  %4636 = vmatprep.subr.bf16.mxu0 0
  %4637 = vmatpush1.bf16.msra.mxu0 0
  %4638 = vmatprep.subr.bf16.mxu0 0
  %4639 = vmatpush1.bf16.msra.mxu0 0
  %4640 = vmatprep.subr.bf16.mxu0 0
  %4641 = vmatpush1.bf16.msra.mxu0 0
  %4642 = vmatprep.subr.bf16.mxu0 0
  %4643 = vmatpush1.bf16.msra.mxu0 0
  %4644 = vmatprep.subr.bf16.mxu0 0
  %4645 = vmatpush1.bf16.msra.mxu0 0
  %4646 = vmatprep.subr.bf16.mxu0 0
  %4647 = vmatpush1.bf16.msra.mxu0 0
  %4648 = vmatprep.subr.bf16.mxu0 0
  %4649 = vmatpush1.bf16.msra.mxu0 0
  %4650 = vmatprep.subr.bf16.mxu0 0
  %4651 = vmatpush1.bf16.msra.mxu0 0
  %4652 = vmatprep.subr.bf16.mxu0 0
  %4653 = vmatpush1.bf16.msra.mxu0 0
  %4654 = vmatprep.subr.bf16.mxu0 0
  %4655 = vmatpush1.bf16.msra.mxu0 0
  %4656 = vmatprep.subr.bf16.mxu0 0
  %4657 = vmatpush1.bf16.msra.mxu0 0
  %4658 = vmatprep.subr.bf16.mxu0 0
  %4659 = vmatpush1.bf16.msra.mxu0 0
  %4660 = vmatprep.subr.bf16.mxu0 0
  %4661 = vmatpush1.bf16.msra.mxu0 0
  %4662 = vmatprep.subr.bf16.mxu0 0
  %4663 = vmatpush1.bf16.msra.mxu0 0
  %4664 = vmatprep.subr.bf16.mxu0 0
  %4665 = vmatpush1.bf16.msra.mxu0 0
  %4666 = vmatprep.mubr.bf16.mxu0 0
  %4667 = vmatmul.mubr.bf16.gmra.mrb[0].mxu0 %v4632
  %v4668 = vpop.f32.mrb[0].mxu0
  %v4669 = vadd.f32 0.0, %v4668
  %v4670 = vpop.f32.mrb[0].mxu0
  %v4671 = vpop.f32.mrb[0].mxu0
  %v4672 = vadd.f32 0.0, %v4671
  %v4673 = vpop.f32.mrb[0].mxu0
  %4674 = vdwg.mxu0
  %v4675 = vpack.c.bf16 %v3215, %v3212
  %v4676 = vpack.c.bf16 %v3262, %v3259
  %v4677 = vpack.c.bf16 %v3309, %v3306
  %v4678 = vpack.c.bf16 %v3356, %v3353
  %v4679 = vpack.c.bf16 %v3403, %v3400
  %v4680 = vpack.c.bf16 %v3450, %v3447
  %v4681 = vpack.c.bf16 %v3497, %v3494
  %v4682 = vpack.c.bf16 %v3544, %v3541
  %v4683 = vpack.c.bf16 %v3591, %v3588
  %v4684 = vpack.c.bf16 %v3638, %v3635
  %v4685 = vpack.c.bf16 %v3685, %v3682
  %v4686 = vpack.c.bf16 %v3732, %v3729
  %v4687 = vpack.c.bf16 %v3779, %v3776
  %v4688 = vpack.c.bf16 %v3826, %v3823
  %v4689 = vpack.c.bf16 %v3873, %v3870
  %v4690 = vpack.c.bf16 %v3920, %v3917
  %v4691 = vpack.c.bf16 %v3967, %v3964
  %v4692 = vpack.c.bf16 %v4014, %v4011
  %v4693 = vpack.c.bf16 %v4061, %v4058
  %v4694 = vpack.c.bf16 %v4108, %v4105
  %v4695 = vpack.c.bf16 %v4155, %v4152
  %v4696 = vpack.c.bf16 %v4202, %v4199
  %v4697 = vpack.c.bf16 %v4249, %v4246
  %v4698 = vpack.c.bf16 %v4296, %v4293
  %v4699 = vpack.c.bf16 %v4343, %v4340
  %v4700 = vpack.c.bf16 %v4390, %v4387
  %v4701 = vpack.c.bf16 %v4437, %v4434
  %v4702 = vpack.c.bf16 %v4484, %v4481
  %v4703 = vpack.c.bf16 %v4531, %v4528
  %v4704 = vpack.c.bf16 %v4578, %v4575
  %v4705 = vpack.c.bf16 %v4625, %v4622
  %v4706 = vpack.c.bf16 %v4672, %v4669
  %v4707 = vld [vmem:[%s6] sm:$0xf]
  %v4708 = vld [vmem:[%s6 + $0x4] sm:$0xf]
  %v4709 = vld [vmem:[%s6 + $0x8] sm:$0xf]
  %v4710 = vld [vmem:[%s6 + $0xc] sm:$0xf]
  %v4712 = vsel %vm676, %v4675, 0
  %v4715 = vsel %vm676, %v4676, 0
  %v4718 = vsel %vm676, %v4677, 0
  %v4721 = vsel %vm676, %v4678, 0
  %v4724 = vsel %vm676, %v4679, 0
  %v4727 = vsel %vm676, %v4680, 0
  %v4730 = vsel %vm676, %v4681, 0
  %v4733 = vsel %vm676, %v4682, 0
  %vm4735 = vcmask 1043456
  %v4737 = vsel %vm4735, %v4707, 0
  %4739 = vmatprep.subr.bf16.mxu0 0
  %4740 = vmatpush1.bf16.msra.mxu0 %v4737
  %4741 = vmatprep.subr.bf16.mxu0 0
  %4742 = vmatpush1.bf16.msra.mxu0 0
  %4743 = vmatprep.subr.bf16.mxu0 0
  %4744 = vmatpush1.bf16.msra.mxu0 0
  %4745 = vmatprep.subr.bf16.mxu0 0
  %4746 = vmatpush1.bf16.msra.mxu0 0
  %4747 = vmatprep.subr.bf16.mxu0 0
  %4748 = vmatpush1.bf16.msra.mxu0 0
  %4749 = vmatprep.subr.bf16.mxu0 0
  %4750 = vmatpush1.bf16.msra.mxu0 0
  %4751 = vmatprep.subr.bf16.mxu0 0
  %4752 = vmatpush1.bf16.msra.mxu0 0
  %4753 = vmatprep.subr.bf16.mxu0 0
  %4754 = vmatpush1.bf16.msra.mxu0 0
  %4755 = vmatprep.subr.bf16.mxu0 0
  %4756 = vmatpush1.bf16.msra.mxu0 0
  %4757 = vmatprep.subr.bf16.mxu0 0
  %4758 = vmatpush1.bf16.msra.mxu0 0
  %4759 = vmatprep.subr.bf16.mxu0 0
  %4760 = vmatpush1.bf16.msra.mxu0 0
  %4761 = vmatprep.subr.bf16.mxu0 0
  %4762 = vmatpush1.bf16.msra.mxu0 0
  %4763 = vmatprep.subr.bf16.mxu0 0
  %4764 = vmatpush1.bf16.msra.mxu0 0
  %4765 = vmatprep.subr.bf16.mxu0 0
  %4766 = vmatpush1.bf16.msra.mxu0 0
  %4767 = vmatprep.subr.bf16.mxu0 0
  %4768 = vmatpush1.bf16.msra.mxu0 0
  %4769 = vmatprep.subr.bf16.mxu0 0
  %4770 = vmatpush1.bf16.msra.mxu0 0
  %4771 = vmatprep.mubr.bf16.mxu0 0
  %4772 = vmatmul.mubr.bf16.gmra.mrb[0].mxu0 %v4712
  %v4773 = vpop.f32.mrb[0].mxu0
  %v4774 = vadd.f32 0.0, %v4773
  %v4775 = vpop.f32.mrb[0].mxu0
  %v4776 = vpop.f32.mrb[0].mxu0
  %v4777 = vadd.f32 0.0, %v4776
  %v4778 = vpop.f32.mrb[0].mxu0
  %4779 = vmatprep.mubr.bf16.mxu0 0
  %4780 = vmatmul.mubr.bf16.gmra.mrb[0].mxu0 %v4715
  %v4781 = vpop.f32.mrb[0].mxu0
  %v4782 = vadd.f32 0.0, %v4781
  %v4783 = vpop.f32.mrb[0].mxu0
  %v4784 = vpop.f32.mrb[0].mxu0
  %v4785 = vadd.f32 0.0, %v4784
  %v4786 = vpop.f32.mrb[0].mxu0
  %4787 = vmatprep.mubr.bf16.mxu0 0
  %4788 = vmatmul.mubr.bf16.gmra.mrb[0].mxu0 %v4718
  %v4789 = vpop.f32.mrb[0].mxu0
  %v4790 = vadd.f32 0.0, %v4789
  %v4791 = vpop.f32.mrb[0].mxu0
  %v4792 = vpop.f32.mrb[0].mxu0
  %v4793 = vadd.f32 0.0, %v4792
  %v4794 = vpop.f32.mrb[0].mxu0
  %4795 = vmatprep.mubr.bf16.mxu0 0
  %4796 = vmatmul.mubr.bf16.gmra.mrb[0].mxu0 %v4721
  %v4797 = vpop.f32.mrb[0].mxu0
  %v4798 = vadd.f32 0.0, %v4797
  %v4799 = vpop.f32.mrb[0].mxu0
  %v4800 = vpop.f32.mrb[0].mxu0
  %v4801 = vadd.f32 0.0, %v4800
  %v4802 = vpop.f32.mrb[0].mxu0
  %4803 = vmatprep.mubr.bf16.mxu0 0
  %4804 = vmatmul.mubr.bf16.gmra.mrb[0].mxu0 %v4724
  %v4805 = vpop.f32.mrb[0].mxu0
  %v4806 = vadd.f32 0.0, %v4805
  %v4807 = vpop.f32.mrb[0].mxu0
  %v4808 = vpop.f32.mrb[0].mxu0
  %v4809 = vadd.f32 0.0, %v4808
  %v4810 = vpop.f32.mrb[0].mxu0
  %4811 = vmatprep.mubr.bf16.mxu0 0
  %4812 = vmatmul.mubr.bf16.gmra.mrb[0].mxu0 %v4727
  %v4813 = vpop.f32.mrb[0].mxu0
  %v4814 = vadd.f32 0.0, %v4813
  %v4815 = vpop.f32.mrb[0].mxu0
  %v4816 = vpop.f32.mrb[0].mxu0
  %v4817 = vadd.f32 0.0, %v4816
  %v4818 = vpop.f32.mrb[0].mxu0
  %4819 = vmatprep.mubr.bf16.mxu0 0
  %4820 = vmatmul.mubr.bf16.gmra.mrb[0].mxu0 %v4730
  %v4821 = vpop.f32.mrb[0].mxu0
  %v4822 = vadd.f32 0.0, %v4821
  %v4823 = vpop.f32.mrb[0].mxu0
  %v4824 = vpop.f32.mrb[0].mxu0
  %v4825 = vadd.f32 0.0, %v4824
  %v4826 = vpop.f32.mrb[0].mxu0
  %4827 = vmatprep.mubr.bf16.mxu0 0
  %4828 = vmatmul.mubr.bf16.gmra.mrb[0].mxu0 %v4733
  %v4829 = vpop.f32.mrb[0].mxu0
  %v4830 = vadd.f32 0.0, %v4829
  %v4831 = vpop.f32.mrb[0].mxu0
  %v4832 = vpop.f32.mrb[0].mxu0
  %v4833 = vadd.f32 0.0, %v4832
  %v4834 = vpop.f32.mrb[0].mxu0
  %4835 = vdwg.mxu0
  %v4837 = vsel %vm676, %v4683, 0
  %v4840 = vsel %vm676, %v4684, 0
  %v4843 = vsel %vm676, %v4685, 0
  %v4846 = vsel %vm676, %v4686, 0
  %v4849 = vsel %vm676, %v4687, 0
  %v4852 = vsel %vm676, %v4688, 0
  %v4855 = vsel %vm676, %v4689, 0
  %v4858 = vsel %vm676, %v4690, 0
  %v4861 = vsel %vm4735, %v4708, 0
  %4863 = vmatprep.subr.bf16.mxu0 0
  %4864 = vmatpush1.bf16.msra.mxu0 %v4861
  %4865 = vmatprep.subr.bf16.mxu0 0
  %4866 = vmatpush1.bf16.msra.mxu0 0
  %4867 = vmatprep.subr.bf16.mxu0 0
  %4868 = vmatpush1.bf16.msra.mxu0 0
  %4869 = vmatprep.subr.bf16.mxu0 0
  %4870 = vmatpush1.bf16.msra.mxu0 0
  %4871 = vmatprep.subr.bf16.mxu0 0
  %4872 = vmatpush1.bf16.msra.mxu0 0
  %4873 = vmatprep.subr.bf16.mxu0 0
  %4874 = vmatpush1.bf16.msra.mxu0 0
  %4875 = vmatprep.subr.bf16.mxu0 0
  %4876 = vmatpush1.bf16.msra.mxu0 0
  %4877 = vmatprep.subr.bf16.mxu0 0
  %4878 = vmatpush1.bf16.msra.mxu0 0
  %4879 = vmatprep.subr.bf16.mxu0 0
  %4880 = vmatpush1.bf16.msra.mxu0 0
  %4881 = vmatprep.subr.bf16.mxu0 0
  %4882 = vmatpush1.bf16.msra.mxu0 0
  %4883 = vmatprep.subr.bf16.mxu0 0
  %4884 = vmatpush1.bf16.msra.mxu0 0
  %4885 = vmatprep.subr.bf16.mxu0 0
  %4886 = vmatpush1.bf16.msra.mxu0 0
  %4887 = vmatprep.subr.bf16.mxu0 0
  %4888 = vmatpush1.bf16.msra.mxu0 0
  %4889 = vmatprep.subr.bf16.mxu0 0
  %4890 = vmatpush1.bf16.msra.mxu0 0
  %4891 = vmatprep.subr.bf16.mxu0 0
  %4892 = vmatpush1.bf16.msra.mxu0 0
  %4893 = vmatprep.subr.bf16.mxu0 0
  %4894 = vmatpush1.bf16.msra.mxu0 0
  %4895 = vmatprep.mubr.bf16.mxu0 0
  %4896 = vmatmul.mubr.bf16.gmra.mrb[0].mxu0 %v4837
  %v4897 = vpop.f32.mrb[0].mxu0
  %v4898 = vadd.f32 0.0, %v4897
  %v4899 = vpop.f32.mrb[0].mxu0
  %v4900 = vpop.f32.mrb[0].mxu0
  %v4901 = vadd.f32 0.0, %v4900
  %v4902 = vpop.f32.mrb[0].mxu0
  %4903 = vmatprep.mubr.bf16.mxu0 0
  %4904 = vmatmul.mubr.bf16.gmra.mrb[0].mxu0 %v4840
  %v4905 = vpop.f32.mrb[0].mxu0
  %v4906 = vadd.f32 0.0, %v4905
  %v4907 = vpop.f32.mrb[0].mxu0
  %v4908 = vpop.f32.mrb[0].mxu0
  %v4909 = vadd.f32 0.0, %v4908
  %v4910 = vpop.f32.mrb[0].mxu0
  %4911 = vmatprep.mubr.bf16.mxu0 0
  %4912 = vmatmul.mubr.bf16.gmra.mrb[0].mxu0 %v4843
  %v4913 = vpop.f32.mrb[0].mxu0
  %v4914 = vadd.f32 0.0, %v4913
  %v4915 = vpop.f32.mrb[0].mxu0
  %v4916 = vpop.f32.mrb[0].mxu0
  %v4917 = vadd.f32 0.0, %v4916
  %v4918 = vpop.f32.mrb[0].mxu0
  %4919 = vmatprep.mubr.bf16.mxu0 0
  %4920 = vmatmul.mubr.bf16.gmra.mrb[0].mxu0 %v4846
  %v4921 = vpop.f32.mrb[0].mxu0
  %v4922 = vadd.f32 0.0, %v4921
  %v4923 = vpop.f32.mrb[0].mxu0
  %v4924 = vpop.f32.mrb[0].mxu0
  %v4925 = vadd.f32 0.0, %v4924
  %v4926 = vpop.f32.mrb[0].mxu0
  %4927 = vmatprep.mubr.bf16.mxu0 0
  %4928 = vmatmul.mubr.bf16.gmra.mrb[0].mxu0 %v4849
  %v4929 = vpop.f32.mrb[0].mxu0
  %v4930 = vadd.f32 0.0, %v4929
  %v4931 = vpop.f32.mrb[0].mxu0
  %v4932 = vpop.f32.mrb[0].mxu0
  %v4933 = vadd.f32 0.0, %v4932
  %v4934 = vpop.f32.mrb[0].mxu0
  %4935 = vmatprep.mubr.bf16.mxu0 0
  %4936 = vmatmul.mubr.bf16.gmra.mrb[0].mxu0 %v4852
  %v4937 = vpop.f32.mrb[0].mxu0
  %v4938 = vadd.f32 0.0, %v4937
  %v4939 = vpop.f32.mrb[0].mxu0
  %v4940 = vpop.f32.mrb[0].mxu0
  %v4941 = vadd.f32 0.0, %v4940
  %v4942 = vpop.f32.mrb[0].mxu0
  %4943 = vmatprep.mubr.bf16.mxu0 0
  %4944 = vmatmul.mubr.bf16.gmra.mrb[0].mxu0 %v4855
  %v4945 = vpop.f32.mrb[0].mxu0
  %v4946 = vadd.f32 0.0, %v4945
  %v4947 = vpop.f32.mrb[0].mxu0
  %v4948 = vpop.f32.mrb[0].mxu0
  %v4949 = vadd.f32 0.0, %v4948
  %v4950 = vpop.f32.mrb[0].mxu0
  %4951 = vmatprep.mubr.bf16.mxu0 0
  %4952 = vmatmul.mubr.bf16.gmra.mrb[0].mxu0 %v4858
  %v4953 = vpop.f32.mrb[0].mxu0
  %v4954 = vadd.f32 0.0, %v4953
  %v4955 = vpop.f32.mrb[0].mxu0
  %v4956 = vpop.f32.mrb[0].mxu0
  %v4957 = vadd.f32 0.0, %v4956
  %v4958 = vpop.f32.mrb[0].mxu0
  %4959 = vdwg.mxu0
  %v4961 = vsel %vm676, %v4691, 0
  %v4964 = vsel %vm676, %v4692, 0
  %v4967 = vsel %vm676, %v4693, 0
  %v4970 = vsel %vm676, %v4694, 0
  %v4973 = vsel %vm676, %v4695, 0
  %v4976 = vsel %vm676, %v4696, 0
  %v4979 = vsel %vm676, %v4697, 0
  %v4982 = vsel %vm676, %v4698, 0
  %v4985 = vsel %vm4735, %v4709, 0
  %4987 = vmatprep.subr.bf16.mxu0 0
  %4988 = vmatpush1.bf16.msra.mxu0 %v4985
  %4989 = vmatprep.subr.bf16.mxu0 0
  %4990 = vmatpush1.bf16.msra.mxu0 0
  %4991 = vmatprep.subr.bf16.mxu0 0
  %4992 = vmatpush1.bf16.msra.mxu0 0
  %4993 = vmatprep.subr.bf16.mxu0 0
  %4994 = vmatpush1.bf16.msra.mxu0 0
  %4995 = vmatprep.subr.bf16.mxu0 0
  %4996 = vmatpush1.bf16.msra.mxu0 0
  %4997 = vmatprep.subr.bf16.mxu0 0
  %4998 = vmatpush1.bf16.msra.mxu0 0
  %4999 = vmatprep.subr.bf16.mxu0 0
  %5000 = vmatpush1.bf16.msra.mxu0 0
  %5001 = vmatprep.subr.bf16.mxu0 0
  %5002 = vmatpush1.bf16.msra.mxu0 0
  %5003 = vmatprep.subr.bf16.mxu0 0
  %5004 = vmatpush1.bf16.msra.mxu0 0
  %5005 = vmatprep.subr.bf16.mxu0 0
  %5006 = vmatpush1.bf16.msra.mxu0 0
  %5007 = vmatprep.subr.bf16.mxu0 0
  %5008 = vmatpush1.bf16.msra.mxu0 0
  %5009 = vmatprep.subr.bf16.mxu0 0
  %5010 = vmatpush1.bf16.msra.mxu0 0
  %5011 = vmatprep.subr.bf16.mxu0 0
  %5012 = vmatpush1.bf16.msra.mxu0 0
  %5013 = vmatprep.subr.bf16.mxu0 0
  %5014 = vmatpush1.bf16.msra.mxu0 0
  %5015 = vmatprep.subr.bf16.mxu0 0
  %5016 = vmatpush1.bf16.msra.mxu0 0
  %5017 = vmatprep.subr.bf16.mxu0 0
  %5018 = vmatpush1.bf16.msra.mxu0 0
  %5019 = vmatprep.mubr.bf16.mxu0 0
  %5020 = vmatmul.mubr.bf16.gmra.mrb[0].mxu0 %v4961
  %v5021 = vpop.f32.mrb[0].mxu0
  %v5022 = vadd.f32 0.0, %v5021
  %v5023 = vpop.f32.mrb[0].mxu0
  %v5024 = vpop.f32.mrb[0].mxu0
  %v5025 = vadd.f32 0.0, %v5024
  %v5026 = vpop.f32.mrb[0].mxu0
  %5027 = vmatprep.mubr.bf16.mxu0 0
  %5028 = vmatmul.mubr.bf16.gmra.mrb[0].mxu0 %v4964
  %v5029 = vpop.f32.mrb[0].mxu0
  %v5030 = vadd.f32 0.0, %v5029
  %v5031 = vpop.f32.mrb[0].mxu0
  %v5032 = vpop.f32.mrb[0].mxu0
  %v5033 = vadd.f32 0.0, %v5032
  %v5034 = vpop.f32.mrb[0].mxu0
  %5035 = vmatprep.mubr.bf16.mxu0 0
  %5036 = vmatmul.mubr.bf16.gmra.mrb[0].mxu0 %v4967
  %v5037 = vpop.f32.mrb[0].mxu0
  %v5038 = vadd.f32 0.0, %v5037
  %v5039 = vpop.f32.mrb[0].mxu0
  %v5040 = vpop.f32.mrb[0].mxu0
  %v5041 = vadd.f32 0.0, %v5040
  %v5042 = vpop.f32.mrb[0].mxu0
  %5043 = vmatprep.mubr.bf16.mxu0 0
  %5044 = vmatmul.mubr.bf16.gmra.mrb[0].mxu0 %v4970
  %v5045 = vpop.f32.mrb[0].mxu0
  %v5046 = vadd.f32 0.0, %v5045
  %v5047 = vpop.f32.mrb[0].mxu0
  %v5048 = vpop.f32.mrb[0].mxu0
  %v5049 = vadd.f32 0.0, %v5048
  %v5050 = vpop.f32.mrb[0].mxu0
  %5051 = vmatprep.mubr.bf16.mxu0 0
  %5052 = vmatmul.mubr.bf16.gmra.mrb[0].mxu0 %v4973
  %v5053 = vpop.f32.mrb[0].mxu0
  %v5054 = vadd.f32 0.0, %v5053
  %v5055 = vpop.f32.mrb[0].mxu0
  %v5056 = vpop.f32.mrb[0].mxu0
  %v5057 = vadd.f32 0.0, %v5056
  %v5058 = vpop.f32.mrb[0].mxu0
  %5059 = vmatprep.mubr.bf16.mxu0 0
  %5060 = vmatmul.mubr.bf16.gmra.mrb[0].mxu0 %v4976
  %v5061 = vpop.f32.mrb[0].mxu0
  %v5062 = vadd.f32 0.0, %v5061
  %v5063 = vpop.f32.mrb[0].mxu0
  %v5064 = vpop.f32.mrb[0].mxu0
  %v5065 = vadd.f32 0.0, %v5064
  %v5066 = vpop.f32.mrb[0].mxu0
  %5067 = vmatprep.mubr.bf16.mxu0 0
  %5068 = vmatmul.mubr.bf16.gmra.mrb[0].mxu0 %v4979
  %v5069 = vpop.f32.mrb[0].mxu0
  %v5070 = vadd.f32 0.0, %v5069
  %v5071 = vpop.f32.mrb[0].mxu0
  %v5072 = vpop.f32.mrb[0].mxu0
  %v5073 = vadd.f32 0.0, %v5072
  %v5074 = vpop.f32.mrb[0].mxu0
  %5075 = vmatprep.mubr.bf16.mxu0 0
  %5076 = vmatmul.mubr.bf16.gmra.mrb[0].mxu0 %v4982
  %v5077 = vpop.f32.mrb[0].mxu0
  %v5078 = vadd.f32 0.0, %v5077
  %v5079 = vpop.f32.mrb[0].mxu0
  %v5080 = vpop.f32.mrb[0].mxu0
  %v5081 = vadd.f32 0.0, %v5080
  %v5082 = vpop.f32.mrb[0].mxu0
  %5083 = vdwg.mxu0
  %v5085 = vsel %vm676, %v4699, 0
  %v5088 = vsel %vm676, %v4700, 0
  %v5091 = vsel %vm676, %v4701, 0
  %v5094 = vsel %vm676, %v4702, 0
  %v5097 = vsel %vm676, %v4703, 0
  %v5100 = vsel %vm676, %v4704, 0
  %v5103 = vsel %vm676, %v4705, 0
  %v5106 = vsel %vm676, %v4706, 0
  %v5109 = vsel %vm4735, %v4710, 0
  %5111 = vmatprep.subr.bf16.mxu0 0
  %5112 = vmatpush1.bf16.msra.mxu0 %v5109
  %5113 = vmatprep.subr.bf16.mxu0 0
  %5114 = vmatpush1.bf16.msra.mxu0 0
  %5115 = vmatprep.subr.bf16.mxu0 0
  %5116 = vmatpush1.bf16.msra.mxu0 0
  %5117 = vmatprep.subr.bf16.mxu0 0
  %5118 = vmatpush1.bf16.msra.mxu0 0
  %5119 = vmatprep.subr.bf16.mxu0 0
  %5120 = vmatpush1.bf16.msra.mxu0 0
  %5121 = vmatprep.subr.bf16.mxu0 0
  %5122 = vmatpush1.bf16.msra.mxu0 0
  %5123 = vmatprep.subr.bf16.mxu0 0
  %5124 = vmatpush1.bf16.msra.mxu0 0
  %5125 = vmatprep.subr.bf16.mxu0 0
  %5126 = vmatpush1.bf16.msra.mxu0 0
  %5127 = vmatprep.subr.bf16.mxu0 0
  %5128 = vmatpush1.bf16.msra.mxu0 0
  %5129 = vmatprep.subr.bf16.mxu0 0
  %5130 = vmatpush1.bf16.msra.mxu0 0
  %5131 = vmatprep.subr.bf16.mxu0 0
  %5132 = vmatpush1.bf16.msra.mxu0 0
  %5133 = vmatprep.subr.bf16.mxu0 0
  %5134 = vmatpush1.bf16.msra.mxu0 0
  %5135 = vmatprep.subr.bf16.mxu0 0
  %5136 = vmatpush1.bf16.msra.mxu0 0
  %5137 = vmatprep.subr.bf16.mxu0 0
  %5138 = vmatpush1.bf16.msra.mxu0 0
  %5139 = vmatprep.subr.bf16.mxu0 0
  %5140 = vmatpush1.bf16.msra.mxu0 0
  %5141 = vmatprep.subr.bf16.mxu0 0
  %5142 = vmatpush1.bf16.msra.mxu0 0
  %5143 = vmatprep.mubr.bf16.mxu0 0
  %5144 = vmatmul.mubr.bf16.gmra.mrb[0].mxu0 %v5085
  %v5145 = vpop.f32.mrb[0].mxu0
  %v5146 = vadd.f32 0.0, %v5145
  %v5147 = vpop.f32.mrb[0].mxu0
  %v5148 = vpop.f32.mrb[0].mxu0
  %v5149 = vadd.f32 0.0, %v5148
  %v5150 = vpop.f32.mrb[0].mxu0
  %5151 = vmatprep.mubr.bf16.mxu0 0
  %5152 = vmatmul.mubr.bf16.gmra.mrb[0].mxu0 %v5088
  %v5153 = vpop.f32.mrb[0].mxu0
  %v5154 = vadd.f32 0.0, %v5153
  %v5155 = vpop.f32.mrb[0].mxu0
  %v5156 = vpop.f32.mrb[0].mxu0
  %v5157 = vadd.f32 0.0, %v5156
  %v5158 = vpop.f32.mrb[0].mxu0
  %5159 = vmatprep.mubr.bf16.mxu0 0
  %5160 = vmatmul.mubr.bf16.gmra.mrb[0].mxu0 %v5091
  %v5161 = vpop.f32.mrb[0].mxu0
  %v5162 = vadd.f32 0.0, %v5161
  %v5163 = vpop.f32.mrb[0].mxu0
  %v5164 = vpop.f32.mrb[0].mxu0
  %v5165 = vadd.f32 0.0, %v5164
  %v5166 = vpop.f32.mrb[0].mxu0
  %5167 = vmatprep.mubr.bf16.mxu0 0
  %5168 = vmatmul.mubr.bf16.gmra.mrb[0].mxu0 %v5094
  %v5169 = vpop.f32.mrb[0].mxu0
  %v5170 = vadd.f32 0.0, %v5169
  %v5171 = vpop.f32.mrb[0].mxu0
  %v5172 = vpop.f32.mrb[0].mxu0
  %v5173 = vadd.f32 0.0, %v5172
  %v5174 = vpop.f32.mrb[0].mxu0
  %5175 = vmatprep.mubr.bf16.mxu0 0
  %5176 = vmatmul.mubr.bf16.gmra.mrb[0].mxu0 %v5097
  %v5177 = vpop.f32.mrb[0].mxu0
  %v5178 = vadd.f32 0.0, %v5177
  %v5179 = vpop.f32.mrb[0].mxu0
  %v5180 = vpop.f32.mrb[0].mxu0
  %v5181 = vadd.f32 0.0, %v5180
  %v5182 = vpop.f32.mrb[0].mxu0
  %5183 = vmatprep.mubr.bf16.mxu0 0
  %5184 = vmatmul.mubr.bf16.gmra.mrb[0].mxu0 %v5100
  %v5185 = vpop.f32.mrb[0].mxu0
  %v5186 = vadd.f32 0.0, %v5185
  %v5187 = vpop.f32.mrb[0].mxu0
  %v5188 = vpop.f32.mrb[0].mxu0
  %v5189 = vadd.f32 0.0, %v5188
  %v5190 = vpop.f32.mrb[0].mxu0
  %5191 = vmatprep.mubr.bf16.mxu0 0
  %5192 = vmatmul.mubr.bf16.gmra.mrb[0].mxu0 %v5103
  %v5193 = vpop.f32.mrb[0].mxu0
  %v5194 = vadd.f32 0.0, %v5193
  %v5195 = vpop.f32.mrb[0].mxu0
  %v5196 = vpop.f32.mrb[0].mxu0
  %v5197 = vadd.f32 0.0, %v5196
  %v5198 = vpop.f32.mrb[0].mxu0
  %5199 = vmatprep.mubr.bf16.mxu0 0
  %5200 = vmatmul.mubr.bf16.gmra.mrb[0].mxu0 %v5106
  %v5201 = vpop.f32.mrb[0].mxu0
  %v5202 = vadd.f32 0.0, %v5201
  %v5203 = vpop.f32.mrb[0].mxu0
  %v5204 = vpop.f32.mrb[0].mxu0
  %v5205 = vadd.f32 0.0, %v5204
  %v5206 = vpop.f32.mrb[0].mxu0
  %5207 = vdwg.mxu0
  %v5208 = vsel %vm75, %v4774, 0.0
  %v5209 = vsel %vm75, %v4898, 0.0
  %v5210 = vadd.f32 %v5208, %v5209
  %v5211 = vsel %vm75, %v5022, 0.0
  %v5212 = vadd.f32 %v5210, %v5211
  %v5213 = vsel %vm75, %v5146, 0.0
  %v5214 = vadd.f32 %v5212, %v5213
  %v5215 = vsel %vm75, %v4777, 0.0
  %v5216 = vsel %vm75, %v4901, 0.0
  %v5217 = vadd.f32 %v5215, %v5216
  %v5218 = vsel %vm75, %v5025, 0.0
  %v5219 = vadd.f32 %v5217, %v5218
  %v5220 = vsel %vm75, %v5149, 0.0
  %v5221 = vadd.f32 %v5219, %v5220
  %v5222 = vsel %vm75, %v4782, 0.0
  %v5223 = vsel %vm75, %v4906, 0.0
  %v5224 = vadd.f32 %v5222, %v5223
  %v5225 = vsel %vm75, %v5030, 0.0
  %v5226 = vadd.f32 %v5224, %v5225
  %v5227 = vsel %vm75, %v5154, 0.0
  %v5228 = vadd.f32 %v5226, %v5227
  %v5229 = vsel %vm75, %v4785, 0.0
  %v5230 = vsel %vm75, %v4909, 0.0
  %v5231 = vadd.f32 %v5229, %v5230
  %v5232 = vsel %vm75, %v5033, 0.0
  %v5233 = vadd.f32 %v5231, %v5232
  %v5234 = vsel %vm75, %v5157, 0.0
  %v5235 = vadd.f32 %v5233, %v5234
  %v5236 = vsel %vm75, %v4790, 0.0
  %v5237 = vsel %vm75, %v4914, 0.0
  %v5238 = vadd.f32 %v5236, %v5237
  %v5239 = vsel %vm75, %v5038, 0.0
  %v5240 = vadd.f32 %v5238, %v5239
  %v5241 = vsel %vm75, %v5162, 0.0
  %v5242 = vadd.f32 %v5240, %v5241
  %v5243 = vsel %vm75, %v4793, 0.0
  %v5244 = vsel %vm75, %v4917, 0.0
  %v5245 = vadd.f32 %v5243, %v5244
  %v5246 = vsel %vm75, %v5041, 0.0
  %v5247 = vadd.f32 %v5245, %v5246
  %v5248 = vsel %vm75, %v5165, 0.0
  %v5249 = vadd.f32 %v5247, %v5248
  %v5250 = vsel %vm75, %v4798, 0.0
  %v5251 = vsel %vm75, %v4922, 0.0
  %v5252 = vadd.f32 %v5250, %v5251
  %v5253 = vsel %vm75, %v5046, 0.0
  %v5254 = vadd.f32 %v5252, %v5253
  %v5255 = vsel %vm75, %v5170, 0.0
  %v5256 = vadd.f32 %v5254, %v5255
  %v5257 = vsel %vm75, %v4801, 0.0
  %v5258 = vsel %vm75, %v4925, 0.0
  %v5259 = vadd.f32 %v5257, %v5258
  %v5260 = vsel %vm75, %v5049, 0.0
  %v5261 = vadd.f32 %v5259, %v5260
  %v5262 = vsel %vm75, %v5173, 0.0
  %v5263 = vadd.f32 %v5261, %v5262
  %v5264 = vsel %vm75, %v4806, 0.0
  %v5265 = vsel %vm75, %v4930, 0.0
  %v5266 = vadd.f32 %v5264, %v5265
  %v5267 = vsel %vm75, %v5054, 0.0
  %v5268 = vadd.f32 %v5266, %v5267
  %v5269 = vsel %vm75, %v5178, 0.0
  %v5270 = vadd.f32 %v5268, %v5269
  %v5271 = vsel %vm75, %v4809, 0.0
  %v5272 = vsel %vm75, %v4933, 0.0
  %v5273 = vadd.f32 %v5271, %v5272
  %v5274 = vsel %vm75, %v5057, 0.0
  %v5275 = vadd.f32 %v5273, %v5274
  %v5276 = vsel %vm75, %v5181, 0.0
  %v5277 = vadd.f32 %v5275, %v5276
  %v5278 = vsel %vm75, %v4814, 0.0
  %v5279 = vsel %vm75, %v4938, 0.0
  %v5280 = vadd.f32 %v5278, %v5279
  %v5281 = vsel %vm75, %v5062, 0.0
  %v5282 = vadd.f32 %v5280, %v5281
  %v5283 = vsel %vm75, %v5186, 0.0
  %v5284 = vadd.f32 %v5282, %v5283
  %v5285 = vsel %vm75, %v4817, 0.0
  %v5286 = vsel %vm75, %v4941, 0.0
  %v5287 = vadd.f32 %v5285, %v5286
  %v5288 = vsel %vm75, %v5065, 0.0
  %v5289 = vadd.f32 %v5287, %v5288
  %v5290 = vsel %vm75, %v5189, 0.0
  %v5291 = vadd.f32 %v5289, %v5290
  %v5292 = vsel %vm75, %v4822, 0.0
  %v5293 = vsel %vm75, %v4946, 0.0
  %v5294 = vadd.f32 %v5292, %v5293
  %v5295 = vsel %vm75, %v5070, 0.0
  %v5296 = vadd.f32 %v5294, %v5295
  %v5297 = vsel %vm75, %v5194, 0.0
  %v5298 = vadd.f32 %v5296, %v5297
  %v5299 = vsel %vm75, %v4825, 0.0
  %v5300 = vsel %vm75, %v4949, 0.0
  %v5301 = vadd.f32 %v5299, %v5300
  %v5302 = vsel %vm75, %v5073, 0.0
  %v5303 = vadd.f32 %v5301, %v5302
  %v5304 = vsel %vm75, %v5197, 0.0
  %v5305 = vadd.f32 %v5303, %v5304
  %v5306 = vsel %vm75, %v4830, 0.0
  %v5307 = vsel %vm75, %v4954, 0.0
  %v5308 = vadd.f32 %v5306, %v5307
  %v5309 = vsel %vm75, %v5078, 0.0
  %v5310 = vadd.f32 %v5308, %v5309
  %v5311 = vsel %vm75, %v5202, 0.0
  %v5312 = vadd.f32 %v5310, %v5311
  %v5313 = vsel %vm75, %v4833, 0.0
  %v5314 = vsel %vm75, %v4957, 0.0
  %v5315 = vadd.f32 %v5313, %v5314
  %v5316 = vsel %vm75, %v5081, 0.0
  %v5317 = vadd.f32 %v5315, %v5316
  %v5318 = vsel %vm75, %v5205, 0.0
  %v5319 = vadd.f32 %v5317, %v5318
  %v5320 = vld [vmem:[%s7] sm:$0x1]
  %v5322 = vlaneseq
  %v5323 = vshrl.u32 %v5322, 7
  %v5324 = vsub.s32 0, %v5323
  %v5325 = vrot.slane %v5320, %v5324
  %v5327 = vadd.f32 %v5214, %v5325
  %v5328 = vadd.f32 %v5221, %v5325
  %v5329 = vadd.f32 %v5228, %v5325
  %v5330 = vadd.f32 %v5235, %v5325
  %v5331 = vadd.f32 %v5242, %v5325
  %v5332 = vadd.f32 %v5249, %v5325
  %v5333 = vadd.f32 %v5256, %v5325
  %v5334 = vadd.f32 %v5263, %v5325
  %v5335 = vadd.f32 %v5270, %v5325
  %v5336 = vadd.f32 %v5277, %v5325
  %v5337 = vadd.f32 %v5284, %v5325
  %v5338 = vadd.f32 %v5291, %v5325
  %v5339 = vadd.f32 %v5298, %v5325
  %v5340 = vadd.f32 %v5305, %v5325
  %v5341 = vadd.f32 %v5312, %v5325
  %v5342 = vadd.f32 %v5319, %v5325
  %v5343 = vadd.f32 %v57, %v5327
  %v5344 = vadd.f32 %v58, %v5328
  %v5345 = vadd.f32 %v59, %v5329
  %v5346 = vadd.f32 %v60, %v5330
  %v5347 = vadd.f32 %v61, %v5331
  %v5348 = vadd.f32 %v62, %v5332
  %v5349 = vadd.f32 %v63, %v5333
  %v5350 = vadd.f32 %v64, %v5334
  %v5351 = vadd.f32 %v65, %v5335
  %v5352 = vadd.f32 %v66, %v5336
  %v5353 = vadd.f32 %v67, %v5337
  %v5354 = vadd.f32 %v68, %v5338
  %v5355 = vadd.f32 %v69, %v5339
  %v5356 = vadd.f32 %v70, %v5340
  %v5357 = vadd.f32 %v71, %v5341
  %v5358 = vadd.f32 %v72, %v5342
  %v5359 = vld [vmem:[%s8] sm:$0x1]
  %v5360 = vld [vmem:[%s9] sm:$0x1]
  %v5361 = vsel %vm75, %v5343, 0.0
  %5362 = vadd.xlane.f32.xlu0 %v5361
  %v5363 = vpop.xlane.xlu0 %5362
  %v5364 = vsel %vm75, %v5344, 0.0
  %5365 = vadd.xlane.f32.xlu0 %v5364
  %v5366 = vpop.xlane.xlu0 %5365
  %v5367 = vsel %vm75, %v5345, 0.0
  %5368 = vadd.xlane.f32.xlu0 %v5367
  %v5369 = vpop.xlane.xlu0 %5368
  %v5370 = vsel %vm75, %v5346, 0.0
  %5371 = vadd.xlane.f32.xlu0 %v5370
  %v5372 = vpop.xlane.xlu0 %5371
  %v5373 = vsel %vm75, %v5347, 0.0
  %5374 = vadd.xlane.f32.xlu0 %v5373
  %v5375 = vpop.xlane.xlu0 %5374
  %v5376 = vsel %vm75, %v5348, 0.0
  %5377 = vadd.xlane.f32.xlu0 %v5376
  %v5378 = vpop.xlane.xlu0 %5377
  %v5379 = vsel %vm75, %v5349, 0.0
  %5380 = vadd.xlane.f32.xlu0 %v5379
  %v5381 = vpop.xlane.xlu0 %5380
  %v5382 = vsel %vm75, %v5350, 0.0
  %5383 = vadd.xlane.f32.xlu0 %v5382
  %v5384 = vpop.xlane.xlu0 %5383
  %v5385 = vsel %vm75, %v5351, 0.0
  %5386 = vadd.xlane.f32.xlu0 %v5385
  %v5387 = vpop.xlane.xlu0 %5386
  %v5388 = vsel %vm75, %v5352, 0.0
  %5389 = vadd.xlane.f32.xlu0 %v5388
  %v5390 = vpop.xlane.xlu0 %5389
  %v5391 = vsel %vm75, %v5353, 0.0
  %5392 = vadd.xlane.f32.xlu0 %v5391
  %v5393 = vpop.xlane.xlu0 %5392
  %v5394 = vsel %vm75, %v5354, 0.0
  %5395 = vadd.xlane.f32.xlu0 %v5394
  %v5396 = vpop.xlane.xlu0 %5395
  %v5397 = vsel %vm75, %v5355, 0.0
  %5398 = vadd.xlane.f32.xlu0 %v5397
  %v5399 = vpop.xlane.xlu0 %5398
  %v5400 = vsel %vm75, %v5356, 0.0
  %5401 = vadd.xlane.f32.xlu0 %v5400
  %v5402 = vpop.xlane.xlu0 %5401
  %v5403 = vsel %vm75, %v5357, 0.0
  %5404 = vadd.xlane.f32.xlu0 %v5403
  %v5405 = vpop.xlane.xlu0 %5404
  %v5406 = vsel %vm75, %v5358, 0.0
  %5407 = vadd.xlane.f32.xlu0 %v5406
  %v5408 = vpop.xlane.xlu0 %5407
  %v5409 = vmul.f32 %v5363, %v124
  %v5410 = vmul.f32 %v5366, %v124
  %v5411 = vmul.f32 %v5369, %v124
  %v5412 = vmul.f32 %v5372, %v124
  %v5413 = vmul.f32 %v5375, %v124
  %v5414 = vmul.f32 %v5378, %v124
  %v5415 = vmul.f32 %v5381, %v124
  %v5416 = vmul.f32 %v5384, %v124
  %v5417 = vmul.f32 %v5387, %v124
  %v5418 = vmul.f32 %v5390, %v124
  %v5419 = vmul.f32 %v5393, %v124
  %v5420 = vmul.f32 %v5396, %v124
  %v5421 = vmul.f32 %v5399, %v124
  %v5422 = vmul.f32 %v5402, %v124
  %v5423 = vmul.f32 %v5405, %v124
  %v5424 = vmul.f32 %v5408, %v124
  %v5425 = vsub.f32 %v5343, %v5409
  %v5426 = vsub.f32 %v5344, %v5410
  %v5427 = vsub.f32 %v5345, %v5411
  %v5428 = vsub.f32 %v5346, %v5412
  %v5429 = vsub.f32 %v5347, %v5413
  %v5430 = vsub.f32 %v5348, %v5414
  %v5431 = vsub.f32 %v5349, %v5415
  %v5432 = vsub.f32 %v5350, %v5416
  %v5433 = vsub.f32 %v5351, %v5417
  %v5434 = vsub.f32 %v5352, %v5418
  %v5435 = vsub.f32 %v5353, %v5419
  %v5436 = vsub.f32 %v5354, %v5420
  %v5437 = vsub.f32 %v5355, %v5421
  %v5438 = vsub.f32 %v5356, %v5422
  %v5439 = vsub.f32 %v5357, %v5423
  %v5440 = vsub.f32 %v5358, %v5424
  %v5441 = vmul.f32 %v5425, %v5425
  %v5442 = vmul.f32 %v5426, %v5426
  %v5443 = vmul.f32 %v5427, %v5427
  %v5444 = vmul.f32 %v5428, %v5428
  %v5445 = vmul.f32 %v5429, %v5429
  %v5446 = vmul.f32 %v5430, %v5430
  %v5447 = vmul.f32 %v5431, %v5431
  %v5448 = vmul.f32 %v5432, %v5432
  %v5449 = vmul.f32 %v5433, %v5433
  %v5450 = vmul.f32 %v5434, %v5434
  %v5451 = vmul.f32 %v5435, %v5435
  %v5452 = vmul.f32 %v5436, %v5436
  %v5453 = vmul.f32 %v5437, %v5437
  %v5454 = vmul.f32 %v5438, %v5438
  %v5455 = vmul.f32 %v5439, %v5439
  %v5456 = vmul.f32 %v5440, %v5440
  %v5457 = vsel %vm75, %v5441, 0.0
  %5458 = vadd.xlane.f32.xlu0 %v5457
  %v5459 = vpop.xlane.xlu0 %5458
  %v5460 = vsel %vm75, %v5442, 0.0
  %5461 = vadd.xlane.f32.xlu0 %v5460
  %v5462 = vpop.xlane.xlu0 %5461
  %v5463 = vsel %vm75, %v5443, 0.0
  %5464 = vadd.xlane.f32.xlu0 %v5463
  %v5465 = vpop.xlane.xlu0 %5464
  %v5466 = vsel %vm75, %v5444, 0.0
  %5467 = vadd.xlane.f32.xlu0 %v5466
  %v5468 = vpop.xlane.xlu0 %5467
  %v5469 = vsel %vm75, %v5445, 0.0
  %5470 = vadd.xlane.f32.xlu0 %v5469
  %v5471 = vpop.xlane.xlu0 %5470
  %v5472 = vsel %vm75, %v5446, 0.0
  %5473 = vadd.xlane.f32.xlu0 %v5472
  %v5474 = vpop.xlane.xlu0 %5473
  %v5475 = vsel %vm75, %v5447, 0.0
  %5476 = vadd.xlane.f32.xlu0 %v5475
  %v5477 = vpop.xlane.xlu0 %5476
  %v5478 = vsel %vm75, %v5448, 0.0
  %5479 = vadd.xlane.f32.xlu0 %v5478
  %v5480 = vpop.xlane.xlu0 %5479
  %v5481 = vsel %vm75, %v5449, 0.0
  %5482 = vadd.xlane.f32.xlu0 %v5481
  %v5483 = vpop.xlane.xlu0 %5482
  %v5484 = vsel %vm75, %v5450, 0.0
  %5485 = vadd.xlane.f32.xlu0 %v5484
  %v5486 = vpop.xlane.xlu0 %5485
  %v5487 = vsel %vm75, %v5451, 0.0
  %5488 = vadd.xlane.f32.xlu0 %v5487
  %v5489 = vpop.xlane.xlu0 %5488
  %v5490 = vsel %vm75, %v5452, 0.0
  %5491 = vadd.xlane.f32.xlu0 %v5490
  %v5492 = vpop.xlane.xlu0 %5491
  %v5493 = vsel %vm75, %v5453, 0.0
  %5494 = vadd.xlane.f32.xlu0 %v5493
  %v5495 = vpop.xlane.xlu0 %5494
  %v5496 = vsel %vm75, %v5454, 0.0
  %5497 = vadd.xlane.f32.xlu0 %v5496
  %v5498 = vpop.xlane.xlu0 %5497
  %v5499 = vsel %vm75, %v5455, 0.0
  %5500 = vadd.xlane.f32.xlu0 %v5499
  %v5501 = vpop.xlane.xlu0 %5500
  %v5502 = vsel %vm75, %v5456, 0.0
  %5503 = vadd.xlane.f32.xlu0 %v5502
  %v5504 = vpop.xlane.xlu0 %5503
  %v5505 = vmul.f32 %v5459, %v124
  %v5506 = vmul.f32 %v5462, %v124
  %v5507 = vmul.f32 %v5465, %v124
  %v5508 = vmul.f32 %v5468, %v124
  %v5509 = vmul.f32 %v5471, %v124
  %v5510 = vmul.f32 %v5474, %v124
  %v5511 = vmul.f32 %v5477, %v124
  %v5512 = vmul.f32 %v5480, %v124
  %v5513 = vmul.f32 %v5483, %v124
  %v5514 = vmul.f32 %v5486, %v124
  %v5515 = vmul.f32 %v5489, %v124
  %v5516 = vmul.f32 %v5492, %v124
  %v5517 = vmul.f32 %v5495, %v124
  %v5518 = vmul.f32 %v5498, %v124
  %v5519 = vmul.f32 %v5501, %v124
  %v5520 = vmul.f32 %v5504, %v124
  %v5521 = vadd.f32 %v5505, 1e-05
  %v5522 = vadd.f32 %v5506, 1e-05
  %v5523 = vadd.f32 %v5507, 1e-05
  %v5524 = vadd.f32 %v5508, 1e-05
  %v5525 = vadd.f32 %v5509, 1e-05
  %v5526 = vadd.f32 %v5510, 1e-05
  %v5527 = vadd.f32 %v5511, 1e-05
  %v5528 = vadd.f32 %v5512, 1e-05
  %v5529 = vadd.f32 %v5513, 1e-05
  %v5530 = vadd.f32 %v5514, 1e-05
  %v5531 = vadd.f32 %v5515, 1e-05
  %v5532 = vadd.f32 %v5516, 1e-05
  %v5533 = vadd.f32 %v5517, 1e-05
  %v5534 = vadd.f32 %v5518, 1e-05
  %v5535 = vadd.f32 %v5519, 1e-05
  %v5536 = vadd.f32 %v5520, 1e-05
  %v5537 = vrsqrt.pop %v5521
  %v5538 = vrsqrt.pop %v5522
  %v5539 = vrsqrt.pop %v5523
  %v5540 = vrsqrt.pop %v5524
  %v5541 = vrsqrt.pop %v5525
  %v5542 = vrsqrt.pop %v5526
  %v5543 = vrsqrt.pop %v5527
  %v5544 = vrsqrt.pop %v5528
  %v5545 = vrsqrt.pop %v5529
  %v5546 = vrsqrt.pop %v5530
  %v5547 = vrsqrt.pop %v5531
  %v5548 = vrsqrt.pop %v5532
  %v5549 = vrsqrt.pop %v5533
  %v5550 = vrsqrt.pop %v5534
  %v5551 = vrsqrt.pop %v5535
  %v5552 = vrsqrt.pop %v5536
  %v5553 = vmul.f32 %v5425, %v5537
  %v5554 = vmul.f32 %v5426, %v5538
  %v5555 = vmul.f32 %v5427, %v5539
  %v5556 = vmul.f32 %v5428, %v5540
  %v5557 = vmul.f32 %v5429, %v5541
  %v5558 = vmul.f32 %v5430, %v5542
  %v5559 = vmul.f32 %v5431, %v5543
  %v5560 = vmul.f32 %v5432, %v5544
  %v5561 = vmul.f32 %v5433, %v5545
  %v5562 = vmul.f32 %v5434, %v5546
  %v5563 = vmul.f32 %v5435, %v5547
  %v5564 = vmul.f32 %v5436, %v5548
  %v5565 = vmul.f32 %v5437, %v5549
  %v5566 = vmul.f32 %v5438, %v5550
  %v5567 = vmul.f32 %v5439, %v5551
  %v5568 = vmul.f32 %v5440, %v5552
  %v5570 = vlaneseq
  %v5571 = vshrl.u32 %v5570, 7
  %v5572 = vsub.s32 0, %v5571
  %v5573 = vrot.slane %v5359, %v5572
  %v5575 = vmul.f32 %v5553, %v5573
  %v5576 = vmul.f32 %v5554, %v5573
  %v5577 = vmul.f32 %v5555, %v5573
  %v5578 = vmul.f32 %v5556, %v5573
  %v5579 = vmul.f32 %v5557, %v5573
  %v5580 = vmul.f32 %v5558, %v5573
  %v5581 = vmul.f32 %v5559, %v5573
  %v5582 = vmul.f32 %v5560, %v5573
  %v5583 = vmul.f32 %v5561, %v5573
  %v5584 = vmul.f32 %v5562, %v5573
  %v5585 = vmul.f32 %v5563, %v5573
  %v5586 = vmul.f32 %v5564, %v5573
  %v5587 = vmul.f32 %v5565, %v5573
  %v5588 = vmul.f32 %v5566, %v5573
  %v5589 = vmul.f32 %v5567, %v5573
  %v5590 = vmul.f32 %v5568, %v5573
  %v5592 = vlaneseq
  %v5593 = vshrl.u32 %v5592, 7
  %v5594 = vsub.s32 0, %v5593
  %v5595 = vrot.slane %v5360, %v5594
  %v5597 = vadd.f32 %v5575, %v5595
  %v5598 = vadd.f32 %v5576, %v5595
  %v5599 = vadd.f32 %v5577, %v5595
  %v5600 = vadd.f32 %v5578, %v5595
  %v5601 = vadd.f32 %v5579, %v5595
  %v5602 = vadd.f32 %v5580, %v5595
  %v5603 = vadd.f32 %v5581, %v5595
  %v5604 = vadd.f32 %v5582, %v5595
  %v5605 = vadd.f32 %v5583, %v5595
  %v5606 = vadd.f32 %v5584, %v5595
  %v5607 = vadd.f32 %v5585, %v5595
  %v5608 = vadd.f32 %v5586, %v5595
  %v5609 = vadd.f32 %v5587, %v5595
  %v5610 = vadd.f32 %v5588, %v5595
  %v5611 = vadd.f32 %v5589, %v5595
  %v5612 = vadd.f32 %v5590, %v5595
  %v5613 = vpack.c.bf16 %v5598, %v5597
  %v5614 = vpack.c.bf16 %v5600, %v5599
  %v5615 = vpack.c.bf16 %v5602, %v5601
  %v5616 = vpack.c.bf16 %v5604, %v5603
  %v5617 = vpack.c.bf16 %v5606, %v5605
  %v5618 = vpack.c.bf16 %v5608, %v5607
  %v5619 = vpack.c.bf16 %v5610, %v5609
  %v5620 = vpack.c.bf16 %v5612, %v5611
  %v5621 = vld [vmem:[%s10] sm:$0xf]
  %v5622 = vld [vmem:[%s10 + $0x4] sm:$0xf]
  %v5623 = vld [vmem:[%s10 + $0x8] sm:$0xf]
  %v5624 = vld [vmem:[%s10 + $0xc] sm:$0xf]
  %v5625 = vld [vmem:[%s11] sm:$0x1]
  %v5627 = vlaneseq
  %v5628 = vshrl.u32 %v5627, 7
  %v5629 = vsub.s32 0, %v5628
  %v5630 = vrot.slane %v5625, %v5629
  %v5636 = vunpack.c.l.b16 %v5621
  %v5637 = vunpack.c.l.b16 %v5622
  %v5638 = vunpack.c.l.b16 %v5623
  %v5639 = vunpack.c.l.b16 %v5624
  %v5640 = vpack.c.b16 %v5637, %v5636
  %v5641 = vpack.c.b16 %v5639, %v5638
  %v5645 = vsel %vm75, %v5613, 0
  %v5648 = vsel %vm75, %v5614, 0
  %v5651 = vsel %vm75, %v5615, 0
  %v5654 = vsel %vm75, %v5616, 0
  %v5657 = vsel %vm75, %v5617, 0
  %v5660 = vsel %vm75, %v5618, 0
  %v5663 = vsel %vm75, %v5619, 0
  %v5666 = vsel %vm75, %v5620, 0
  %5668 = vmatprep.subr.bf16.mxu0 0
  %5669 = vmatpush1.bf16.msra.mxu0 %v5640
  %5670 = vmatprep.subr.bf16.mxu0 0
  %5671 = vmatpush1.bf16.msra.mxu0 %v5641
  %5672 = vmatprep.subr.bf16.mxu0 0
  %5673 = vmatpush1.bf16.msra.mxu0 0
  %5674 = vmatprep.subr.bf16.mxu0 0
  %5675 = vmatpush1.bf16.msra.mxu0 0
  %5676 = vmatprep.subr.bf16.mxu0 0
  %5677 = vmatpush1.bf16.msra.mxu0 0
  %5678 = vmatprep.subr.bf16.mxu0 0
  %5679 = vmatpush1.bf16.msra.mxu0 0
  %5680 = vmatprep.subr.bf16.mxu0 0
  %5681 = vmatpush1.bf16.msra.mxu0 0
  %5682 = vmatprep.subr.bf16.mxu0 0
  %5683 = vmatpush1.bf16.msra.mxu0 0
  %5684 = vmatprep.subr.bf16.mxu0 0
  %5685 = vmatpush1.bf16.msra.mxu0 0
  %5686 = vmatprep.subr.bf16.mxu0 0
  %5687 = vmatpush1.bf16.msra.mxu0 0
  %5688 = vmatprep.subr.bf16.mxu0 0
  %5689 = vmatpush1.bf16.msra.mxu0 0
  %5690 = vmatprep.subr.bf16.mxu0 0
  %5691 = vmatpush1.bf16.msra.mxu0 0
  %5692 = vmatprep.subr.bf16.mxu0 0
  %5693 = vmatpush1.bf16.msra.mxu0 0
  %5694 = vmatprep.subr.bf16.mxu0 0
  %5695 = vmatpush1.bf16.msra.mxu0 0
  %5696 = vmatprep.subr.bf16.mxu0 0
  %5697 = vmatpush1.bf16.msra.mxu0 0
  %5698 = vmatprep.subr.bf16.mxu0 0
  %5699 = vmatpush1.bf16.msra.mxu0 0
  %5700 = vmatprep.mubr.bf16.mxu0 0
  %5701 = vmatmul.mubr.bf16.gmra.mrb[0].mxu0 %v5645
  %v5702 = vpop.f32.mrb[0].mxu0
  %v5703 = vadd.f32 %v5630, %v5702
  %v5704 = vpop.f32.mrb[0].mxu0
  %v5705 = vpop.f32.mrb[0].mxu0
  %v5706 = vadd.f32 %v5630, %v5705
  %v5707 = vpop.f32.mrb[0].mxu0
  %5708 = vmatprep.mubr.bf16.mxu0 0
  %5709 = vmatmul.mubr.bf16.gmra.mrb[0].mxu0 %v5648
  %v5710 = vpop.f32.mrb[0].mxu0
  %v5711 = vadd.f32 %v5630, %v5710
  %v5712 = vpop.f32.mrb[0].mxu0
  %v5713 = vpop.f32.mrb[0].mxu0
  %v5714 = vadd.f32 %v5630, %v5713
  %v5715 = vpop.f32.mrb[0].mxu0
  %5716 = vmatprep.mubr.bf16.mxu0 0
  %5717 = vmatmul.mubr.bf16.gmra.mrb[0].mxu0 %v5651
  %v5718 = vpop.f32.mrb[0].mxu0
  %v5719 = vadd.f32 %v5630, %v5718
  %v5720 = vpop.f32.mrb[0].mxu0
  %v5721 = vpop.f32.mrb[0].mxu0
  %v5722 = vadd.f32 %v5630, %v5721
  %v5723 = vpop.f32.mrb[0].mxu0
  %5724 = vmatprep.mubr.bf16.mxu0 0
  %5725 = vmatmul.mubr.bf16.gmra.mrb[0].mxu0 %v5654
  %v5726 = vpop.f32.mrb[0].mxu0
  %v5727 = vadd.f32 %v5630, %v5726
  %v5728 = vpop.f32.mrb[0].mxu0
  %v5729 = vpop.f32.mrb[0].mxu0
  %v5730 = vadd.f32 %v5630, %v5729
  %v5731 = vpop.f32.mrb[0].mxu0
  %5732 = vmatprep.mubr.bf16.mxu0 0
  %5733 = vmatmul.mubr.bf16.gmra.mrb[0].mxu0 %v5657
  %v5734 = vpop.f32.mrb[0].mxu0
  %v5735 = vadd.f32 %v5630, %v5734
  %v5736 = vpop.f32.mrb[0].mxu0
  %v5737 = vpop.f32.mrb[0].mxu0
  %v5738 = vadd.f32 %v5630, %v5737
  %v5739 = vpop.f32.mrb[0].mxu0
  %5740 = vmatprep.mubr.bf16.mxu0 0
  %5741 = vmatmul.mubr.bf16.gmra.mrb[0].mxu0 %v5660
  %v5742 = vpop.f32.mrb[0].mxu0
  %v5743 = vadd.f32 %v5630, %v5742
  %v5744 = vpop.f32.mrb[0].mxu0
  %v5745 = vpop.f32.mrb[0].mxu0
  %v5746 = vadd.f32 %v5630, %v5745
  %v5747 = vpop.f32.mrb[0].mxu0
  %5748 = vmatprep.mubr.bf16.mxu0 0
  %5749 = vmatmul.mubr.bf16.gmra.mrb[0].mxu0 %v5663
  %v5750 = vpop.f32.mrb[0].mxu0
  %v5751 = vadd.f32 %v5630, %v5750
  %v5752 = vpop.f32.mrb[0].mxu0
  %v5753 = vpop.f32.mrb[0].mxu0
  %v5754 = vadd.f32 %v5630, %v5753
  %v5755 = vpop.f32.mrb[0].mxu0
  %5756 = vmatprep.mubr.bf16.mxu0 0
  %5757 = vmatmul.mubr.bf16.gmra.mrb[0].mxu0 %v5666
  %v5758 = vpop.f32.mrb[0].mxu0
  %v5759 = vadd.f32 %v5630, %v5758
  %v5760 = vpop.f32.mrb[0].mxu0
  %v5761 = vpop.f32.mrb[0].mxu0
  %v5762 = vadd.f32 %v5630, %v5761
  %v5763 = vpop.f32.mrb[0].mxu0
  %5764 = vdwg.mxu0
  %v5765 = vmul.f32 %v5703, 0.5
  %v5766 = vmul.f32 %v5706, 0.5
  %v5767 = vmul.f32 %v5711, 0.5
  %v5768 = vmul.f32 %v5714, 0.5
  %v5769 = vmul.f32 %v5719, 0.5
  %v5770 = vmul.f32 %v5722, 0.5
  %v5771 = vmul.f32 %v5727, 0.5
  %v5772 = vmul.f32 %v5730, 0.5
  %v5773 = vmul.f32 %v5735, 0.5
  %v5774 = vmul.f32 %v5738, 0.5
  %v5775 = vmul.f32 %v5743, 0.5
  %v5776 = vmul.f32 %v5746, 0.5
  %v5777 = vmul.f32 %v5751, 0.5
  %v5778 = vmul.f32 %v5754, 0.5
  %v5779 = vmul.f32 %v5759, 0.5
  %v5780 = vmul.f32 %v5762, 0.5
  %v5781 = vmul.f32 %v5703, 0.70710677
  %v5782 = vmul.f32 %v5706, 0.70710677
  %v5783 = vmul.f32 %v5711, 0.70710677
  %v5784 = vmul.f32 %v5714, 0.70710677
  %v5785 = vmul.f32 %v5719, 0.70710677
  %v5786 = vmul.f32 %v5722, 0.70710677
  %v5787 = vmul.f32 %v5727, 0.70710677
  %v5788 = vmul.f32 %v5730, 0.70710677
  %v5789 = vmul.f32 %v5735, 0.70710677
  %v5790 = vmul.f32 %v5738, 0.70710677
  %v5791 = vmul.f32 %v5743, 0.70710677
  %v5792 = vmul.f32 %v5746, 0.70710677
  %v5793 = vmul.f32 %v5751, 0.70710677
  %v5794 = vmul.f32 %v5754, 0.70710677
  %v5795 = vmul.f32 %v5759, 0.70710677
  %v5796 = vmul.f32 %v5762, 0.70710677
  %v5797 = verf.f32.pop %v5781
  %v5798 = verf.f32.pop %v5782
  %v5799 = verf.f32.pop %v5783
  %v5800 = verf.f32.pop %v5784
  %v5801 = verf.f32.pop %v5785
  %v5802 = verf.f32.pop %v5786
  %v5803 = verf.f32.pop %v5787
  %v5804 = verf.f32.pop %v5788
  %v5805 = verf.f32.pop %v5789
  %v5806 = verf.f32.pop %v5790
  %v5807 = verf.f32.pop %v5791
  %v5808 = verf.f32.pop %v5792
  %v5809 = verf.f32.pop %v5793
  %v5810 = verf.f32.pop %v5794
  %v5811 = verf.f32.pop %v5795
  %v5812 = verf.f32.pop %v5796
  %v5813 = vadd.f32 %v5797, 1.0
  %v5814 = vadd.f32 %v5798, 1.0
  %v5815 = vadd.f32 %v5799, 1.0
  %v5816 = vadd.f32 %v5800, 1.0
  %v5817 = vadd.f32 %v5801, 1.0
  %v5818 = vadd.f32 %v5802, 1.0
  %v5819 = vadd.f32 %v5803, 1.0
  %v5820 = vadd.f32 %v5804, 1.0
  %v5821 = vadd.f32 %v5805, 1.0
  %v5822 = vadd.f32 %v5806, 1.0
  %v5823 = vadd.f32 %v5807, 1.0
  %v5824 = vadd.f32 %v5808, 1.0
  %v5825 = vadd.f32 %v5809, 1.0
  %v5826 = vadd.f32 %v5810, 1.0
  %v5827 = vadd.f32 %v5811, 1.0
  %v5828 = vadd.f32 %v5812, 1.0
  %v5829 = vmul.f32 %v5765, %v5813
  %v5830 = vmul.f32 %v5766, %v5814
  %v5831 = vmul.f32 %v5767, %v5815
  %v5832 = vmul.f32 %v5768, %v5816
  %v5833 = vmul.f32 %v5769, %v5817
  %v5834 = vmul.f32 %v5770, %v5818
  %v5835 = vmul.f32 %v5771, %v5819
  %v5836 = vmul.f32 %v5772, %v5820
  %v5837 = vmul.f32 %v5773, %v5821
  %v5838 = vmul.f32 %v5774, %v5822
  %v5839 = vmul.f32 %v5775, %v5823
  %v5840 = vmul.f32 %v5776, %v5824
  %v5841 = vmul.f32 %v5777, %v5825
  %v5842 = vmul.f32 %v5778, %v5826
  %v5843 = vmul.f32 %v5779, %v5827
  %v5844 = vmul.f32 %v5780, %v5828
  %v5845 = vpack.c.bf16 %v5830, %v5829
  %v5846 = vpack.c.bf16 %v5832, %v5831
  %v5847 = vpack.c.bf16 %v5834, %v5833
  %v5848 = vpack.c.bf16 %v5836, %v5835
  %v5849 = vpack.c.bf16 %v5838, %v5837
  %v5850 = vpack.c.bf16 %v5840, %v5839
  %v5851 = vpack.c.bf16 %v5842, %v5841
  %v5852 = vpack.c.bf16 %v5844, %v5843
  %v5853 = vld [vmem:[%s12] sm:$0xf]
  %v5854 = vld [vmem:[%s12 + $0x4] sm:$0xf]
  %v5855 = vld [vmem:[%s12 + $0x8] sm:$0xf]
  %v5856 = vld [vmem:[%s12 + $0xc] sm:$0xf]
  %v5857 = vld [vmem:[%s12 + $0x10] sm:$0xf]
  %v5858 = vld [vmem:[%s12 + $0x14] sm:$0xf]
  %v5859 = vld [vmem:[%s12 + $0x18] sm:$0xf]
  %v5860 = vld [vmem:[%s12 + $0x1c] sm:$0xf]
  %v5861 = vld [vmem:[%s12 + $0x20] sm:$0xf]
  %v5862 = vld [vmem:[%s12 + $0x24] sm:$0xf]
  %v5863 = vld [vmem:[%s12 + $0x28] sm:$0xf]
  %v5864 = vld [vmem:[%s12 + $0x2c] sm:$0xf]
  %v5865 = vld [vmem:[%s12 + $0x30] sm:$0xf]
  %v5866 = vld [vmem:[%s12 + $0x34] sm:$0xf]
  %v5867 = vld [vmem:[%s12 + $0x38] sm:$0xf]
  %v5868 = vld [vmem:[%s12 + $0x3c] sm:$0xf]
  %v5869 = vld [vmem:[%s13] sm:$0x1]
  %v5871 = vlaneseq
  %v5872 = vshrl.u32 %v5871, 7
  %v5873 = vsub.s32 0, %v5872
  %v5874 = vrot.slane %v5869, %v5873
  %v5892 = vunpack.c.l.b16 %v5853
  %v5893 = vunpack.c.l.b16 %v5854
  %v5894 = vunpack.c.l.b16 %v5855
  %v5895 = vunpack.c.l.b16 %v5856
  %v5896 = vunpack.c.l.b16 %v5857
  %v5897 = vunpack.c.l.b16 %v5858
  %v5898 = vunpack.c.l.b16 %v5859
  %v5899 = vunpack.c.l.b16 %v5860
  %v5900 = vunpack.c.l.b16 %v5861
  %v5901 = vunpack.c.l.b16 %v5862
  %v5902 = vunpack.c.l.b16 %v5863
  %v5903 = vunpack.c.l.b16 %v5864
  %v5904 = vunpack.c.l.b16 %v5865
  %v5905 = vunpack.c.l.b16 %v5866
  %v5906 = vunpack.c.l.b16 %v5867
  %v5907 = vunpack.c.l.b16 %v5868
  %v5908 = vpack.c.b16 %v5893, %v5892
  %v5909 = vpack.c.b16 %v5895, %v5894
  %v5910 = vpack.c.b16 %v5897, %v5896
  %v5911 = vpack.c.b16 %v5899, %v5898
  %v5912 = vpack.c.b16 %v5901, %v5900
  %v5913 = vpack.c.b16 %v5903, %v5902
  %v5914 = vpack.c.b16 %v5905, %v5904
  %v5915 = vpack.c.b16 %v5907, %v5906
  %5924 = vmatprep.subr.bf16.mxu0 0
  %5925 = vmatpush1.bf16.msra.mxu0 %v5908
  %5926 = vmatprep.subr.bf16.mxu0 0
  %5927 = vmatpush1.bf16.msra.mxu0 %v5909
  %5928 = vmatprep.subr.bf16.mxu0 0
  %5929 = vmatpush1.bf16.msra.mxu0 %v5910
  %5930 = vmatprep.subr.bf16.mxu0 0
  %5931 = vmatpush1.bf16.msra.mxu0 %v5911
  %5932 = vmatprep.subr.bf16.mxu0 0
  %5933 = vmatpush1.bf16.msra.mxu0 %v5912
  %5934 = vmatprep.subr.bf16.mxu0 0
  %5935 = vmatpush1.bf16.msra.mxu0 %v5913
  %5936 = vmatprep.subr.bf16.mxu0 0
  %5937 = vmatpush1.bf16.msra.mxu0 %v5914
  %5938 = vmatprep.subr.bf16.mxu0 0
  %5939 = vmatpush1.bf16.msra.mxu0 %v5915
  %5940 = vmatprep.subr.bf16.mxu0 0
  %5941 = vmatpush1.bf16.msra.mxu0 0
  %5942 = vmatprep.subr.bf16.mxu0 0
  %5943 = vmatpush1.bf16.msra.mxu0 0
  %5944 = vmatprep.subr.bf16.mxu0 0
  %5945 = vmatpush1.bf16.msra.mxu0 0
  %5946 = vmatprep.subr.bf16.mxu0 0
  %5947 = vmatpush1.bf16.msra.mxu0 0
  %5948 = vmatprep.subr.bf16.mxu0 0
  %5949 = vmatpush1.bf16.msra.mxu0 0
  %5950 = vmatprep.subr.bf16.mxu0 0
  %5951 = vmatpush1.bf16.msra.mxu0 0
  %5952 = vmatprep.subr.bf16.mxu0 0
  %5953 = vmatpush1.bf16.msra.mxu0 0
  %5954 = vmatprep.subr.bf16.mxu0 0
  %5955 = vmatpush1.bf16.msra.mxu0 0
  %5956 = vmatprep.mubr.bf16.mxu0 0
  %5957 = vmatmul.mubr.bf16.gmra.mrb[0].mxu0 %v5845
  %v5958 = vpop.f32.mrb[0].mxu0
  %v5959 = vadd.f32 %v5874, %v5958
  %v5960 = vpop.f32.mrb[0].mxu0
  %v5961 = vpop.f32.mrb[0].mxu0
  %v5962 = vadd.f32 %v5874, %v5961
  %v5963 = vpop.f32.mrb[0].mxu0
  %5964 = vmatprep.mubr.bf16.mxu0 0
  %5965 = vmatmul.mubr.bf16.gmra.mrb[0].mxu0 %v5846
  %v5966 = vpop.f32.mrb[0].mxu0
  %v5967 = vadd.f32 %v5874, %v5966
  %v5968 = vpop.f32.mrb[0].mxu0
  %v5969 = vpop.f32.mrb[0].mxu0
  %v5970 = vadd.f32 %v5874, %v5969
  %v5971 = vpop.f32.mrb[0].mxu0
  %5972 = vmatprep.mubr.bf16.mxu0 0
  %5973 = vmatmul.mubr.bf16.gmra.mrb[0].mxu0 %v5847
  %v5974 = vpop.f32.mrb[0].mxu0
  %v5975 = vadd.f32 %v5874, %v5974
  %v5976 = vpop.f32.mrb[0].mxu0
  %v5977 = vpop.f32.mrb[0].mxu0
  %v5978 = vadd.f32 %v5874, %v5977
  %v5979 = vpop.f32.mrb[0].mxu0
  %5980 = vmatprep.mubr.bf16.mxu0 0
  %5981 = vmatmul.mubr.bf16.gmra.mrb[0].mxu0 %v5848
  %v5982 = vpop.f32.mrb[0].mxu0
  %v5983 = vadd.f32 %v5874, %v5982
  %v5984 = vpop.f32.mrb[0].mxu0
  %v5985 = vpop.f32.mrb[0].mxu0
  %v5986 = vadd.f32 %v5874, %v5985
  %v5987 = vpop.f32.mrb[0].mxu0
  %5988 = vmatprep.mubr.bf16.mxu0 0
  %5989 = vmatmul.mubr.bf16.gmra.mrb[0].mxu0 %v5849
  %v5990 = vpop.f32.mrb[0].mxu0
  %v5991 = vadd.f32 %v5874, %v5990
  %v5992 = vpop.f32.mrb[0].mxu0
  %v5993 = vpop.f32.mrb[0].mxu0
  %v5994 = vadd.f32 %v5874, %v5993
  %v5995 = vpop.f32.mrb[0].mxu0
  %5996 = vmatprep.mubr.bf16.mxu0 0
  %5997 = vmatmul.mubr.bf16.gmra.mrb[0].mxu0 %v5850
  %v5998 = vpop.f32.mrb[0].mxu0
  %v5999 = vadd.f32 %v5874, %v5998
  %v6000 = vpop.f32.mrb[0].mxu0
  %v6001 = vpop.f32.mrb[0].mxu0
  %v6002 = vadd.f32 %v5874, %v6001
  %v6003 = vpop.f32.mrb[0].mxu0
  %6004 = vmatprep.mubr.bf16.mxu0 0
  %6005 = vmatmul.mubr.bf16.gmra.mrb[0].mxu0 %v5851
  %v6006 = vpop.f32.mrb[0].mxu0
  %v6007 = vadd.f32 %v5874, %v6006
  %v6008 = vpop.f32.mrb[0].mxu0
  %v6009 = vpop.f32.mrb[0].mxu0
  %v6010 = vadd.f32 %v5874, %v6009
  %v6011 = vpop.f32.mrb[0].mxu0
  %6012 = vmatprep.mubr.bf16.mxu0 0
  %6013 = vmatmul.mubr.bf16.gmra.mrb[0].mxu0 %v5852
  %v6014 = vpop.f32.mrb[0].mxu0
  %v6015 = vadd.f32 %v5874, %v6014
  %v6016 = vpop.f32.mrb[0].mxu0
  %v6017 = vpop.f32.mrb[0].mxu0
  %v6018 = vadd.f32 %v5874, %v6017
  %v6019 = vpop.f32.mrb[0].mxu0
  %6020 = vdwg.mxu0
  %v6021 = vadd.f32 %v5343, %v5959
  %v6022 = vadd.f32 %v5344, %v5962
  %v6023 = vadd.f32 %v5345, %v5967
  %v6024 = vadd.f32 %v5346, %v5970
  %v6025 = vadd.f32 %v5347, %v5975
  %v6026 = vadd.f32 %v5348, %v5978
  %v6027 = vadd.f32 %v5349, %v5983
  %v6028 = vadd.f32 %v5350, %v5986
  %v6029 = vadd.f32 %v5351, %v5991
  %v6030 = vadd.f32 %v5352, %v5994
  %v6031 = vadd.f32 %v5353, %v5999
  %v6032 = vadd.f32 %v5354, %v6002
  %v6033 = vadd.f32 %v5355, %v6007
  %v6034 = vadd.f32 %v5356, %v6010
  %v6035 = vadd.f32 %v5357, %v6015
  %v6036 = vadd.f32 %v5358, %v6018
  %v6037 = vpack.c.bf16 %v6022, %v6021
  %v6038 = vpack.c.bf16 %v6024, %v6023
  %v6039 = vpack.c.bf16 %v6026, %v6025
  %v6040 = vpack.c.bf16 %v6028, %v6027
  %v6041 = vpack.c.bf16 %v6030, %v6029
  %v6042 = vpack.c.bf16 %v6032, %v6031
  %v6043 = vpack.c.bf16 %v6034, %v6033
  %v6044 = vpack.c.bf16 %v6036, %v6035
  %v6045 = vld [vmem:[%s14] sm:$0xf]
  %v6046 = vld [vmem:[%s14 + $0x4] sm:$0xf]
  %v6047 = vld [vmem:[%s14 + $0x8] sm:$0xf]
  %v6048 = vld [vmem:[%s14 + $0xc] sm:$0xf]
  %v6053 = vunpack.c.l.b16 %v6045
  %v6054 = vunpack.c.l.b16 %v6046
  %v6055 = vunpack.c.l.b16 %v6047
  %v6056 = vunpack.c.l.b16 %v6048
  %v6057 = vpack.c.b16 %v6054, %v6053
  %v6058 = vpack.c.b16 %v6056, %v6055
  %v6062 = vsel %vm75, %v6037, 0
  %v6065 = vsel %vm75, %v6038, 0
  %v6068 = vsel %vm75, %v6039, 0
  %v6071 = vsel %vm75, %v6040, 0
  %v6074 = vsel %vm75, %v6041, 0
  %v6077 = vsel %vm75, %v6042, 0
  %v6080 = vsel %vm75, %v6043, 0
  %v6083 = vsel %vm75, %v6044, 0
  %6085 = vmatprep.subr.bf16.mxu0 0
  %6086 = vmatpush1.bf16.msra.mxu0 %v6057
  %6087 = vmatprep.subr.bf16.mxu0 0
  %6088 = vmatpush1.bf16.msra.mxu0 %v6058
  %6089 = vmatprep.subr.bf16.mxu0 0
  %6090 = vmatpush1.bf16.msra.mxu0 0
  %6091 = vmatprep.subr.bf16.mxu0 0
  %6092 = vmatpush1.bf16.msra.mxu0 0
  %6093 = vmatprep.subr.bf16.mxu0 0
  %6094 = vmatpush1.bf16.msra.mxu0 0
  %6095 = vmatprep.subr.bf16.mxu0 0
  %6096 = vmatpush1.bf16.msra.mxu0 0
  %6097 = vmatprep.subr.bf16.mxu0 0
  %6098 = vmatpush1.bf16.msra.mxu0 0
  %6099 = vmatprep.subr.bf16.mxu0 0
  %6100 = vmatpush1.bf16.msra.mxu0 0
  %6101 = vmatprep.subr.bf16.mxu0 0
  %6102 = vmatpush1.bf16.msra.mxu0 0
  %6103 = vmatprep.subr.bf16.mxu0 0
  %6104 = vmatpush1.bf16.msra.mxu0 0
  %6105 = vmatprep.subr.bf16.mxu0 0
  %6106 = vmatpush1.bf16.msra.mxu0 0
  %6107 = vmatprep.subr.bf16.mxu0 0
  %6108 = vmatpush1.bf16.msra.mxu0 0
  %6109 = vmatprep.subr.bf16.mxu0 0
  %6110 = vmatpush1.bf16.msra.mxu0 0
  %6111 = vmatprep.subr.bf16.mxu0 0
  %6112 = vmatpush1.bf16.msra.mxu0 0
  %6113 = vmatprep.subr.bf16.mxu0 0
  %6114 = vmatpush1.bf16.msra.mxu0 0
  %6115 = vmatprep.subr.bf16.mxu0 0
  %6116 = vmatpush1.bf16.msra.mxu0 0
  %6117 = vmatprep.mubr.bf16.mxu0 0
  %6118 = vmatmul.mubr.bf16.gmra.mrb[0].mxu0 %v6062
  %v6119 = vpop.f32.mrb[0].mxu0
  %v6120 = vadd.f32 0.0, %v6119
  %v6121 = vpop.f32.mrb[0].mxu0
  %v6122 = vpop.f32.mrb[0].mxu0
  %v6123 = vadd.f32 0.0, %v6122
  %v6124 = vpop.f32.mrb[0].mxu0
  %6125 = vmatprep.mubr.bf16.mxu0 0
  %6126 = vmatmul.mubr.bf16.gmra.mrb[0].mxu0 %v6065
  %v6127 = vpop.f32.mrb[0].mxu0
  %v6128 = vadd.f32 0.0, %v6127
  %v6129 = vpop.f32.mrb[0].mxu0
  %v6130 = vpop.f32.mrb[0].mxu0
  %v6131 = vadd.f32 0.0, %v6130
  %v6132 = vpop.f32.mrb[0].mxu0
  %6133 = vmatprep.mubr.bf16.mxu0 0
  %6134 = vmatmul.mubr.bf16.gmra.mrb[0].mxu0 %v6068
  %v6135 = vpop.f32.mrb[0].mxu0
  %v6136 = vadd.f32 0.0, %v6135
  %v6137 = vpop.f32.mrb[0].mxu0
  %v6138 = vpop.f32.mrb[0].mxu0
  %v6139 = vadd.f32 0.0, %v6138
  %v6140 = vpop.f32.mrb[0].mxu0
  %6141 = vmatprep.mubr.bf16.mxu0 0
  %6142 = vmatmul.mubr.bf16.gmra.mrb[0].mxu0 %v6071
  %v6143 = vpop.f32.mrb[0].mxu0
  %v6144 = vadd.f32 0.0, %v6143
  %v6145 = vpop.f32.mrb[0].mxu0
  %v6146 = vpop.f32.mrb[0].mxu0
  %v6147 = vadd.f32 0.0, %v6146
  %v6148 = vpop.f32.mrb[0].mxu0
  %6149 = vmatprep.mubr.bf16.mxu0 0
  %6150 = vmatmul.mubr.bf16.gmra.mrb[0].mxu0 %v6074
  %v6151 = vpop.f32.mrb[0].mxu0
  %v6152 = vadd.f32 0.0, %v6151
  %v6153 = vpop.f32.mrb[0].mxu0
  %v6154 = vpop.f32.mrb[0].mxu0
  %v6155 = vadd.f32 0.0, %v6154
  %v6156 = vpop.f32.mrb[0].mxu0
  %6157 = vmatprep.mubr.bf16.mxu0 0
  %6158 = vmatmul.mubr.bf16.gmra.mrb[0].mxu0 %v6077
  %v6159 = vpop.f32.mrb[0].mxu0
  %v6160 = vadd.f32 0.0, %v6159
  %v6161 = vpop.f32.mrb[0].mxu0
  %v6162 = vpop.f32.mrb[0].mxu0
  %v6163 = vadd.f32 0.0, %v6162
  %v6164 = vpop.f32.mrb[0].mxu0
  %6165 = vmatprep.mubr.bf16.mxu0 0
  %6166 = vmatmul.mubr.bf16.gmra.mrb[0].mxu0 %v6080
  %v6167 = vpop.f32.mrb[0].mxu0
  %v6168 = vadd.f32 0.0, %v6167
  %v6169 = vpop.f32.mrb[0].mxu0
  %v6170 = vpop.f32.mrb[0].mxu0
  %v6171 = vadd.f32 0.0, %v6170
  %v6172 = vpop.f32.mrb[0].mxu0
  %6173 = vmatprep.mubr.bf16.mxu0 0
  %6174 = vmatmul.mubr.bf16.gmra.mrb[0].mxu0 %v6083
  %v6175 = vpop.f32.mrb[0].mxu0
  %v6176 = vadd.f32 0.0, %v6175
  %v6177 = vpop.f32.mrb[0].mxu0
  %v6178 = vpop.f32.mrb[0].mxu0
  %v6179 = vadd.f32 0.0, %v6178
  %v6180 = vpop.f32.mrb[0].mxu0
  %6181 = vdwg.mxu0
  %v6182 = vld [vmem:[%s15] sm:$0x1]
  %v6183 = vld [vmem:[%s16] sm:$0x1]
  %vm6184 = vcmask 523264
  %v6185 = vsel %vm6184, %v6120, 0.0
  %6186 = vadd.xlane.f32.xlu0 %v6185
  %v6187 = vpop.xlane.xlu0 %6186
  %v6188 = vsel %vm6184, %v6123, 0.0
  %6189 = vadd.xlane.f32.xlu0 %v6188
  %v6190 = vpop.xlane.xlu0 %6189
  %v6191 = vsel %vm6184, %v6128, 0.0
  %6192 = vadd.xlane.f32.xlu0 %v6191
  %v6193 = vpop.xlane.xlu0 %6192
  %v6194 = vsel %vm6184, %v6131, 0.0
  %6195 = vadd.xlane.f32.xlu0 %v6194
  %v6196 = vpop.xlane.xlu0 %6195
  %v6197 = vsel %vm6184, %v6136, 0.0
  %6198 = vadd.xlane.f32.xlu0 %v6197
  %v6199 = vpop.xlane.xlu0 %6198
  %v6200 = vsel %vm6184, %v6139, 0.0
  %6201 = vadd.xlane.f32.xlu0 %v6200
  %v6202 = vpop.xlane.xlu0 %6201
  %v6203 = vsel %vm6184, %v6144, 0.0
  %6204 = vadd.xlane.f32.xlu0 %v6203
  %v6205 = vpop.xlane.xlu0 %6204
  %v6206 = vsel %vm6184, %v6147, 0.0
  %6207 = vadd.xlane.f32.xlu0 %v6206
  %v6208 = vpop.xlane.xlu0 %6207
  %v6209 = vsel %vm6184, %v6152, 0.0
  %6210 = vadd.xlane.f32.xlu0 %v6209
  %v6211 = vpop.xlane.xlu0 %6210
  %v6212 = vsel %vm6184, %v6155, 0.0
  %6213 = vadd.xlane.f32.xlu0 %v6212
  %v6214 = vpop.xlane.xlu0 %6213
  %v6215 = vsel %vm6184, %v6160, 0.0
  %6216 = vadd.xlane.f32.xlu0 %v6215
  %v6217 = vpop.xlane.xlu0 %6216
  %v6218 = vsel %vm6184, %v6163, 0.0
  %6219 = vadd.xlane.f32.xlu0 %v6218
  %v6220 = vpop.xlane.xlu0 %6219
  %v6221 = vsel %vm6184, %v6168, 0.0
  %6222 = vadd.xlane.f32.xlu0 %v6221
  %v6223 = vpop.xlane.xlu0 %6222
  %v6224 = vsel %vm6184, %v6171, 0.0
  %6225 = vadd.xlane.f32.xlu0 %v6224
  %v6226 = vpop.xlane.xlu0 %6225
  %v6227 = vsel %vm6184, %v6176, 0.0
  %6228 = vadd.xlane.f32.xlu0 %v6227
  %v6229 = vpop.xlane.xlu0 %6228
  %v6230 = vsel %vm6184, %v6179, 0.0
  %6231 = vadd.xlane.f32.xlu0 %v6230
  %v6232 = vpop.xlane.xlu0 %6231
  %v6233 = vrcp.pop 64.0
  %v6234 = vmul.f32 %v6187, %v6233
  %v6235 = vmul.f32 %v6190, %v6233
  %v6236 = vmul.f32 %v6193, %v6233
  %v6237 = vmul.f32 %v6196, %v6233
  %v6238 = vmul.f32 %v6199, %v6233
  %v6239 = vmul.f32 %v6202, %v6233
  %v6240 = vmul.f32 %v6205, %v6233
  %v6241 = vmul.f32 %v6208, %v6233
  %v6242 = vmul.f32 %v6211, %v6233
  %v6243 = vmul.f32 %v6214, %v6233
  %v6244 = vmul.f32 %v6217, %v6233
  %v6245 = vmul.f32 %v6220, %v6233
  %v6246 = vmul.f32 %v6223, %v6233
  %v6247 = vmul.f32 %v6226, %v6233
  %v6248 = vmul.f32 %v6229, %v6233
  %v6249 = vmul.f32 %v6232, %v6233
  %v6250 = vsub.f32 %v6120, %v6234
  %v6251 = vsub.f32 %v6123, %v6235
  %v6252 = vsub.f32 %v6128, %v6236
  %v6253 = vsub.f32 %v6131, %v6237
  %v6254 = vsub.f32 %v6136, %v6238
  %v6255 = vsub.f32 %v6139, %v6239
  %v6256 = vsub.f32 %v6144, %v6240
  %v6257 = vsub.f32 %v6147, %v6241
  %v6258 = vsub.f32 %v6152, %v6242
  %v6259 = vsub.f32 %v6155, %v6243
  %v6260 = vsub.f32 %v6160, %v6244
  %v6261 = vsub.f32 %v6163, %v6245
  %v6262 = vsub.f32 %v6168, %v6246
  %v6263 = vsub.f32 %v6171, %v6247
  %v6264 = vsub.f32 %v6176, %v6248
  %v6265 = vsub.f32 %v6179, %v6249
  %v6266 = vmul.f32 %v6250, %v6250
  %v6267 = vmul.f32 %v6251, %v6251
  %v6268 = vmul.f32 %v6252, %v6252
  %v6269 = vmul.f32 %v6253, %v6253
  %v6270 = vmul.f32 %v6254, %v6254
  %v6271 = vmul.f32 %v6255, %v6255
  %v6272 = vmul.f32 %v6256, %v6256
  %v6273 = vmul.f32 %v6257, %v6257
  %v6274 = vmul.f32 %v6258, %v6258
  %v6275 = vmul.f32 %v6259, %v6259
  %v6276 = vmul.f32 %v6260, %v6260
  %v6277 = vmul.f32 %v6261, %v6261
  %v6278 = vmul.f32 %v6262, %v6262
  %v6279 = vmul.f32 %v6263, %v6263
  %v6280 = vmul.f32 %v6264, %v6264
  %v6281 = vmul.f32 %v6265, %v6265
  %v6282 = vsel %vm6184, %v6266, 0.0
  %6283 = vadd.xlane.f32.xlu0 %v6282
  %v6284 = vpop.xlane.xlu0 %6283
  %v6285 = vsel %vm6184, %v6267, 0.0
  %6286 = vadd.xlane.f32.xlu0 %v6285
  %v6287 = vpop.xlane.xlu0 %6286
  %v6288 = vsel %vm6184, %v6268, 0.0
  %6289 = vadd.xlane.f32.xlu0 %v6288
  %v6290 = vpop.xlane.xlu0 %6289
  %v6291 = vsel %vm6184, %v6269, 0.0
  %6292 = vadd.xlane.f32.xlu0 %v6291
  %v6293 = vpop.xlane.xlu0 %6292
  %v6294 = vsel %vm6184, %v6270, 0.0
  %6295 = vadd.xlane.f32.xlu0 %v6294
  %v6296 = vpop.xlane.xlu0 %6295
  %v6297 = vsel %vm6184, %v6271, 0.0
  %6298 = vadd.xlane.f32.xlu0 %v6297
  %v6299 = vpop.xlane.xlu0 %6298
  %v6300 = vsel %vm6184, %v6272, 0.0
  %6301 = vadd.xlane.f32.xlu0 %v6300
  %v6302 = vpop.xlane.xlu0 %6301
  %v6303 = vsel %vm6184, %v6273, 0.0
  %6304 = vadd.xlane.f32.xlu0 %v6303
  %v6305 = vpop.xlane.xlu0 %6304
  %v6306 = vsel %vm6184, %v6274, 0.0
  %6307 = vadd.xlane.f32.xlu0 %v6306
  %v6308 = vpop.xlane.xlu0 %6307
  %v6309 = vsel %vm6184, %v6275, 0.0
  %6310 = vadd.xlane.f32.xlu0 %v6309
  %v6311 = vpop.xlane.xlu0 %6310
  %v6312 = vsel %vm6184, %v6276, 0.0
  %6313 = vadd.xlane.f32.xlu0 %v6312
  %v6314 = vpop.xlane.xlu0 %6313
  %v6315 = vsel %vm6184, %v6277, 0.0
  %6316 = vadd.xlane.f32.xlu0 %v6315
  %v6317 = vpop.xlane.xlu0 %6316
  %v6318 = vsel %vm6184, %v6278, 0.0
  %6319 = vadd.xlane.f32.xlu0 %v6318
  %v6320 = vpop.xlane.xlu0 %6319
  %v6321 = vsel %vm6184, %v6279, 0.0
  %6322 = vadd.xlane.f32.xlu0 %v6321
  %v6323 = vpop.xlane.xlu0 %6322
  %v6324 = vsel %vm6184, %v6280, 0.0
  %6325 = vadd.xlane.f32.xlu0 %v6324
  %v6326 = vpop.xlane.xlu0 %6325
  %v6327 = vsel %vm6184, %v6281, 0.0
  %6328 = vadd.xlane.f32.xlu0 %v6327
  %v6329 = vpop.xlane.xlu0 %6328
  %v6330 = vmul.f32 %v6284, %v6233
  %v6331 = vmul.f32 %v6287, %v6233
  %v6332 = vmul.f32 %v6290, %v6233
  %v6333 = vmul.f32 %v6293, %v6233
  %v6334 = vmul.f32 %v6296, %v6233
  %v6335 = vmul.f32 %v6299, %v6233
  %v6336 = vmul.f32 %v6302, %v6233
  %v6337 = vmul.f32 %v6305, %v6233
  %v6338 = vmul.f32 %v6308, %v6233
  %v6339 = vmul.f32 %v6311, %v6233
  %v6340 = vmul.f32 %v6314, %v6233
  %v6341 = vmul.f32 %v6317, %v6233
  %v6342 = vmul.f32 %v6320, %v6233
  %v6343 = vmul.f32 %v6323, %v6233
  %v6344 = vmul.f32 %v6326, %v6233
  %v6345 = vmul.f32 %v6329, %v6233
  %v6346 = vadd.f32 %v6330, 1e-05
  %v6347 = vadd.f32 %v6331, 1e-05
  %v6348 = vadd.f32 %v6332, 1e-05
  %v6349 = vadd.f32 %v6333, 1e-05
  %v6350 = vadd.f32 %v6334, 1e-05
  %v6351 = vadd.f32 %v6335, 1e-05
  %v6352 = vadd.f32 %v6336, 1e-05
  %v6353 = vadd.f32 %v6337, 1e-05
  %v6354 = vadd.f32 %v6338, 1e-05
  %v6355 = vadd.f32 %v6339, 1e-05
  %v6356 = vadd.f32 %v6340, 1e-05
  %v6357 = vadd.f32 %v6341, 1e-05
  %v6358 = vadd.f32 %v6342, 1e-05
  %v6359 = vadd.f32 %v6343, 1e-05
  %v6360 = vadd.f32 %v6344, 1e-05
  %v6361 = vadd.f32 %v6345, 1e-05
  %v6362 = vrsqrt.pop %v6346
  %v6363 = vrsqrt.pop %v6347
  %v6364 = vrsqrt.pop %v6348
  %v6365 = vrsqrt.pop %v6349
  %v6366 = vrsqrt.pop %v6350
  %v6367 = vrsqrt.pop %v6351
  %v6368 = vrsqrt.pop %v6352
  %v6369 = vrsqrt.pop %v6353
  %v6370 = vrsqrt.pop %v6354
  %v6371 = vrsqrt.pop %v6355
  %v6372 = vrsqrt.pop %v6356
  %v6373 = vrsqrt.pop %v6357
  %v6374 = vrsqrt.pop %v6358
  %v6375 = vrsqrt.pop %v6359
  %v6376 = vrsqrt.pop %v6360
  %v6377 = vrsqrt.pop %v6361
  %v6378 = vmul.f32 %v6250, %v6362
  %v6379 = vmul.f32 %v6251, %v6363
  %v6380 = vmul.f32 %v6252, %v6364
  %v6381 = vmul.f32 %v6253, %v6365
  %v6382 = vmul.f32 %v6254, %v6366
  %v6383 = vmul.f32 %v6255, %v6367
  %v6384 = vmul.f32 %v6256, %v6368
  %v6385 = vmul.f32 %v6257, %v6369
  %v6386 = vmul.f32 %v6258, %v6370
  %v6387 = vmul.f32 %v6259, %v6371
  %v6388 = vmul.f32 %v6260, %v6372
  %v6389 = vmul.f32 %v6261, %v6373
  %v6390 = vmul.f32 %v6262, %v6374
  %v6391 = vmul.f32 %v6263, %v6375
  %v6392 = vmul.f32 %v6264, %v6376
  %v6393 = vmul.f32 %v6265, %v6377
  %v6395 = vlaneseq
  %v6396 = vshrl.u32 %v6395, 7
  %v6397 = vsub.s32 0, %v6396
  %v6398 = vrot.slane %v6182, %v6397
  %v6400 = vmul.f32 %v6378, %v6398
  %v6401 = vmul.f32 %v6379, %v6398
  %v6402 = vmul.f32 %v6380, %v6398
  %v6403 = vmul.f32 %v6381, %v6398
  %v6404 = vmul.f32 %v6382, %v6398
  %v6405 = vmul.f32 %v6383, %v6398
  %v6406 = vmul.f32 %v6384, %v6398
  %v6407 = vmul.f32 %v6385, %v6398
  %v6408 = vmul.f32 %v6386, %v6398
  %v6409 = vmul.f32 %v6387, %v6398
  %v6410 = vmul.f32 %v6388, %v6398
  %v6411 = vmul.f32 %v6389, %v6398
  %v6412 = vmul.f32 %v6390, %v6398
  %v6413 = vmul.f32 %v6391, %v6398
  %v6414 = vmul.f32 %v6392, %v6398
  %v6415 = vmul.f32 %v6393, %v6398
  %v6417 = vlaneseq
  %v6418 = vshrl.u32 %v6417, 7
  %v6419 = vsub.s32 0, %v6418
  %v6420 = vrot.slane %v6183, %v6419
  %v6422 = vadd.f32 %v6400, %v6420
  %v6423 = vadd.f32 %v6401, %v6420
  %v6424 = vadd.f32 %v6402, %v6420
  %v6425 = vadd.f32 %v6403, %v6420
  %v6426 = vadd.f32 %v6404, %v6420
  %v6427 = vadd.f32 %v6405, %v6420
  %v6428 = vadd.f32 %v6406, %v6420
  %v6429 = vadd.f32 %v6407, %v6420
  %v6430 = vadd.f32 %v6408, %v6420
  %v6431 = vadd.f32 %v6409, %v6420
  %v6432 = vadd.f32 %v6410, %v6420
  %v6433 = vadd.f32 %v6411, %v6420
  %v6434 = vadd.f32 %v6412, %v6420
  %v6435 = vadd.f32 %v6413, %v6420
  %v6436 = vadd.f32 %v6414, %v6420
  %v6437 = vadd.f32 %v6415, %v6420
  %6438 = vxpose.xlu0.b32.start [1/16] %v6422, 128
  %6439 = vxpose.xlu0.b32.cont [2/16] %v6423, 128
  %6440 = vxpose.xlu0.b32.cont [3/16] %v6424, 128
  %6441 = vxpose.xlu0.b32.cont [4/16] %v6425, 128
  %6442 = vxpose.xlu0.b32.cont [5/16] %v6426, 128
  %6443 = vxpose.xlu0.b32.cont [6/16] %v6427, 128
  %6444 = vxpose.xlu0.b32.cont [7/16] %v6428, 128
  %6445 = vxpose.xlu0.b32.cont [8/16] %v6429, 128
  %6446 = vxpose.xlu0.b32.cont [9/16] %v6430, 128
  %6447 = vxpose.xlu0.b32.cont [10/16] %v6431, 128
  %6448 = vxpose.xlu0.b32.cont [11/16] %v6432, 128
  %6449 = vxpose.xlu0.b32.cont [12/16] %v6433, 128
  %6450 = vxpose.xlu0.b32.cont [13/16] %v6434, 128
  %6451 = vxpose.xlu0.b32.cont [14/16] %v6435, 128
  %6452 = vxpose.xlu0.b32.cont [15/16] %v6436, 128
  %6453 = vxpose.xlu0.b32.end [16/16] %v6437, 128
  %v6454 = vpop.trf.xlu0
  %v6455 = vpop.trf.xlu0
  %v6456 = vpop.trf.xlu0
  %v6457 = vpop.trf.xlu0
  %v6458 = vpop.trf.xlu0
  %v6459 = vpop.trf.xlu0
  %v6460 = vpop.trf.xlu0
  %v6461 = vpop.trf.xlu0
  %v6462 = vpop.trf.xlu0
  %v6463 = vpop.trf.xlu0
  %v6464 = vpop.trf.xlu0
  %v6465 = vpop.trf.xlu0
  %v6466 = vpop.trf.xlu0
  %v6467 = vpop.trf.xlu0
  %v6468 = vpop.trf.xlu0
  %v6469 = vpop.trf.xlu0
  %6470 = vst [vmem:[%s17] sm:$0xff] %v6454
  %6471 = vst [vmem:[%s17 + $0x8] sm:$0xff] %v6455
  %6472 = vst [vmem:[%s17 + $0x10] sm:$0xff] %v6456
  %6473 = vst [vmem:[%s17 + $0x18] sm:$0xff] %v6457
  %6474 = vst [vmem:[%s17 + $0x20] sm:$0xff] %v6458
  %6475 = vst [vmem:[%s17 + $0x28] sm:$0xff] %v6459
  %6476 = vst [vmem:[%s17 + $0x30] sm:$0xff] %v6460
  %6477 = vst [vmem:[%s17 + $0x38] sm:$0xff] %v6461
  // Predicated region
  $region70: #{basic_layer_up_forward.3} parent=0 // pred_check
    _
  $region71: #{basic_layer_up_forward.3} parent=0 // pred_check_branch
    %6479 = sbr.rel (0) target = $region73
  $region72: #{basic_layer_up_forward.3} parent=0 // pred_region
    _
  $region73: #{basic_layer_up_forward.3} parent=0 // pred_fallthru
    _
  // Predicated region
  $region74: #{basic_layer_up_forward.3} parent=0 // pred_check
    _
  $region75: #{basic_layer_up_forward.3} parent=0 // pred_check_branch
    %6481 = sbr.rel (0) target = $region77
  $region76: #{basic_layer_up_forward.3} parent=0 // pred_region
    _
  $region77: #{basic_layer_up_forward.3} parent=0 // pred_fallthru
    _

</llo_original>
